<compile_context>
chip_gen: v7x
topology: tpu7x:2x2x1
jax: 0.10.0
libtpu: 0.0.40
codegen_flags: <defaults>
</compile_context>

<pallas_src>
import jax
import jax.numpy as jnp
from jax.experimental import pallas as pl
from jax.experimental.pallas import tpu as pltpu

# ----------------------------- configuration --------------------------------
EMBED_DIM = 32          # PyTorch default 768, scaled down
NUM_MODALITIES = 3
NUM_TIMEPOINTS = 5
CM_HEADS = 4            # cross-modal attention heads (hard-coded in module)
TR_HEADS = 8            # transformer encoder heads
NUM_LAYERS = 4
NUM_CLASSES = 3
DIM_FFN = 2048          # nn.TransformerEncoderLayer default dim_feedforward
LN_EPS = 1e-5
BATCH = 2

HEAD_PAD = 128          # lane-dense classifier output width (sliced to 3 outside)
WEIGHT_DTYPE = jnp.bfloat16
NEG_INF = -1e30


# ----------------------------- kernel helpers --------------------------------


def _floordiv(x, d, n):
    """Exact x // d for int32 x in [0, n*d), division-free (n-1 compares)."""
    q = jnp.zeros_like(x)
    for k in range(1, n):
        q = q + jnp.where(x >= k * d, 1, 0)
    return q


def _layernorm(x, gamma, beta):
    mu = jnp.mean(x, axis=-1, keepdims=True)
    var = jnp.mean((x - mu) ** 2, axis=-1, keepdims=True)
    return (x - mu) * jax.lax.rsqrt(var + LN_EPS) * gamma + beta


def _attn_masks(r, slen, nseq, h, dh, e):
    """Packing / masking matrices for merged-head attention (iota-generated).

    r:    rows in the slab (= nseq * slen independent sequence rows)
    tile:     (h*r, r)  0/1, row h*r+i selects query row i     (q packing)
    bias:     (h*r, r)  0 within a sequence, -1e30 across      (seq block-diag)
    lane:     (h*r, e)  0/1, keeps only head-(row // r) lanes  (head packing)
    collapse: (r, h*r)  0/1, sums the h head blocks back to r rows
    """
    hr = h * r
    r_t = jax.lax.broadcasted_iota(jnp.int32, (hr, r), 0)
    j_t = jax.lax.broadcasted_iota(jnp.int32, (hr, r), 1)
    r_mod = r_t - _floordiv(r_t, r, h) * r                      # query index
    tile = jnp.where(r_mod == j_t, 1.0, 0.0).astype(jnp.float32)
    same_seq = _floordiv(r_mod, slen, nseq) == _floordiv(j_t, slen, nseq)
    bias = jnp.where(same_seq, 0.0, NEG_INF).astype(jnp.float32)

    r_l = jax.lax.broadcasted_iota(jnp.int32, (hr, e), 0)
    e_l = jax.lax.broadcasted_iota(jnp.int32, (hr, e), 1)
    lane = jnp.where(_floordiv(r_l, r, h) == _floordiv(e_l, dh, h),
                     1.0, 0.0).astype(jnp.float32)

    i_c = jax.lax.broadcasted_iota(jnp.int32, (r, hr), 0)
    r_c = jax.lax.broadcasted_iota(jnp.int32, (r, hr), 1)
    collapse = jnp.where((r_c - _floordiv(r_c, r, h) * r) == i_c,
                         1.0, 0.0).astype(jnp.float32)
    return tile, bias, lane, collapse


def _mha_merged(x, wq, wk, wv, bq, bk, bv, wo, bo, tile, bias, lane, collapse):
    """Multi-head self-attention over independent sequences packed row-wise.

    All heads are processed together: no per-head loop, no sub-lane-width
    slicing.  x is (R, E) f32; projection weights are bf16 with 1/sqrt(dh)
    pre-folded into wq/bq.  Returns (R, E) f32 (PyTorch MHA semantics).
    """
    xb = x.astype(WEIGHT_DTYPE)
    q = jnp.dot(xb, wq, preferred_element_type=jnp.float32) + bq      # (R, E)
    k = jnp.dot(xb, wk, preferred_element_type=jnp.float32) + bk
    v = jnp.dot(xb, wv, preferred_element_type=jnp.float32) + bv
    # Head-packed queries: row h*R+i carries query i with only head-h lanes.
    q_pk = jnp.dot(tile, q, preferred_element_type=jnp.float32) * lane  # (HR,E)
    # One score matmul for every (head, query) pair against every key row.
    s = jax.lax.dot_general(q_pk, k, (((1,), (1,)), ((), ())),
                            preferred_element_type=jnp.float32) + bias  # (HR,R)
    s = s - jnp.max(s, axis=-1, keepdims=True)
    p = jnp.exp(s)
    p = p / jnp.sum(p, axis=-1, keepdims=True)                          # exact
    o_pk = jnp.dot(p, v, preferred_element_type=jnp.float32) * lane     # (HR,E)
    o = jnp.dot(collapse, o_pk, preferred_element_type=jnp.float32)     # (R, E)
    return jnp.dot(o.astype(WEIGHT_DTYPE), wo,
                   preferred_element_type=jnp.float32) + bo


# ----------------------------- fused kernel ----------------------------------


def fused_kernel(
        x_ref,
        cwq_ref, cwk_ref, cwv_ref, cbq_ref, cbk_ref, cbv_ref,
        cwo_ref, cbo_ref, cg_ref, cb_ref,
        wq_ref, wk_ref, wv_ref, bq_ref, bk_ref, bv_ref, wo_ref, bo_ref,
        g1_ref, b1_ref, w1_ref, bb1_ref, w2_ref, bb2_ref, g2_ref, b2_ref,
        hw_ref, hb_ref,
        o_ref,
        z_ref, et_ref, eb_ref, el_ref, ec_ref):
    l = pl.program_id(0)
    bt, e = z_ref.shape

    # ---- step 0: cross-modal attention + mean, and cache encoder masks ------
    @pl.when(l == 0)
    def _():
        x = x_ref[...]                                      # (B*T*M, E) f32
        rows = x.shape[0]
        tile, bias, lane, collapse = _attn_masks(
            rows, NUM_MODALITIES, rows // NUM_MODALITIES,
            CM_HEADS, e // CM_HEADS, e)
        attn = _mha_merged(x, cwq_ref[...], cwk_ref[...], cwv_ref[...],
                           cbq_ref[...], cbk_ref[...], cbv_ref[...],
                           cwo_ref[...], cbo_ref[...],
                           tile, bias, lane, collapse)
        y = _layernorm(attn + x, cg_ref[...], cb_ref[...])
        # mean over the modality axis as an averaging matmul (BT, BT*M) @ y
        ii = jax.lax.broadcasted_iota(jnp.int32, (bt, rows), 0)
        rr = jax.lax.broadcasted_iota(jnp.int32, (bt, rows), 1)
        mean_mat = (jnp.where(_floordiv(rr, NUM_MODALITIES, bt) == ii, 1.0, 0.0)
                    .astype(jnp.float32) / NUM_MODALITIES)
        z_ref[...] = jnp.dot(mean_mat, y, preferred_element_type=jnp.float32)
        # encoder packing masks are layer-invariant: build once, keep in VMEM
        et, ebias, elane, ecol = _attn_masks(
            bt, NUM_TIMEPOINTS, bt // NUM_TIMEPOINTS,
            TR_HEADS, e // TR_HEADS, e)
        et_ref[...] = et
        eb_ref[...] = ebias
        el_ref[...] = elane
        ec_ref[...] = ecol

    # ---- encoder layer l (post-norm, ReLU FFN; weights streamed per step) ---
    z = z_ref[...]
    attn = _mha_merged(z, wq_ref[0], wk_ref[0], wv_ref[0],
                       bq_ref[0], bk_ref[0], bv_ref[0], wo_ref[0], bo_ref[0],
                       et_ref[...], eb_ref[...], el_ref[...], ec_ref[...])
    y1 = _layernorm(z + attn, g1_ref[0], b1_ref[0])
    h = jnp.dot(y1.astype(WEIGHT_DTYPE), w1_ref[0],
                preferred_element_type=jnp.float32) + bb1_ref[0]
    h = jnp.maximum(h, 0.0)                                   # ReLU
    ff = jnp.dot(h.astype(WEIGHT_DTYPE), w2_ref[0],
                 preferred_element_type=jnp.float32) + bb2_ref[0]
    z_new = _layernorm(y1 + ff, g2_ref[0], b2_ref[0])
    z_ref[...] = z_new

    # ---- classifier head on the last layer (lane-dense 128-wide output) -----
    @pl.when(l == pl.num_programs(0) - 1)
    def _():
        o_ref[...] = jnp.dot(z_new, hw_ref[...],
                             preferred_element_type=jnp.float32) + hb_ref[...]


# ----------------------------- pallas_call wrapper ----------------------------


def _const_spec(shape):
    """Full array, same block every grid step (loaded once, kept resident)."""
    nd = len(shape)
    return pl.BlockSpec(shape, lambda l, _nd=nd: (0,) * _nd)


def _layer_spec(shape):
    """One (1, ...) slice per grid step along the leading layer axis."""
    blk = (1,) + tuple(shape[1:])
    pad = (0,) * (len(shape) - 1)
    return pl.BlockSpec(blk, lambda l, _pad=pad: (l,) + _pad)


def temporal_transformer_forward(x, params):
    b, t, m, e = x.shape
    bt = b * t
    xf = x.reshape(bt * m, e)                     # row = (b*T + t)*M + m

    cm = params["cm"]
    ly = params["layers"]
    n_layers = ly["wq"].shape[0]

    args = (xf,
            cm["wq"], cm["wk"], cm["wv"], cm["bq"], cm["bk"], cm["bv"],
            cm["wo"], cm["bo"], cm["g"], cm["b"],
            ly["wq"], ly["wk"], ly["wv"], ly["bq"], ly["bk"], ly["bv"],
            ly["wo"], ly["bo"], ly["g1"], ly["b1"],
            ly["w1"], ly["bb1"], ly["w2"], ly["bb2"], ly["g2"], ly["b2"],
            params["head_w"], params["head_b"])

    n_const = 11           # x + cross-modal params: resident for the whole grid
    n_layer = 16           # stacked per-layer encoder params: streamed
    in_specs = ([_const_spec(a.shape) for a in args[:n_const]]
                + [_layer_spec(a.shape)
                   for a in args[n_const:n_const + n_layer]]
                + [_const_spec(a.shape)
                   for a in args[n_const + n_layer:]])

    hr_enc = TR_HEADS * bt
    out = pl.pallas_call(
        fused_kernel,
        out_shape=jax.ShapeDtypeStruct((bt, HEAD_PAD), jnp.float32),
        grid=(n_layers,),
        in_specs=in_specs,
        out_specs=pl.BlockSpec((bt, HEAD_PAD), lambda l: (0, 0)),
        scratch_shapes=[
            pltpu.VMEM((bt, e), jnp.float32),        # carried activation z
            pltpu.VMEM((hr_enc, bt), jnp.float32),   # encoder q-packing matrix
            pltpu.VMEM((hr_enc, bt), jnp.float32),   # encoder sequence bias
            pltpu.VMEM((hr_enc, e), jnp.float32),    # encoder head-lane mask
            pltpu.VMEM((bt, hr_enc), jnp.float32),   # encoder collapse matrix
        ],
        compiler_params=pltpu.CompilerParams(
            dimension_semantics=("arbitrary",)),
    )(*args)
    return out[:, :NUM_CLASSES].reshape(b, t, NUM_CLASSES)


# ----------------------------- parameters ------------------------------------


def init_params(key, e=EMBED_DIM, ffn=DIM_FFN, n_layers=NUM_LAYERS,
                n_classes=NUM_CLASSES):
    keys = iter(jax.random.split(key, 5 + 6 * n_layers))

    def dense(shape):
        return jax.random.normal(next(keys), shape, jnp.float32) * 0.02

    # ---- cross-modal attention (4 heads); 1/sqrt(dh) folded into Q weights ----
    q_scale_cm = 1.0 / ((e // CM_HEADS) ** 0.5)
    cm = dict(
        wq=(dense((e, e)) * q_scale_cm).astype(WEIGHT_DTYPE),
        wk=dense((e, e)).astype(WEIGHT_DTYPE),
        wv=dense((e, e)).astype(WEIGHT_DTYPE),
        bq=jnp.zeros((1, e), jnp.float32),
        bk=jnp.zeros((1, e), jnp.float32),
        bv=jnp.zeros((1, e), jnp.float32),
        wo=dense((e, e)).astype(WEIGHT_DTYPE),
        bo=jnp.zeros((1, e), jnp.float32),
        g=jnp.ones((1, e), jnp.float32),
        b=jnp.zeros((1, e), jnp.float32),
    )

    # ---- transformer encoder layers (8 heads), stacked on a leading L axis ----
    q_scale_tr = 1.0 / ((e // TR_HEADS) ** 0.5)

    def stack(shape, scale=1.0):
        return (jnp.stack([dense(shape) for _ in range(n_layers)]) * scale
                ).astype(WEIGHT_DTYPE)

    layers = dict(
        wq=stack((e, e), q_scale_tr),                          # (L, E, E)
        wk=stack((e, e)),
        wv=stack((e, e)),
        bq=jnp.zeros((n_layers, 1, e), jnp.float32),
        bk=jnp.zeros((n_layers, 1, e), jnp.float32),
        bv=jnp.zeros((n_layers, 1, e), jnp.float32),
        wo=stack((e, e)),
        bo=jnp.zeros((n_layers, 1, e), jnp.float32),
        g1=jnp.ones((n_layers, 1, e), jnp.float32),
        b1=jnp.zeros((n_layers, 1, e), jnp.float32),
        w1=stack((e, ffn)),                                    # (L, E, FFN)
        bb1=jnp.zeros((n_layers, 1, ffn), jnp.float32),
        w2=stack((ffn, e)),                                    # (L, FFN, E)
        bb2=jnp.zeros((n_layers, 1, e), jnp.float32),
        g2=jnp.ones((n_layers, 1, e), jnp.float32),
        b2=jnp.zeros((n_layers, 1, e), jnp.float32),
    )

    # classifier head, zero-padded to 128 output lanes for a lane-dense store
    head_w = jnp.zeros((e, HEAD_PAD), jnp.float32)
    head_w = head_w.at[:, :n_classes].set(dense((e, n_classes)))
    head_b = jnp.zeros((1, HEAD_PAD), jnp.float32)
    return dict(cm=cm, layers=layers, head_w=head_w, head_b=head_b)


# ----------------------------- main -------------------------------------------

if __name__ == "__main__":
    key = jax.random.PRNGKey(0)
    k_x, k_p = jax.random.split(key)
    x = jax.random.normal(
        k_x, (BATCH, NUM_TIMEPOINTS, NUM_MODALITIES, EMBED_DIM), jnp.float32)
    params = init_params(k_p)

    forward = jax.jit(temporal_transformer_forward)
    out = jax.block_until_ready(forward(x, params))

    assert out.shape == (BATCH, NUM_TIMEPOINTS, NUM_CLASSES), out.shape
    assert out.dtype == jnp.float32
    assert bool(jnp.all(jnp.isfinite(out)))
    print("KERNEL_OK")
</pallas_src>

<mosaic_0001>
module attributes {stable_mosaic.version = 11 : i64} {
  func.func @fused_kernel(%arg0: i32, %arg1: memref<30x32xf32, #tpu.memory_space<vmem>>, %arg2: memref<32x32xbf16, #tpu.memory_space<vmem>>, %arg3: memref<32x32xbf16, #tpu.memory_space<vmem>>, %arg4: memref<32x32xbf16, #tpu.memory_space<vmem>>, %arg5: memref<1x32xf32, #tpu.memory_space<vmem>>, %arg6: memref<1x32xf32, #tpu.memory_space<vmem>>, %arg7: memref<1x32xf32, #tpu.memory_space<vmem>>, %arg8: memref<32x32xbf16, #tpu.memory_space<vmem>>, %arg9: memref<1x32xf32, #tpu.memory_space<vmem>>, %arg10: memref<1x32xf32, #tpu.memory_space<vmem>>, %arg11: memref<1x32xf32, #tpu.memory_space<vmem>>, %arg12: memref<1x32x32xbf16, #tpu.memory_space<vmem>>, %arg13: memref<1x32x32xbf16, #tpu.memory_space<vmem>>, %arg14: memref<1x32x32xbf16, #tpu.memory_space<vmem>>, %arg15: memref<1x1x32xf32, #tpu.memory_space<vmem>>, %arg16: memref<1x1x32xf32, #tpu.memory_space<vmem>>, %arg17: memref<1x1x32xf32, #tpu.memory_space<vmem>>, %arg18: memref<1x32x32xbf16, #tpu.memory_space<vmem>>, %arg19: memref<1x1x32xf32, #tpu.memory_space<vmem>>, %arg20: memref<1x1x32xf32, #tpu.memory_space<vmem>>, %arg21: memref<1x1x32xf32, #tpu.memory_space<vmem>>, %arg22: memref<1x32x2048xbf16, #tpu.memory_space<vmem>>, %arg23: memref<1x1x2048xf32, #tpu.memory_space<vmem>>, %arg24: memref<1x2048x32xbf16, #tpu.memory_space<vmem>>, %arg25: memref<1x1x32xf32, #tpu.memory_space<vmem>>, %arg26: memref<1x1x32xf32, #tpu.memory_space<vmem>>, %arg27: memref<1x1x32xf32, #tpu.memory_space<vmem>>, %arg28: memref<32x128xf32, #tpu.memory_space<vmem>>, %arg29: memref<1x128xf32, #tpu.memory_space<vmem>>, %arg30: memref<10x128xf32, #tpu.memory_space<vmem>>, %arg31: memref<10x32xf32, #tpu.memory_space<vmem>>, %arg32: memref<80x10xf32, #tpu.memory_space<vmem>>, %arg33: memref<80x10xf32, #tpu.memory_space<vmem>>, %arg34: memref<80x32xf32, #tpu.memory_space<vmem>>, %arg35: memref<10x80xf32, #tpu.memory_space<vmem>>) attributes {dimension_semantics = [#tpu.dimension_semantics<arbitrary>], iteration_bounds = array<i64: 4>, scalar_prefetch = 0 : i64, scratch_operands = 5 : i64, tpu.core_type = #tpu.core_type<tc>, window_params = [{pipeline_mode = #tpu.pipeline_mode<synchronous>, transform_indices = @transform_0, window_bounds = array<i64: 30, 32>}, {pipeline_mode = #tpu.pipeline_mode<synchronous>, transform_indices = @transform_1, window_bounds = array<i64: 32, 32>}, {pipeline_mode = #tpu.pipeline_mode<synchronous>, transform_indices = @transform_2, window_bounds = array<i64: 32, 32>}, {pipeline_mode = #tpu.pipeline_mode<synchronous>, transform_indices = @transform_3, window_bounds = array<i64: 32, 32>}, {pipeline_mode = #tpu.pipeline_mode<synchronous>, transform_indices = @transform_4, window_bounds = array<i64: 1, 32>}, {pipeline_mode = #tpu.pipeline_mode<synchronous>, transform_indices = @transform_5, window_bounds = array<i64: 1, 32>}, {pipeline_mode = #tpu.pipeline_mode<synchronous>, transform_indices = @transform_6, window_bounds = array<i64: 1, 32>}, {pipeline_mode = #tpu.pipeline_mode<synchronous>, transform_indices = @transform_7, window_bounds = array<i64: 32, 32>}, {pipeline_mode = #tpu.pipeline_mode<synchronous>, transform_indices = @transform_8, window_bounds = array<i64: 1, 32>}, {pipeline_mode = #tpu.pipeline_mode<synchronous>, transform_indices = @transform_9, window_bounds = array<i64: 1, 32>}, {pipeline_mode = #tpu.pipeline_mode<synchronous>, transform_indices = @transform_10, window_bounds = array<i64: 1, 32>}, {transform_indices = @transform_11, window_bounds = array<i64: 1, 32, 32>}, {transform_indices = @transform_12, window_bounds = array<i64: 1, 32, 32>}, {transform_indices = @transform_13, window_bounds = array<i64: 1, 32, 32>}, {transform_indices = @transform_14, window_bounds = array<i64: 1, 1, 32>}, {transform_indices = @transform_15, window_bounds = array<i64: 1, 1, 32>}, {transform_indices = @transform_16, window_bounds = array<i64: 1, 1, 32>}, {transform_indices = @transform_17, window_bounds = array<i64: 1, 32, 32>}, {transform_indices = @transform_18, window_bounds = array<i64: 1, 1, 32>}, {transform_indices = @transform_19, window_bounds = array<i64: 1, 1, 32>}, {transform_indices = @transform_20, window_bounds = array<i64: 1, 1, 32>}, {transform_indices = @transform_21, window_bounds = array<i64: 1, 32, 2048>}, {transform_indices = @transform_22, window_bounds = array<i64: 1, 1, 2048>}, {transform_indices = @transform_23, window_bounds = array<i64: 1, 2048, 32>}, {transform_indices = @transform_24, window_bounds = array<i64: 1, 1, 32>}, {transform_indices = @transform_25, window_bounds = array<i64: 1, 1, 32>}, {transform_indices = @transform_26, window_bounds = array<i64: 1, 1, 32>}, {pipeline_mode = #tpu.pipeline_mode<synchronous>, transform_indices = @transform_27, window_bounds = array<i64: 32, 128>}, {pipeline_mode = #tpu.pipeline_mode<synchronous>, transform_indices = @transform_28, window_bounds = array<i64: 1, 128>}, {pipeline_mode = #tpu.pipeline_mode<synchronous>, transform_indices = @transform_29, window_bounds = array<i64: 10, 128>}]} {
    %c0_i32 = arith.constant 0 : i32
    %0 = arith.cmpi eq, %arg0, %c0_i32 : i32
    %1 = arith.extui %0 : i1 to i32
    %c0_i32_0 = arith.constant 0 : i32
    %2 = arith.cmpi ne, %1, %c0_i32_0 : i32
    scf.if %2 {
      %c0_83 = arith.constant 0 : index
      %c0_84 = arith.constant 0 : index
      %130 = vector.load %arg1[%c0_83, %c0_84] : memref<30x32xf32, #tpu.memory_space<vmem>>, vector<30x32xf32>
      %131 = tpu.iota {dimensions = array<i32: 0>} : vector<120x30xi32>
      %132 = tpu.iota {dimensions = array<i32: 1>} : vector<120x30xi32>
      %c0_i32_85 = arith.constant 0 : i32
      %133 = vector.broadcast %c0_i32_85 : i32 to vector<120x30xi32>
      %c30_i32 = arith.constant 30 : i32
      %134 = vector.broadcast %c30_i32 : i32 to vector<120x30xi32>
      %135 = arith.cmpi sge, %131, %134 : vector<120x30xi32>
      %c1_i32 = arith.constant 1 : i32
      %c0_i32_86 = arith.constant 0 : i32
      %136 = vector.broadcast %c1_i32 : i32 to vector<120x30xi32>
      %137 = vector.broadcast %c0_i32_86 : i32 to vector<120x30xi32>
      %138 = arith.select %135, %136, %137 : vector<120x30xi1>, vector<120x30xi32>
      %139 = arith.addi %133, %138 : vector<120x30xi32>
      %c60_i32 = arith.constant 60 : i32
      %140 = vector.broadcast %c60_i32 : i32 to vector<120x30xi32>
      %141 = arith.cmpi sge, %131, %140 : vector<120x30xi32>
      %c1_i32_87 = arith.constant 1 : i32
      %c0_i32_88 = arith.constant 0 : i32
      %142 = vector.broadcast %c1_i32_87 : i32 to vector<120x30xi32>
      %143 = vector.broadcast %c0_i32_88 : i32 to vector<120x30xi32>
      %144 = arith.select %141, %142, %143 : vector<120x30xi1>, vector<120x30xi32>
      %145 = arith.addi %139, %144 : vector<120x30xi32>
      %c90_i32 = arith.constant 90 : i32
      %146 = vector.broadcast %c90_i32 : i32 to vector<120x30xi32>
      %147 = arith.cmpi sge, %131, %146 : vector<120x30xi32>
      %c1_i32_89 = arith.constant 1 : i32
      %c0_i32_90 = arith.constant 0 : i32
      %148 = vector.broadcast %c1_i32_89 : i32 to vector<120x30xi32>
      %149 = vector.broadcast %c0_i32_90 : i32 to vector<120x30xi32>
      %150 = arith.select %147, %148, %149 : vector<120x30xi1>, vector<120x30xi32>
      %151 = arith.addi %145, %150 : vector<120x30xi32>
      %c30_i32_91 = arith.constant 30 : i32
      %152 = vector.broadcast %c30_i32_91 : i32 to vector<120x30xi32>
      %153 = arith.muli %151, %152 : vector<120x30xi32>
      %154 = arith.subi %131, %153 : vector<120x30xi32>
      %155 = arith.cmpi eq, %154, %132 : vector<120x30xi32>
      %cst_92 = arith.constant 1.000000e+00 : f32
      %cst_93 = arith.constant 0.000000e+00 : f32
      %156 = vector.broadcast %cst_92 : f32 to vector<120x30xf32>
      %157 = vector.broadcast %cst_93 : f32 to vector<120x30xf32>
      %158 = arith.select %155, %156, %157 : vector<120x30xi1>, vector<120x30xf32>
      %c0_i32_94 = arith.constant 0 : i32
      %159 = vector.broadcast %c0_i32_94 : i32 to vector<120x30xi32>
      %c3_i32_95 = arith.constant 3 : i32
      %160 = vector.broadcast %c3_i32_95 : i32 to vector<120x30xi32>
      %161 = arith.cmpi sge, %154, %160 : vector<120x30xi32>
      %c1_i32_96 = arith.constant 1 : i32
      %c0_i32_97 = arith.constant 0 : i32
      %162 = vector.broadcast %c1_i32_96 : i32 to vector<120x30xi32>
      %163 = vector.broadcast %c0_i32_97 : i32 to vector<120x30xi32>
      %164 = arith.select %161, %162, %163 : vector<120x30xi1>, vector<120x30xi32>
      %165 = arith.addi %159, %164 : vector<120x30xi32>
      %c6_i32 = arith.constant 6 : i32
      %166 = vector.broadcast %c6_i32 : i32 to vector<120x30xi32>
      %167 = arith.cmpi sge, %154, %166 : vector<120x30xi32>
      %c1_i32_98 = arith.constant 1 : i32
      %c0_i32_99 = arith.constant 0 : i32
      %168 = vector.broadcast %c1_i32_98 : i32 to vector<120x30xi32>
      %169 = vector.broadcast %c0_i32_99 : i32 to vector<120x30xi32>
      %170 = arith.select %167, %168, %169 : vector<120x30xi1>, vector<120x30xi32>
      %171 = arith.addi %165, %170 : vector<120x30xi32>
      %c9_i32 = arith.constant 9 : i32
      %172 = vector.broadcast %c9_i32 : i32 to vector<120x30xi32>
      %173 = arith.cmpi sge, %154, %172 : vector<120x30xi32>
      %c1_i32_100 = arith.constant 1 : i32
      %c0_i32_101 = arith.constant 0 : i32
      %174 = vector.broadcast %c1_i32_100 : i32 to vector<120x30xi32>
      %175 = vector.broadcast %c0_i32_101 : i32 to vector<120x30xi32>
      %176 = arith.select %173, %174, %175 : vector<120x30xi1>, vector<120x30xi32>
      %177 = arith.addi %171, %176 : vector<120x30xi32>
      %c12_i32 = arith.constant 12 : i32
      %178 = vector.broadcast %c12_i32 : i32 to vector<120x30xi32>
      %179 = arith.cmpi sge, %154, %178 : vector<120x30xi32>
      %c1_i32_102 = arith.constant 1 : i32
      %c0_i32_103 = arith.constant 0 : i32
      %180 = vector.broadcast %c1_i32_102 : i32 to vector<120x30xi32>
      %181 = vector.broadcast %c0_i32_103 : i32 to vector<120x30xi32>
      %182 = arith.select %179, %180, %181 : vector<120x30xi1>, vector<120x30xi32>
      %183 = arith.addi %177, %182 : vector<120x30xi32>
      %c15_i32 = arith.constant 15 : i32
      %184 = vector.broadcast %c15_i32 : i32 to vector<120x30xi32>
      %185 = arith.cmpi sge, %154, %184 : vector<120x30xi32>
      %c1_i32_104 = arith.constant 1 : i32
      %c0_i32_105 = arith.constant 0 : i32
      %186 = vector.broadcast %c1_i32_104 : i32 to vector<120x30xi32>
      %187 = vector.broadcast %c0_i32_105 : i32 to vector<120x30xi32>
      %188 = arith.select %185, %186, %187 : vector<120x30xi1>, vector<120x30xi32>
      %189 = arith.addi %183, %188 : vector<120x30xi32>
      %c18_i32 = arith.constant 18 : i32
      %190 = vector.broadcast %c18_i32 : i32 to vector<120x30xi32>
      %191 = arith.cmpi sge, %154, %190 : vector<120x30xi32>
      %c1_i32_106 = arith.constant 1 : i32
      %c0_i32_107 = arith.constant 0 : i32
      %192 = vector.broadcast %c1_i32_106 : i32 to vector<120x30xi32>
      %193 = vector.broadcast %c0_i32_107 : i32 to vector<120x30xi32>
      %194 = arith.select %191, %192, %193 : vector<120x30xi1>, vector<120x30xi32>
      %195 = arith.addi %189, %194 : vector<120x30xi32>
      %c21_i32 = arith.constant 21 : i32
      %196 = vector.broadcast %c21_i32 : i32 to vector<120x30xi32>
      %197 = arith.cmpi sge, %154, %196 : vector<120x30xi32>
      %c1_i32_108 = arith.constant 1 : i32
      %c0_i32_109 = arith.constant 0 : i32
      %198 = vector.broadcast %c1_i32_108 : i32 to vector<120x30xi32>
      %199 = vector.broadcast %c0_i32_109 : i32 to vector<120x30xi32>
      %200 = arith.select %197, %198, %199 : vector<120x30xi1>, vector<120x30xi32>
      %201 = arith.addi %195, %200 : vector<120x30xi32>
      %c24_i32 = arith.constant 24 : i32
      %202 = vector.broadcast %c24_i32 : i32 to vector<120x30xi32>
      %203 = arith.cmpi sge, %154, %202 : vector<120x30xi32>
      %c1_i32_110 = arith.constant 1 : i32
      %c0_i32_111 = arith.constant 0 : i32
      %204 = vector.broadcast %c1_i32_110 : i32 to vector<120x30xi32>
      %205 = vector.broadcast %c0_i32_111 : i32 to vector<120x30xi32>
      %206 = arith.select %203, %204, %205 : vector<120x30xi1>, vector<120x30xi32>
      %207 = arith.addi %201, %206 : vector<120x30xi32>
      %c27_i32 = arith.constant 27 : i32
      %208 = vector.broadcast %c27_i32 : i32 to vector<120x30xi32>
      %209 = arith.cmpi sge, %154, %208 : vector<120x30xi32>
      %c1_i32_112 = arith.constant 1 : i32
      %c0_i32_113 = arith.constant 0 : i32
      %210 = vector.broadcast %c1_i32_112 : i32 to vector<120x30xi32>
      %211 = vector.broadcast %c0_i32_113 : i32 to vector<120x30xi32>
      %212 = arith.select %209, %210, %211 : vector<120x30xi1>, vector<120x30xi32>
      %213 = arith.addi %207, %212 : vector<120x30xi32>
      %c0_i32_114 = arith.constant 0 : i32
      %214 = vector.broadcast %c0_i32_114 : i32 to vector<120x30xi32>
      %c3_i32_115 = arith.constant 3 : i32
      %215 = vector.broadcast %c3_i32_115 : i32 to vector<120x30xi32>
      %216 = arith.cmpi sge, %132, %215 : vector<120x30xi32>
      %c1_i32_116 = arith.constant 1 : i32
      %c0_i32_117 = arith.constant 0 : i32
      %217 = vector.broadcast %c1_i32_116 : i32 to vector<120x30xi32>
      %218 = vector.broadcast %c0_i32_117 : i32 to vector<120x30xi32>
      %219 = arith.select %216, %217, %218 : vector<120x30xi1>, vector<120x30xi32>
      %220 = arith.addi %214, %219 : vector<120x30xi32>
      %c6_i32_118 = arith.constant 6 : i32
      %221 = vector.broadcast %c6_i32_118 : i32 to vector<120x30xi32>
      %222 = arith.cmpi sge, %132, %221 : vector<120x30xi32>
      %c1_i32_119 = arith.constant 1 : i32
      %c0_i32_120 = arith.constant 0 : i32
      %223 = vector.broadcast %c1_i32_119 : i32 to vector<120x30xi32>
      %224 = vector.broadcast %c0_i32_120 : i32 to vector<120x30xi32>
      %225 = arith.select %222, %223, %224 : vector<120x30xi1>, vector<120x30xi32>
      %226 = arith.addi %220, %225 : vector<120x30xi32>
      %c9_i32_121 = arith.constant 9 : i32
      %227 = vector.broadcast %c9_i32_121 : i32 to vector<120x30xi32>
      %228 = arith.cmpi sge, %132, %227 : vector<120x30xi32>
      %c1_i32_122 = arith.constant 1 : i32
      %c0_i32_123 = arith.constant 0 : i32
      %229 = vector.broadcast %c1_i32_122 : i32 to vector<120x30xi32>
      %230 = vector.broadcast %c0_i32_123 : i32 to vector<120x30xi32>
      %231 = arith.select %228, %229, %230 : vector<120x30xi1>, vector<120x30xi32>
      %232 = arith.addi %226, %231 : vector<120x30xi32>
      %c12_i32_124 = arith.constant 12 : i32
      %233 = vector.broadcast %c12_i32_124 : i32 to vector<120x30xi32>
      %234 = arith.cmpi sge, %132, %233 : vector<120x30xi32>
      %c1_i32_125 = arith.constant 1 : i32
      %c0_i32_126 = arith.constant 0 : i32
      %235 = vector.broadcast %c1_i32_125 : i32 to vector<120x30xi32>
      %236 = vector.broadcast %c0_i32_126 : i32 to vector<120x30xi32>
      %237 = arith.select %234, %235, %236 : vector<120x30xi1>, vector<120x30xi32>
      %238 = arith.addi %232, %237 : vector<120x30xi32>
      %c15_i32_127 = arith.constant 15 : i32
      %239 = vector.broadcast %c15_i32_127 : i32 to vector<120x30xi32>
      %240 = arith.cmpi sge, %132, %239 : vector<120x30xi32>
      %c1_i32_128 = arith.constant 1 : i32
      %c0_i32_129 = arith.constant 0 : i32
      %241 = vector.broadcast %c1_i32_128 : i32 to vector<120x30xi32>
      %242 = vector.broadcast %c0_i32_129 : i32 to vector<120x30xi32>
      %243 = arith.select %240, %241, %242 : vector<120x30xi1>, vector<120x30xi32>
      %244 = arith.addi %238, %243 : vector<120x30xi32>
      %c18_i32_130 = arith.constant 18 : i32
      %245 = vector.broadcast %c18_i32_130 : i32 to vector<120x30xi32>
      %246 = arith.cmpi sge, %132, %245 : vector<120x30xi32>
      %c1_i32_131 = arith.constant 1 : i32
      %c0_i32_132 = arith.constant 0 : i32
      %247 = vector.broadcast %c1_i32_131 : i32 to vector<120x30xi32>
      %248 = vector.broadcast %c0_i32_132 : i32 to vector<120x30xi32>
      %249 = arith.select %246, %247, %248 : vector<120x30xi1>, vector<120x30xi32>
      %250 = arith.addi %244, %249 : vector<120x30xi32>
      %c21_i32_133 = arith.constant 21 : i32
      %251 = vector.broadcast %c21_i32_133 : i32 to vector<120x30xi32>
      %252 = arith.cmpi sge, %132, %251 : vector<120x30xi32>
      %c1_i32_134 = arith.constant 1 : i32
      %c0_i32_135 = arith.constant 0 : i32
      %253 = vector.broadcast %c1_i32_134 : i32 to vector<120x30xi32>
      %254 = vector.broadcast %c0_i32_135 : i32 to vector<120x30xi32>
      %255 = arith.select %252, %253, %254 : vector<120x30xi1>, vector<120x30xi32>
      %256 = arith.addi %250, %255 : vector<120x30xi32>
      %c24_i32_136 = arith.constant 24 : i32
      %257 = vector.broadcast %c24_i32_136 : i32 to vector<120x30xi32>
      %258 = arith.cmpi sge, %132, %257 : vector<120x30xi32>
      %c1_i32_137 = arith.constant 1 : i32
      %c0_i32_138 = arith.constant 0 : i32
      %259 = vector.broadcast %c1_i32_137 : i32 to vector<120x30xi32>
      %260 = vector.broadcast %c0_i32_138 : i32 to vector<120x30xi32>
      %261 = arith.select %258, %259, %260 : vector<120x30xi1>, vector<120x30xi32>
      %262 = arith.addi %256, %261 : vector<120x30xi32>
      %c27_i32_139 = arith.constant 27 : i32
      %263 = vector.broadcast %c27_i32_139 : i32 to vector<120x30xi32>
      %264 = arith.cmpi sge, %132, %263 : vector<120x30xi32>
      %c1_i32_140 = arith.constant 1 : i32
      %c0_i32_141 = arith.constant 0 : i32
      %265 = vector.broadcast %c1_i32_140 : i32 to vector<120x30xi32>
      %266 = vector.broadcast %c0_i32_141 : i32 to vector<120x30xi32>
      %267 = arith.select %264, %265, %266 : vector<120x30xi1>, vector<120x30xi32>
      %268 = arith.addi %262, %267 : vector<120x30xi32>
      %269 = arith.cmpi eq, %213, %268 : vector<120x30xi32>
      %cst_142 = arith.constant 0.000000e+00 : f32
      %cst_143 = arith.constant -1.000000e+30 : f32
      %270 = vector.broadcast %cst_142 : f32 to vector<120x30xf32>
      %271 = vector.broadcast %cst_143 : f32 to vector<120x30xf32>
      %272 = arith.select %269, %270, %271 : vector<120x30xi1>, vector<120x30xf32>
      %273 = tpu.iota {dimensions = array<i32: 0>} : vector<120x32xi32>
      %274 = tpu.iota {dimensions = array<i32: 1>} : vector<120x32xi32>
      %c0_i32_144 = arith.constant 0 : i32
      %275 = vector.broadcast %c0_i32_144 : i32 to vector<120x32xi32>
      %c30_i32_145 = arith.constant 30 : i32
      %276 = vector.broadcast %c30_i32_145 : i32 to vector<120x32xi32>
      %277 = arith.cmpi sge, %273, %276 : vector<120x32xi32>
      %c1_i32_146 = arith.constant 1 : i32
      %c0_i32_147 = arith.constant 0 : i32
      %278 = vector.broadcast %c1_i32_146 : i32 to vector<120x32xi32>
      %279 = vector.broadcast %c0_i32_147 : i32 to vector<120x32xi32>
      %280 = arith.select %277, %278, %279 : vector<120x32xi1>, vector<120x32xi32>
      %281 = arith.addi %275, %280 : vector<120x32xi32>
      %c60_i32_148 = arith.constant 60 : i32
      %282 = vector.broadcast %c60_i32_148 : i32 to vector<120x32xi32>
      %283 = arith.cmpi sge, %273, %282 : vector<120x32xi32>
      %c1_i32_149 = arith.constant 1 : i32
      %c0_i32_150 = arith.constant 0 : i32
      %284 = vector.broadcast %c1_i32_149 : i32 to vector<120x32xi32>
      %285 = vector.broadcast %c0_i32_150 : i32 to vector<120x32xi32>
      %286 = arith.select %283, %284, %285 : vector<120x32xi1>, vector<120x32xi32>
      %287 = arith.addi %281, %286 : vector<120x32xi32>
      %c90_i32_151 = arith.constant 90 : i32
      %288 = vector.broadcast %c90_i32_151 : i32 to vector<120x32xi32>
      %289 = arith.cmpi sge, %273, %288 : vector<120x32xi32>
      %c1_i32_152 = arith.constant 1 : i32
      %c0_i32_153 = arith.constant 0 : i32
      %290 = vector.broadcast %c1_i32_152 : i32 to vector<120x32xi32>
      %291 = vector.broadcast %c0_i32_153 : i32 to vector<120x32xi32>
      %292 = arith.select %289, %290, %291 : vector<120x32xi1>, vector<120x32xi32>
      %293 = arith.addi %287, %292 : vector<120x32xi32>
      %c0_i32_154 = arith.constant 0 : i32
      %294 = vector.broadcast %c0_i32_154 : i32 to vector<120x32xi32>
      %c8_i32 = arith.constant 8 : i32
      %295 = vector.broadcast %c8_i32 : i32 to vector<120x32xi32>
      %296 = arith.cmpi sge, %274, %295 : vector<120x32xi32>
      %c1_i32_155 = arith.constant 1 : i32
      %c0_i32_156 = arith.constant 0 : i32
      %297 = vector.broadcast %c1_i32_155 : i32 to vector<120x32xi32>
      %298 = vector.broadcast %c0_i32_156 : i32 to vector<120x32xi32>
      %299 = arith.select %296, %297, %298 : vector<120x32xi1>, vector<120x32xi32>
      %300 = arith.addi %294, %299 : vector<120x32xi32>
      %c16_i32 = arith.constant 16 : i32
      %301 = vector.broadcast %c16_i32 : i32 to vector<120x32xi32>
      %302 = arith.cmpi sge, %274, %301 : vector<120x32xi32>
      %c1_i32_157 = arith.constant 1 : i32
      %c0_i32_158 = arith.constant 0 : i32
      %303 = vector.broadcast %c1_i32_157 : i32 to vector<120x32xi32>
      %304 = vector.broadcast %c0_i32_158 : i32 to vector<120x32xi32>
      %305 = arith.select %302, %303, %304 : vector<120x32xi1>, vector<120x32xi32>
      %306 = arith.addi %300, %305 : vector<120x32xi32>
      %c24_i32_159 = arith.constant 24 : i32
      %307 = vector.broadcast %c24_i32_159 : i32 to vector<120x32xi32>
      %308 = arith.cmpi sge, %274, %307 : vector<120x32xi32>
      %c1_i32_160 = arith.constant 1 : i32
      %c0_i32_161 = arith.constant 0 : i32
      %309 = vector.broadcast %c1_i32_160 : i32 to vector<120x32xi32>
      %310 = vector.broadcast %c0_i32_161 : i32 to vector<120x32xi32>
      %311 = arith.select %308, %309, %310 : vector<120x32xi1>, vector<120x32xi32>
      %312 = arith.addi %306, %311 : vector<120x32xi32>
      %313 = arith.cmpi eq, %293, %312 : vector<120x32xi32>
      %cst_162 = arith.constant 1.000000e+00 : f32
      %cst_163 = arith.constant 0.000000e+00 : f32
      %314 = vector.broadcast %cst_162 : f32 to vector<120x32xf32>
      %315 = vector.broadcast %cst_163 : f32 to vector<120x32xf32>
      %316 = arith.select %313, %314, %315 : vector<120x32xi1>, vector<120x32xf32>
      %317 = tpu.iota {dimensions = array<i32: 0>} : vector<30x120xi32>
      %318 = tpu.iota {dimensions = array<i32: 1>} : vector<30x120xi32>
      %c0_i32_164 = arith.constant 0 : i32
      %319 = vector.broadcast %c0_i32_164 : i32 to vector<30x120xi32>
      %c30_i32_165 = arith.constant 30 : i32
      %320 = vector.broadcast %c30_i32_165 : i32 to vector<30x120xi32>
      %321 = arith.cmpi sge, %318, %320 : vector<30x120xi32>
      %c1_i32_166 = arith.constant 1 : i32
      %c0_i32_167 = arith.constant 0 : i32
      %322 = vector.broadcast %c1_i32_166 : i32 to vector<30x120xi32>
      %323 = vector.broadcast %c0_i32_167 : i32 to vector<30x120xi32>
      %324 = arith.select %321, %322, %323 : vector<30x120xi1>, vector<30x120xi32>
      %325 = arith.addi %319, %324 : vector<30x120xi32>
      %c60_i32_168 = arith.constant 60 : i32
      %326 = vector.broadcast %c60_i32_168 : i32 to vector<30x120xi32>
      %327 = arith.cmpi sge, %318, %326 : vector<30x120xi32>
      %c1_i32_169 = arith.constant 1 : i32
      %c0_i32_170 = arith.constant 0 : i32
      %328 = vector.broadcast %c1_i32_169 : i32 to vector<30x120xi32>
      %329 = vector.broadcast %c0_i32_170 : i32 to vector<30x120xi32>
      %330 = arith.select %327, %328, %329 : vector<30x120xi1>, vector<30x120xi32>
      %331 = arith.addi %325, %330 : vector<30x120xi32>
      %c90_i32_171 = arith.constant 90 : i32
      %332 = vector.broadcast %c90_i32_171 : i32 to vector<30x120xi32>
      %333 = arith.cmpi sge, %318, %332 : vector<30x120xi32>
      %c1_i32_172 = arith.constant 1 : i32
      %c0_i32_173 = arith.constant 0 : i32
      %334 = vector.broadcast %c1_i32_172 : i32 to vector<30x120xi32>
      %335 = vector.broadcast %c0_i32_173 : i32 to vector<30x120xi32>
      %336 = arith.select %333, %334, %335 : vector<30x120xi1>, vector<30x120xi32>
      %337 = arith.addi %331, %336 : vector<30x120xi32>
      %c30_i32_174 = arith.constant 30 : i32
      %338 = vector.broadcast %c30_i32_174 : i32 to vector<30x120xi32>
      %339 = arith.muli %337, %338 : vector<30x120xi32>
      %340 = arith.subi %318, %339 : vector<30x120xi32>
      %341 = arith.cmpi eq, %340, %317 : vector<30x120xi32>
      %cst_175 = arith.constant 1.000000e+00 : f32
      %cst_176 = arith.constant 0.000000e+00 : f32
      %342 = vector.broadcast %cst_175 : f32 to vector<30x120xf32>
      %343 = vector.broadcast %cst_176 : f32 to vector<30x120xf32>
      %344 = arith.select %341, %342, %343 : vector<30x120xi1>, vector<30x120xf32>
      %c0_177 = arith.constant 0 : index
      %c0_178 = arith.constant 0 : index
      %345 = vector.load %arg2[%c0_177, %c0_178] : memref<32x32xbf16, #tpu.memory_space<vmem>>, vector<32x32xbf16>
      %c0_179 = arith.constant 0 : index
      %c0_180 = arith.constant 0 : index
      %346 = vector.load %arg3[%c0_179, %c0_180] : memref<32x32xbf16, #tpu.memory_space<vmem>>, vector<32x32xbf16>
      %c0_181 = arith.constant 0 : index
      %c0_182 = arith.constant 0 : index
      %347 = vector.load %arg4[%c0_181, %c0_182] : memref<32x32xbf16, #tpu.memory_space<vmem>>, vector<32x32xbf16>
      %c0_183 = arith.constant 0 : index
      %c0_184 = arith.constant 0 : index
      %348 = vector.load %arg5[%c0_183, %c0_184] : memref<1x32xf32, #tpu.memory_space<vmem>>, vector<1x32xf32>
      %c0_185 = arith.constant 0 : index
      %c0_186 = arith.constant 0 : index
      %349 = vector.load %arg6[%c0_185, %c0_186] : memref<1x32xf32, #tpu.memory_space<vmem>>, vector<1x32xf32>
      %c0_187 = arith.constant 0 : index
      %c0_188 = arith.constant 0 : index
      %350 = vector.load %arg7[%c0_187, %c0_188] : memref<1x32xf32, #tpu.memory_space<vmem>>, vector<1x32xf32>
      %c0_189 = arith.constant 0 : index
      %c0_190 = arith.constant 0 : index
      %351 = vector.load %arg8[%c0_189, %c0_190] : memref<32x32xbf16, #tpu.memory_space<vmem>>, vector<32x32xbf16>
      %c0_191 = arith.constant 0 : index
      %c0_192 = arith.constant 0 : index
      %352 = vector.load %arg9[%c0_191, %c0_192] : memref<1x32xf32, #tpu.memory_space<vmem>>, vector<1x32xf32>
      %353 = arith.truncf %130 : vector<30x32xf32> to vector<30x32xbf16>
      %cst_193 = arith.constant dense<0.000000e+00> : vector<30x32xf32>
      %354 = tpu.matmul %353, %345, %cst_193 {dimension_numbers = #tpu.dot_dimension_numbers<[1], [0], [0], [1], [0, 0, 1, 1], [], []>} : vector<30x32xbf16>, vector<32x32xbf16>, vector<30x32xf32> -> vector<30x32xf32>
      %355 = vector.broadcast %348 : vector<1x32xf32> to vector<30x32xf32>
      %356 = arith.addf %354, %355 : vector<30x32xf32>
      %cst_194 = arith.constant dense<0.000000e+00> : vector<30x32xf32>
      %357 = tpu.matmul %353, %346, %cst_194 {dimension_numbers = #tpu.dot_dimension_numbers<[1], [0], [0], [1], [0, 0, 1, 1], [], []>} : vector<30x32xbf16>, vector<32x32xbf16>, vector<30x32xf32> -> vector<30x32xf32>
      %358 = vector.broadcast %349 : vector<1x32xf32> to vector<30x32xf32>
      %359 = arith.addf %357, %358 : vector<30x32xf32>
      %cst_195 = arith.constant dense<0.000000e+00> : vector<30x32xf32>
      %360 = tpu.matmul %353, %347, %cst_195 {dimension_numbers = #tpu.dot_dimension_numbers<[1], [0], [0], [1], [0, 0, 1, 1], [], []>} : vector<30x32xbf16>, vector<32x32xbf16>, vector<30x32xf32> -> vector<30x32xf32>
      %361 = vector.broadcast %350 : vector<1x32xf32> to vector<30x32xf32>
      %362 = arith.addf %360, %361 : vector<30x32xf32>
      %cst_196 = arith.constant dense<0.000000e+00> : vector<120x32xf32>
      %363 = tpu.matmul %158, %356, %cst_196 {dimension_numbers = #tpu.dot_dimension_numbers<[1], [0], [0], [1], [0, 0, 1, 1], [], []>} : vector<120x30xf32>, vector<30x32xf32>, vector<120x32xf32> -> vector<120x32xf32>
      %364 = arith.mulf %363, %316 : vector<120x32xf32>
      %cst_197 = arith.constant dense<0.000000e+00> : vector<120x30xf32>
      %365 = tpu.matmul %364, %359, %cst_197 {dimension_numbers = #tpu.dot_dimension_numbers<[1], [1], [0], [0], [0, 0, 1, 0], [], []>} : vector<120x32xf32>, vector<30x32xf32>, vector<120x30xf32> -> vector<120x30xf32>
      %366 = arith.addf %365, %272 : vector<120x30xf32>
      %cst_198 = arith.constant dense<0xFF800000> : vector<120xf32>
      %367 = vector.multi_reduction <maximumf>, %366, %cst_198 [1] : vector<120x30xf32> to vector<120xf32>
      %368 = vector.shape_cast %367 : vector<120xf32> to vector<120x1xf32>
      %369 = vector.broadcast %368 : vector<120x1xf32> to vector<120x30xf32>
      %370 = arith.subf %366, %369 : vector<120x30xf32>
      %371 = math.exp %370 : vector<120x30xf32>
      %cst_199 = arith.constant dense<0.000000e+00> : vector<120xf32>
      %372 = vector.multi_reduction <add>, %371, %cst_199 [1] : vector<120x30xf32> to vector<120xf32>
      %373 = vector.shape_cast %372 : vector<120xf32> to vector<120x1xf32>
      %374 = vector.broadcast %373 : vector<120x1xf32> to vector<120x30xf32>
      %375 = arith.divf %371, %374 : vector<120x30xf32>
      %cst_200 = arith.constant dense<0.000000e+00> : vector<120x32xf32>
      %376 = tpu.matmul %375, %362, %cst_200 {dimension_numbers = #tpu.dot_dimension_numbers<[1], [0], [0], [1], [0, 0, 1, 1], [], []>} : vector<120x30xf32>, vector<30x32xf32>, vector<120x32xf32> -> vector<120x32xf32>
      %377 = arith.mulf %376, %316 : vector<120x32xf32>
      %cst_201 = arith.constant dense<0.000000e+00> : vector<30x32xf32>
      %378 = tpu.matmul %344, %377, %cst_201 {dimension_numbers = #tpu.dot_dimension_numbers<[1], [0], [0], [1], [0, 0, 1, 1], [], []>} : vector<30x120xf32>, vector<120x32xf32>, vector<30x32xf32> -> vector<30x32xf32>
      %379 = arith.truncf %378 : vector<30x32xf32> to vector<30x32xbf16>
      %cst_202 = arith.constant dense<0.000000e+00> : vector<30x32xf32>
      %380 = tpu.matmul %379, %351, %cst_202 {dimension_numbers = #tpu.dot_dimension_numbers<[1], [0], [0], [1], [0, 0, 1, 1], [], []>} : vector<30x32xbf16>, vector<32x32xbf16>, vector<30x32xf32> -> vector<30x32xf32>
      %381 = vector.broadcast %352 : vector<1x32xf32> to vector<30x32xf32>
      %382 = arith.addf %380, %381 : vector<30x32xf32>
      %383 = arith.addf %382, %130 : vector<30x32xf32>
      %c0_203 = arith.constant 0 : index
      %c0_204 = arith.constant 0 : index
      %384 = vector.load %arg10[%c0_203, %c0_204] : memref<1x32xf32, #tpu.memory_space<vmem>>, vector<1x32xf32>
      %c0_205 = arith.constant 0 : index
      %c0_206 = arith.constant 0 : index
      %385 = vector.load %arg11[%c0_205, %c0_206] : memref<1x32xf32, #tpu.memory_space<vmem>>, vector<1x32xf32>
      %cst_207 = arith.constant dense<0.000000e+00> : vector<30xf32>
      %386 = vector.multi_reduction <add>, %383, %cst_207 [1] : vector<30x32xf32> to vector<30xf32>
      %387 = vector.shape_cast %386 : vector<30xf32> to vector<30x1xf32>
      %cst_208 = arith.constant 3.200000e+01 : f32
      %388 = vector.broadcast %cst_208 : f32 to vector<30x1xf32>
      %389 = arith.divf %387, %388 : vector<30x1xf32>
      %390 = vector.broadcast %389 : vector<30x1xf32> to vector<30x32xf32>
      %391 = arith.subf %383, %390 : vector<30x32xf32>
      %392 = arith.mulf %391, %391 : vector<30x32xf32>
      %cst_209 = arith.constant dense<0.000000e+00> : vector<30xf32>
      %393 = vector.multi_reduction <add>, %392, %cst_209 [1] : vector<30x32xf32> to vector<30xf32>
      %394 = vector.shape_cast %393 : vector<30xf32> to vector<30x1xf32>
      %cst_210 = arith.constant 3.200000e+01 : f32
      %395 = vector.broadcast %cst_210 : f32 to vector<30x1xf32>
      %396 = arith.divf %394, %395 : vector<30x1xf32>
      %397 = vector.broadcast %389 : vector<30x1xf32> to vector<30x32xf32>
      %398 = arith.subf %383, %397 : vector<30x32xf32>
      %cst_211 = arith.constant 9.99999974E-6 : f32
      %399 = vector.broadcast %cst_211 : f32 to vector<30x1xf32>
      %400 = arith.addf %396, %399 : vector<30x1xf32>
      %401 = math.rsqrt %400 : vector<30x1xf32>
      %402 = vector.broadcast %401 : vector<30x1xf32> to vector<30x32xf32>
      %403 = arith.mulf %398, %402 : vector<30x32xf32>
      %404 = vector.broadcast %384 : vector<1x32xf32> to vector<30x32xf32>
      %405 = arith.mulf %403, %404 : vector<30x32xf32>
      %406 = vector.broadcast %385 : vector<1x32xf32> to vector<30x32xf32>
      %407 = arith.addf %405, %406 : vector<30x32xf32>
      %408 = tpu.iota {dimensions = array<i32: 0>} : vector<10x30xi32>
      %409 = tpu.iota {dimensions = array<i32: 1>} : vector<10x30xi32>
      %c0_i32_212 = arith.constant 0 : i32
      %410 = vector.broadcast %c0_i32_212 : i32 to vector<10x30xi32>
      %c3_i32_213 = arith.constant 3 : i32
      %411 = vector.broadcast %c3_i32_213 : i32 to vector<10x30xi32>
      %412 = arith.cmpi sge, %409, %411 : vector<10x30xi32>
      %c1_i32_214 = arith.constant 1 : i32
      %c0_i32_215 = arith.constant 0 : i32
      %413 = vector.broadcast %c1_i32_214 : i32 to vector<10x30xi32>
      %414 = vector.broadcast %c0_i32_215 : i32 to vector<10x30xi32>
      %415 = arith.select %412, %413, %414 : vector<10x30xi1>, vector<10x30xi32>
      %416 = arith.addi %410, %415 : vector<10x30xi32>
      %c6_i32_216 = arith.constant 6 : i32
      %417 = vector.broadcast %c6_i32_216 : i32 to vector<10x30xi32>
      %418 = arith.cmpi sge, %409, %417 : vector<10x30xi32>
      %c1_i32_217 = arith.constant 1 : i32
      %c0_i32_218 = arith.constant 0 : i32
      %419 = vector.broadcast %c1_i32_217 : i32 to vector<10x30xi32>
      %420 = vector.broadcast %c0_i32_218 : i32 to vector<10x30xi32>
      %421 = arith.select %418, %419, %420 : vector<10x30xi1>, vector<10x30xi32>
      %422 = arith.addi %416, %421 : vector<10x30xi32>
      %c9_i32_219 = arith.constant 9 : i32
      %423 = vector.broadcast %c9_i32_219 : i32 to vector<10x30xi32>
      %424 = arith.cmpi sge, %409, %423 : vector<10x30xi32>
      %c1_i32_220 = arith.constant 1 : i32
      %c0_i32_221 = arith.constant 0 : i32
      %425 = vector.broadcast %c1_i32_220 : i32 to vector<10x30xi32>
      %426 = vector.broadcast %c0_i32_221 : i32 to vector<10x30xi32>
      %427 = arith.select %424, %425, %426 : vector<10x30xi1>, vector<10x30xi32>
      %428 = arith.addi %422, %427 : vector<10x30xi32>
      %c12_i32_222 = arith.constant 12 : i32
      %429 = vector.broadcast %c12_i32_222 : i32 to vector<10x30xi32>
      %430 = arith.cmpi sge, %409, %429 : vector<10x30xi32>
      %c1_i32_223 = arith.constant 1 : i32
      %c0_i32_224 = arith.constant 0 : i32
      %431 = vector.broadcast %c1_i32_223 : i32 to vector<10x30xi32>
      %432 = vector.broadcast %c0_i32_224 : i32 to vector<10x30xi32>
      %433 = arith.select %430, %431, %432 : vector<10x30xi1>, vector<10x30xi32>
      %434 = arith.addi %428, %433 : vector<10x30xi32>
      %c15_i32_225 = arith.constant 15 : i32
      %435 = vector.broadcast %c15_i32_225 : i32 to vector<10x30xi32>
      %436 = arith.cmpi sge, %409, %435 : vector<10x30xi32>
      %c1_i32_226 = arith.constant 1 : i32
      %c0_i32_227 = arith.constant 0 : i32
      %437 = vector.broadcast %c1_i32_226 : i32 to vector<10x30xi32>
      %438 = vector.broadcast %c0_i32_227 : i32 to vector<10x30xi32>
      %439 = arith.select %436, %437, %438 : vector<10x30xi1>, vector<10x30xi32>
      %440 = arith.addi %434, %439 : vector<10x30xi32>
      %c18_i32_228 = arith.constant 18 : i32
      %441 = vector.broadcast %c18_i32_228 : i32 to vector<10x30xi32>
      %442 = arith.cmpi sge, %409, %441 : vector<10x30xi32>
      %c1_i32_229 = arith.constant 1 : i32
      %c0_i32_230 = arith.constant 0 : i32
      %443 = vector.broadcast %c1_i32_229 : i32 to vector<10x30xi32>
      %444 = vector.broadcast %c0_i32_230 : i32 to vector<10x30xi32>
      %445 = arith.select %442, %443, %444 : vector<10x30xi1>, vector<10x30xi32>
      %446 = arith.addi %440, %445 : vector<10x30xi32>
      %c21_i32_231 = arith.constant 21 : i32
      %447 = vector.broadcast %c21_i32_231 : i32 to vector<10x30xi32>
      %448 = arith.cmpi sge, %409, %447 : vector<10x30xi32>
      %c1_i32_232 = arith.constant 1 : i32
      %c0_i32_233 = arith.constant 0 : i32
      %449 = vector.broadcast %c1_i32_232 : i32 to vector<10x30xi32>
      %450 = vector.broadcast %c0_i32_233 : i32 to vector<10x30xi32>
      %451 = arith.select %448, %449, %450 : vector<10x30xi1>, vector<10x30xi32>
      %452 = arith.addi %446, %451 : vector<10x30xi32>
      %c24_i32_234 = arith.constant 24 : i32
      %453 = vector.broadcast %c24_i32_234 : i32 to vector<10x30xi32>
      %454 = arith.cmpi sge, %409, %453 : vector<10x30xi32>
      %c1_i32_235 = arith.constant 1 : i32
      %c0_i32_236 = arith.constant 0 : i32
      %455 = vector.broadcast %c1_i32_235 : i32 to vector<10x30xi32>
      %456 = vector.broadcast %c0_i32_236 : i32 to vector<10x30xi32>
      %457 = arith.select %454, %455, %456 : vector<10x30xi1>, vector<10x30xi32>
      %458 = arith.addi %452, %457 : vector<10x30xi32>
      %c27_i32_237 = arith.constant 27 : i32
      %459 = vector.broadcast %c27_i32_237 : i32 to vector<10x30xi32>
      %460 = arith.cmpi sge, %409, %459 : vector<10x30xi32>
      %c1_i32_238 = arith.constant 1 : i32
      %c0_i32_239 = arith.constant 0 : i32
      %461 = vector.broadcast %c1_i32_238 : i32 to vector<10x30xi32>
      %462 = vector.broadcast %c0_i32_239 : i32 to vector<10x30xi32>
      %463 = arith.select %460, %461, %462 : vector<10x30xi1>, vector<10x30xi32>
      %464 = arith.addi %458, %463 : vector<10x30xi32>
      %465 = arith.cmpi eq, %464, %408 : vector<10x30xi32>
      %cst_240 = arith.constant 1.000000e+00 : f32
      %cst_241 = arith.constant 0.000000e+00 : f32
      %466 = vector.broadcast %cst_240 : f32 to vector<10x30xf32>
      %467 = vector.broadcast %cst_241 : f32 to vector<10x30xf32>
      %468 = arith.select %465, %466, %467 : vector<10x30xi1>, vector<10x30xf32>
      %cst_242 = arith.constant 3.000000e+00 : f32
      %469 = vector.broadcast %cst_242 : f32 to vector<10x30xf32>
      %470 = arith.divf %468, %469 : vector<10x30xf32>
      %cst_243 = arith.constant dense<0.000000e+00> : vector<10x32xf32>
      %471 = tpu.matmul %470, %407, %cst_243 {dimension_numbers = #tpu.dot_dimension_numbers<[1], [0], [0], [1], [0, 0, 1, 1], [], []>} : vector<10x30xf32>, vector<30x32xf32>, vector<10x32xf32> -> vector<10x32xf32>
      %c0_244 = arith.constant 0 : index
      %c0_245 = arith.constant 0 : index
      %472 = vector.load %arg31[%c0_244, %c0_245] : memref<10x32xf32, #tpu.memory_space<vmem>>, vector<10x32xf32>
      tpu.vector_store %arg31[%c0_244, %c0_245], %471 {strides = array<i32>} : memref<10x32xf32, #tpu.memory_space<vmem>>, vector<10x32xf32>,
      %473 = tpu.iota {dimensions = array<i32: 0>} : vector<80x10xi32>
      %474 = tpu.iota {dimensions = array<i32: 1>} : vector<80x10xi32>
      %c0_i32_246 = arith.constant 0 : i32
      %475 = vector.broadcast %c0_i32_246 : i32 to vector<80x10xi32>
      %c10_i32 = arith.constant 10 : i32
      %476 = vector.broadcast %c10_i32 : i32 to vector<80x10xi32>
      %477 = arith.cmpi sge, %473, %476 : vector<80x10xi32>
      %c1_i32_247 = arith.constant 1 : i32
      %c0_i32_248 = arith.constant 0 : i32
      %478 = vector.broadcast %c1_i32_247 : i32 to vector<80x10xi32>
      %479 = vector.broadcast %c0_i32_248 : i32 to vector<80x10xi32>
      %480 = arith.select %477, %478, %479 : vector<80x10xi1>, vector<80x10xi32>
      %481 = arith.addi %475, %480 : vector<80x10xi32>
      %c20_i32 = arith.constant 20 : i32
      %482 = vector.broadcast %c20_i32 : i32 to vector<80x10xi32>
      %483 = arith.cmpi sge, %473, %482 : vector<80x10xi32>
      %c1_i32_249 = arith.constant 1 : i32
      %c0_i32_250 = arith.constant 0 : i32
      %484 = vector.broadcast %c1_i32_249 : i32 to vector<80x10xi32>
      %485 = vector.broadcast %c0_i32_250 : i32 to vector<80x10xi32>
      %486 = arith.select %483, %484, %485 : vector<80x10xi1>, vector<80x10xi32>
      %487 = arith.addi %481, %486 : vector<80x10xi32>
      %c30_i32_251 = arith.constant 30 : i32
      %488 = vector.broadcast %c30_i32_251 : i32 to vector<80x10xi32>
      %489 = arith.cmpi sge, %473, %488 : vector<80x10xi32>
      %c1_i32_252 = arith.constant 1 : i32
      %c0_i32_253 = arith.constant 0 : i32
      %490 = vector.broadcast %c1_i32_252 : i32 to vector<80x10xi32>
      %491 = vector.broadcast %c0_i32_253 : i32 to vector<80x10xi32>
      %492 = arith.select %489, %490, %491 : vector<80x10xi1>, vector<80x10xi32>
      %493 = arith.addi %487, %492 : vector<80x10xi32>
      %c40_i32 = arith.constant 40 : i32
      %494 = vector.broadcast %c40_i32 : i32 to vector<80x10xi32>
      %495 = arith.cmpi sge, %473, %494 : vector<80x10xi32>
      %c1_i32_254 = arith.constant 1 : i32
      %c0_i32_255 = arith.constant 0 : i32
      %496 = vector.broadcast %c1_i32_254 : i32 to vector<80x10xi32>
      %497 = vector.broadcast %c0_i32_255 : i32 to vector<80x10xi32>
      %498 = arith.select %495, %496, %497 : vector<80x10xi1>, vector<80x10xi32>
      %499 = arith.addi %493, %498 : vector<80x10xi32>
      %c50_i32 = arith.constant 50 : i32
      %500 = vector.broadcast %c50_i32 : i32 to vector<80x10xi32>
      %501 = arith.cmpi sge, %473, %500 : vector<80x10xi32>
      %c1_i32_256 = arith.constant 1 : i32
      %c0_i32_257 = arith.constant 0 : i32
      %502 = vector.broadcast %c1_i32_256 : i32 to vector<80x10xi32>
      %503 = vector.broadcast %c0_i32_257 : i32 to vector<80x10xi32>
      %504 = arith.select %501, %502, %503 : vector<80x10xi1>, vector<80x10xi32>
      %505 = arith.addi %499, %504 : vector<80x10xi32>
      %c60_i32_258 = arith.constant 60 : i32
      %506 = vector.broadcast %c60_i32_258 : i32 to vector<80x10xi32>
      %507 = arith.cmpi sge, %473, %506 : vector<80x10xi32>
      %c1_i32_259 = arith.constant 1 : i32
      %c0_i32_260 = arith.constant 0 : i32
      %508 = vector.broadcast %c1_i32_259 : i32 to vector<80x10xi32>
      %509 = vector.broadcast %c0_i32_260 : i32 to vector<80x10xi32>
      %510 = arith.select %507, %508, %509 : vector<80x10xi1>, vector<80x10xi32>
      %511 = arith.addi %505, %510 : vector<80x10xi32>
      %c70_i32 = arith.constant 70 : i32
      %512 = vector.broadcast %c70_i32 : i32 to vector<80x10xi32>
      %513 = arith.cmpi sge, %473, %512 : vector<80x10xi32>
      %c1_i32_261 = arith.constant 1 : i32
      %c0_i32_262 = arith.constant 0 : i32
      %514 = vector.broadcast %c1_i32_261 : i32 to vector<80x10xi32>
      %515 = vector.broadcast %c0_i32_262 : i32 to vector<80x10xi32>
      %516 = arith.select %513, %514, %515 : vector<80x10xi1>, vector<80x10xi32>
      %517 = arith.addi %511, %516 : vector<80x10xi32>
      %c10_i32_263 = arith.constant 10 : i32
      %518 = vector.broadcast %c10_i32_263 : i32 to vector<80x10xi32>
      %519 = arith.muli %517, %518 : vector<80x10xi32>
      %520 = arith.subi %473, %519 : vector<80x10xi32>
      %521 = arith.cmpi eq, %520, %474 : vector<80x10xi32>
      %cst_264 = arith.constant 1.000000e+00 : f32
      %cst_265 = arith.constant 0.000000e+00 : f32
      %522 = vector.broadcast %cst_264 : f32 to vector<80x10xf32>
      %523 = vector.broadcast %cst_265 : f32 to vector<80x10xf32>
      %524 = arith.select %521, %522, %523 : vector<80x10xi1>, vector<80x10xf32>
      %c0_i32_266 = arith.constant 0 : i32
      %525 = vector.broadcast %c0_i32_266 : i32 to vector<80x10xi32>
      %c5_i32 = arith.constant 5 : i32
      %526 = vector.broadcast %c5_i32 : i32 to vector<80x10xi32>
      %527 = arith.cmpi sge, %520, %526 : vector<80x10xi32>
      %c1_i32_267 = arith.constant 1 : i32
      %c0_i32_268 = arith.constant 0 : i32
      %528 = vector.broadcast %c1_i32_267 : i32 to vector<80x10xi32>
      %529 = vector.broadcast %c0_i32_268 : i32 to vector<80x10xi32>
      %530 = arith.select %527, %528, %529 : vector<80x10xi1>, vector<80x10xi32>
      %531 = arith.addi %525, %530 : vector<80x10xi32>
      %c0_i32_269 = arith.constant 0 : i32
      %532 = vector.broadcast %c0_i32_269 : i32 to vector<80x10xi32>
      %c5_i32_270 = arith.constant 5 : i32
      %533 = vector.broadcast %c5_i32_270 : i32 to vector<80x10xi32>
      %534 = arith.cmpi sge, %474, %533 : vector<80x10xi32>
      %c1_i32_271 = arith.constant 1 : i32
      %c0_i32_272 = arith.constant 0 : i32
      %535 = vector.broadcast %c1_i32_271 : i32 to vector<80x10xi32>
      %536 = vector.broadcast %c0_i32_272 : i32 to vector<80x10xi32>
      %537 = arith.select %534, %535, %536 : vector<80x10xi1>, vector<80x10xi32>
      %538 = arith.addi %532, %537 : vector<80x10xi32>
      %539 = arith.cmpi eq, %531, %538 : vector<80x10xi32>
      %cst_273 = arith.constant 0.000000e+00 : f32
      %cst_274 = arith.constant -1.000000e+30 : f32
      %540 = vector.broadcast %cst_273 : f32 to vector<80x10xf32>
      %541 = vector.broadcast %cst_274 : f32 to vector<80x10xf32>
      %542 = arith.select %539, %540, %541 : vector<80x10xi1>, vector<80x10xf32>
      %543 = tpu.iota {dimensions = array<i32: 0>} : vector<80x32xi32>
      %544 = tpu.iota {dimensions = array<i32: 1>} : vector<80x32xi32>
      %c0_i32_275 = arith.constant 0 : i32
      %545 = vector.broadcast %c0_i32_275 : i32 to vector<80x32xi32>
      %c10_i32_276 = arith.constant 10 : i32
      %546 = vector.broadcast %c10_i32_276 : i32 to vector<80x32xi32>
      %547 = arith.cmpi sge, %543, %546 : vector<80x32xi32>
      %c1_i32_277 = arith.constant 1 : i32
      %c0_i32_278 = arith.constant 0 : i32
      %548 = vector.broadcast %c1_i32_277 : i32 to vector<80x32xi32>
      %549 = vector.broadcast %c0_i32_278 : i32 to vector<80x32xi32>
      %550 = arith.select %547, %548, %549 : vector<80x32xi1>, vector<80x32xi32>
      %551 = arith.addi %545, %550 : vector<80x32xi32>
      %c20_i32_279 = arith.constant 20 : i32
      %552 = vector.broadcast %c20_i32_279 : i32 to vector<80x32xi32>
      %553 = arith.cmpi sge, %543, %552 : vector<80x32xi32>
      %c1_i32_280 = arith.constant 1 : i32
      %c0_i32_281 = arith.constant 0 : i32
      %554 = vector.broadcast %c1_i32_280 : i32 to vector<80x32xi32>
      %555 = vector.broadcast %c0_i32_281 : i32 to vector<80x32xi32>
      %556 = arith.select %553, %554, %555 : vector<80x32xi1>, vector<80x32xi32>
      %557 = arith.addi %551, %556 : vector<80x32xi32>
      %c30_i32_282 = arith.constant 30 : i32
      %558 = vector.broadcast %c30_i32_282 : i32 to vector<80x32xi32>
      %559 = arith.cmpi sge, %543, %558 : vector<80x32xi32>
      %c1_i32_283 = arith.constant 1 : i32
      %c0_i32_284 = arith.constant 0 : i32
      %560 = vector.broadcast %c1_i32_283 : i32 to vector<80x32xi32>
      %561 = vector.broadcast %c0_i32_284 : i32 to vector<80x32xi32>
      %562 = arith.select %559, %560, %561 : vector<80x32xi1>, vector<80x32xi32>
      %563 = arith.addi %557, %562 : vector<80x32xi32>
      %c40_i32_285 = arith.constant 40 : i32
      %564 = vector.broadcast %c40_i32_285 : i32 to vector<80x32xi32>
      %565 = arith.cmpi sge, %543, %564 : vector<80x32xi32>
      %c1_i32_286 = arith.constant 1 : i32
      %c0_i32_287 = arith.constant 0 : i32
      %566 = vector.broadcast %c1_i32_286 : i32 to vector<80x32xi32>
      %567 = vector.broadcast %c0_i32_287 : i32 to vector<80x32xi32>
      %568 = arith.select %565, %566, %567 : vector<80x32xi1>, vector<80x32xi32>
      %569 = arith.addi %563, %568 : vector<80x32xi32>
      %c50_i32_288 = arith.constant 50 : i32
      %570 = vector.broadcast %c50_i32_288 : i32 to vector<80x32xi32>
      %571 = arith.cmpi sge, %543, %570 : vector<80x32xi32>
      %c1_i32_289 = arith.constant 1 : i32
      %c0_i32_290 = arith.constant 0 : i32
      %572 = vector.broadcast %c1_i32_289 : i32 to vector<80x32xi32>
      %573 = vector.broadcast %c0_i32_290 : i32 to vector<80x32xi32>
      %574 = arith.select %571, %572, %573 : vector<80x32xi1>, vector<80x32xi32>
      %575 = arith.addi %569, %574 : vector<80x32xi32>
      %c60_i32_291 = arith.constant 60 : i32
      %576 = vector.broadcast %c60_i32_291 : i32 to vector<80x32xi32>
      %577 = arith.cmpi sge, %543, %576 : vector<80x32xi32>
      %c1_i32_292 = arith.constant 1 : i32
      %c0_i32_293 = arith.constant 0 : i32
      %578 = vector.broadcast %c1_i32_292 : i32 to vector<80x32xi32>
      %579 = vector.broadcast %c0_i32_293 : i32 to vector<80x32xi32>
      %580 = arith.select %577, %578, %579 : vector<80x32xi1>, vector<80x32xi32>
      %581 = arith.addi %575, %580 : vector<80x32xi32>
      %c70_i32_294 = arith.constant 70 : i32
      %582 = vector.broadcast %c70_i32_294 : i32 to vector<80x32xi32>
      %583 = arith.cmpi sge, %543, %582 : vector<80x32xi32>
      %c1_i32_295 = arith.constant 1 : i32
      %c0_i32_296 = arith.constant 0 : i32
      %584 = vector.broadcast %c1_i32_295 : i32 to vector<80x32xi32>
      %585 = vector.broadcast %c0_i32_296 : i32 to vector<80x32xi32>
      %586 = arith.select %583, %584, %585 : vector<80x32xi1>, vector<80x32xi32>
      %587 = arith.addi %581, %586 : vector<80x32xi32>
      %c0_i32_297 = arith.constant 0 : i32
      %588 = vector.broadcast %c0_i32_297 : i32 to vector<80x32xi32>
      %c4_i32 = arith.constant 4 : i32
      %589 = vector.broadcast %c4_i32 : i32 to vector<80x32xi32>
      %590 = arith.cmpi sge, %544, %589 : vector<80x32xi32>
      %c1_i32_298 = arith.constant 1 : i32
      %c0_i32_299 = arith.constant 0 : i32
      %591 = vector.broadcast %c1_i32_298 : i32 to vector<80x32xi32>
      %592 = vector.broadcast %c0_i32_299 : i32 to vector<80x32xi32>
      %593 = arith.select %590, %591, %592 : vector<80x32xi1>, vector<80x32xi32>
      %594 = arith.addi %588, %593 : vector<80x32xi32>
      %c8_i32_300 = arith.constant 8 : i32
      %595 = vector.broadcast %c8_i32_300 : i32 to vector<80x32xi32>
      %596 = arith.cmpi sge, %544, %595 : vector<80x32xi32>
      %c1_i32_301 = arith.constant 1 : i32
      %c0_i32_302 = arith.constant 0 : i32
      %597 = vector.broadcast %c1_i32_301 : i32 to vector<80x32xi32>
      %598 = vector.broadcast %c0_i32_302 : i32 to vector<80x32xi32>
      %599 = arith.select %596, %597, %598 : vector<80x32xi1>, vector<80x32xi32>
      %600 = arith.addi %594, %599 : vector<80x32xi32>
      %c12_i32_303 = arith.constant 12 : i32
      %601 = vector.broadcast %c12_i32_303 : i32 to vector<80x32xi32>
      %602 = arith.cmpi sge, %544, %601 : vector<80x32xi32>
      %c1_i32_304 = arith.constant 1 : i32
      %c0_i32_305 = arith.constant 0 : i32
      %603 = vector.broadcast %c1_i32_304 : i32 to vector<80x32xi32>
      %604 = vector.broadcast %c0_i32_305 : i32 to vector<80x32xi32>
      %605 = arith.select %602, %603, %604 : vector<80x32xi1>, vector<80x32xi32>
      %606 = arith.addi %600, %605 : vector<80x32xi32>
      %c16_i32_306 = arith.constant 16 : i32
      %607 = vector.broadcast %c16_i32_306 : i32 to vector<80x32xi32>
      %608 = arith.cmpi sge, %544, %607 : vector<80x32xi32>
      %c1_i32_307 = arith.constant 1 : i32
      %c0_i32_308 = arith.constant 0 : i32
      %609 = vector.broadcast %c1_i32_307 : i32 to vector<80x32xi32>
      %610 = vector.broadcast %c0_i32_308 : i32 to vector<80x32xi32>
      %611 = arith.select %608, %609, %610 : vector<80x32xi1>, vector<80x32xi32>
      %612 = arith.addi %606, %611 : vector<80x32xi32>
      %c20_i32_309 = arith.constant 20 : i32
      %613 = vector.broadcast %c20_i32_309 : i32 to vector<80x32xi32>
      %614 = arith.cmpi sge, %544, %613 : vector<80x32xi32>
      %c1_i32_310 = arith.constant 1 : i32
      %c0_i32_311 = arith.constant 0 : i32
      %615 = vector.broadcast %c1_i32_310 : i32 to vector<80x32xi32>
      %616 = vector.broadcast %c0_i32_311 : i32 to vector<80x32xi32>
      %617 = arith.select %614, %615, %616 : vector<80x32xi1>, vector<80x32xi32>
      %618 = arith.addi %612, %617 : vector<80x32xi32>
      %c24_i32_312 = arith.constant 24 : i32
      %619 = vector.broadcast %c24_i32_312 : i32 to vector<80x32xi32>
      %620 = arith.cmpi sge, %544, %619 : vector<80x32xi32>
      %c1_i32_313 = arith.constant 1 : i32
      %c0_i32_314 = arith.constant 0 : i32
      %621 = vector.broadcast %c1_i32_313 : i32 to vector<80x32xi32>
      %622 = vector.broadcast %c0_i32_314 : i32 to vector<80x32xi32>
      %623 = arith.select %620, %621, %622 : vector<80x32xi1>, vector<80x32xi32>
      %624 = arith.addi %618, %623 : vector<80x32xi32>
      %c28_i32 = arith.constant 28 : i32
      %625 = vector.broadcast %c28_i32 : i32 to vector<80x32xi32>
      %626 = arith.cmpi sge, %544, %625 : vector<80x32xi32>
      %c1_i32_315 = arith.constant 1 : i32
      %c0_i32_316 = arith.constant 0 : i32
      %627 = vector.broadcast %c1_i32_315 : i32 to vector<80x32xi32>
      %628 = vector.broadcast %c0_i32_316 : i32 to vector<80x32xi32>
      %629 = arith.select %626, %627, %628 : vector<80x32xi1>, vector<80x32xi32>
      %630 = arith.addi %624, %629 : vector<80x32xi32>
      %631 = arith.cmpi eq, %587, %630 : vector<80x32xi32>
      %cst_317 = arith.constant 1.000000e+00 : f32
      %cst_318 = arith.constant 0.000000e+00 : f32
      %632 = vector.broadcast %cst_317 : f32 to vector<80x32xf32>
      %633 = vector.broadcast %cst_318 : f32 to vector<80x32xf32>
      %634 = arith.select %631, %632, %633 : vector<80x32xi1>, vector<80x32xf32>
      %635 = tpu.iota {dimensions = array<i32: 0>} : vector<10x80xi32>
      %636 = tpu.iota {dimensions = array<i32: 1>} : vector<10x80xi32>
      %c0_i32_319 = arith.constant 0 : i32
      %637 = vector.broadcast %c0_i32_319 : i32 to vector<10x80xi32>
      %c10_i32_320 = arith.constant 10 : i32
      %638 = vector.broadcast %c10_i32_320 : i32 to vector<10x80xi32>
      %639 = arith.cmpi sge, %636, %638 : vector<10x80xi32>
      %c1_i32_321 = arith.constant 1 : i32
      %c0_i32_322 = arith.constant 0 : i32
      %640 = vector.broadcast %c1_i32_321 : i32 to vector<10x80xi32>
      %641 = vector.broadcast %c0_i32_322 : i32 to vector<10x80xi32>
      %642 = arith.select %639, %640, %641 : vector<10x80xi1>, vector<10x80xi32>
      %643 = arith.addi %637, %642 : vector<10x80xi32>
      %c20_i32_323 = arith.constant 20 : i32
      %644 = vector.broadcast %c20_i32_323 : i32 to vector<10x80xi32>
      %645 = arith.cmpi sge, %636, %644 : vector<10x80xi32>
      %c1_i32_324 = arith.constant 1 : i32
      %c0_i32_325 = arith.constant 0 : i32
      %646 = vector.broadcast %c1_i32_324 : i32 to vector<10x80xi32>
      %647 = vector.broadcast %c0_i32_325 : i32 to vector<10x80xi32>
      %648 = arith.select %645, %646, %647 : vector<10x80xi1>, vector<10x80xi32>
      %649 = arith.addi %643, %648 : vector<10x80xi32>
      %c30_i32_326 = arith.constant 30 : i32
      %650 = vector.broadcast %c30_i32_326 : i32 to vector<10x80xi32>
      %651 = arith.cmpi sge, %636, %650 : vector<10x80xi32>
      %c1_i32_327 = arith.constant 1 : i32
      %c0_i32_328 = arith.constant 0 : i32
      %652 = vector.broadcast %c1_i32_327 : i32 to vector<10x80xi32>
      %653 = vector.broadcast %c0_i32_328 : i32 to vector<10x80xi32>
      %654 = arith.select %651, %652, %653 : vector<10x80xi1>, vector<10x80xi32>
      %655 = arith.addi %649, %654 : vector<10x80xi32>
      %c40_i32_329 = arith.constant 40 : i32
      %656 = vector.broadcast %c40_i32_329 : i32 to vector<10x80xi32>
      %657 = arith.cmpi sge, %636, %656 : vector<10x80xi32>
      %c1_i32_330 = arith.constant 1 : i32
      %c0_i32_331 = arith.constant 0 : i32
      %658 = vector.broadcast %c1_i32_330 : i32 to vector<10x80xi32>
      %659 = vector.broadcast %c0_i32_331 : i32 to vector<10x80xi32>
      %660 = arith.select %657, %658, %659 : vector<10x80xi1>, vector<10x80xi32>
      %661 = arith.addi %655, %660 : vector<10x80xi32>
      %c50_i32_332 = arith.constant 50 : i32
      %662 = vector.broadcast %c50_i32_332 : i32 to vector<10x80xi32>
      %663 = arith.cmpi sge, %636, %662 : vector<10x80xi32>
      %c1_i32_333 = arith.constant 1 : i32
      %c0_i32_334 = arith.constant 0 : i32
      %664 = vector.broadcast %c1_i32_333 : i32 to vector<10x80xi32>
      %665 = vector.broadcast %c0_i32_334 : i32 to vector<10x80xi32>
      %666 = arith.select %663, %664, %665 : vector<10x80xi1>, vector<10x80xi32>
      %667 = arith.addi %661, %666 : vector<10x80xi32>
      %c60_i32_335 = arith.constant 60 : i32
      %668 = vector.broadcast %c60_i32_335 : i32 to vector<10x80xi32>
      %669 = arith.cmpi sge, %636, %668 : vector<10x80xi32>
      %c1_i32_336 = arith.constant 1 : i32
      %c0_i32_337 = arith.constant 0 : i32
      %670 = vector.broadcast %c1_i32_336 : i32 to vector<10x80xi32>
      %671 = vector.broadcast %c0_i32_337 : i32 to vector<10x80xi32>
      %672 = arith.select %669, %670, %671 : vector<10x80xi1>, vector<10x80xi32>
      %673 = arith.addi %667, %672 : vector<10x80xi32>
      %c70_i32_338 = arith.constant 70 : i32
      %674 = vector.broadcast %c70_i32_338 : i32 to vector<10x80xi32>
      %675 = arith.cmpi sge, %636, %674 : vector<10x80xi32>
      %c1_i32_339 = arith.constant 1 : i32
      %c0_i32_340 = arith.constant 0 : i32
      %676 = vector.broadcast %c1_i32_339 : i32 to vector<10x80xi32>
      %677 = vector.broadcast %c0_i32_340 : i32 to vector<10x80xi32>
      %678 = arith.select %675, %676, %677 : vector<10x80xi1>, vector<10x80xi32>
      %679 = arith.addi %673, %678 : vector<10x80xi32>
      %c10_i32_341 = arith.constant 10 : i32
      %680 = vector.broadcast %c10_i32_341 : i32 to vector<10x80xi32>
      %681 = arith.muli %679, %680 : vector<10x80xi32>
      %682 = arith.subi %636, %681 : vector<10x80xi32>
      %683 = arith.cmpi eq, %682, %635 : vector<10x80xi32>
      %cst_342 = arith.constant 1.000000e+00 : f32
      %cst_343 = arith.constant 0.000000e+00 : f32
      %684 = vector.broadcast %cst_342 : f32 to vector<10x80xf32>
      %685 = vector.broadcast %cst_343 : f32 to vector<10x80xf32>
      %686 = arith.select %683, %684, %685 : vector<10x80xi1>, vector<10x80xf32>
      %c0_344 = arith.constant 0 : index
      %c0_345 = arith.constant 0 : index
      %687 = vector.load %arg32[%c0_344, %c0_345] : memref<80x10xf32, #tpu.memory_space<vmem>>, vector<80x10xf32>
      tpu.vector_store %arg32[%c0_344, %c0_345], %524 {strides = array<i32>} : memref<80x10xf32, #tpu.memory_space<vmem>>, vector<80x10xf32>,
      %c0_346 = arith.constant 0 : index
      %c0_347 = arith.constant 0 : index
      %688 = vector.load %arg33[%c0_346, %c0_347] : memref<80x10xf32, #tpu.memory_space<vmem>>, vector<80x10xf32>
      tpu.vector_store %arg33[%c0_346, %c0_347], %542 {strides = array<i32>} : memref<80x10xf32, #tpu.memory_space<vmem>>, vector<80x10xf32>,
      %c0_348 = arith.constant 0 : index
      %c0_349 = arith.constant 0 : index
      %689 = vector.load %arg34[%c0_348, %c0_349] : memref<80x32xf32, #tpu.memory_space<vmem>>, vector<80x32xf32>
      tpu.vector_store %arg34[%c0_348, %c0_349], %634 {strides = array<i32>} : memref<80x32xf32, #tpu.memory_space<vmem>>, vector<80x32xf32>,
      %c0_350 = arith.constant 0 : index
      %c0_351 = arith.constant 0 : index
      %690 = vector.load %arg35[%c0_350, %c0_351] : memref<10x80xf32, #tpu.memory_space<vmem>>, vector<10x80xf32>
      tpu.vector_store %arg35[%c0_350, %c0_351], %686 {strides = array<i32>} : memref<10x80xf32, #tpu.memory_space<vmem>>, vector<10x80xf32>,
    } else {
    }
    %c0 = arith.constant 0 : index
    %c0_1 = arith.constant 0 : index
    %3 = vector.load %arg31[%c0, %c0_1] : memref<10x32xf32, #tpu.memory_space<vmem>>, vector<10x32xf32>
    %c0_2 = arith.constant 0 : index
    %c0_3 = arith.constant 0 : index
    %c0_4 = arith.constant 0 : index
    %4 = vector.load %arg12[%c0_2, %c0_3, %c0_4] : memref<1x32x32xbf16, #tpu.memory_space<vmem>>, vector<1x32x32xbf16>
    %5 = vector.shape_cast %4 : vector<1x32x32xbf16> to vector<32x32xbf16>
    %c0_5 = arith.constant 0 : index
    %c0_6 = arith.constant 0 : index
    %c0_7 = arith.constant 0 : index
    %6 = vector.load %arg13[%c0_5, %c0_6, %c0_7] : memref<1x32x32xbf16, #tpu.memory_space<vmem>>, vector<1x32x32xbf16>
    %7 = vector.shape_cast %6 : vector<1x32x32xbf16> to vector<32x32xbf16>
    %c0_8 = arith.constant 0 : index
    %c0_9 = arith.constant 0 : index
    %c0_10 = arith.constant 0 : index
    %8 = vector.load %arg14[%c0_8, %c0_9, %c0_10] : memref<1x32x32xbf16, #tpu.memory_space<vmem>>, vector<1x32x32xbf16>
    %9 = vector.shape_cast %8 : vector<1x32x32xbf16> to vector<32x32xbf16>
    %c0_11 = arith.constant 0 : index
    %c0_12 = arith.constant 0 : index
    %c0_13 = arith.constant 0 : index
    %10 = vector.load %arg15[%c0_11, %c0_12, %c0_13] : memref<1x1x32xf32, #tpu.memory_space<vmem>>, vector<1x1x32xf32>
    %11 = vector.shape_cast %10 : vector<1x1x32xf32> to vector<1x32xf32>
    %c0_14 = arith.constant 0 : index
    %c0_15 = arith.constant 0 : index
    %c0_16 = arith.constant 0 : index
    %12 = vector.load %arg16[%c0_14, %c0_15, %c0_16] : memref<1x1x32xf32, #tpu.memory_space<vmem>>, vector<1x1x32xf32>
    %13 = vector.shape_cast %12 : vector<1x1x32xf32> to vector<1x32xf32>
    %c0_17 = arith.constant 0 : index
    %c0_18 = arith.constant 0 : index
    %c0_19 = arith.constant 0 : index
    %14 = vector.load %arg17[%c0_17, %c0_18, %c0_19] : memref<1x1x32xf32, #tpu.memory_space<vmem>>, vector<1x1x32xf32>
    %15 = vector.shape_cast %14 : vector<1x1x32xf32> to vector<1x32xf32>
    %c0_20 = arith.constant 0 : index
    %c0_21 = arith.constant 0 : index
    %c0_22 = arith.constant 0 : index
    %16 = vector.load %arg18[%c0_20, %c0_21, %c0_22] : memref<1x32x32xbf16, #tpu.memory_space<vmem>>, vector<1x32x32xbf16>
    %17 = vector.shape_cast %16 : vector<1x32x32xbf16> to vector<32x32xbf16>
    %c0_23 = arith.constant 0 : index
    %c0_24 = arith.constant 0 : index
    %c0_25 = arith.constant 0 : index
    %18 = vector.load %arg19[%c0_23, %c0_24, %c0_25] : memref<1x1x32xf32, #tpu.memory_space<vmem>>, vector<1x1x32xf32>
    %19 = vector.shape_cast %18 : vector<1x1x32xf32> to vector<1x32xf32>
    %c0_26 = arith.constant 0 : index
    %c0_27 = arith.constant 0 : index
    %20 = vector.load %arg32[%c0_26, %c0_27] : memref<80x10xf32, #tpu.memory_space<vmem>>, vector<80x10xf32>
    %c0_28 = arith.constant 0 : index
    %c0_29 = arith.constant 0 : index
    %21 = vector.load %arg33[%c0_28, %c0_29] : memref<80x10xf32, #tpu.memory_space<vmem>>, vector<80x10xf32>
    %c0_30 = arith.constant 0 : index
    %c0_31 = arith.constant 0 : index
    %22 = vector.load %arg34[%c0_30, %c0_31] : memref<80x32xf32, #tpu.memory_space<vmem>>, vector<80x32xf32>
    %c0_32 = arith.constant 0 : index
    %c0_33 = arith.constant 0 : index
    %23 = vector.load %arg35[%c0_32, %c0_33] : memref<10x80xf32, #tpu.memory_space<vmem>>, vector<10x80xf32>
    %24 = arith.truncf %3 : vector<10x32xf32> to vector<10x32xbf16>
    %cst = arith.constant dense<0.000000e+00> : vector<10x32xf32>
    %25 = tpu.matmul %24, %5, %cst {dimension_numbers = #tpu.dot_dimension_numbers<[1], [0], [0], [1], [0, 0, 1, 1], [], []>} : vector<10x32xbf16>, vector<32x32xbf16>, vector<10x32xf32> -> vector<10x32xf32>
    %26 = vector.broadcast %11 : vector<1x32xf32> to vector<10x32xf32>
    %27 = arith.addf %25, %26 : vector<10x32xf32>
    %cst_34 = arith.constant dense<0.000000e+00> : vector<10x32xf32>
    %28 = tpu.matmul %24, %7, %cst_34 {dimension_numbers = #tpu.dot_dimension_numbers<[1], [0], [0], [1], [0, 0, 1, 1], [], []>} : vector<10x32xbf16>, vector<32x32xbf16>, vector<10x32xf32> -> vector<10x32xf32>
    %29 = vector.broadcast %13 : vector<1x32xf32> to vector<10x32xf32>
    %30 = arith.addf %28, %29 : vector<10x32xf32>
    %cst_35 = arith.constant dense<0.000000e+00> : vector<10x32xf32>
    %31 = tpu.matmul %24, %9, %cst_35 {dimension_numbers = #tpu.dot_dimension_numbers<[1], [0], [0], [1], [0, 0, 1, 1], [], []>} : vector<10x32xbf16>, vector<32x32xbf16>, vector<10x32xf32> -> vector<10x32xf32>
    %32 = vector.broadcast %15 : vector<1x32xf32> to vector<10x32xf32>
    %33 = arith.addf %31, %32 : vector<10x32xf32>
    %cst_36 = arith.constant dense<0.000000e+00> : vector<80x32xf32>
    %34 = tpu.matmul %20, %27, %cst_36 {dimension_numbers = #tpu.dot_dimension_numbers<[1], [0], [0], [1], [0, 0, 1, 1], [], []>} : vector<80x10xf32>, vector<10x32xf32>, vector<80x32xf32> -> vector<80x32xf32>
    %35 = arith.mulf %34, %22 : vector<80x32xf32>
    %cst_37 = arith.constant dense<0.000000e+00> : vector<80x10xf32>
    %36 = tpu.matmul %35, %30, %cst_37 {dimension_numbers = #tpu.dot_dimension_numbers<[1], [1], [0], [0], [0, 0, 1, 0], [], []>} : vector<80x32xf32>, vector<10x32xf32>, vector<80x10xf32> -> vector<80x10xf32>
    %37 = arith.addf %36, %21 : vector<80x10xf32>
    %cst_38 = arith.constant dense<0xFF800000> : vector<80xf32>
    %38 = vector.multi_reduction <maximumf>, %37, %cst_38 [1] : vector<80x10xf32> to vector<80xf32>
    %39 = vector.shape_cast %38 : vector<80xf32> to vector<80x1xf32>
    %40 = vector.broadcast %39 : vector<80x1xf32> to vector<80x10xf32>
    %41 = arith.subf %37, %40 : vector<80x10xf32>
    %42 = math.exp %41 : vector<80x10xf32>
    %cst_39 = arith.constant dense<0.000000e+00> : vector<80xf32>
    %43 = vector.multi_reduction <add>, %42, %cst_39 [1] : vector<80x10xf32> to vector<80xf32>
    %44 = vector.shape_cast %43 : vector<80xf32> to vector<80x1xf32>
    %45 = vector.broadcast %44 : vector<80x1xf32> to vector<80x10xf32>
    %46 = arith.divf %42, %45 : vector<80x10xf32>
    %cst_40 = arith.constant dense<0.000000e+00> : vector<80x32xf32>
    %47 = tpu.matmul %46, %33, %cst_40 {dimension_numbers = #tpu.dot_dimension_numbers<[1], [0], [0], [1], [0, 0, 1, 1], [], []>} : vector<80x10xf32>, vector<10x32xf32>, vector<80x32xf32> -> vector<80x32xf32>
    %48 = arith.mulf %47, %22 : vector<80x32xf32>
    %cst_41 = arith.constant dense<0.000000e+00> : vector<10x32xf32>
    %49 = tpu.matmul %23, %48, %cst_41 {dimension_numbers = #tpu.dot_dimension_numbers<[1], [0], [0], [1], [0, 0, 1, 1], [], []>} : vector<10x80xf32>, vector<80x32xf32>, vector<10x32xf32> -> vector<10x32xf32>
    %50 = arith.truncf %49 : vector<10x32xf32> to vector<10x32xbf16>
    %cst_42 = arith.constant dense<0.000000e+00> : vector<10x32xf32>
    %51 = tpu.matmul %50, %17, %cst_42 {dimension_numbers = #tpu.dot_dimension_numbers<[1], [0], [0], [1], [0, 0, 1, 1], [], []>} : vector<10x32xbf16>, vector<32x32xbf16>, vector<10x32xf32> -> vector<10x32xf32>
    %52 = vector.broadcast %19 : vector<1x32xf32> to vector<10x32xf32>
    %53 = arith.addf %51, %52 : vector<10x32xf32>
    %54 = arith.addf %3, %53 : vector<10x32xf32>
    %c0_43 = arith.constant 0 : index
    %c0_44 = arith.constant 0 : index
    %c0_45 = arith.constant 0 : index
    %55 = vector.load %arg20[%c0_43, %c0_44, %c0_45] : memref<1x1x32xf32, #tpu.memory_space<vmem>>, vector<1x1x32xf32>
    %56 = vector.shape_cast %55 : vector<1x1x32xf32> to vector<1x32xf32>
    %c0_46 = arith.constant 0 : index
    %c0_47 = arith.constant 0 : index
    %c0_48 = arith.constant 0 : index
    %57 = vector.load %arg21[%c0_46, %c0_47, %c0_48] : memref<1x1x32xf32, #tpu.memory_space<vmem>>, vector<1x1x32xf32>
    %58 = vector.shape_cast %57 : vector<1x1x32xf32> to vector<1x32xf32>
    %cst_49 = arith.constant dense<0.000000e+00> : vector<10xf32>
    %59 = vector.multi_reduction <add>, %54, %cst_49 [1] : vector<10x32xf32> to vector<10xf32>
    %60 = vector.shape_cast %59 : vector<10xf32> to vector<10x1xf32>
    %cst_50 = arith.constant 3.200000e+01 : f32
    %61 = vector.broadcast %cst_50 : f32 to vector<10x1xf32>
    %62 = arith.divf %60, %61 : vector<10x1xf32>
    %63 = vector.broadcast %62 : vector<10x1xf32> to vector<10x32xf32>
    %64 = arith.subf %54, %63 : vector<10x32xf32>
    %65 = arith.mulf %64, %64 : vector<10x32xf32>
    %cst_51 = arith.constant dense<0.000000e+00> : vector<10xf32>
    %66 = vector.multi_reduction <add>, %65, %cst_51 [1] : vector<10x32xf32> to vector<10xf32>
    %67 = vector.shape_cast %66 : vector<10xf32> to vector<10x1xf32>
    %cst_52 = arith.constant 3.200000e+01 : f32
    %68 = vector.broadcast %cst_52 : f32 to vector<10x1xf32>
    %69 = arith.divf %67, %68 : vector<10x1xf32>
    %70 = vector.broadcast %62 : vector<10x1xf32> to vector<10x32xf32>
    %71 = arith.subf %54, %70 : vector<10x32xf32>
    %cst_53 = arith.constant 9.99999974E-6 : f32
    %72 = vector.broadcast %cst_53 : f32 to vector<10x1xf32>
    %73 = arith.addf %69, %72 : vector<10x1xf32>
    %74 = math.rsqrt %73 : vector<10x1xf32>
    %75 = vector.broadcast %74 : vector<10x1xf32> to vector<10x32xf32>
    %76 = arith.mulf %71, %75 : vector<10x32xf32>
    %77 = vector.broadcast %56 : vector<1x32xf32> to vector<10x32xf32>
    %78 = arith.mulf %76, %77 : vector<10x32xf32>
    %79 = vector.broadcast %58 : vector<1x32xf32> to vector<10x32xf32>
    %80 = arith.addf %78, %79 : vector<10x32xf32>
    %81 = arith.truncf %80 : vector<10x32xf32> to vector<10x32xbf16>
    %c0_54 = arith.constant 0 : index
    %c0_55 = arith.constant 0 : index
    %c0_56 = arith.constant 0 : index
    %82 = vector.load %arg22[%c0_54, %c0_55, %c0_56] : memref<1x32x2048xbf16, #tpu.memory_space<vmem>>, vector<1x32x2048xbf16>
    %83 = vector.shape_cast %82 : vector<1x32x2048xbf16> to vector<32x2048xbf16>
    %cst_57 = arith.constant dense<0.000000e+00> : vector<10x2048xf32>
    %84 = tpu.matmul %81, %83, %cst_57 {dimension_numbers = #tpu.dot_dimension_numbers<[1], [0], [0], [1], [0, 0, 1, 1], [], []>} : vector<10x32xbf16>, vector<32x2048xbf16>, vector<10x2048xf32> -> vector<10x2048xf32>
    %c0_58 = arith.constant 0 : index
    %c0_59 = arith.constant 0 : index
    %c0_60 = arith.constant 0 : index
    %85 = vector.load %arg23[%c0_58, %c0_59, %c0_60] : memref<1x1x2048xf32, #tpu.memory_space<vmem>>, vector<1x1x2048xf32>
    %86 = vector.shape_cast %85 : vector<1x1x2048xf32> to vector<1x2048xf32>
    %87 = vector.broadcast %86 : vector<1x2048xf32> to vector<10x2048xf32>
    %88 = arith.addf %84, %87 : vector<10x2048xf32>
    %cst_61 = arith.constant 0.000000e+00 : f32
    %89 = vector.broadcast %cst_61 : f32 to vector<10x2048xf32>
    %90 = arith.maximumf %88, %89 : vector<10x2048xf32>
    %91 = arith.truncf %90 : vector<10x2048xf32> to vector<10x2048xbf16>
    %c0_62 = arith.constant 0 : index
    %c0_63 = arith.constant 0 : index
    %c0_64 = arith.constant 0 : index
    %92 = vector.load %arg24[%c0_62, %c0_63, %c0_64] : memref<1x2048x32xbf16, #tpu.memory_space<vmem>>, vector<1x2048x32xbf16>
    %93 = vector.shape_cast %92 : vector<1x2048x32xbf16> to vector<2048x32xbf16>
    %cst_65 = arith.constant dense<0.000000e+00> : vector<10x32xf32>
    %94 = tpu.matmul %91, %93, %cst_65 {dimension_numbers = #tpu.dot_dimension_numbers<[1], [0], [0], [1], [0, 0, 1, 1], [], []>} : vector<10x2048xbf16>, vector<2048x32xbf16>, vector<10x32xf32> -> vector<10x32xf32>
    %c0_66 = arith.constant 0 : index
    %c0_67 = arith.constant 0 : index
    %c0_68 = arith.constant 0 : index
    %95 = vector.load %arg25[%c0_66, %c0_67, %c0_68] : memref<1x1x32xf32, #tpu.memory_space<vmem>>, vector<1x1x32xf32>
    %96 = vector.shape_cast %95 : vector<1x1x32xf32> to vector<1x32xf32>
    %97 = vector.broadcast %96 : vector<1x32xf32> to vector<10x32xf32>
    %98 = arith.addf %94, %97 : vector<10x32xf32>
    %99 = arith.addf %80, %98 : vector<10x32xf32>
    %c0_69 = arith.constant 0 : index
    %c0_70 = arith.constant 0 : index
    %c0_71 = arith.constant 0 : index
    %100 = vector.load %arg26[%c0_69, %c0_70, %c0_71] : memref<1x1x32xf32, #tpu.memory_space<vmem>>, vector<1x1x32xf32>
    %101 = vector.shape_cast %100 : vector<1x1x32xf32> to vector<1x32xf32>
    %c0_72 = arith.constant 0 : index
    %c0_73 = arith.constant 0 : index
    %c0_74 = arith.constant 0 : index
    %102 = vector.load %arg27[%c0_72, %c0_73, %c0_74] : memref<1x1x32xf32, #tpu.memory_space<vmem>>, vector<1x1x32xf32>
    %103 = vector.shape_cast %102 : vector<1x1x32xf32> to vector<1x32xf32>
    %cst_75 = arith.constant dense<0.000000e+00> : vector<10xf32>
    %104 = vector.multi_reduction <add>, %99, %cst_75 [1] : vector<10x32xf32> to vector<10xf32>
    %105 = vector.shape_cast %104 : vector<10xf32> to vector<10x1xf32>
    %cst_76 = arith.constant 3.200000e+01 : f32
    %106 = vector.broadcast %cst_76 : f32 to vector<10x1xf32>
    %107 = arith.divf %105, %106 : vector<10x1xf32>
    %108 = vector.broadcast %107 : vector<10x1xf32> to vector<10x32xf32>
    %109 = arith.subf %99, %108 : vector<10x32xf32>
    %110 = arith.mulf %109, %109 : vector<10x32xf32>
    %cst_77 = arith.constant dense<0.000000e+00> : vector<10xf32>
    %111 = vector.multi_reduction <add>, %110, %cst_77 [1] : vector<10x32xf32> to vector<10xf32>
    %112 = vector.shape_cast %111 : vector<10xf32> to vector<10x1xf32>
    %cst_78 = arith.constant 3.200000e+01 : f32
    %113 = vector.broadcast %cst_78 : f32 to vector<10x1xf32>
    %114 = arith.divf %112, %113 : vector<10x1xf32>
    %115 = vector.broadcast %107 : vector<10x1xf32> to vector<10x32xf32>
    %116 = arith.subf %99, %115 : vector<10x32xf32>
    %cst_79 = arith.constant 9.99999974E-6 : f32
    %117 = vector.broadcast %cst_79 : f32 to vector<10x1xf32>
    %118 = arith.addf %114, %117 : vector<10x1xf32>
    %119 = math.rsqrt %118 : vector<10x1xf32>
    %120 = vector.broadcast %119 : vector<10x1xf32> to vector<10x32xf32>
    %121 = arith.mulf %116, %120 : vector<10x32xf32>
    %122 = vector.broadcast %101 : vector<1x32xf32> to vector<10x32xf32>
    %123 = arith.mulf %121, %122 : vector<10x32xf32>
    %124 = vector.broadcast %103 : vector<1x32xf32> to vector<10x32xf32>
    %125 = arith.addf %123, %124 : vector<10x32xf32>
    %c0_80 = arith.constant 0 : index
    %c0_81 = arith.constant 0 : index
    %126 = vector.load %arg31[%c0_80, %c0_81] : memref<10x32xf32, #tpu.memory_space<vmem>>, vector<10x32xf32>
    tpu.vector_store %arg31[%c0_80, %c0_81], %125 {strides = array<i32>} : memref<10x32xf32, #tpu.memory_space<vmem>>, vector<10x32xf32>,
    %c3_i32 = arith.constant 3 : i32
    %127 = arith.cmpi eq, %arg0, %c3_i32 : i32
    %128 = arith.extui %127 : i1 to i32
    %c0_i32_82 = arith.constant 0 : i32
    %129 = arith.cmpi ne, %128, %c0_i32_82 : i32
    scf.if %129 {
      %c0_83 = arith.constant 0 : index
      %c0_84 = arith.constant 0 : index
      %130 = vector.load %arg28[%c0_83, %c0_84] : memref<32x128xf32, #tpu.memory_space<vmem>>, vector<32x128xf32>
      %cst_85 = arith.constant dense<0.000000e+00> : vector<10x128xf32>
      %131 = tpu.matmul %125, %130, %cst_85 {dimension_numbers = #tpu.dot_dimension_numbers<[1], [0], [0], [1], [0, 0, 1, 1], [], []>} : vector<10x32xf32>, vector<32x128xf32>, vector<10x128xf32> -> vector<10x128xf32>
      %c0_86 = arith.constant 0 : index
      %c0_87 = arith.constant 0 : index
      %132 = vector.load %arg29[%c0_86, %c0_87] : memref<1x128xf32, #tpu.memory_space<vmem>>, vector<1x128xf32>
      %133 = vector.broadcast %132 : vector<1x128xf32> to vector<10x128xf32>
      %134 = arith.addf %131, %133 : vector<10x128xf32>
      %c0_88 = arith.constant 0 : index
      %c0_89 = arith.constant 0 : index
      %135 = vector.load %arg30[%c0_88, %c0_89] : memref<10x128xf32, #tpu.memory_space<vmem>>, vector<10x128xf32>
      tpu.vector_store %arg30[%c0_88, %c0_89], %134 {strides = array<i32>} : memref<10x128xf32, #tpu.memory_space<vmem>>, vector<10x128xf32>,
    } else {
    }
    return
  }
  func.func @transform_0(%arg0: i32) -> (i32, i32) {
    %c0_i32 = arith.constant 0 : i32
    %c0_i32_0 = arith.constant 0 : i32
    %c0_i32_1 = arith.constant 0 : i32
    return %c0_i32, %c0_i32_0 : i32, i32
  }
  func.func @transform_1(%arg0: i32) -> (i32, i32) {
    %c0_i32 = arith.constant 0 : i32
    %c0_i32_0 = arith.constant 0 : i32
    %c0_i32_1 = arith.constant 0 : i32
    return %c0_i32, %c0_i32_0 : i32, i32
  }
  func.func @transform_2(%arg0: i32) -> (i32, i32) {
    %c0_i32 = arith.constant 0 : i32
    %c0_i32_0 = arith.constant 0 : i32
    %c0_i32_1 = arith.constant 0 : i32
    return %c0_i32, %c0_i32_0 : i32, i32
  }
  func.func @transform_3(%arg0: i32) -> (i32, i32) {
    %c0_i32 = arith.constant 0 : i32
    %c0_i32_0 = arith.constant 0 : i32
    %c0_i32_1 = arith.constant 0 : i32
    return %c0_i32, %c0_i32_0 : i32, i32
  }
  func.func @transform_4(%arg0: i32) -> (i32, i32) {
    %c0_i32 = arith.constant 0 : i32
    %c0_i32_0 = arith.constant 0 : i32
    %c0_i32_1 = arith.constant 0 : i32
    return %c0_i32, %c0_i32_0 : i32, i32
  }
  func.func @transform_5(%arg0: i32) -> (i32, i32) {
    %c0_i32 = arith.constant 0 : i32
    %c0_i32_0 = arith.constant 0 : i32
    %c0_i32_1 = arith.constant 0 : i32
    return %c0_i32, %c0_i32_0 : i32, i32
  }
  func.func @transform_6(%arg0: i32) -> (i32, i32) {
    %c0_i32 = arith.constant 0 : i32
    %c0_i32_0 = arith.constant 0 : i32
    %c0_i32_1 = arith.constant 0 : i32
    return %c0_i32, %c0_i32_0 : i32, i32
  }
  func.func @transform_7(%arg0: i32) -> (i32, i32) {
    %c0_i32 = arith.constant 0 : i32
    %c0_i32_0 = arith.constant 0 : i32
    %c0_i32_1 = arith.constant 0 : i32
    return %c0_i32, %c0_i32_0 : i32, i32
  }
  func.func @transform_8(%arg0: i32) -> (i32, i32) {
    %c0_i32 = arith.constant 0 : i32
    %c0_i32_0 = arith.constant 0 : i32
    %c0_i32_1 = arith.constant 0 : i32
    return %c0_i32, %c0_i32_0 : i32, i32
  }
  func.func @transform_9(%arg0: i32) -> (i32, i32) {
    %c0_i32 = arith.constant 0 : i32
    %c0_i32_0 = arith.constant 0 : i32
    %c0_i32_1 = arith.constant 0 : i32
    return %c0_i32, %c0_i32_0 : i32, i32
  }
  func.func @transform_10(%arg0: i32) -> (i32, i32) {
    %c0_i32 = arith.constant 0 : i32
    %c0_i32_0 = arith.constant 0 : i32
    %c0_i32_1 = arith.constant 0 : i32
    return %c0_i32, %c0_i32_0 : i32, i32
  }
  func.func @transform_11(%arg0: i32) -> (i32, i32, i32) {
    %c0_i32 = arith.constant 0 : i32
    %c0_i32_0 = arith.constant 0 : i32
    %c0_i32_1 = arith.constant 0 : i32
    return %arg0, %c0_i32, %c0_i32_0 : i32, i32, i32
  }
  func.func @transform_12(%arg0: i32) -> (i32, i32, i32) {
    %c0_i32 = arith.constant 0 : i32
    %c0_i32_0 = arith.constant 0 : i32
    %c0_i32_1 = arith.constant 0 : i32
    return %arg0, %c0_i32, %c0_i32_0 : i32, i32, i32
  }
  func.func @transform_13(%arg0: i32) -> (i32, i32, i32) {
    %c0_i32 = arith.constant 0 : i32
    %c0_i32_0 = arith.constant 0 : i32
    %c0_i32_1 = arith.constant 0 : i32
    return %arg0, %c0_i32, %c0_i32_0 : i32, i32, i32
  }
  func.func @transform_14(%arg0: i32) -> (i32, i32, i32) {
    %c0_i32 = arith.constant 0 : i32
    %c0_i32_0 = arith.constant 0 : i32
    %c0_i32_1 = arith.constant 0 : i32
    return %arg0, %c0_i32, %c0_i32_0 : i32, i32, i32
  }
  func.func @transform_15(%arg0: i32) -> (i32, i32, i32) {
    %c0_i32 = arith.constant 0 : i32
    %c0_i32_0 = arith.constant 0 : i32
    %c0_i32_1 = arith.constant 0 : i32
    return %arg0, %c0_i32, %c0_i32_0 : i32, i32, i32
  }
  func.func @transform_16(%arg0: i32) -> (i32, i32, i32) {
    %c0_i32 = arith.constant 0 : i32
    %c0_i32_0 = arith.constant 0 : i32
    %c0_i32_1 = arith.constant 0 : i32
    return %arg0, %c0_i32, %c0_i32_0 : i32, i32, i32
  }
  func.func @transform_17(%arg0: i32) -> (i32, i32, i32) {
    %c0_i32 = arith.constant 0 : i32
    %c0_i32_0 = arith.constant 0 : i32
    %c0_i32_1 = arith.constant 0 : i32
    return %arg0, %c0_i32, %c0_i32_0 : i32, i32, i32
  }
  func.func @transform_18(%arg0: i32) -> (i32, i32, i32) {
    %c0_i32 = arith.constant 0 : i32
    %c0_i32_0 = arith.constant 0 : i32
    %c0_i32_1 = arith.constant 0 : i32
    return %arg0, %c0_i32, %c0_i32_0 : i32, i32, i32
  }
  func.func @transform_19(%arg0: i32) -> (i32, i32, i32) {
    %c0_i32 = arith.constant 0 : i32
    %c0_i32_0 = arith.constant 0 : i32
    %c0_i32_1 = arith.constant 0 : i32
    return %arg0, %c0_i32, %c0_i32_0 : i32, i32, i32
  }
  func.func @transform_20(%arg0: i32) -> (i32, i32, i32) {
    %c0_i32 = arith.constant 0 : i32
    %c0_i32_0 = arith.constant 0 : i32
    %c0_i32_1 = arith.constant 0 : i32
    return %arg0, %c0_i32, %c0_i32_0 : i32, i32, i32
  }
  func.func @transform_21(%arg0: i32) -> (i32, i32, i32) {
    %c0_i32 = arith.constant 0 : i32
    %c0_i32_0 = arith.constant 0 : i32
    %c0_i32_1 = arith.constant 0 : i32
    return %arg0, %c0_i32, %c0_i32_0 : i32, i32, i32
  }
  func.func @transform_22(%arg0: i32) -> (i32, i32, i32) {
    %c0_i32 = arith.constant 0 : i32
    %c0_i32_0 = arith.constant 0 : i32
    %c0_i32_1 = arith.constant 0 : i32
    return %arg0, %c0_i32, %c0_i32_0 : i32, i32, i32
  }
  func.func @transform_23(%arg0: i32) -> (i32, i32, i32) {
    %c0_i32 = arith.constant 0 : i32
    %c0_i32_0 = arith.constant 0 : i32
    %c0_i32_1 = arith.constant 0 : i32
    return %arg0, %c0_i32, %c0_i32_0 : i32, i32, i32
  }
  func.func @transform_24(%arg0: i32) -> (i32, i32, i32) {
    %c0_i32 = arith.constant 0 : i32
    %c0_i32_0 = arith.constant 0 : i32
    %c0_i32_1 = arith.constant 0 : i32
    return %arg0, %c0_i32, %c0_i32_0 : i32, i32, i32
  }
  func.func @transform_25(%arg0: i32) -> (i32, i32, i32) {
    %c0_i32 = arith.constant 0 : i32
    %c0_i32_0 = arith.constant 0 : i32
    %c0_i32_1 = arith.constant 0 : i32
    return %arg0, %c0_i32, %c0_i32_0 : i32, i32, i32
  }
  func.func @transform_26(%arg0: i32) -> (i32, i32, i32) {
    %c0_i32 = arith.constant 0 : i32
    %c0_i32_0 = arith.constant 0 : i32
    %c0_i32_1 = arith.constant 0 : i32
    return %arg0, %c0_i32, %c0_i32_0 : i32, i32, i32
  }
  func.func @transform_27(%arg0: i32) -> (i32, i32) {
    %c0_i32 = arith.constant 0 : i32
    %c0_i32_0 = arith.constant 0 : i32
    %c0_i32_1 = arith.constant 0 : i32
    return %c0_i32, %c0_i32_0 : i32, i32
  }
  func.func @transform_28(%arg0: i32) -> (i32, i32) {
    %c0_i32 = arith.constant 0 : i32
    %c0_i32_0 = arith.constant 0 : i32
    %c0_i32_1 = arith.constant 0 : i32
    return %c0_i32, %c0_i32_0 : i32, i32
  }
  func.func @transform_29(%arg0: i32) -> (i32, i32) {
    %c0_i32 = arith.constant 0 : i32
    %c0_i32_0 = arith.constant 0 : i32
    %c0_i32_1 = arith.constant 0 : i32
    return %c0_i32, %c0_i32_0 : i32, i32
  }
}

</mosaic_0001>

<llo_original>
// kernel: temporal_transformer_forward.1
$region0: #{temporal_transformer_forward.1}
  #allocation0 [shape = 'u32[]', space=smem, size = 0x4, offset = 0x4, fixed_abs, tag = 'smem constant byte address 0x4 - core index']
  #allocation1 [shape = 'u32[144,128]{1,0:T(1,128)}', space=vmem, size = 0x12000, scoped, tag = 'internal scratch']
  #allocation2 [shape = 'f32[10,32]{1,0:T(8,128)}', space=vmem, size = 0x2000, scoped, tag = 'scratch operand']
  #allocation3 [shape = 'f32[80,10]{1,0:T(8,128)}', space=vmem, size = 0xa000, scoped, tag = 'scratch operand']
  #allocation4 [shape = 'f32[80,10]{1,0:T(8,128)}', space=vmem, size = 0xa000, scoped, tag = 'scratch operand']
  #allocation5 [shape = 'f32[80,32]{1,0:T(8,128)}', space=vmem, size = 0xa000, scoped, tag = 'scratch operand']
  #allocation6 [shape = 'f32[10,80]{1,0:T(8,128)}', space=vmem, size = 0x2000, scoped, tag = 'scratch operand']
  %s0 = inlined_call_operand.smem [shape: u32[30], index: -1, kind: input, shape index: {}]
  %s1 = sld [smem:[%s0]]
  %s2 = scalar_lea.smem %s0, 1
  %s3 = sld [smem:[%s2]]
  %s4 = scalar_lea.smem %s0, 2
  %s5 = sld [smem:[%s4]]
  %s6 = scalar_lea.smem %s0, 3
  %s7 = sld [smem:[%s6]]
  %s8 = scalar_lea.smem %s0, 4
  %s9 = sld [smem:[%s8]]
  %s10 = scalar_lea.smem %s0, 5
  %s11 = sld [smem:[%s10]]
  %s12 = scalar_lea.smem %s0, 6
  %s13 = sld [smem:[%s12]]
  %s14 = scalar_lea.smem %s0, 7
  %s15 = sld [smem:[%s14]]
  %s16 = scalar_lea.smem %s0, 8
  %s17 = sld [smem:[%s16]]
  %s18 = scalar_lea.smem %s0, 9
  %s19 = sld [smem:[%s18]]
  %s20 = scalar_lea.smem %s0, 10
  %s21 = sld [smem:[%s20]]
  %s22 = scalar_lea.smem %s0, 11
  %s23 = sld [smem:[%s22]]
  %s24 = scalar_lea.smem %s0, 12
  %s25 = sld [smem:[%s24]]
  %s26 = scalar_lea.smem %s0, 13
  %s27 = sld [smem:[%s26]]
  %s28 = scalar_lea.smem %s0, 14
  %s29 = sld [smem:[%s28]]
  %s30 = scalar_lea.smem %s0, 15
  %s31 = sld [smem:[%s30]]
  %s32 = scalar_lea.smem %s0, 16
  %s33 = sld [smem:[%s32]]
  %s34 = scalar_lea.smem %s0, 17
  %s35 = sld [smem:[%s34]]
  %s36 = scalar_lea.smem %s0, 18
  %s37 = sld [smem:[%s36]]
  %s38 = scalar_lea.smem %s0, 19
  %s39 = sld [smem:[%s38]]
  %s40 = scalar_lea.smem %s0, 20
  %s41 = sld [smem:[%s40]]
  %s42 = scalar_lea.smem %s0, 21
  %s43 = sld [smem:[%s42]]
  %s44 = scalar_lea.smem %s0, 22
  %s45 = sld [smem:[%s44]]
  %s46 = scalar_lea.smem %s0, 23
  %s47 = sld [smem:[%s46]]
  %s48 = scalar_lea.smem %s0, 24
  %s49 = sld [smem:[%s48]]
  %s50 = scalar_lea.smem %s0, 25
  %s51 = sld [smem:[%s50]]
  %s52 = scalar_lea.smem %s0, 26
  %s53 = sld [smem:[%s52]]
  %s54 = scalar_lea.smem %s0, 27
  %s55 = sld [smem:[%s54]]
  %s56 = scalar_lea.smem %s0, 28
  %s57 = sld [smem:[%s56]]
  %s58 = scalar_lea.smem %s0, 29
  %s59 = sld [smem:[%s58]]
  %s60 = sld [smem:[#allocation0]]
  $region157: #{temporal_transformer_forward.1} parent=0
    _
  %s62 = ssub.s32 1, %s60
  %s63 = scalar_select 0, %s62, %s60
  loop: start=0, step=1, limit=6
  $region2: #{temporal_transformer_forward.1} parent=0 // loop_pre_header
    _
  $region3: #{temporal_transformer_forward.1} parent=0 // loop_header
    %s65 = sphi 0, %s69
    %p66 = scmp.ge.s32.totalorder %s65, 6
    %s73 = sphi 0, %s73
    %s75 = sphi 0, %s73
    %s76 = sphi 0, %s75
    %s90 = sphi 0, %s76
    %s94 = sphi 0, %s94
    %s96 = sphi 0, %s94
    %s97 = sphi 0, %s96
    %s111 = sphi 0, %s97
    %s115 = sphi 0, %s115
    %s117 = sphi 0, %s115
    %s118 = sphi 0, %s117
    %s132 = sphi 0, %s118
    %s136 = sphi 0, %s136
    %s138 = sphi 0, %s136
    %s139 = sphi 0, %s138
    %s153 = sphi 0, %s139
    %s157 = sphi 0, %s157
    %s159 = sphi 0, %s157
    %s160 = sphi 0, %s159
    %s174 = sphi 0, %s160
    %s178 = sphi 0, %s178
    %s180 = sphi 0, %s178
    %s181 = sphi 0, %s180
    %s195 = sphi 0, %s181
    %s199 = sphi 0, %s199
    %s201 = sphi 0, %s199
    %s202 = sphi 0, %s201
    %s216 = sphi 0, %s202
    %s220 = sphi 0, %s220
    %s222 = sphi 0, %s220
    %s223 = sphi 0, %s222
    %s237 = sphi 0, %s223
    %s241 = sphi 0, %s241
    %s243 = sphi 0, %s241
    %s244 = sphi 0, %s243
    %s258 = sphi 0, %s244
    %s262 = sphi 0, %s262
    %s264 = sphi 0, %s262
    %s265 = sphi 0, %s264
    %s279 = sphi 0, %s265
    %s283 = sphi 0, %s283
    %s285 = sphi 0, %s283
    %s286 = sphi 0, %s285
    %s300 = sphi 0, %s286
    %s306 = sphi 0, %s308
    %s309 = sphi 0, %s306
    %s310 = sphi 0, %s309
    %s326 = sphi 0, %s310
    %s332 = sphi 0, %s334
    %s335 = sphi 0, %s332
    %s336 = sphi 0, %s335
    %s352 = sphi 0, %s336
    %s358 = sphi 0, %s360
    %s361 = sphi 0, %s358
    %s362 = sphi 0, %s361
    %s378 = sphi 0, %s362
    %s384 = sphi 0, %s386
    %s387 = sphi 0, %s384
    %s388 = sphi 0, %s387
    %s404 = sphi 0, %s388
    %s410 = sphi 0, %s412
    %s413 = sphi 0, %s410
    %s414 = sphi 0, %s413
    %s430 = sphi 0, %s414
    %s436 = sphi 0, %s438
    %s439 = sphi 0, %s436
    %s440 = sphi 0, %s439
    %s456 = sphi 0, %s440
    %s462 = sphi 0, %s464
    %s465 = sphi 0, %s462
    %s466 = sphi 0, %s465
    %s482 = sphi 0, %s466
    %s488 = sphi 0, %s490
    %s491 = sphi 0, %s488
    %s492 = sphi 0, %s491
    %s508 = sphi 0, %s492
    %s514 = sphi 0, %s516
    %s517 = sphi 0, %s514
    %s518 = sphi 0, %s517
    %s534 = sphi 0, %s518
    %s540 = sphi 0, %s542
    %s543 = sphi 0, %s540
    %s544 = sphi 0, %s543
    %s560 = sphi 0, %s544
    %s566 = sphi 0, %s568
    %s569 = sphi 0, %s566
    %s570 = sphi 0, %s569
    %s586 = sphi 0, %s570
    %s592 = sphi 0, %s594
    %s595 = sphi 0, %s592
    %s596 = sphi 0, %s595
    %s612 = sphi 0, %s596
    %s618 = sphi 0, %s620
    %s621 = sphi 0, %s618
    %s622 = sphi 0, %s621
    %s638 = sphi 0, %s622
    %s644 = sphi 0, %s646
    %s647 = sphi 0, %s644
    %s648 = sphi 0, %s647
    %s664 = sphi 0, %s648
    %s670 = sphi 0, %s672
    %s673 = sphi 0, %s670
    %s674 = sphi 0, %s673
    %s690 = sphi 0, %s674
    %s696 = sphi 0, %s698
    %s699 = sphi 0, %s696
    %s700 = sphi 0, %s699
    %s716 = sphi 0, %s700
    %s720 = sphi 0, %s720
    %s722 = sphi 0, %s720
    %s723 = sphi 0, %s722
    %s737 = sphi 0, %s723
    %s741 = sphi 0, %s741
    %s743 = sphi 0, %s741
    %s744 = sphi 0, %s743
    %s758 = sphi 0, %s744
    %s762 = sphi 0, %s762
    %s764 = sphi 0, %s762
    %s765 = sphi 0, %s764
    %s779 = sphi 0, %s765
  $region4: #{temporal_transformer_forward.1} parent=0 // loop_header_branch
    %68 = sbr.rel (%p66) target = $region8
  $region5: #{temporal_transformer_forward.1} parent=0 // loop_body
    %s70 = ssub.s32 %s65, 1
    %s71 = ssub.s32 %s65, 2
    %s72 = sadd.s32 %s65, 1
    %s74 = sadd.s32 %s73, 1
    %p77 = scmp.eq.s32.totalorder %s65, 3
    %p78 = scmp.ne.s32.totalorder %s73, %s75
    %p79 = scmp.eq.s32.totalorder %s65, 0
    %p80 = por %p78, %p79
    %p81 = scmp.ne.s32.totalorder %s73, %s75
    %p82 = scmp.eq.s32.totalorder %s70, 3
    %p83 = por %p81, %p82
    %p84 = scmp.ne.s32.totalorder %s75, %s76
    %p85 = scmp.eq.s32.totalorder %s70, 0
    %p86 = por %p84, %p85
    %p87 = scmp.ne.s32.totalorder %s75, %s76
    %p88 = scmp.eq.s32.totalorder %s71, 3
    %p89 = por %p87, %p88
    %p91 = scmp.ne.s32.totalorder %s76, %s90
    %p92 = scmp.eq.s32.totalorder %s71, 0
    %p93 = por %p91, %p92
    %s95 = sadd.s32 %s94, 1
    %p98 = scmp.eq.s32.totalorder %s65, 3
    %p99 = scmp.ne.s32.totalorder %s94, %s96
    %p100 = scmp.eq.s32.totalorder %s65, 0
    %p101 = por %p99, %p100
    %p102 = scmp.ne.s32.totalorder %s94, %s96
    %p103 = scmp.eq.s32.totalorder %s70, 3
    %p104 = por %p102, %p103
    %p105 = scmp.ne.s32.totalorder %s96, %s97
    %p106 = scmp.eq.s32.totalorder %s70, 0
    %p107 = por %p105, %p106
    %p108 = scmp.ne.s32.totalorder %s96, %s97
    %p109 = scmp.eq.s32.totalorder %s71, 3
    %p110 = por %p108, %p109
    %p112 = scmp.ne.s32.totalorder %s97, %s111
    %p113 = scmp.eq.s32.totalorder %s71, 0
    %p114 = por %p112, %p113
    %s116 = sadd.s32 %s115, 1
    %p119 = scmp.eq.s32.totalorder %s65, 3
    %p120 = scmp.ne.s32.totalorder %s115, %s117
    %p121 = scmp.eq.s32.totalorder %s65, 0
    %p122 = por %p120, %p121
    %p123 = scmp.ne.s32.totalorder %s115, %s117
    %p124 = scmp.eq.s32.totalorder %s70, 3
    %p125 = por %p123, %p124
    %p126 = scmp.ne.s32.totalorder %s117, %s118
    %p127 = scmp.eq.s32.totalorder %s70, 0
    %p128 = por %p126, %p127
    %p129 = scmp.ne.s32.totalorder %s117, %s118
    %p130 = scmp.eq.s32.totalorder %s71, 3
    %p131 = por %p129, %p130
    %p133 = scmp.ne.s32.totalorder %s118, %s132
    %p134 = scmp.eq.s32.totalorder %s71, 0
    %p135 = por %p133, %p134
    %s137 = sadd.s32 %s136, 1
    %p140 = scmp.eq.s32.totalorder %s65, 3
    %p141 = scmp.ne.s32.totalorder %s136, %s138
    %p142 = scmp.eq.s32.totalorder %s65, 0
    %p143 = por %p141, %p142
    %p144 = scmp.ne.s32.totalorder %s136, %s138
    %p145 = scmp.eq.s32.totalorder %s70, 3
    %p146 = por %p144, %p145
    %p147 = scmp.ne.s32.totalorder %s138, %s139
    %p148 = scmp.eq.s32.totalorder %s70, 0
    %p149 = por %p147, %p148
    %p150 = scmp.ne.s32.totalorder %s138, %s139
    %p151 = scmp.eq.s32.totalorder %s71, 3
    %p152 = por %p150, %p151
    %p154 = scmp.ne.s32.totalorder %s139, %s153
    %p155 = scmp.eq.s32.totalorder %s71, 0
    %p156 = por %p154, %p155
    %s158 = sadd.s32 %s157, 1
    %p161 = scmp.eq.s32.totalorder %s65, 3
    %p162 = scmp.ne.s32.totalorder %s157, %s159
    %p163 = scmp.eq.s32.totalorder %s65, 0
    %p164 = por %p162, %p163
    %p165 = scmp.ne.s32.totalorder %s157, %s159
    %p166 = scmp.eq.s32.totalorder %s70, 3
    %p167 = por %p165, %p166
    %p168 = scmp.ne.s32.totalorder %s159, %s160
    %p169 = scmp.eq.s32.totalorder %s70, 0
    %p170 = por %p168, %p169
    %p171 = scmp.ne.s32.totalorder %s159, %s160
    %p172 = scmp.eq.s32.totalorder %s71, 3
    %p173 = por %p171, %p172
    %p175 = scmp.ne.s32.totalorder %s160, %s174
    %p176 = scmp.eq.s32.totalorder %s71, 0
    %p177 = por %p175, %p176
    %s179 = sadd.s32 %s178, 1
    %p182 = scmp.eq.s32.totalorder %s65, 3
    %p183 = scmp.ne.s32.totalorder %s178, %s180
    %p184 = scmp.eq.s32.totalorder %s65, 0
    %p185 = por %p183, %p184
    %p186 = scmp.ne.s32.totalorder %s178, %s180
    %p187 = scmp.eq.s32.totalorder %s70, 3
    %p188 = por %p186, %p187
    %p189 = scmp.ne.s32.totalorder %s180, %s181
    %p190 = scmp.eq.s32.totalorder %s70, 0
    %p191 = por %p189, %p190
    %p192 = scmp.ne.s32.totalorder %s180, %s181
    %p193 = scmp.eq.s32.totalorder %s71, 3
    %p194 = por %p192, %p193
    %p196 = scmp.ne.s32.totalorder %s181, %s195
    %p197 = scmp.eq.s32.totalorder %s71, 0
    %p198 = por %p196, %p197
    %s200 = sadd.s32 %s199, 1
    %p203 = scmp.eq.s32.totalorder %s65, 3
    %p204 = scmp.ne.s32.totalorder %s199, %s201
    %p205 = scmp.eq.s32.totalorder %s65, 0
    %p206 = por %p204, %p205
    %p207 = scmp.ne.s32.totalorder %s199, %s201
    %p208 = scmp.eq.s32.totalorder %s70, 3
    %p209 = por %p207, %p208
    %p210 = scmp.ne.s32.totalorder %s201, %s202
    %p211 = scmp.eq.s32.totalorder %s70, 0
    %p212 = por %p210, %p211
    %p213 = scmp.ne.s32.totalorder %s201, %s202
    %p214 = scmp.eq.s32.totalorder %s71, 3
    %p215 = por %p213, %p214
    %p217 = scmp.ne.s32.totalorder %s202, %s216
    %p218 = scmp.eq.s32.totalorder %s71, 0
    %p219 = por %p217, %p218
    %s221 = sadd.s32 %s220, 1
    %p224 = scmp.eq.s32.totalorder %s65, 3
    %p225 = scmp.ne.s32.totalorder %s220, %s222
    %p226 = scmp.eq.s32.totalorder %s65, 0
    %p227 = por %p225, %p226
    %p228 = scmp.ne.s32.totalorder %s220, %s222
    %p229 = scmp.eq.s32.totalorder %s70, 3
    %p230 = por %p228, %p229
    %p231 = scmp.ne.s32.totalorder %s222, %s223
    %p232 = scmp.eq.s32.totalorder %s70, 0
    %p233 = por %p231, %p232
    %p234 = scmp.ne.s32.totalorder %s222, %s223
    %p235 = scmp.eq.s32.totalorder %s71, 3
    %p236 = por %p234, %p235
    %p238 = scmp.ne.s32.totalorder %s223, %s237
    %p239 = scmp.eq.s32.totalorder %s71, 0
    %p240 = por %p238, %p239
    %s242 = sadd.s32 %s241, 1
    %p245 = scmp.eq.s32.totalorder %s65, 3
    %p246 = scmp.ne.s32.totalorder %s241, %s243
    %p247 = scmp.eq.s32.totalorder %s65, 0
    %p248 = por %p246, %p247
    %p249 = scmp.ne.s32.totalorder %s241, %s243
    %p250 = scmp.eq.s32.totalorder %s70, 3
    %p251 = por %p249, %p250
    %p252 = scmp.ne.s32.totalorder %s243, %s244
    %p253 = scmp.eq.s32.totalorder %s70, 0
    %p254 = por %p252, %p253
    %p255 = scmp.ne.s32.totalorder %s243, %s244
    %p256 = scmp.eq.s32.totalorder %s71, 3
    %p257 = por %p255, %p256
    %p259 = scmp.ne.s32.totalorder %s244, %s258
    %p260 = scmp.eq.s32.totalorder %s71, 0
    %p261 = por %p259, %p260
    %s263 = sadd.s32 %s262, 1
    %p266 = scmp.eq.s32.totalorder %s65, 3
    %p267 = scmp.ne.s32.totalorder %s262, %s264
    %p268 = scmp.eq.s32.totalorder %s65, 0
    %p269 = por %p267, %p268
    %p270 = scmp.ne.s32.totalorder %s262, %s264
    %p271 = scmp.eq.s32.totalorder %s70, 3
    %p272 = por %p270, %p271
    %p273 = scmp.ne.s32.totalorder %s264, %s265
    %p274 = scmp.eq.s32.totalorder %s70, 0
    %p275 = por %p273, %p274
    %p276 = scmp.ne.s32.totalorder %s264, %s265
    %p277 = scmp.eq.s32.totalorder %s71, 3
    %p278 = por %p276, %p277
    %p280 = scmp.ne.s32.totalorder %s265, %s279
    %p281 = scmp.eq.s32.totalorder %s71, 0
    %p282 = por %p280, %p281
    %s284 = sadd.s32 %s283, 1
    %p287 = scmp.eq.s32.totalorder %s65, 3
    %p288 = scmp.ne.s32.totalorder %s283, %s285
    %p289 = scmp.eq.s32.totalorder %s65, 0
    %p290 = por %p288, %p289
    %p291 = scmp.ne.s32.totalorder %s283, %s285
    %p292 = scmp.eq.s32.totalorder %s70, 3
    %p293 = por %p291, %p292
    %p294 = scmp.ne.s32.totalorder %s285, %s286
    %p295 = scmp.eq.s32.totalorder %s70, 0
    %p296 = por %p294, %p295
    %p297 = scmp.ne.s32.totalorder %s285, %s286
    %p298 = scmp.eq.s32.totalorder %s71, 3
    %p299 = por %p297, %p298
    %p301 = scmp.ne.s32.totalorder %s286, %s300
    %p302 = scmp.eq.s32.totalorder %s71, 0
    %p303 = por %p301, %p302
    %s304 = ssub.s32 %s65, %s72
    %p305 = scmp.eq.s32.totalorder %s304, 0
    %s307 = sadd.s32 %s306, 1
    %s308 = scalar_select %p305, %s306, %s307
    %p311 = pneg %p305
    %p312 = scmp.eq.s32.totalorder %s65, 3
    %p313 = por %p311, %p312
    %p314 = scmp.ne.s32.totalorder %s306, %s309
    %p315 = scmp.eq.s32.totalorder %s65, 0
    %p316 = por %p314, %p315
    %p317 = scmp.ne.s32.totalorder %s306, %s309
    %p318 = scmp.eq.s32.totalorder %s70, 3
    %p319 = por %p317, %p318
    %p320 = scmp.ne.s32.totalorder %s309, %s310
    %p321 = scmp.eq.s32.totalorder %s70, 0
    %p322 = por %p320, %p321
    %p323 = scmp.ne.s32.totalorder %s309, %s310
    %p324 = scmp.eq.s32.totalorder %s71, 3
    %p325 = por %p323, %p324
    %p327 = scmp.ne.s32.totalorder %s310, %s326
    %p328 = scmp.eq.s32.totalorder %s71, 0
    %p329 = por %p327, %p328
    %s330 = ssub.s32 %s65, %s72
    %p331 = scmp.eq.s32.totalorder %s330, 0
    %s333 = sadd.s32 %s332, 1
    %s334 = scalar_select %p331, %s332, %s333
    %p337 = pneg %p331
    %p338 = scmp.eq.s32.totalorder %s65, 3
    %p339 = por %p337, %p338
    %p340 = scmp.ne.s32.totalorder %s332, %s335
    %p341 = scmp.eq.s32.totalorder %s65, 0
    %p342 = por %p340, %p341
    %p343 = scmp.ne.s32.totalorder %s332, %s335
    %p344 = scmp.eq.s32.totalorder %s70, 3
    %p345 = por %p343, %p344
    %p346 = scmp.ne.s32.totalorder %s335, %s336
    %p347 = scmp.eq.s32.totalorder %s70, 0
    %p348 = por %p346, %p347
    %p349 = scmp.ne.s32.totalorder %s335, %s336
    %p350 = scmp.eq.s32.totalorder %s71, 3
    %p351 = por %p349, %p350
    %p353 = scmp.ne.s32.totalorder %s336, %s352
    %p354 = scmp.eq.s32.totalorder %s71, 0
    %p355 = por %p353, %p354
    %s356 = ssub.s32 %s65, %s72
    %p357 = scmp.eq.s32.totalorder %s356, 0
    %s359 = sadd.s32 %s358, 1
    %s360 = scalar_select %p357, %s358, %s359
    %p363 = pneg %p357
    %p364 = scmp.eq.s32.totalorder %s65, 3
    %p365 = por %p363, %p364
    %p366 = scmp.ne.s32.totalorder %s358, %s361
    %p367 = scmp.eq.s32.totalorder %s65, 0
    %p368 = por %p366, %p367
    %p369 = scmp.ne.s32.totalorder %s358, %s361
    %p370 = scmp.eq.s32.totalorder %s70, 3
    %p371 = por %p369, %p370
    %p372 = scmp.ne.s32.totalorder %s361, %s362
    %p373 = scmp.eq.s32.totalorder %s70, 0
    %p374 = por %p372, %p373
    %p375 = scmp.ne.s32.totalorder %s361, %s362
    %p376 = scmp.eq.s32.totalorder %s71, 3
    %p377 = por %p375, %p376
    %p379 = scmp.ne.s32.totalorder %s362, %s378
    %p380 = scmp.eq.s32.totalorder %s71, 0
    %p381 = por %p379, %p380
    %s382 = ssub.s32 %s65, %s72
    %p383 = scmp.eq.s32.totalorder %s382, 0
    %s385 = sadd.s32 %s384, 1
    %s386 = scalar_select %p383, %s384, %s385
    %p389 = pneg %p383
    %p390 = scmp.eq.s32.totalorder %s65, 3
    %p391 = por %p389, %p390
    %p392 = scmp.ne.s32.totalorder %s384, %s387
    %p393 = scmp.eq.s32.totalorder %s65, 0
    %p394 = por %p392, %p393
    %p395 = scmp.ne.s32.totalorder %s384, %s387
    %p396 = scmp.eq.s32.totalorder %s70, 3
    %p397 = por %p395, %p396
    %p398 = scmp.ne.s32.totalorder %s387, %s388
    %p399 = scmp.eq.s32.totalorder %s70, 0
    %p400 = por %p398, %p399
    %p401 = scmp.ne.s32.totalorder %s387, %s388
    %p402 = scmp.eq.s32.totalorder %s71, 3
    %p403 = por %p401, %p402
    %p405 = scmp.ne.s32.totalorder %s388, %s404
    %p406 = scmp.eq.s32.totalorder %s71, 0
    %p407 = por %p405, %p406
    %s408 = ssub.s32 %s65, %s72
    %p409 = scmp.eq.s32.totalorder %s408, 0
    %s411 = sadd.s32 %s410, 1
    %s412 = scalar_select %p409, %s410, %s411
    %p415 = pneg %p409
    %p416 = scmp.eq.s32.totalorder %s65, 3
    %p417 = por %p415, %p416
    %p418 = scmp.ne.s32.totalorder %s410, %s413
    %p419 = scmp.eq.s32.totalorder %s65, 0
    %p420 = por %p418, %p419
    %p421 = scmp.ne.s32.totalorder %s410, %s413
    %p422 = scmp.eq.s32.totalorder %s70, 3
    %p423 = por %p421, %p422
    %p424 = scmp.ne.s32.totalorder %s413, %s414
    %p425 = scmp.eq.s32.totalorder %s70, 0
    %p426 = por %p424, %p425
    %p427 = scmp.ne.s32.totalorder %s413, %s414
    %p428 = scmp.eq.s32.totalorder %s71, 3
    %p429 = por %p427, %p428
    %p431 = scmp.ne.s32.totalorder %s414, %s430
    %p432 = scmp.eq.s32.totalorder %s71, 0
    %p433 = por %p431, %p432
    %s434 = ssub.s32 %s65, %s72
    %p435 = scmp.eq.s32.totalorder %s434, 0
    %s437 = sadd.s32 %s436, 1
    %s438 = scalar_select %p435, %s436, %s437
    %p441 = pneg %p435
    %p442 = scmp.eq.s32.totalorder %s65, 3
    %p443 = por %p441, %p442
    %p444 = scmp.ne.s32.totalorder %s436, %s439
    %p445 = scmp.eq.s32.totalorder %s65, 0
    %p446 = por %p444, %p445
    %p447 = scmp.ne.s32.totalorder %s436, %s439
    %p448 = scmp.eq.s32.totalorder %s70, 3
    %p449 = por %p447, %p448
    %p450 = scmp.ne.s32.totalorder %s439, %s440
    %p451 = scmp.eq.s32.totalorder %s70, 0
    %p452 = por %p450, %p451
    %p453 = scmp.ne.s32.totalorder %s439, %s440
    %p454 = scmp.eq.s32.totalorder %s71, 3
    %p455 = por %p453, %p454
    %p457 = scmp.ne.s32.totalorder %s440, %s456
    %p458 = scmp.eq.s32.totalorder %s71, 0
    %p459 = por %p457, %p458
    %s460 = ssub.s32 %s65, %s72
    %p461 = scmp.eq.s32.totalorder %s460, 0
    %s463 = sadd.s32 %s462, 1
    %s464 = scalar_select %p461, %s462, %s463
    %p467 = pneg %p461
    %p468 = scmp.eq.s32.totalorder %s65, 3
    %p469 = por %p467, %p468
    %p470 = scmp.ne.s32.totalorder %s462, %s465
    %p471 = scmp.eq.s32.totalorder %s65, 0
    %p472 = por %p470, %p471
    %p473 = scmp.ne.s32.totalorder %s462, %s465
    %p474 = scmp.eq.s32.totalorder %s70, 3
    %p475 = por %p473, %p474
    %p476 = scmp.ne.s32.totalorder %s465, %s466
    %p477 = scmp.eq.s32.totalorder %s70, 0
    %p478 = por %p476, %p477
    %p479 = scmp.ne.s32.totalorder %s465, %s466
    %p480 = scmp.eq.s32.totalorder %s71, 3
    %p481 = por %p479, %p480
    %p483 = scmp.ne.s32.totalorder %s466, %s482
    %p484 = scmp.eq.s32.totalorder %s71, 0
    %p485 = por %p483, %p484
    %s486 = ssub.s32 %s65, %s72
    %p487 = scmp.eq.s32.totalorder %s486, 0
    %s489 = sadd.s32 %s488, 1
    %s490 = scalar_select %p487, %s488, %s489
    %p493 = pneg %p487
    %p494 = scmp.eq.s32.totalorder %s65, 3
    %p495 = por %p493, %p494
    %p496 = scmp.ne.s32.totalorder %s488, %s491
    %p497 = scmp.eq.s32.totalorder %s65, 0
    %p498 = por %p496, %p497
    %p499 = scmp.ne.s32.totalorder %s488, %s491
    %p500 = scmp.eq.s32.totalorder %s70, 3
    %p501 = por %p499, %p500
    %p502 = scmp.ne.s32.totalorder %s491, %s492
    %p503 = scmp.eq.s32.totalorder %s70, 0
    %p504 = por %p502, %p503
    %p505 = scmp.ne.s32.totalorder %s491, %s492
    %p506 = scmp.eq.s32.totalorder %s71, 3
    %p507 = por %p505, %p506
    %p509 = scmp.ne.s32.totalorder %s492, %s508
    %p510 = scmp.eq.s32.totalorder %s71, 0
    %p511 = por %p509, %p510
    %s512 = ssub.s32 %s65, %s72
    %p513 = scmp.eq.s32.totalorder %s512, 0
    %s515 = sadd.s32 %s514, 1
    %s516 = scalar_select %p513, %s514, %s515
    %p519 = pneg %p513
    %p520 = scmp.eq.s32.totalorder %s65, 3
    %p521 = por %p519, %p520
    %p522 = scmp.ne.s32.totalorder %s514, %s517
    %p523 = scmp.eq.s32.totalorder %s65, 0
    %p524 = por %p522, %p523
    %p525 = scmp.ne.s32.totalorder %s514, %s517
    %p526 = scmp.eq.s32.totalorder %s70, 3
    %p527 = por %p525, %p526
    %p528 = scmp.ne.s32.totalorder %s517, %s518
    %p529 = scmp.eq.s32.totalorder %s70, 0
    %p530 = por %p528, %p529
    %p531 = scmp.ne.s32.totalorder %s517, %s518
    %p532 = scmp.eq.s32.totalorder %s71, 3
    %p533 = por %p531, %p532
    %p535 = scmp.ne.s32.totalorder %s518, %s534
    %p536 = scmp.eq.s32.totalorder %s71, 0
    %p537 = por %p535, %p536
    %s538 = ssub.s32 %s65, %s72
    %p539 = scmp.eq.s32.totalorder %s538, 0
    %s541 = sadd.s32 %s540, 1
    %s542 = scalar_select %p539, %s540, %s541
    %p545 = pneg %p539
    %p546 = scmp.eq.s32.totalorder %s65, 3
    %p547 = por %p545, %p546
    %p548 = scmp.ne.s32.totalorder %s540, %s543
    %p549 = scmp.eq.s32.totalorder %s65, 0
    %p550 = por %p548, %p549
    %p551 = scmp.ne.s32.totalorder %s540, %s543
    %p552 = scmp.eq.s32.totalorder %s70, 3
    %p553 = por %p551, %p552
    %p554 = scmp.ne.s32.totalorder %s543, %s544
    %p555 = scmp.eq.s32.totalorder %s70, 0
    %p556 = por %p554, %p555
    %p557 = scmp.ne.s32.totalorder %s543, %s544
    %p558 = scmp.eq.s32.totalorder %s71, 3
    %p559 = por %p557, %p558
    %p561 = scmp.ne.s32.totalorder %s544, %s560
    %p562 = scmp.eq.s32.totalorder %s71, 0
    %p563 = por %p561, %p562
    %s564 = ssub.s32 %s65, %s72
    %p565 = scmp.eq.s32.totalorder %s564, 0
    %s567 = sadd.s32 %s566, 1
    %s568 = scalar_select %p565, %s566, %s567
    %p571 = pneg %p565
    %p572 = scmp.eq.s32.totalorder %s65, 3
    %p573 = por %p571, %p572
    %p574 = scmp.ne.s32.totalorder %s566, %s569
    %p575 = scmp.eq.s32.totalorder %s65, 0
    %p576 = por %p574, %p575
    %p577 = scmp.ne.s32.totalorder %s566, %s569
    %p578 = scmp.eq.s32.totalorder %s70, 3
    %p579 = por %p577, %p578
    %p580 = scmp.ne.s32.totalorder %s569, %s570
    %p581 = scmp.eq.s32.totalorder %s70, 0
    %p582 = por %p580, %p581
    %p583 = scmp.ne.s32.totalorder %s569, %s570
    %p584 = scmp.eq.s32.totalorder %s71, 3
    %p585 = por %p583, %p584
    %p587 = scmp.ne.s32.totalorder %s570, %s586
    %p588 = scmp.eq.s32.totalorder %s71, 0
    %p589 = por %p587, %p588
    %s590 = ssub.s32 %s65, %s72
    %p591 = scmp.eq.s32.totalorder %s590, 0
    %s593 = sadd.s32 %s592, 1
    %s594 = scalar_select %p591, %s592, %s593
    %p597 = pneg %p591
    %p598 = scmp.eq.s32.totalorder %s65, 3
    %p599 = por %p597, %p598
    %p600 = scmp.ne.s32.totalorder %s592, %s595
    %p601 = scmp.eq.s32.totalorder %s65, 0
    %p602 = por %p600, %p601
    %p603 = scmp.ne.s32.totalorder %s592, %s595
    %p604 = scmp.eq.s32.totalorder %s70, 3
    %p605 = por %p603, %p604
    %p606 = scmp.ne.s32.totalorder %s595, %s596
    %p607 = scmp.eq.s32.totalorder %s70, 0
    %p608 = por %p606, %p607
    %p609 = scmp.ne.s32.totalorder %s595, %s596
    %p610 = scmp.eq.s32.totalorder %s71, 3
    %p611 = por %p609, %p610
    %p613 = scmp.ne.s32.totalorder %s596, %s612
    %p614 = scmp.eq.s32.totalorder %s71, 0
    %p615 = por %p613, %p614
    %s616 = ssub.s32 %s65, %s72
    %p617 = scmp.eq.s32.totalorder %s616, 0
    %s619 = sadd.s32 %s618, 1
    %s620 = scalar_select %p617, %s618, %s619
    %p623 = pneg %p617
    %p624 = scmp.eq.s32.totalorder %s65, 3
    %p625 = por %p623, %p624
    %p626 = scmp.ne.s32.totalorder %s618, %s621
    %p627 = scmp.eq.s32.totalorder %s65, 0
    %p628 = por %p626, %p627
    %p629 = scmp.ne.s32.totalorder %s618, %s621
    %p630 = scmp.eq.s32.totalorder %s70, 3
    %p631 = por %p629, %p630
    %p632 = scmp.ne.s32.totalorder %s621, %s622
    %p633 = scmp.eq.s32.totalorder %s70, 0
    %p634 = por %p632, %p633
    %p635 = scmp.ne.s32.totalorder %s621, %s622
    %p636 = scmp.eq.s32.totalorder %s71, 3
    %p637 = por %p635, %p636
    %p639 = scmp.ne.s32.totalorder %s622, %s638
    %p640 = scmp.eq.s32.totalorder %s71, 0
    %p641 = por %p639, %p640
    %s642 = ssub.s32 %s65, %s72
    %p643 = scmp.eq.s32.totalorder %s642, 0
    %s645 = sadd.s32 %s644, 1
    %s646 = scalar_select %p643, %s644, %s645
    %p649 = pneg %p643
    %p650 = scmp.eq.s32.totalorder %s65, 3
    %p651 = por %p649, %p650
    %p652 = scmp.ne.s32.totalorder %s644, %s647
    %p653 = scmp.eq.s32.totalorder %s65, 0
    %p654 = por %p652, %p653
    %p655 = scmp.ne.s32.totalorder %s644, %s647
    %p656 = scmp.eq.s32.totalorder %s70, 3
    %p657 = por %p655, %p656
    %p658 = scmp.ne.s32.totalorder %s647, %s648
    %p659 = scmp.eq.s32.totalorder %s70, 0
    %p660 = por %p658, %p659
    %p661 = scmp.ne.s32.totalorder %s647, %s648
    %p662 = scmp.eq.s32.totalorder %s71, 3
    %p663 = por %p661, %p662
    %p665 = scmp.ne.s32.totalorder %s648, %s664
    %p666 = scmp.eq.s32.totalorder %s71, 0
    %p667 = por %p665, %p666
    %s668 = ssub.s32 %s65, %s72
    %p669 = scmp.eq.s32.totalorder %s668, 0
    %s671 = sadd.s32 %s670, 1
    %s672 = scalar_select %p669, %s670, %s671
    %p675 = pneg %p669
    %p676 = scmp.eq.s32.totalorder %s65, 3
    %p677 = por %p675, %p676
    %p678 = scmp.ne.s32.totalorder %s670, %s673
    %p679 = scmp.eq.s32.totalorder %s65, 0
    %p680 = por %p678, %p679
    %p681 = scmp.ne.s32.totalorder %s670, %s673
    %p682 = scmp.eq.s32.totalorder %s70, 3
    %p683 = por %p681, %p682
    %p684 = scmp.ne.s32.totalorder %s673, %s674
    %p685 = scmp.eq.s32.totalorder %s70, 0
    %p686 = por %p684, %p685
    %p687 = scmp.ne.s32.totalorder %s673, %s674
    %p688 = scmp.eq.s32.totalorder %s71, 3
    %p689 = por %p687, %p688
    %p691 = scmp.ne.s32.totalorder %s674, %s690
    %p692 = scmp.eq.s32.totalorder %s71, 0
    %p693 = por %p691, %p692
    %s694 = ssub.s32 %s65, %s72
    %p695 = scmp.eq.s32.totalorder %s694, 0
    %s697 = sadd.s32 %s696, 1
    %s698 = scalar_select %p695, %s696, %s697
    %p701 = pneg %p695
    %p702 = scmp.eq.s32.totalorder %s65, 3
    %p703 = por %p701, %p702
    %p704 = scmp.ne.s32.totalorder %s696, %s699
    %p705 = scmp.eq.s32.totalorder %s65, 0
    %p706 = por %p704, %p705
    %p707 = scmp.ne.s32.totalorder %s696, %s699
    %p708 = scmp.eq.s32.totalorder %s70, 3
    %p709 = por %p707, %p708
    %p710 = scmp.ne.s32.totalorder %s699, %s700
    %p711 = scmp.eq.s32.totalorder %s70, 0
    %p712 = por %p710, %p711
    %p713 = scmp.ne.s32.totalorder %s699, %s700
    %p714 = scmp.eq.s32.totalorder %s71, 3
    %p715 = por %p713, %p714
    %p717 = scmp.ne.s32.totalorder %s700, %s716
    %p718 = scmp.eq.s32.totalorder %s71, 0
    %p719 = por %p717, %p718
    %s721 = sadd.s32 %s720, 1
    %p724 = scmp.eq.s32.totalorder %s65, 3
    %p725 = scmp.ne.s32.totalorder %s720, %s722
    %p726 = scmp.eq.s32.totalorder %s65, 0
    %p727 = por %p725, %p726
    %p728 = scmp.ne.s32.totalorder %s720, %s722
    %p729 = scmp.eq.s32.totalorder %s70, 3
    %p730 = por %p728, %p729
    %p731 = scmp.ne.s32.totalorder %s722, %s723
    %p732 = scmp.eq.s32.totalorder %s70, 0
    %p733 = por %p731, %p732
    %p734 = scmp.ne.s32.totalorder %s722, %s723
    %p735 = scmp.eq.s32.totalorder %s71, 3
    %p736 = por %p734, %p735
    %p738 = scmp.ne.s32.totalorder %s723, %s737
    %p739 = scmp.eq.s32.totalorder %s71, 0
    %p740 = por %p738, %p739
    %s742 = sadd.s32 %s741, 1
    %p745 = scmp.eq.s32.totalorder %s65, 3
    %p746 = scmp.ne.s32.totalorder %s741, %s743
    %p747 = scmp.eq.s32.totalorder %s65, 0
    %p748 = por %p746, %p747
    %p749 = scmp.ne.s32.totalorder %s741, %s743
    %p750 = scmp.eq.s32.totalorder %s70, 3
    %p751 = por %p749, %p750
    %p752 = scmp.ne.s32.totalorder %s743, %s744
    %p753 = scmp.eq.s32.totalorder %s70, 0
    %p754 = por %p752, %p753
    %p755 = scmp.ne.s32.totalorder %s743, %s744
    %p756 = scmp.eq.s32.totalorder %s71, 3
    %p757 = por %p755, %p756
    %p759 = scmp.ne.s32.totalorder %s744, %s758
    %p760 = scmp.eq.s32.totalorder %s71, 0
    %p761 = por %p759, %p760
    %s763 = sadd.s32 %s762, 1
    %p766 = scmp.eq.s32.totalorder %s65, 3
    %p767 = scmp.ne.s32.totalorder %s762, %s764
    %p768 = scmp.eq.s32.totalorder %s65, 0
    %p769 = por %p767, %p768
    %p770 = scmp.ne.s32.totalorder %s762, %s764
    %p771 = scmp.eq.s32.totalorder %s70, 3
    %p772 = por %p770, %p771
    %p773 = scmp.ne.s32.totalorder %s764, %s765
    %p774 = scmp.eq.s32.totalorder %s70, 0
    %p775 = por %p773, %p774
    %p776 = scmp.ne.s32.totalorder %s764, %s765
    %p777 = scmp.eq.s32.totalorder %s71, 3
    %p778 = por %p776, %p777
    %p780 = scmp.ne.s32.totalorder %s765, %s779
    %p781 = scmp.eq.s32.totalorder %s71, 0
    %p782 = por %p780, %p781
    %p783 = scmp.le.s32.totalorder 1, %s65
    %p784 = scmp.lt.s32.totalorder %s65, 5
    %p785 = pnand %p783, %p784
    %p786 = pneg %p785
    // Predicated region
    $region9: #{temporal_transformer_forward.1} parent=5 // pred_check
      _
    $region10: #{temporal_transformer_forward.1} parent=5 // pred_check_branch
      %788 = sbr.rel (%p785) target = $region12
    $region11: #{temporal_transformer_forward.1} parent=5 // pred_region
      %s789 = ssub.s32 %s65, 1
      // Predicated region
      $region13: #{temporal_transformer_forward.1} parent=11 // pred_check
        %p790 = pneg %p86
      $region14: #{temporal_transformer_forward.1} parent=11 // pred_check_branch
        %792 = sbr.rel (%p790) target = $region16
      $region15: #{temporal_transformer_forward.1} parent=11 // pred_region
        _
      $region16: #{temporal_transformer_forward.1} parent=11 // pred_fallthru
        _
      // Predicated region
      $region17: #{temporal_transformer_forward.1} parent=11 // pred_check
        %p793 = pneg %p107
      $region18: #{temporal_transformer_forward.1} parent=11 // pred_check_branch
        %795 = sbr.rel (%p793) target = $region20
      $region19: #{temporal_transformer_forward.1} parent=11 // pred_region
        _
      $region20: #{temporal_transformer_forward.1} parent=11 // pred_fallthru
        _
      // Predicated region
      $region21: #{temporal_transformer_forward.1} parent=11 // pred_check
        %p796 = pneg %p128
      $region22: #{temporal_transformer_forward.1} parent=11 // pred_check_branch
        %798 = sbr.rel (%p796) target = $region24
      $region23: #{temporal_transformer_forward.1} parent=11 // pred_region
        _
      $region24: #{temporal_transformer_forward.1} parent=11 // pred_fallthru
        _
      // Predicated region
      $region25: #{temporal_transformer_forward.1} parent=11 // pred_check
        %p799 = pneg %p149
      $region26: #{temporal_transformer_forward.1} parent=11 // pred_check_branch
        %801 = sbr.rel (%p799) target = $region28
      $region27: #{temporal_transformer_forward.1} parent=11 // pred_region
        _
      $region28: #{temporal_transformer_forward.1} parent=11 // pred_fallthru
        _
      // Predicated region
      $region29: #{temporal_transformer_forward.1} parent=11 // pred_check
        %p802 = pneg %p170
      $region30: #{temporal_transformer_forward.1} parent=11 // pred_check_branch
        %804 = sbr.rel (%p802) target = $region32
      $region31: #{temporal_transformer_forward.1} parent=11 // pred_region
        _
      $region32: #{temporal_transformer_forward.1} parent=11 // pred_fallthru
        _
      // Predicated region
      $region33: #{temporal_transformer_forward.1} parent=11 // pred_check
        %p805 = pneg %p191
      $region34: #{temporal_transformer_forward.1} parent=11 // pred_check_branch
        %807 = sbr.rel (%p805) target = $region36
      $region35: #{temporal_transformer_forward.1} parent=11 // pred_region
        _
      $region36: #{temporal_transformer_forward.1} parent=11 // pred_fallthru
        _
      // Predicated region
      $region37: #{temporal_transformer_forward.1} parent=11 // pred_check
        %p808 = pneg %p212
      $region38: #{temporal_transformer_forward.1} parent=11 // pred_check_branch
        %810 = sbr.rel (%p808) target = $region40
      $region39: #{temporal_transformer_forward.1} parent=11 // pred_region
        _
      $region40: #{temporal_transformer_forward.1} parent=11 // pred_fallthru
        _
      // Predicated region
      $region41: #{temporal_transformer_forward.1} parent=11 // pred_check
        %p811 = pneg %p233
      $region42: #{temporal_transformer_forward.1} parent=11 // pred_check_branch
        %813 = sbr.rel (%p811) target = $region44
      $region43: #{temporal_transformer_forward.1} parent=11 // pred_region
        _
      $region44: #{temporal_transformer_forward.1} parent=11 // pred_fallthru
        _
      // Predicated region
      $region45: #{temporal_transformer_forward.1} parent=11 // pred_check
        %p814 = pneg %p254
      $region46: #{temporal_transformer_forward.1} parent=11 // pred_check_branch
        %816 = sbr.rel (%p814) target = $region48
      $region47: #{temporal_transformer_forward.1} parent=11 // pred_region
        _
      $region48: #{temporal_transformer_forward.1} parent=11 // pred_fallthru
        _
      // Predicated region
      $region49: #{temporal_transformer_forward.1} parent=11 // pred_check
        %p817 = pneg %p275
      $region50: #{temporal_transformer_forward.1} parent=11 // pred_check_branch
        %819 = sbr.rel (%p817) target = $region52
      $region51: #{temporal_transformer_forward.1} parent=11 // pred_region
        _
      $region52: #{temporal_transformer_forward.1} parent=11 // pred_fallthru
        _
      // Predicated region
      $region53: #{temporal_transformer_forward.1} parent=11 // pred_check
        %p820 = pneg %p296
      $region54: #{temporal_transformer_forward.1} parent=11 // pred_check_branch
        %822 = sbr.rel (%p820) target = $region56
      $region55: #{temporal_transformer_forward.1} parent=11 // pred_region
        _
      $region56: #{temporal_transformer_forward.1} parent=11 // pred_fallthru
        _
      // Predicated region
      $region57: #{temporal_transformer_forward.1} parent=11 // pred_check
        %p823 = pneg %p733
      $region58: #{temporal_transformer_forward.1} parent=11 // pred_check_branch
        %825 = sbr.rel (%p823) target = $region60
      $region59: #{temporal_transformer_forward.1} parent=11 // pred_region
        _
      $region60: #{temporal_transformer_forward.1} parent=11 // pred_fallthru
        _
      // Predicated region
      $region61: #{temporal_transformer_forward.1} parent=11 // pred_check
        %p826 = pneg %p754
      $region62: #{temporal_transformer_forward.1} parent=11 // pred_check_branch
        %828 = sbr.rel (%p826) target = $region64
      $region63: #{temporal_transformer_forward.1} parent=11 // pred_region
        _
      $region64: #{temporal_transformer_forward.1} parent=11 // pred_fallthru
        _
    $region12: #{temporal_transformer_forward.1} parent=5 // pred_fallthru
      _
    %p829 = scmp.lt.s32.totalorder %s65, 4
    // Predicated region
    $region65: #{temporal_transformer_forward.1} parent=5 // pred_check
      %p830 = pneg %p829
    $region66: #{temporal_transformer_forward.1} parent=5 // pred_check_branch
      %832 = sbr.rel (%p830) target = $region68
    $region67: #{temporal_transformer_forward.1} parent=5 // pred_region
      // Predicated region
      $region69: #{temporal_transformer_forward.1} parent=67 // pred_check
        %p833 = pneg %p316
      $region70: #{temporal_transformer_forward.1} parent=67 // pred_check_branch
        %835 = sbr.rel (%p833) target = $region72
      $region71: #{temporal_transformer_forward.1} parent=67 // pred_region
        %p836 = scmp.lt.s32.totalorder %s65, 3
        %s837 = scalar_select %p836, %s65, 3
        %s838 = smul.addr %s837, 4
        %s839 = smul.addr %s838, 4
        %s840 = scalar_lea.vmem %s23, %s839
      $region72: #{temporal_transformer_forward.1} parent=67 // pred_fallthru
        _
      // Predicated region
      $region73: #{temporal_transformer_forward.1} parent=67 // pred_check
        %p841 = pneg %p342
      $region74: #{temporal_transformer_forward.1} parent=67 // pred_check_branch
        %843 = sbr.rel (%p841) target = $region76
      $region75: #{temporal_transformer_forward.1} parent=67 // pred_region
        %p844 = scmp.lt.s32.totalorder %s65, 3
        %s845 = scalar_select %p844, %s65, 3
        %s846 = smul.addr %s845, 4
        %s847 = smul.addr %s846, 4
        %s848 = scalar_lea.vmem %s25, %s847
      $region76: #{temporal_transformer_forward.1} parent=67 // pred_fallthru
        _
      // Predicated region
      $region77: #{temporal_transformer_forward.1} parent=67 // pred_check
        %p849 = pneg %p368
      $region78: #{temporal_transformer_forward.1} parent=67 // pred_check_branch
        %851 = sbr.rel (%p849) target = $region80
      $region79: #{temporal_transformer_forward.1} parent=67 // pred_region
        %p852 = scmp.lt.s32.totalorder %s65, 3
        %s853 = scalar_select %p852, %s65, 3
        %s854 = smul.addr %s853, 4
        %s855 = smul.addr %s854, 4
        %s856 = scalar_lea.vmem %s27, %s855
      $region80: #{temporal_transformer_forward.1} parent=67 // pred_fallthru
        _
      // Predicated region
      $region81: #{temporal_transformer_forward.1} parent=67 // pred_check
        %p857 = pneg %p394
      $region82: #{temporal_transformer_forward.1} parent=67 // pred_check_branch
        %859 = sbr.rel (%p857) target = $region84
      $region83: #{temporal_transformer_forward.1} parent=67 // pred_region
        %p860 = scmp.lt.s32.totalorder %s65, 3
        %s861 = scalar_select %p860, %s65, 3
        %s862 = scalar_lea.vmem %s29, %s861
      $region84: #{temporal_transformer_forward.1} parent=67 // pred_fallthru
        _
      // Predicated region
      $region85: #{temporal_transformer_forward.1} parent=67 // pred_check
        %p863 = pneg %p420
      $region86: #{temporal_transformer_forward.1} parent=67 // pred_check_branch
        %865 = sbr.rel (%p863) target = $region88
      $region87: #{temporal_transformer_forward.1} parent=67 // pred_region
        %p866 = scmp.lt.s32.totalorder %s65, 3
        %s867 = scalar_select %p866, %s65, 3
        %s868 = scalar_lea.vmem %s31, %s867
      $region88: #{temporal_transformer_forward.1} parent=67 // pred_fallthru
        _
      // Predicated region
      $region89: #{temporal_transformer_forward.1} parent=67 // pred_check
        %p869 = pneg %p446
      $region90: #{temporal_transformer_forward.1} parent=67 // pred_check_branch
        %871 = sbr.rel (%p869) target = $region92
      $region91: #{temporal_transformer_forward.1} parent=67 // pred_region
        %p872 = scmp.lt.s32.totalorder %s65, 3
        %s873 = scalar_select %p872, %s65, 3
        %s874 = scalar_lea.vmem %s33, %s873
      $region92: #{temporal_transformer_forward.1} parent=67 // pred_fallthru
        _
      // Predicated region
      $region93: #{temporal_transformer_forward.1} parent=67 // pred_check
        %p875 = pneg %p472
      $region94: #{temporal_transformer_forward.1} parent=67 // pred_check_branch
        %877 = sbr.rel (%p875) target = $region96
      $region95: #{temporal_transformer_forward.1} parent=67 // pred_region
        %p878 = scmp.lt.s32.totalorder %s65, 3
        %s879 = scalar_select %p878, %s65, 3
        %s880 = smul.addr %s879, 4
        %s881 = smul.addr %s880, 4
        %s882 = scalar_lea.vmem %s35, %s881
      $region96: #{temporal_transformer_forward.1} parent=67 // pred_fallthru
        _
      // Predicated region
      $region97: #{temporal_transformer_forward.1} parent=67 // pred_check
        %p883 = pneg %p498
      $region98: #{temporal_transformer_forward.1} parent=67 // pred_check_branch
        %885 = sbr.rel (%p883) target = $region100
      $region99: #{temporal_transformer_forward.1} parent=67 // pred_region
        %p886 = scmp.lt.s32.totalorder %s65, 3
        %s887 = scalar_select %p886, %s65, 3
        %s888 = scalar_lea.vmem %s37, %s887
      $region100: #{temporal_transformer_forward.1} parent=67 // pred_fallthru
        _
      // Predicated region
      $region101: #{temporal_transformer_forward.1} parent=67 // pred_check
        %p889 = pneg %p524
      $region102: #{temporal_transformer_forward.1} parent=67 // pred_check_branch
        %891 = sbr.rel (%p889) target = $region104
      $region103: #{temporal_transformer_forward.1} parent=67 // pred_region
        %p892 = scmp.lt.s32.totalorder %s65, 3
        %s893 = scalar_select %p892, %s65, 3
        %s894 = scalar_lea.vmem %s39, %s893
      $region104: #{temporal_transformer_forward.1} parent=67 // pred_fallthru
        _
      // Predicated region
      $region105: #{temporal_transformer_forward.1} parent=67 // pred_check
        %p895 = pneg %p550
      $region106: #{temporal_transformer_forward.1} parent=67 // pred_check_branch
        %897 = sbr.rel (%p895) target = $region108
      $region107: #{temporal_transformer_forward.1} parent=67 // pred_region
        %p898 = scmp.lt.s32.totalorder %s65, 3
        %s899 = scalar_select %p898, %s65, 3
        %s900 = scalar_lea.vmem %s41, %s899
      $region108: #{temporal_transformer_forward.1} parent=67 // pred_fallthru
        _
      // Predicated region
      $region109: #{temporal_transformer_forward.1} parent=67 // pred_check
        %p901 = pneg %p576
      $region110: #{temporal_transformer_forward.1} parent=67 // pred_check_branch
        %903 = sbr.rel (%p901) target = $region112
      $region111: #{temporal_transformer_forward.1} parent=67 // pred_region
        %p904 = scmp.lt.s32.totalorder %s65, 3
        %s905 = scalar_select %p904, %s65, 3
        %s906 = smul.addr %s905, 64
        %s907 = smul.addr %s906, 4
        %s908 = scalar_lea.vmem %s43, %s907
      $region112: #{temporal_transformer_forward.1} parent=67 // pred_fallthru
        _
      // Predicated region
      $region113: #{temporal_transformer_forward.1} parent=67 // pred_check
        %p909 = pneg %p602
      $region114: #{temporal_transformer_forward.1} parent=67 // pred_check_branch
        %911 = sbr.rel (%p909) target = $region116
      $region115: #{temporal_transformer_forward.1} parent=67 // pred_region
        %p912 = scmp.lt.s32.totalorder %s65, 3
        %s913 = scalar_select %p912, %s65, 3
        %s914 = smul.addr %s913, 16
        %s915 = scalar_lea.vmem %s45, %s914
      $region116: #{temporal_transformer_forward.1} parent=67 // pred_fallthru
        _
      // Predicated region
      $region117: #{temporal_transformer_forward.1} parent=67 // pred_check
        %p916 = pneg %p628
      $region118: #{temporal_transformer_forward.1} parent=67 // pred_check_branch
        %918 = sbr.rel (%p916) target = $region120
      $region119: #{temporal_transformer_forward.1} parent=67 // pred_region
        %p919 = scmp.lt.s32.totalorder %s65, 3
        %s920 = scalar_select %p919, %s65, 3
        %s921 = smul.addr %s920, 256
        %s922 = smul.addr %s921, 4
        %s923 = scalar_lea.vmem %s47, %s922
      $region120: #{temporal_transformer_forward.1} parent=67 // pred_fallthru
        _
      // Predicated region
      $region121: #{temporal_transformer_forward.1} parent=67 // pred_check
        %p924 = pneg %p654
      $region122: #{temporal_transformer_forward.1} parent=67 // pred_check_branch
        %926 = sbr.rel (%p924) target = $region124
      $region123: #{temporal_transformer_forward.1} parent=67 // pred_region
        %p927 = scmp.lt.s32.totalorder %s65, 3
        %s928 = scalar_select %p927, %s65, 3
        %s929 = scalar_lea.vmem %s49, %s928
      $region124: #{temporal_transformer_forward.1} parent=67 // pred_fallthru
        _
      // Predicated region
      $region125: #{temporal_transformer_forward.1} parent=67 // pred_check
        %p930 = pneg %p680
      $region126: #{temporal_transformer_forward.1} parent=67 // pred_check_branch
        %932 = sbr.rel (%p930) target = $region128
      $region127: #{temporal_transformer_forward.1} parent=67 // pred_region
        %p933 = scmp.lt.s32.totalorder %s65, 3
        %s934 = scalar_select %p933, %s65, 3
        %s935 = scalar_lea.vmem %s51, %s934
      $region128: #{temporal_transformer_forward.1} parent=67 // pred_fallthru
        _
      // Predicated region
      $region129: #{temporal_transformer_forward.1} parent=67 // pred_check
        %p936 = pneg %p706
      $region130: #{temporal_transformer_forward.1} parent=67 // pred_check_branch
        %938 = sbr.rel (%p936) target = $region132
      $region131: #{temporal_transformer_forward.1} parent=67 // pred_region
        %p939 = scmp.lt.s32.totalorder %s65, 3
        %s940 = scalar_select %p939, %s65, 3
        %s941 = scalar_lea.vmem %s53, %s940
      $region132: #{temporal_transformer_forward.1} parent=67 // pred_fallthru
        _
    $region68: #{temporal_transformer_forward.1} parent=5 // pred_fallthru
      _
    %p942 = scmp.le.s32.totalorder 1, %s65
    %p943 = scmp.lt.s32.totalorder %s65, 5
    %p944 = pnand %p942, %p943
    %p945 = pneg %p944
    // Predicated region
    $region133: #{temporal_transformer_forward.1} parent=5 // pred_check
      _
    $region134: #{temporal_transformer_forward.1} parent=5 // pred_check_branch
      %947 = sbr.rel (%p944) target = $region136
    $region135: #{temporal_transformer_forward.1} parent=5 // pred_region
      %s948 = ssub.s32 %s65, 1
      %p949 = pneg %p86
      %p950 = pneg %p83
      %p951 = pneg %p107
      %p952 = pneg %p104
      %p953 = pneg %p128
      %p954 = pneg %p125
      %p955 = pneg %p149
      %p956 = pneg %p146
      %p957 = pneg %p170
      %p958 = pneg %p167
      %p959 = pneg %p191
      %p960 = pneg %p188
      %p961 = pneg %p212
      %p962 = pneg %p209
      %p963 = pneg %p233
      %p964 = pneg %p230
      %p965 = pneg %p254
      %p966 = pneg %p251
      %p967 = pneg %p275
      %p968 = pneg %p272
      %p969 = pneg %p296
      %p970 = pneg %p293
      %p971 = scmp.lt.s32.totalorder %s70, 3
      %s972 = scalar_select %p971, %s70, 3
      %s973 = smul.addr %s972, 4
      %s974 = smul.addr %s973, 4
      %s975 = scalar_lea.vmem %s23, %s974
      %p976 = pneg %p322
      %p977 = pneg %p319
      %p978 = scmp.lt.s32.totalorder %s70, 3
      %s979 = scalar_select %p978, %s70, 3
      %s980 = smul.addr %s979, 4
      %s981 = smul.addr %s980, 4
      %s982 = scalar_lea.vmem %s25, %s981
      %p983 = pneg %p348
      %p984 = pneg %p345
      %p985 = scmp.lt.s32.totalorder %s70, 3
      %s986 = scalar_select %p985, %s70, 3
      %s987 = smul.addr %s986, 4
      %s988 = smul.addr %s987, 4
      %s989 = scalar_lea.vmem %s27, %s988
      %p990 = pneg %p374
      %p991 = pneg %p371
      %p992 = scmp.lt.s32.totalorder %s70, 3
      %s993 = scalar_select %p992, %s70, 3
      %s994 = scalar_lea.vmem %s29, %s993
      %p995 = pneg %p400
      %p996 = pneg %p397
      %p997 = scmp.lt.s32.totalorder %s70, 3
      %s998 = scalar_select %p997, %s70, 3
      %s999 = scalar_lea.vmem %s31, %s998
      %p1000 = pneg %p426
      %p1001 = pneg %p423
      %p1002 = scmp.lt.s32.totalorder %s70, 3
      %s1003 = scalar_select %p1002, %s70, 3
      %s1004 = scalar_lea.vmem %s33, %s1003
      %p1005 = pneg %p452
      %p1006 = pneg %p449
      %p1007 = scmp.lt.s32.totalorder %s70, 3
      %s1008 = scalar_select %p1007, %s70, 3
      %s1009 = smul.addr %s1008, 4
      %s1010 = smul.addr %s1009, 4
      %s1011 = scalar_lea.vmem %s35, %s1010
      %p1012 = pneg %p478
      %p1013 = pneg %p475
      %p1014 = scmp.lt.s32.totalorder %s70, 3
      %s1015 = scalar_select %p1014, %s70, 3
      %s1016 = scalar_lea.vmem %s37, %s1015
      %p1017 = pneg %p504
      %p1018 = pneg %p501
      %p1019 = scmp.lt.s32.totalorder %s70, 3
      %s1020 = scalar_select %p1019, %s70, 3
      %s1021 = scalar_lea.vmem %s39, %s1020
      %p1022 = pneg %p530
      %p1023 = pneg %p527
      %p1024 = scmp.lt.s32.totalorder %s70, 3
      %s1025 = scalar_select %p1024, %s70, 3
      %s1026 = scalar_lea.vmem %s41, %s1025
      %p1027 = pneg %p556
      %p1028 = pneg %p553
      %p1029 = scmp.lt.s32.totalorder %s70, 3
      %s1030 = scalar_select %p1029, %s70, 3
      %s1031 = smul.addr %s1030, 64
      %s1032 = smul.addr %s1031, 4
      %s1033 = scalar_lea.vmem %s43, %s1032
      %p1034 = pneg %p582
      %p1035 = pneg %p579
      %p1036 = scmp.lt.s32.totalorder %s70, 3
      %s1037 = scalar_select %p1036, %s70, 3
      %s1038 = smul.addr %s1037, 16
      %s1039 = scalar_lea.vmem %s45, %s1038
      %p1040 = pneg %p608
      %p1041 = pneg %p605
      %p1042 = scmp.lt.s32.totalorder %s70, 3
      %s1043 = scalar_select %p1042, %s70, 3
      %s1044 = smul.addr %s1043, 256
      %s1045 = smul.addr %s1044, 4
      %s1046 = scalar_lea.vmem %s47, %s1045
      %p1047 = pneg %p634
      %p1048 = pneg %p631
      %p1049 = scmp.lt.s32.totalorder %s70, 3
      %s1050 = scalar_select %p1049, %s70, 3
      %s1051 = scalar_lea.vmem %s49, %s1050
      %p1052 = pneg %p660
      %p1053 = pneg %p657
      %p1054 = scmp.lt.s32.totalorder %s70, 3
      %s1055 = scalar_select %p1054, %s70, 3
      %s1056 = scalar_lea.vmem %s51, %s1055
      %p1057 = pneg %p686
      %p1058 = pneg %p683
      %p1059 = scmp.lt.s32.totalorder %s70, 3
      %s1060 = scalar_select %p1059, %s70, 3
      %s1061 = scalar_lea.vmem %s53, %s1060
      %p1062 = pneg %p712
      %p1063 = pneg %p709
      %p1064 = pneg %p733
      %p1065 = pneg %p730
      %p1066 = pneg %p754
      %p1067 = pneg %p751
      %p1068 = pneg %p775
      %p1069 = pneg %p772
      %p1070 = scmp.lt.s32.totalorder %s70, 3
      %s1071 = scalar_select %p1070, %s70, 3
      %s1072 = smul.addr %s1071, 4
      %s1073 = smul.addr %s1072, 4
      %s1074 = scalar_lea.vmem %s23, %s1073
      %p1075 = scmp.lt.s32.totalorder %s70, 3
      %s1076 = scalar_select %p1075, %s70, 3
      %s1077 = smul.addr %s1076, 4
      %s1078 = smul.addr %s1077, 4
      %s1079 = scalar_lea.vmem %s25, %s1078
      %p1080 = scmp.lt.s32.totalorder %s70, 3
      %s1081 = scalar_select %p1080, %s70, 3
      %s1082 = smul.addr %s1081, 4
      %s1083 = smul.addr %s1082, 4
      %s1084 = scalar_lea.vmem %s27, %s1083
      %p1085 = scmp.lt.s32.totalorder %s70, 3
      %s1086 = scalar_select %p1085, %s70, 3
      %s1087 = scalar_lea.vmem %s29, %s1086
      %p1088 = scmp.lt.s32.totalorder %s70, 3
      %s1089 = scalar_select %p1088, %s70, 3
      %s1090 = scalar_lea.vmem %s31, %s1089
      %p1091 = scmp.lt.s32.totalorder %s70, 3
      %s1092 = scalar_select %p1091, %s70, 3
      %s1093 = scalar_lea.vmem %s33, %s1092
      %p1094 = scmp.lt.s32.totalorder %s70, 3
      %s1095 = scalar_select %p1094, %s70, 3
      %s1096 = smul.addr %s1095, 4
      %s1097 = smul.addr %s1096, 4
      %s1098 = scalar_lea.vmem %s35, %s1097
      %p1099 = scmp.lt.s32.totalorder %s70, 3
      %s1100 = scalar_select %p1099, %s70, 3
      %s1101 = scalar_lea.vmem %s37, %s1100
      %p1102 = scmp.lt.s32.totalorder %s70, 3
      %s1103 = scalar_select %p1102, %s70, 3
      %s1104 = scalar_lea.vmem %s39, %s1103
      %p1105 = scmp.lt.s32.totalorder %s70, 3
      %s1106 = scalar_select %p1105, %s70, 3
      %s1107 = scalar_lea.vmem %s41, %s1106
      %p1108 = scmp.lt.s32.totalorder %s70, 3
      %s1109 = scalar_select %p1108, %s70, 3
      %s1110 = smul.addr %s1109, 64
      %s1111 = smul.addr %s1110, 4
      %s1112 = scalar_lea.vmem %s43, %s1111
      %p1113 = scmp.lt.s32.totalorder %s70, 3
      %s1114 = scalar_select %p1113, %s70, 3
      %s1115 = smul.addr %s1114, 16
      %s1116 = scalar_lea.vmem %s45, %s1115
      %p1117 = scmp.lt.s32.totalorder %s70, 3
      %s1118 = scalar_select %p1117, %s70, 3
      %s1119 = smul.addr %s1118, 256
      %s1120 = smul.addr %s1119, 4
      %s1121 = scalar_lea.vmem %s47, %s1120
      %p1122 = scmp.lt.s32.totalorder %s70, 3
      %s1123 = scalar_select %p1122, %s70, 3
      %s1124 = scalar_lea.vmem %s49, %s1123
      %p1125 = scmp.lt.s32.totalorder %s70, 3
      %s1126 = scalar_select %p1125, %s70, 3
      %s1127 = scalar_lea.vmem %s51, %s1126
      %p1128 = scmp.lt.s32.totalorder %s70, 3
      %s1129 = scalar_select %p1128, %s70, 3
      %s1130 = scalar_lea.vmem %s53, %s1129
      %p1132 = scmp.eq.s32.totalorder %s70, 0
      // Predicated region
      $region137: #{temporal_transformer_forward.1} parent=135 // pred_check
        %p1133 = pneg %p1132
      $region138: #{temporal_transformer_forward.1} parent=135 // pred_check_branch
        %1135 = sbr.rel (%p1133) target = $region140
      $region139: #{temporal_transformer_forward.1} parent=135 // pred_region
        %v1136 = vld [vmem:[%s1] sm:$0xff]
        %v1137 = vld [vmem:[%s1 + $0x8] sm:$0xff]
        %v1138 = vld [vmem:[%s1 + $0x10] sm:$0xff]
        %v1139 = vld [vmem:[%s1 + $0x18] sm:$0x3f]
        %v1140 = vlaneseq
        %v1141 = vshrl.u32 %v1140, 7
        %v1142 = vadd.s32 %v1141, 8
        %v1143 = vadd.s32 %v1141, 16
        %v1144 = vadd.s32 %v1141, 24
        %v1145 = vadd.s32 %v1141, 32
        %v1146 = vadd.s32 %v1141, 40
        %v1147 = vadd.s32 %v1141, 48
        %v1148 = vadd.s32 %v1141, 56
        %v1149 = vadd.s32 %v1141, 64
        %v1150 = vadd.s32 %v1141, 72
        %v1151 = vadd.s32 %v1141, 80
        %v1152 = vadd.s32 %v1141, 88
        %v1153 = vadd.s32 %v1141, 96
        %v1154 = vadd.s32 %v1141, 104
        %v1155 = vadd.s32 %v1141, 112
        %v1156 = vlaneseq
        %v1157 = vand.u32 %v1156, 127
        %vm1158 = vcmp.ge.s32.totalorder %v1141, 30
        %vm1159 = vcmp.ge.s32.totalorder %v1142, 30
        %vm1160 = vcmp.ge.s32.totalorder %v1143, 30
        %vm1161 = vcmp.ge.s32.totalorder %v1144, 30
        %vm1162 = vcmp.ge.s32.totalorder %v1145, 30
        %vm1163 = vcmp.ge.s32.totalorder %v1146, 30
        %vm1164 = vcmp.ge.s32.totalorder %v1147, 30
        %vm1165 = vcmp.ge.s32.totalorder %v1148, 30
        %vm1166 = vcmp.ge.s32.totalorder %v1149, 30
        %vm1167 = vcmp.ge.s32.totalorder %v1150, 30
        %vm1168 = vcmp.ge.s32.totalorder %v1151, 30
        %vm1169 = vcmp.ge.s32.totalorder %v1152, 30
        %vm1170 = vcmp.ge.s32.totalorder %v1153, 30
        %vm1171 = vcmp.ge.s32.totalorder %v1154, 30
        %vm1172 = vcmp.ge.s32.totalorder %v1155, 30
        %v1173 = vsel %vm1158, 1, 0
        %v1174 = vsel %vm1159, 1, 0
        %v1175 = vsel %vm1160, 1, 0
        %v1176 = vsel %vm1161, 1, 0
        %v1177 = vsel %vm1162, 1, 0
        %v1178 = vsel %vm1163, 1, 0
        %v1179 = vsel %vm1164, 1, 0
        %v1180 = vsel %vm1165, 1, 0
        %v1181 = vsel %vm1166, 1, 0
        %v1182 = vsel %vm1167, 1, 0
        %v1183 = vsel %vm1168, 1, 0
        %v1184 = vsel %vm1169, 1, 0
        %v1185 = vsel %vm1170, 1, 0
        %v1186 = vsel %vm1171, 1, 0
        %v1187 = vsel %vm1172, 1, 0
        %vm1188 = vcmp.ge.s32.totalorder %v1141, 60
        %vm1189 = vcmp.ge.s32.totalorder %v1142, 60
        %vm1190 = vcmp.ge.s32.totalorder %v1143, 60
        %vm1191 = vcmp.ge.s32.totalorder %v1144, 60
        %vm1192 = vcmp.ge.s32.totalorder %v1145, 60
        %vm1193 = vcmp.ge.s32.totalorder %v1146, 60
        %vm1194 = vcmp.ge.s32.totalorder %v1147, 60
        %vm1195 = vcmp.ge.s32.totalorder %v1148, 60
        %vm1196 = vcmp.ge.s32.totalorder %v1149, 60
        %vm1197 = vcmp.ge.s32.totalorder %v1150, 60
        %vm1198 = vcmp.ge.s32.totalorder %v1151, 60
        %vm1199 = vcmp.ge.s32.totalorder %v1152, 60
        %vm1200 = vcmp.ge.s32.totalorder %v1153, 60
        %vm1201 = vcmp.ge.s32.totalorder %v1154, 60
        %vm1202 = vcmp.ge.s32.totalorder %v1155, 60
        %v1203 = vsel %vm1188, 1, 0
        %v1204 = vsel %vm1189, 1, 0
        %v1205 = vsel %vm1190, 1, 0
        %v1206 = vsel %vm1191, 1, 0
        %v1207 = vsel %vm1192, 1, 0
        %v1208 = vsel %vm1193, 1, 0
        %v1209 = vsel %vm1194, 1, 0
        %v1210 = vsel %vm1195, 1, 0
        %v1211 = vsel %vm1196, 1, 0
        %v1212 = vsel %vm1197, 1, 0
        %v1213 = vsel %vm1198, 1, 0
        %v1214 = vsel %vm1199, 1, 0
        %v1215 = vsel %vm1200, 1, 0
        %v1216 = vsel %vm1201, 1, 0
        %v1217 = vsel %vm1202, 1, 0
        %v1218 = vadd.s32 %v1173, %v1203
        %v1219 = vadd.s32 %v1174, %v1204
        %v1220 = vadd.s32 %v1175, %v1205
        %v1221 = vadd.s32 %v1176, %v1206
        %v1222 = vadd.s32 %v1177, %v1207
        %v1223 = vadd.s32 %v1178, %v1208
        %v1224 = vadd.s32 %v1179, %v1209
        %v1225 = vadd.s32 %v1180, %v1210
        %v1226 = vadd.s32 %v1181, %v1211
        %v1227 = vadd.s32 %v1182, %v1212
        %v1228 = vadd.s32 %v1183, %v1213
        %v1229 = vadd.s32 %v1184, %v1214
        %v1230 = vadd.s32 %v1185, %v1215
        %v1231 = vadd.s32 %v1186, %v1216
        %v1232 = vadd.s32 %v1187, %v1217
        %vm1233 = vcmp.ge.s32.totalorder %v1141, 90
        %vm1234 = vcmp.ge.s32.totalorder %v1142, 90
        %vm1235 = vcmp.ge.s32.totalorder %v1143, 90
        %vm1236 = vcmp.ge.s32.totalorder %v1144, 90
        %vm1237 = vcmp.ge.s32.totalorder %v1145, 90
        %vm1238 = vcmp.ge.s32.totalorder %v1146, 90
        %vm1239 = vcmp.ge.s32.totalorder %v1147, 90
        %vm1240 = vcmp.ge.s32.totalorder %v1148, 90
        %vm1241 = vcmp.ge.s32.totalorder %v1149, 90
        %vm1242 = vcmp.ge.s32.totalorder %v1150, 90
        %vm1243 = vcmp.ge.s32.totalorder %v1151, 90
        %vm1244 = vcmp.ge.s32.totalorder %v1152, 90
        %vm1245 = vcmp.ge.s32.totalorder %v1153, 90
        %vm1246 = vcmp.ge.s32.totalorder %v1154, 90
        %vm1247 = vcmp.ge.s32.totalorder %v1155, 90
        %v1248 = vsel %vm1233, 1, 0
        %v1249 = vsel %vm1234, 1, 0
        %v1250 = vsel %vm1235, 1, 0
        %v1251 = vsel %vm1236, 1, 0
        %v1252 = vsel %vm1237, 1, 0
        %v1253 = vsel %vm1238, 1, 0
        %v1254 = vsel %vm1239, 1, 0
        %v1255 = vsel %vm1240, 1, 0
        %v1256 = vsel %vm1241, 1, 0
        %v1257 = vsel %vm1242, 1, 0
        %v1258 = vsel %vm1243, 1, 0
        %v1259 = vsel %vm1244, 1, 0
        %v1260 = vsel %vm1245, 1, 0
        %v1261 = vsel %vm1246, 1, 0
        %v1262 = vsel %vm1247, 1, 0
        %v1263 = vadd.s32 %v1218, %v1248
        %v1264 = vadd.s32 %v1219, %v1249
        %v1265 = vadd.s32 %v1220, %v1250
        %v1266 = vadd.s32 %v1221, %v1251
        %v1267 = vadd.s32 %v1222, %v1252
        %v1268 = vadd.s32 %v1223, %v1253
        %v1269 = vadd.s32 %v1224, %v1254
        %v1270 = vadd.s32 %v1225, %v1255
        %v1271 = vadd.s32 %v1226, %v1256
        %v1272 = vadd.s32 %v1227, %v1257
        %v1273 = vadd.s32 %v1228, %v1258
        %v1274 = vadd.s32 %v1229, %v1259
        %v1275 = vadd.s32 %v1230, %v1260
        %v1276 = vadd.s32 %v1231, %v1261
        %v1277 = vadd.s32 %v1232, %v1262
        %v1278 = vmul.u32 %v1263, 30
        %v1279 = vmul.u32 %v1264, 30
        %v1280 = vmul.u32 %v1265, 30
        %v1281 = vmul.u32 %v1266, 30
        %v1282 = vmul.u32 %v1267, 30
        %v1283 = vmul.u32 %v1268, 30
        %v1284 = vmul.u32 %v1269, 30
        %v1285 = vmul.u32 %v1270, 30
        %v1286 = vmul.u32 %v1271, 30
        %v1287 = vmul.u32 %v1272, 30
        %v1288 = vmul.u32 %v1273, 30
        %v1289 = vmul.u32 %v1274, 30
        %v1290 = vmul.u32 %v1275, 30
        %v1291 = vmul.u32 %v1276, 30
        %v1292 = vmul.u32 %v1277, 30
        %v1293 = vsub.s32 %v1141, %v1278
        %v1294 = vsub.s32 %v1142, %v1279
        %v1295 = vsub.s32 %v1143, %v1280
        %v1296 = vsub.s32 %v1144, %v1281
        %v1297 = vsub.s32 %v1145, %v1282
        %v1298 = vsub.s32 %v1146, %v1283
        %v1299 = vsub.s32 %v1147, %v1284
        %v1300 = vsub.s32 %v1148, %v1285
        %v1301 = vsub.s32 %v1149, %v1286
        %v1302 = vsub.s32 %v1150, %v1287
        %v1303 = vsub.s32 %v1151, %v1288
        %v1304 = vsub.s32 %v1152, %v1289
        %v1305 = vsub.s32 %v1153, %v1290
        %v1306 = vsub.s32 %v1154, %v1291
        %v1307 = vsub.s32 %v1155, %v1292
        %vm1308 = vcmp.eq.s32.totalorder %v1293, %v1157
        %vm1309 = vcmp.eq.s32.totalorder %v1294, %v1157
        %vm1310 = vcmp.eq.s32.totalorder %v1295, %v1157
        %vm1311 = vcmp.eq.s32.totalorder %v1296, %v1157
        %vm1312 = vcmp.eq.s32.totalorder %v1297, %v1157
        %vm1313 = vcmp.eq.s32.totalorder %v1298, %v1157
        %vm1314 = vcmp.eq.s32.totalorder %v1299, %v1157
        %vm1315 = vcmp.eq.s32.totalorder %v1300, %v1157
        %vm1316 = vcmp.eq.s32.totalorder %v1301, %v1157
        %vm1317 = vcmp.eq.s32.totalorder %v1302, %v1157
        %vm1318 = vcmp.eq.s32.totalorder %v1303, %v1157
        %vm1319 = vcmp.eq.s32.totalorder %v1304, %v1157
        %vm1320 = vcmp.eq.s32.totalorder %v1305, %v1157
        %vm1321 = vcmp.eq.s32.totalorder %v1306, %v1157
        %vm1322 = vcmp.eq.s32.totalorder %v1307, %v1157
        %v1323 = vsel %vm1308, 1.0, 0.0
        %v1324 = vsel %vm1309, 1.0, 0.0
        %v1325 = vsel %vm1310, 1.0, 0.0
        %v1326 = vsel %vm1311, 1.0, 0.0
        %v1327 = vsel %vm1312, 1.0, 0.0
        %v1328 = vsel %vm1313, 1.0, 0.0
        %v1329 = vsel %vm1314, 1.0, 0.0
        %v1330 = vsel %vm1315, 1.0, 0.0
        %v1331 = vsel %vm1316, 1.0, 0.0
        %v1332 = vsel %vm1317, 1.0, 0.0
        %v1333 = vsel %vm1318, 1.0, 0.0
        %v1334 = vsel %vm1319, 1.0, 0.0
        %v1335 = vsel %vm1320, 1.0, 0.0
        %v1336 = vsel %vm1321, 1.0, 0.0
        %v1337 = vsel %vm1322, 1.0, 0.0
        %vm1338 = vcmp.ge.s32.totalorder %v1293, 3
        %vm1339 = vcmp.ge.s32.totalorder %v1294, 3
        %vm1340 = vcmp.ge.s32.totalorder %v1295, 3
        %vm1341 = vcmp.ge.s32.totalorder %v1296, 3
        %vm1342 = vcmp.ge.s32.totalorder %v1297, 3
        %vm1343 = vcmp.ge.s32.totalorder %v1298, 3
        %vm1344 = vcmp.ge.s32.totalorder %v1299, 3
        %vm1345 = vcmp.ge.s32.totalorder %v1300, 3
        %vm1346 = vcmp.ge.s32.totalorder %v1301, 3
        %vm1347 = vcmp.ge.s32.totalorder %v1302, 3
        %vm1348 = vcmp.ge.s32.totalorder %v1303, 3
        %vm1349 = vcmp.ge.s32.totalorder %v1304, 3
        %vm1350 = vcmp.ge.s32.totalorder %v1305, 3
        %vm1351 = vcmp.ge.s32.totalorder %v1306, 3
        %vm1352 = vcmp.ge.s32.totalorder %v1307, 3
        %v1353 = vsel %vm1338, 1, 0
        %v1354 = vsel %vm1339, 1, 0
        %v1355 = vsel %vm1340, 1, 0
        %v1356 = vsel %vm1341, 1, 0
        %v1357 = vsel %vm1342, 1, 0
        %v1358 = vsel %vm1343, 1, 0
        %v1359 = vsel %vm1344, 1, 0
        %v1360 = vsel %vm1345, 1, 0
        %v1361 = vsel %vm1346, 1, 0
        %v1362 = vsel %vm1347, 1, 0
        %v1363 = vsel %vm1348, 1, 0
        %v1364 = vsel %vm1349, 1, 0
        %v1365 = vsel %vm1350, 1, 0
        %v1366 = vsel %vm1351, 1, 0
        %v1367 = vsel %vm1352, 1, 0
        %vm1368 = vcmp.ge.s32.totalorder %v1293, 6
        %vm1369 = vcmp.ge.s32.totalorder %v1294, 6
        %vm1370 = vcmp.ge.s32.totalorder %v1295, 6
        %vm1371 = vcmp.ge.s32.totalorder %v1296, 6
        %vm1372 = vcmp.ge.s32.totalorder %v1297, 6
        %vm1373 = vcmp.ge.s32.totalorder %v1298, 6
        %vm1374 = vcmp.ge.s32.totalorder %v1299, 6
        %vm1375 = vcmp.ge.s32.totalorder %v1300, 6
        %vm1376 = vcmp.ge.s32.totalorder %v1301, 6
        %vm1377 = vcmp.ge.s32.totalorder %v1302, 6
        %vm1378 = vcmp.ge.s32.totalorder %v1303, 6
        %vm1379 = vcmp.ge.s32.totalorder %v1304, 6
        %vm1380 = vcmp.ge.s32.totalorder %v1305, 6
        %vm1381 = vcmp.ge.s32.totalorder %v1306, 6
        %vm1382 = vcmp.ge.s32.totalorder %v1307, 6
        %v1383 = vsel %vm1368, 1, 0
        %v1384 = vsel %vm1369, 1, 0
        %v1385 = vsel %vm1370, 1, 0
        %v1386 = vsel %vm1371, 1, 0
        %v1387 = vsel %vm1372, 1, 0
        %v1388 = vsel %vm1373, 1, 0
        %v1389 = vsel %vm1374, 1, 0
        %v1390 = vsel %vm1375, 1, 0
        %v1391 = vsel %vm1376, 1, 0
        %v1392 = vsel %vm1377, 1, 0
        %v1393 = vsel %vm1378, 1, 0
        %v1394 = vsel %vm1379, 1, 0
        %v1395 = vsel %vm1380, 1, 0
        %v1396 = vsel %vm1381, 1, 0
        %v1397 = vsel %vm1382, 1, 0
        %v1398 = vadd.s32 %v1353, %v1383
        %v1399 = vadd.s32 %v1354, %v1384
        %v1400 = vadd.s32 %v1355, %v1385
        %v1401 = vadd.s32 %v1356, %v1386
        %v1402 = vadd.s32 %v1357, %v1387
        %v1403 = vadd.s32 %v1358, %v1388
        %v1404 = vadd.s32 %v1359, %v1389
        %v1405 = vadd.s32 %v1360, %v1390
        %v1406 = vadd.s32 %v1361, %v1391
        %v1407 = vadd.s32 %v1362, %v1392
        %v1408 = vadd.s32 %v1363, %v1393
        %v1409 = vadd.s32 %v1364, %v1394
        %v1410 = vadd.s32 %v1365, %v1395
        %v1411 = vadd.s32 %v1366, %v1396
        %v1412 = vadd.s32 %v1367, %v1397
        %vm1413 = vcmp.ge.s32.totalorder %v1293, 9
        %vm1414 = vcmp.ge.s32.totalorder %v1294, 9
        %vm1415 = vcmp.ge.s32.totalorder %v1295, 9
        %vm1416 = vcmp.ge.s32.totalorder %v1296, 9
        %vm1417 = vcmp.ge.s32.totalorder %v1297, 9
        %vm1418 = vcmp.ge.s32.totalorder %v1298, 9
        %vm1419 = vcmp.ge.s32.totalorder %v1299, 9
        %vm1420 = vcmp.ge.s32.totalorder %v1300, 9
        %vm1421 = vcmp.ge.s32.totalorder %v1301, 9
        %vm1422 = vcmp.ge.s32.totalorder %v1302, 9
        %vm1423 = vcmp.ge.s32.totalorder %v1303, 9
        %vm1424 = vcmp.ge.s32.totalorder %v1304, 9
        %vm1425 = vcmp.ge.s32.totalorder %v1305, 9
        %vm1426 = vcmp.ge.s32.totalorder %v1306, 9
        %vm1427 = vcmp.ge.s32.totalorder %v1307, 9
        %v1428 = vsel %vm1413, 1, 0
        %v1429 = vsel %vm1414, 1, 0
        %v1430 = vsel %vm1415, 1, 0
        %v1431 = vsel %vm1416, 1, 0
        %v1432 = vsel %vm1417, 1, 0
        %v1433 = vsel %vm1418, 1, 0
        %v1434 = vsel %vm1419, 1, 0
        %v1435 = vsel %vm1420, 1, 0
        %v1436 = vsel %vm1421, 1, 0
        %v1437 = vsel %vm1422, 1, 0
        %v1438 = vsel %vm1423, 1, 0
        %v1439 = vsel %vm1424, 1, 0
        %v1440 = vsel %vm1425, 1, 0
        %v1441 = vsel %vm1426, 1, 0
        %v1442 = vsel %vm1427, 1, 0
        %v1443 = vadd.s32 %v1398, %v1428
        %v1444 = vadd.s32 %v1399, %v1429
        %v1445 = vadd.s32 %v1400, %v1430
        %v1446 = vadd.s32 %v1401, %v1431
        %v1447 = vadd.s32 %v1402, %v1432
        %v1448 = vadd.s32 %v1403, %v1433
        %v1449 = vadd.s32 %v1404, %v1434
        %v1450 = vadd.s32 %v1405, %v1435
        %v1451 = vadd.s32 %v1406, %v1436
        %v1452 = vadd.s32 %v1407, %v1437
        %v1453 = vadd.s32 %v1408, %v1438
        %v1454 = vadd.s32 %v1409, %v1439
        %v1455 = vadd.s32 %v1410, %v1440
        %v1456 = vadd.s32 %v1411, %v1441
        %v1457 = vadd.s32 %v1412, %v1442
        %vm1458 = vcmp.ge.s32.totalorder %v1293, 12
        %vm1459 = vcmp.ge.s32.totalorder %v1294, 12
        %vm1460 = vcmp.ge.s32.totalorder %v1295, 12
        %vm1461 = vcmp.ge.s32.totalorder %v1296, 12
        %vm1462 = vcmp.ge.s32.totalorder %v1297, 12
        %vm1463 = vcmp.ge.s32.totalorder %v1298, 12
        %vm1464 = vcmp.ge.s32.totalorder %v1299, 12
        %vm1465 = vcmp.ge.s32.totalorder %v1300, 12
        %vm1466 = vcmp.ge.s32.totalorder %v1301, 12
        %vm1467 = vcmp.ge.s32.totalorder %v1302, 12
        %vm1468 = vcmp.ge.s32.totalorder %v1303, 12
        %vm1469 = vcmp.ge.s32.totalorder %v1304, 12
        %vm1470 = vcmp.ge.s32.totalorder %v1305, 12
        %vm1471 = vcmp.ge.s32.totalorder %v1306, 12
        %vm1472 = vcmp.ge.s32.totalorder %v1307, 12
        %v1473 = vsel %vm1458, 1, 0
        %v1474 = vsel %vm1459, 1, 0
        %v1475 = vsel %vm1460, 1, 0
        %v1476 = vsel %vm1461, 1, 0
        %v1477 = vsel %vm1462, 1, 0
        %v1478 = vsel %vm1463, 1, 0
        %v1479 = vsel %vm1464, 1, 0
        %v1480 = vsel %vm1465, 1, 0
        %v1481 = vsel %vm1466, 1, 0
        %v1482 = vsel %vm1467, 1, 0
        %v1483 = vsel %vm1468, 1, 0
        %v1484 = vsel %vm1469, 1, 0
        %v1485 = vsel %vm1470, 1, 0
        %v1486 = vsel %vm1471, 1, 0
        %v1487 = vsel %vm1472, 1, 0
        %v1488 = vadd.s32 %v1443, %v1473
        %v1489 = vadd.s32 %v1444, %v1474
        %v1490 = vadd.s32 %v1445, %v1475
        %v1491 = vadd.s32 %v1446, %v1476
        %v1492 = vadd.s32 %v1447, %v1477
        %v1493 = vadd.s32 %v1448, %v1478
        %v1494 = vadd.s32 %v1449, %v1479
        %v1495 = vadd.s32 %v1450, %v1480
        %v1496 = vadd.s32 %v1451, %v1481
        %v1497 = vadd.s32 %v1452, %v1482
        %v1498 = vadd.s32 %v1453, %v1483
        %v1499 = vadd.s32 %v1454, %v1484
        %v1500 = vadd.s32 %v1455, %v1485
        %v1501 = vadd.s32 %v1456, %v1486
        %v1502 = vadd.s32 %v1457, %v1487
        %vm1503 = vcmp.ge.s32.totalorder %v1293, 15
        %vm1504 = vcmp.ge.s32.totalorder %v1294, 15
        %vm1505 = vcmp.ge.s32.totalorder %v1295, 15
        %vm1506 = vcmp.ge.s32.totalorder %v1296, 15
        %vm1507 = vcmp.ge.s32.totalorder %v1297, 15
        %vm1508 = vcmp.ge.s32.totalorder %v1298, 15
        %vm1509 = vcmp.ge.s32.totalorder %v1299, 15
        %vm1510 = vcmp.ge.s32.totalorder %v1300, 15
        %vm1511 = vcmp.ge.s32.totalorder %v1301, 15
        %vm1512 = vcmp.ge.s32.totalorder %v1302, 15
        %vm1513 = vcmp.ge.s32.totalorder %v1303, 15
        %vm1514 = vcmp.ge.s32.totalorder %v1304, 15
        %vm1515 = vcmp.ge.s32.totalorder %v1305, 15
        %vm1516 = vcmp.ge.s32.totalorder %v1306, 15
        %vm1517 = vcmp.ge.s32.totalorder %v1307, 15
        %v1518 = vsel %vm1503, 1, 0
        %v1519 = vsel %vm1504, 1, 0
        %v1520 = vsel %vm1505, 1, 0
        %v1521 = vsel %vm1506, 1, 0
        %v1522 = vsel %vm1507, 1, 0
        %v1523 = vsel %vm1508, 1, 0
        %v1524 = vsel %vm1509, 1, 0
        %v1525 = vsel %vm1510, 1, 0
        %v1526 = vsel %vm1511, 1, 0
        %v1527 = vsel %vm1512, 1, 0
        %v1528 = vsel %vm1513, 1, 0
        %v1529 = vsel %vm1514, 1, 0
        %v1530 = vsel %vm1515, 1, 0
        %v1531 = vsel %vm1516, 1, 0
        %v1532 = vsel %vm1517, 1, 0
        %v1533 = vadd.s32 %v1488, %v1518
        %v1534 = vadd.s32 %v1489, %v1519
        %v1535 = vadd.s32 %v1490, %v1520
        %v1536 = vadd.s32 %v1491, %v1521
        %v1537 = vadd.s32 %v1492, %v1522
        %v1538 = vadd.s32 %v1493, %v1523
        %v1539 = vadd.s32 %v1494, %v1524
        %v1540 = vadd.s32 %v1495, %v1525
        %v1541 = vadd.s32 %v1496, %v1526
        %v1542 = vadd.s32 %v1497, %v1527
        %v1543 = vadd.s32 %v1498, %v1528
        %v1544 = vadd.s32 %v1499, %v1529
        %v1545 = vadd.s32 %v1500, %v1530
        %v1546 = vadd.s32 %v1501, %v1531
        %v1547 = vadd.s32 %v1502, %v1532
        %vm1548 = vcmp.ge.s32.totalorder %v1293, 18
        %vm1549 = vcmp.ge.s32.totalorder %v1294, 18
        %vm1550 = vcmp.ge.s32.totalorder %v1295, 18
        %vm1551 = vcmp.ge.s32.totalorder %v1296, 18
        %vm1552 = vcmp.ge.s32.totalorder %v1297, 18
        %vm1553 = vcmp.ge.s32.totalorder %v1298, 18
        %vm1554 = vcmp.ge.s32.totalorder %v1299, 18
        %vm1555 = vcmp.ge.s32.totalorder %v1300, 18
        %vm1556 = vcmp.ge.s32.totalorder %v1301, 18
        %vm1557 = vcmp.ge.s32.totalorder %v1302, 18
        %vm1558 = vcmp.ge.s32.totalorder %v1303, 18
        %vm1559 = vcmp.ge.s32.totalorder %v1304, 18
        %vm1560 = vcmp.ge.s32.totalorder %v1305, 18
        %vm1561 = vcmp.ge.s32.totalorder %v1306, 18
        %vm1562 = vcmp.ge.s32.totalorder %v1307, 18
        %v1563 = vsel %vm1548, 1, 0
        %v1564 = vsel %vm1549, 1, 0
        %v1565 = vsel %vm1550, 1, 0
        %v1566 = vsel %vm1551, 1, 0
        %v1567 = vsel %vm1552, 1, 0
        %v1568 = vsel %vm1553, 1, 0
        %v1569 = vsel %vm1554, 1, 0
        %v1570 = vsel %vm1555, 1, 0
        %v1571 = vsel %vm1556, 1, 0
        %v1572 = vsel %vm1557, 1, 0
        %v1573 = vsel %vm1558, 1, 0
        %v1574 = vsel %vm1559, 1, 0
        %v1575 = vsel %vm1560, 1, 0
        %v1576 = vsel %vm1561, 1, 0
        %v1577 = vsel %vm1562, 1, 0
        %v1578 = vadd.s32 %v1533, %v1563
        %v1579 = vadd.s32 %v1534, %v1564
        %v1580 = vadd.s32 %v1535, %v1565
        %v1581 = vadd.s32 %v1536, %v1566
        %v1582 = vadd.s32 %v1537, %v1567
        %v1583 = vadd.s32 %v1538, %v1568
        %v1584 = vadd.s32 %v1539, %v1569
        %v1585 = vadd.s32 %v1540, %v1570
        %v1586 = vadd.s32 %v1541, %v1571
        %v1587 = vadd.s32 %v1542, %v1572
        %v1588 = vadd.s32 %v1543, %v1573
        %v1589 = vadd.s32 %v1544, %v1574
        %v1590 = vadd.s32 %v1545, %v1575
        %v1591 = vadd.s32 %v1546, %v1576
        %v1592 = vadd.s32 %v1547, %v1577
        %vm1593 = vcmp.ge.s32.totalorder %v1293, 21
        %vm1594 = vcmp.ge.s32.totalorder %v1294, 21
        %vm1595 = vcmp.ge.s32.totalorder %v1295, 21
        %vm1596 = vcmp.ge.s32.totalorder %v1296, 21
        %vm1597 = vcmp.ge.s32.totalorder %v1297, 21
        %vm1598 = vcmp.ge.s32.totalorder %v1298, 21
        %vm1599 = vcmp.ge.s32.totalorder %v1299, 21
        %vm1600 = vcmp.ge.s32.totalorder %v1300, 21
        %vm1601 = vcmp.ge.s32.totalorder %v1301, 21
        %vm1602 = vcmp.ge.s32.totalorder %v1302, 21
        %vm1603 = vcmp.ge.s32.totalorder %v1303, 21
        %vm1604 = vcmp.ge.s32.totalorder %v1304, 21
        %vm1605 = vcmp.ge.s32.totalorder %v1305, 21
        %vm1606 = vcmp.ge.s32.totalorder %v1306, 21
        %vm1607 = vcmp.ge.s32.totalorder %v1307, 21
        %v1608 = vsel %vm1593, 1, 0
        %v1609 = vsel %vm1594, 1, 0
        %v1610 = vsel %vm1595, 1, 0
        %v1611 = vsel %vm1596, 1, 0
        %v1612 = vsel %vm1597, 1, 0
        %v1613 = vsel %vm1598, 1, 0
        %v1614 = vsel %vm1599, 1, 0
        %v1615 = vsel %vm1600, 1, 0
        %v1616 = vsel %vm1601, 1, 0
        %v1617 = vsel %vm1602, 1, 0
        %v1618 = vsel %vm1603, 1, 0
        %v1619 = vsel %vm1604, 1, 0
        %v1620 = vsel %vm1605, 1, 0
        %v1621 = vsel %vm1606, 1, 0
        %v1622 = vsel %vm1607, 1, 0
        %v1623 = vadd.s32 %v1578, %v1608
        %v1624 = vadd.s32 %v1579, %v1609
        %v1625 = vadd.s32 %v1580, %v1610
        %v1626 = vadd.s32 %v1581, %v1611
        %v1627 = vadd.s32 %v1582, %v1612
        %v1628 = vadd.s32 %v1583, %v1613
        %v1629 = vadd.s32 %v1584, %v1614
        %v1630 = vadd.s32 %v1585, %v1615
        %v1631 = vadd.s32 %v1586, %v1616
        %v1632 = vadd.s32 %v1587, %v1617
        %v1633 = vadd.s32 %v1588, %v1618
        %v1634 = vadd.s32 %v1589, %v1619
        %v1635 = vadd.s32 %v1590, %v1620
        %v1636 = vadd.s32 %v1591, %v1621
        %v1637 = vadd.s32 %v1592, %v1622
        %vm1638 = vcmp.ge.s32.totalorder %v1293, 24
        %vm1639 = vcmp.ge.s32.totalorder %v1294, 24
        %vm1640 = vcmp.ge.s32.totalorder %v1295, 24
        %vm1641 = vcmp.ge.s32.totalorder %v1296, 24
        %vm1642 = vcmp.ge.s32.totalorder %v1297, 24
        %vm1643 = vcmp.ge.s32.totalorder %v1298, 24
        %vm1644 = vcmp.ge.s32.totalorder %v1299, 24
        %vm1645 = vcmp.ge.s32.totalorder %v1300, 24
        %vm1646 = vcmp.ge.s32.totalorder %v1301, 24
        %vm1647 = vcmp.ge.s32.totalorder %v1302, 24
        %vm1648 = vcmp.ge.s32.totalorder %v1303, 24
        %vm1649 = vcmp.ge.s32.totalorder %v1304, 24
        %vm1650 = vcmp.ge.s32.totalorder %v1305, 24
        %vm1651 = vcmp.ge.s32.totalorder %v1306, 24
        %vm1652 = vcmp.ge.s32.totalorder %v1307, 24
        %v1653 = vsel %vm1638, 1, 0
        %v1654 = vsel %vm1639, 1, 0
        %v1655 = vsel %vm1640, 1, 0
        %v1656 = vsel %vm1641, 1, 0
        %v1657 = vsel %vm1642, 1, 0
        %v1658 = vsel %vm1643, 1, 0
        %v1659 = vsel %vm1644, 1, 0
        %v1660 = vsel %vm1645, 1, 0
        %v1661 = vsel %vm1646, 1, 0
        %v1662 = vsel %vm1647, 1, 0
        %v1663 = vsel %vm1648, 1, 0
        %v1664 = vsel %vm1649, 1, 0
        %v1665 = vsel %vm1650, 1, 0
        %v1666 = vsel %vm1651, 1, 0
        %v1667 = vsel %vm1652, 1, 0
        %v1668 = vadd.s32 %v1623, %v1653
        %v1669 = vadd.s32 %v1624, %v1654
        %v1670 = vadd.s32 %v1625, %v1655
        %v1671 = vadd.s32 %v1626, %v1656
        %v1672 = vadd.s32 %v1627, %v1657
        %v1673 = vadd.s32 %v1628, %v1658
        %v1674 = vadd.s32 %v1629, %v1659
        %v1675 = vadd.s32 %v1630, %v1660
        %v1676 = vadd.s32 %v1631, %v1661
        %v1677 = vadd.s32 %v1632, %v1662
        %v1678 = vadd.s32 %v1633, %v1663
        %v1679 = vadd.s32 %v1634, %v1664
        %v1680 = vadd.s32 %v1635, %v1665
        %v1681 = vadd.s32 %v1636, %v1666
        %v1682 = vadd.s32 %v1637, %v1667
        %vm1683 = vcmp.ge.s32.totalorder %v1293, 27
        %vm1684 = vcmp.ge.s32.totalorder %v1294, 27
        %vm1685 = vcmp.ge.s32.totalorder %v1295, 27
        %vm1686 = vcmp.ge.s32.totalorder %v1296, 27
        %vm1687 = vcmp.ge.s32.totalorder %v1297, 27
        %vm1688 = vcmp.ge.s32.totalorder %v1298, 27
        %vm1689 = vcmp.ge.s32.totalorder %v1299, 27
        %vm1690 = vcmp.ge.s32.totalorder %v1300, 27
        %vm1691 = vcmp.ge.s32.totalorder %v1301, 27
        %vm1692 = vcmp.ge.s32.totalorder %v1302, 27
        %vm1693 = vcmp.ge.s32.totalorder %v1303, 27
        %vm1694 = vcmp.ge.s32.totalorder %v1304, 27
        %vm1695 = vcmp.ge.s32.totalorder %v1305, 27
        %vm1696 = vcmp.ge.s32.totalorder %v1306, 27
        %vm1697 = vcmp.ge.s32.totalorder %v1307, 27
        %v1698 = vsel %vm1683, 1, 0
        %v1699 = vsel %vm1684, 1, 0
        %v1700 = vsel %vm1685, 1, 0
        %v1701 = vsel %vm1686, 1, 0
        %v1702 = vsel %vm1687, 1, 0
        %v1703 = vsel %vm1688, 1, 0
        %v1704 = vsel %vm1689, 1, 0
        %v1705 = vsel %vm1690, 1, 0
        %v1706 = vsel %vm1691, 1, 0
        %v1707 = vsel %vm1692, 1, 0
        %v1708 = vsel %vm1693, 1, 0
        %v1709 = vsel %vm1694, 1, 0
        %v1710 = vsel %vm1695, 1, 0
        %v1711 = vsel %vm1696, 1, 0
        %v1712 = vsel %vm1697, 1, 0
        %v1713 = vadd.s32 %v1668, %v1698
        %v1714 = vadd.s32 %v1669, %v1699
        %v1715 = vadd.s32 %v1670, %v1700
        %v1716 = vadd.s32 %v1671, %v1701
        %v1717 = vadd.s32 %v1672, %v1702
        %v1718 = vadd.s32 %v1673, %v1703
        %v1719 = vadd.s32 %v1674, %v1704
        %v1720 = vadd.s32 %v1675, %v1705
        %v1721 = vadd.s32 %v1676, %v1706
        %v1722 = vadd.s32 %v1677, %v1707
        %v1723 = vadd.s32 %v1678, %v1708
        %v1724 = vadd.s32 %v1679, %v1709
        %v1725 = vadd.s32 %v1680, %v1710
        %v1726 = vadd.s32 %v1681, %v1711
        %v1727 = vadd.s32 %v1682, %v1712
        %vm1728 = vcmp.ge.s32.totalorder %v1157, 3
        %v1729 = vsel %vm1728, 1, 0
        %vm1730 = vcmp.ge.s32.totalorder %v1157, 6
        %v1731 = vsel %vm1730, 1, 0
        %v1732 = vadd.s32 %v1729, %v1731
        %vm1733 = vcmp.ge.s32.totalorder %v1157, 9
        %v1734 = vsel %vm1733, 1, 0
        %v1735 = vadd.s32 %v1732, %v1734
        %vm1736 = vcmp.ge.s32.totalorder %v1157, 12
        %v1737 = vsel %vm1736, 1, 0
        %v1738 = vadd.s32 %v1735, %v1737
        %vm1739 = vcmp.ge.s32.totalorder %v1157, 15
        %v1740 = vsel %vm1739, 1, 0
        %v1741 = vadd.s32 %v1738, %v1740
        %vm1742 = vcmp.ge.s32.totalorder %v1157, 18
        %v1743 = vsel %vm1742, 1, 0
        %v1744 = vadd.s32 %v1741, %v1743
        %vm1745 = vcmp.ge.s32.totalorder %v1157, 21
        %v1746 = vsel %vm1745, 1, 0
        %v1747 = vadd.s32 %v1744, %v1746
        %vm1748 = vcmp.ge.s32.totalorder %v1157, 24
        %v1749 = vsel %vm1748, 1, 0
        %v1750 = vadd.s32 %v1747, %v1749
        %vm1751 = vcmp.ge.s32.totalorder %v1157, 27
        %v1752 = vsel %vm1751, 1, 0
        %v1753 = vadd.s32 %v1750, %v1752
        %vm1754 = vcmp.eq.s32.totalorder %v1713, %v1753
        %vm1755 = vcmp.eq.s32.totalorder %v1714, %v1753
        %vm1756 = vcmp.eq.s32.totalorder %v1715, %v1753
        %vm1757 = vcmp.eq.s32.totalorder %v1716, %v1753
        %vm1758 = vcmp.eq.s32.totalorder %v1717, %v1753
        %vm1759 = vcmp.eq.s32.totalorder %v1718, %v1753
        %vm1760 = vcmp.eq.s32.totalorder %v1719, %v1753
        %vm1761 = vcmp.eq.s32.totalorder %v1720, %v1753
        %vm1762 = vcmp.eq.s32.totalorder %v1721, %v1753
        %vm1763 = vcmp.eq.s32.totalorder %v1722, %v1753
        %vm1764 = vcmp.eq.s32.totalorder %v1723, %v1753
        %vm1765 = vcmp.eq.s32.totalorder %v1724, %v1753
        %vm1766 = vcmp.eq.s32.totalorder %v1725, %v1753
        %vm1767 = vcmp.eq.s32.totalorder %v1726, %v1753
        %vm1768 = vcmp.eq.s32.totalorder %v1727, %v1753
        %v1769 = vsel %vm1754, 0.0, -1e+30
        %v1770 = vsel %vm1755, 0.0, -1e+30
        %v1771 = vsel %vm1756, 0.0, -1e+30
        %v1772 = vsel %vm1757, 0.0, -1e+30
        %v1773 = vsel %vm1758, 0.0, -1e+30
        %v1774 = vsel %vm1759, 0.0, -1e+30
        %v1775 = vsel %vm1760, 0.0, -1e+30
        %v1776 = vsel %vm1761, 0.0, -1e+30
        %v1777 = vsel %vm1762, 0.0, -1e+30
        %v1778 = vsel %vm1763, 0.0, -1e+30
        %v1779 = vsel %vm1764, 0.0, -1e+30
        %v1780 = vsel %vm1765, 0.0, -1e+30
        %v1781 = vsel %vm1766, 0.0, -1e+30
        %v1782 = vsel %vm1767, 0.0, -1e+30
        %v1783 = vsel %vm1768, 0.0, -1e+30
        %vm1784 = vcmp.ge.s32.totalorder %v1157, 8
        %v1785 = vsel %vm1784, 1, 0
        %vm1786 = vcmp.ge.s32.totalorder %v1157, 16
        %v1787 = vsel %vm1786, 1, 0
        %v1788 = vadd.s32 %v1785, %v1787
        %v1789 = vadd.s32 %v1788, %v1749
        %vm1790 = vcmp.eq.s32.totalorder %v1263, %v1789
        %vm1791 = vcmp.eq.s32.totalorder %v1264, %v1789
        %vm1792 = vcmp.eq.s32.totalorder %v1265, %v1789
        %vm1793 = vcmp.eq.s32.totalorder %v1266, %v1789
        %vm1794 = vcmp.eq.s32.totalorder %v1267, %v1789
        %vm1795 = vcmp.eq.s32.totalorder %v1268, %v1789
        %vm1796 = vcmp.eq.s32.totalorder %v1269, %v1789
        %vm1797 = vcmp.eq.s32.totalorder %v1270, %v1789
        %vm1798 = vcmp.eq.s32.totalorder %v1271, %v1789
        %vm1799 = vcmp.eq.s32.totalorder %v1272, %v1789
        %vm1800 = vcmp.eq.s32.totalorder %v1273, %v1789
        %vm1801 = vcmp.eq.s32.totalorder %v1274, %v1789
        %vm1802 = vcmp.eq.s32.totalorder %v1275, %v1789
        %vm1803 = vcmp.eq.s32.totalorder %v1276, %v1789
        %vm1804 = vcmp.eq.s32.totalorder %v1277, %v1789
        %v1805 = vsel %vm1790, 1.0, 0.0
        %v1806 = vsel %vm1791, 1.0, 0.0
        %v1807 = vsel %vm1792, 1.0, 0.0
        %v1808 = vsel %vm1793, 1.0, 0.0
        %v1809 = vsel %vm1794, 1.0, 0.0
        %v1810 = vsel %vm1795, 1.0, 0.0
        %v1811 = vsel %vm1796, 1.0, 0.0
        %v1812 = vsel %vm1797, 1.0, 0.0
        %v1813 = vsel %vm1798, 1.0, 0.0
        %v1814 = vsel %vm1799, 1.0, 0.0
        %v1815 = vsel %vm1800, 1.0, 0.0
        %v1816 = vsel %vm1801, 1.0, 0.0
        %v1817 = vsel %vm1802, 1.0, 0.0
        %v1818 = vsel %vm1803, 1.0, 0.0
        %v1819 = vsel %vm1804, 1.0, 0.0
        %vm1820 = vcmp.ge.s32.totalorder %v1157, 30
        %v1821 = vsel %vm1820, 1, 0
        %vm1822 = vcmp.ge.s32.totalorder %v1157, 60
        %v1823 = vsel %vm1822, 1, 0
        %v1824 = vadd.s32 %v1821, %v1823
        %vm1825 = vcmp.ge.s32.totalorder %v1157, 90
        %v1826 = vsel %vm1825, 1, 0
        %v1827 = vadd.s32 %v1824, %v1826
        %v1828 = vmul.u32 %v1827, 30
        %v1829 = vsub.s32 %v1157, %v1828
        %vm1830 = vcmp.eq.s32.totalorder %v1829, %v1141
        %vm1831 = vcmp.eq.s32.totalorder %v1829, %v1142
        %vm1832 = vcmp.eq.s32.totalorder %v1829, %v1143
        %vm1833 = vcmp.eq.s32.totalorder %v1829, %v1144
        %v1834 = vsel %vm1830, 1.0, 0.0
        %v1835 = vsel %vm1831, 1.0, 0.0
        %v1836 = vsel %vm1832, 1.0, 0.0
        %v1837 = vsel %vm1833, 1.0, 0.0
        %v1838 = vld [vmem:[%s3] sm:$0xf]
        %v1839 = vld [vmem:[%s3 + $0x4] sm:$0xf]
        %v1840 = vld [vmem:[%s3 + $0x8] sm:$0xf]
        %v1841 = vld [vmem:[%s3 + $0xc] sm:$0xf]
        %v1842 = vld [vmem:[%s5] sm:$0xf]
        %v1843 = vld [vmem:[%s5 + $0x4] sm:$0xf]
        %v1844 = vld [vmem:[%s5 + $0x8] sm:$0xf]
        %v1845 = vld [vmem:[%s5 + $0xc] sm:$0xf]
        %v1846 = vld [vmem:[%s7] sm:$0xf]
        %v1847 = vld [vmem:[%s7 + $0x4] sm:$0xf]
        %v1848 = vld [vmem:[%s7 + $0x8] sm:$0xf]
        %v1849 = vld [vmem:[%s7 + $0xc] sm:$0xf]
        %v1850 = vld [vmem:[%s9] sm:$0x1]
        %v1851 = vld [vmem:[%s11] sm:$0x1]
        %v1852 = vld [vmem:[%s13] sm:$0x1]
        %v1853 = vld [vmem:[%s15] sm:$0xf]
        %v1854 = vld [vmem:[%s15 + $0x4] sm:$0xf]
        %v1855 = vld [vmem:[%s15 + $0x8] sm:$0xf]
        %v1856 = vld [vmem:[%s15 + $0xc] sm:$0xf]
        %v1857 = vld [vmem:[%s17] sm:$0x1]
        %v1858 = vpack.c.bf16 %v1137, %v1136
        %v1859 = vpack.c.bf16 %v1139, %v1138
        %v1861 = vlaneseq
        %v1862 = vshrl.u32 %v1861, 7
        %v1863 = vsub.s32 0, %v1862
        %v1864 = vrot.slane %v1850, %v1863
        %v1870 = vunpack.c.l.b16 %v1838
        %v1871 = vunpack.c.l.b16 %v1839
        %v1872 = vunpack.c.l.b16 %v1840
        %v1873 = vunpack.c.l.b16 %v1841
        %v1874 = vpack.c.b16 %v1871, %v1870
        %v1875 = vpack.c.b16 %v1873, %v1872
        %vm1878 = vcmask 261120
        %v1880 = vsel %vm1878, %v1858, 0
        %v1883 = vsel %vm1878, %v1859, 0
        %1885 = vmatprep.subr.bf16.mxu0 0
        %1886 = vmatpush1.bf16.msra.mxu0 %v1874
        %1887 = vmatprep.subr.bf16.mxu0 0
        %1888 = vmatpush1.bf16.msra.mxu0 %v1875
        %1889 = vmatprep.subr.bf16.mxu0 0
        %1890 = vmatpush1.bf16.msra.mxu0 0
        %1891 = vmatprep.subr.bf16.mxu0 0
        %1892 = vmatpush1.bf16.msra.mxu0 0
        %1893 = vmatprep.subr.bf16.mxu0 0
        %1894 = vmatpush1.bf16.msra.mxu0 0
        %1895 = vmatprep.subr.bf16.mxu0 0
        %1896 = vmatpush1.bf16.msra.mxu0 0
        %1897 = vmatprep.subr.bf16.mxu0 0
        %1898 = vmatpush1.bf16.msra.mxu0 0
        %1899 = vmatprep.subr.bf16.mxu0 0
        %1900 = vmatpush1.bf16.msra.mxu0 0
        %1901 = vmatprep.subr.bf16.mxu0 0
        %1902 = vmatpush1.bf16.msra.mxu0 0
        %1903 = vmatprep.subr.bf16.mxu0 0
        %1904 = vmatpush1.bf16.msra.mxu0 0
        %1905 = vmatprep.subr.bf16.mxu0 0
        %1906 = vmatpush1.bf16.msra.mxu0 0
        %1907 = vmatprep.subr.bf16.mxu0 0
        %1908 = vmatpush1.bf16.msra.mxu0 0
        %1909 = vmatprep.subr.bf16.mxu0 0
        %1910 = vmatpush1.bf16.msra.mxu0 0
        %1911 = vmatprep.subr.bf16.mxu0 0
        %1912 = vmatpush1.bf16.msra.mxu0 0
        %1913 = vmatprep.subr.bf16.mxu0 0
        %1914 = vmatpush1.bf16.msra.mxu0 0
        %1915 = vmatprep.subr.bf16.mxu0 0
        %1916 = vmatpush1.bf16.msra.mxu0 0
        %1917 = vmatprep.mubr.bf16.mxu0 0
        %1918 = vmatmul.mubr.bf16.gmra.mrb[0].mxu0 %v1880
        %v1919 = vpop.f32.mrb[0].mxu0
        %v1920 = vadd.f32 %v1864, %v1919
        %v1921 = vpop.f32.mrb[0].mxu0
        %v1922 = vpop.f32.mrb[0].mxu0
        %v1923 = vadd.f32 %v1864, %v1922
        %v1924 = vpop.f32.mrb[0].mxu0
        %1925 = vmatprep.mubr.bf16.mxu0 0
        %1926 = vmatmul.mubr.bf16.gmra.mrb[0].mxu0 %v1883
        %v1927 = vpop.f32.mrb[0].mxu0
        %v1928 = vadd.f32 %v1864, %v1927
        %v1929 = vpop.f32.mrb[0].mxu0
        %v1930 = vpop.f32.mrb[0].mxu0
        %v1931 = vadd.f32 %v1864, %v1930
        %v1932 = vpop.f32.mrb[0].mxu0
        %1933 = vdwg.mxu0
        %v1935 = vlaneseq
        %v1936 = vshrl.u32 %v1935, 7
        %v1937 = vsub.s32 0, %v1936
        %v1938 = vrot.slane %v1851, %v1937
        %v1944 = vunpack.c.l.b16 %v1842
        %v1945 = vunpack.c.l.b16 %v1843
        %v1946 = vunpack.c.l.b16 %v1844
        %v1947 = vunpack.c.l.b16 %v1845
        %v1948 = vpack.c.b16 %v1945, %v1944
        %v1949 = vpack.c.b16 %v1947, %v1946
        %1952 = vmatprep.subr.bf16.mxu0 0
        %1953 = vmatpush1.bf16.msra.mxu0 %v1948
        %1954 = vmatprep.subr.bf16.mxu0 0
        %1955 = vmatpush1.bf16.msra.mxu0 %v1949
        %1956 = vmatprep.subr.bf16.mxu0 0
        %1957 = vmatpush1.bf16.msra.mxu0 0
        %1958 = vmatprep.subr.bf16.mxu0 0
        %1959 = vmatpush1.bf16.msra.mxu0 0
        %1960 = vmatprep.subr.bf16.mxu0 0
        %1961 = vmatpush1.bf16.msra.mxu0 0
        %1962 = vmatprep.subr.bf16.mxu0 0
        %1963 = vmatpush1.bf16.msra.mxu0 0
        %1964 = vmatprep.subr.bf16.mxu0 0
        %1965 = vmatpush1.bf16.msra.mxu0 0
        %1966 = vmatprep.subr.bf16.mxu0 0
        %1967 = vmatpush1.bf16.msra.mxu0 0
        %1968 = vmatprep.subr.bf16.mxu0 0
        %1969 = vmatpush1.bf16.msra.mxu0 0
        %1970 = vmatprep.subr.bf16.mxu0 0
        %1971 = vmatpush1.bf16.msra.mxu0 0
        %1972 = vmatprep.subr.bf16.mxu0 0
        %1973 = vmatpush1.bf16.msra.mxu0 0
        %1974 = vmatprep.subr.bf16.mxu0 0
        %1975 = vmatpush1.bf16.msra.mxu0 0
        %1976 = vmatprep.subr.bf16.mxu0 0
        %1977 = vmatpush1.bf16.msra.mxu0 0
        %1978 = vmatprep.subr.bf16.mxu0 0
        %1979 = vmatpush1.bf16.msra.mxu0 0
        %1980 = vmatprep.subr.bf16.mxu0 0
        %1981 = vmatpush1.bf16.msra.mxu0 0
        %1982 = vmatprep.subr.bf16.mxu0 0
        %1983 = vmatpush1.bf16.msra.mxu0 0
        %1984 = vmatprep.mubr.bf16.mxu0 0
        %1985 = vmatmul.mubr.bf16.gmra.mrb[0].mxu0 %v1880
        %v1986 = vpop.f32.mrb[0].mxu0
        %v1987 = vadd.f32 %v1938, %v1986
        %v1988 = vpop.f32.mrb[0].mxu0
        %v1989 = vpop.f32.mrb[0].mxu0
        %v1990 = vadd.f32 %v1938, %v1989
        %v1991 = vpop.f32.mrb[0].mxu0
        %1992 = vmatprep.mubr.bf16.mxu0 0
        %1993 = vmatmul.mubr.bf16.gmra.mrb[0].mxu0 %v1883
        %v1994 = vpop.f32.mrb[0].mxu0
        %v1995 = vadd.f32 %v1938, %v1994
        %v1996 = vpop.f32.mrb[0].mxu0
        %v1997 = vpop.f32.mrb[0].mxu0
        %v1998 = vadd.f32 %v1938, %v1997
        %v1999 = vpop.f32.mrb[0].mxu0
        %2000 = vdwg.mxu0
        %v2002 = vlaneseq
        %v2003 = vshrl.u32 %v2002, 7
        %v2004 = vsub.s32 0, %v2003
        %v2005 = vrot.slane %v1852, %v2004
        %v2011 = vunpack.c.l.b16 %v1846
        %v2012 = vunpack.c.l.b16 %v1847
        %v2013 = vunpack.c.l.b16 %v1848
        %v2014 = vunpack.c.l.b16 %v1849
        %v2015 = vpack.c.b16 %v2012, %v2011
        %v2016 = vpack.c.b16 %v2014, %v2013
        %2019 = vmatprep.subr.bf16.mxu0 0
        %2020 = vmatpush1.bf16.msra.mxu0 %v2015
        %2021 = vmatprep.subr.bf16.mxu0 0
        %2022 = vmatpush1.bf16.msra.mxu0 %v2016
        %2023 = vmatprep.subr.bf16.mxu0 0
        %2024 = vmatpush1.bf16.msra.mxu0 0
        %2025 = vmatprep.subr.bf16.mxu0 0
        %2026 = vmatpush1.bf16.msra.mxu0 0
        %2027 = vmatprep.subr.bf16.mxu0 0
        %2028 = vmatpush1.bf16.msra.mxu0 0
        %2029 = vmatprep.subr.bf16.mxu0 0
        %2030 = vmatpush1.bf16.msra.mxu0 0
        %2031 = vmatprep.subr.bf16.mxu0 0
        %2032 = vmatpush1.bf16.msra.mxu0 0
        %2033 = vmatprep.subr.bf16.mxu0 0
        %2034 = vmatpush1.bf16.msra.mxu0 0
        %2035 = vmatprep.subr.bf16.mxu0 0
        %2036 = vmatpush1.bf16.msra.mxu0 0
        %2037 = vmatprep.subr.bf16.mxu0 0
        %2038 = vmatpush1.bf16.msra.mxu0 0
        %2039 = vmatprep.subr.bf16.mxu0 0
        %2040 = vmatpush1.bf16.msra.mxu0 0
        %2041 = vmatprep.subr.bf16.mxu0 0
        %2042 = vmatpush1.bf16.msra.mxu0 0
        %2043 = vmatprep.subr.bf16.mxu0 0
        %2044 = vmatpush1.bf16.msra.mxu0 0
        %2045 = vmatprep.subr.bf16.mxu0 0
        %2046 = vmatpush1.bf16.msra.mxu0 0
        %2047 = vmatprep.subr.bf16.mxu0 0
        %2048 = vmatpush1.bf16.msra.mxu0 0
        %2049 = vmatprep.subr.bf16.mxu0 0
        %2050 = vmatpush1.bf16.msra.mxu0 0
        %2051 = vmatprep.mubr.bf16.mxu0 0
        %2052 = vmatmul.mubr.bf16.gmra.mrb[0].mxu0 %v1880
        %v2053 = vpop.f32.mrb[0].mxu0
        %v2054 = vadd.f32 %v2005, %v2053
        %v2055 = vpop.f32.mrb[0].mxu0
        %v2056 = vpop.f32.mrb[0].mxu0
        %v2057 = vadd.f32 %v2005, %v2056
        %v2058 = vpop.f32.mrb[0].mxu0
        %2059 = vmatprep.mubr.bf16.mxu0 0
        %2060 = vmatmul.mubr.bf16.gmra.mrb[0].mxu0 %v1883
        %v2061 = vpop.f32.mrb[0].mxu0
        %v2062 = vadd.f32 %v2005, %v2061
        %v2063 = vpop.f32.mrb[0].mxu0
        %v2064 = vpop.f32.mrb[0].mxu0
        %v2065 = vadd.f32 %v2005, %v2064
        %v2066 = vpop.f32.mrb[0].mxu0
        %2067 = vdwg.mxu0
        %vm2068 = vcmask 244736
        %v2070 = vsel %vm2068, %v1323, 0
        %v2073 = vsel %vm2068, %v1324, 0
        %v2076 = vsel %vm2068, %v1325, 0
        %v2079 = vsel %vm2068, %v1326, 0
        %v2082 = vsel %vm2068, %v1327, 0
        %v2085 = vsel %vm2068, %v1328, 0
        %v2088 = vsel %vm2068, %v1329, 0
        %v2091 = vsel %vm2068, %v1330, 0
        %v2094 = vsel %vm2068, %v1331, 0
        %v2097 = vsel %vm2068, %v1332, 0
        %v2100 = vsel %vm2068, %v1333, 0
        %v2103 = vsel %vm2068, %v1334, 0
        %v2106 = vsel %vm2068, %v1335, 0
        %v2109 = vsel %vm2068, %v1336, 0
        %v2112 = vsel %vm2068, %v1337, 0
        %vm2114 = vcmask 1045504
        %v2116 = vsel %vm2114, %v1931, 0
        %2118 = vmatprep.subr.mxu0 0.0
        %2119 = vmatpush1.msra.mxu0 %v1920
        %2120 = vmatprep.subr.mxu0 0.0
        %2121 = vmatpush1.msra.mxu0 %v1923
        %2122 = vmatprep.subr.mxu0 0.0
        %2123 = vmatpush1.msra.mxu0 %v1928
        %2124 = vmatprep.subr.mxu0 0.0
        %2125 = vmatpush1.msra.mxu0 %v2116
        %2126 = vmatprep.subr.mxu0 0.0
        %2127 = vmatpush1.msra.mxu0 0.0
        %2128 = vmatprep.subr.mxu0 0.0
        %2129 = vmatpush1.msra.mxu0 0.0
        %2130 = vmatprep.subr.mxu0 0.0
        %2131 = vmatpush1.msra.mxu0 0.0
        %2132 = vmatprep.subr.mxu0 0.0
        %2133 = vmatpush1.msra.mxu0 0.0
        %2134 = vmatprep.subr.mxu0 0.0
        %2135 = vmatpush1.msra.mxu0 0.0
        %2136 = vmatprep.subr.mxu0 0.0
        %2137 = vmatpush1.msra.mxu0 0.0
        %2138 = vmatprep.subr.mxu0 0.0
        %2139 = vmatpush1.msra.mxu0 0.0
        %2140 = vmatprep.subr.mxu0 0.0
        %2141 = vmatpush1.msra.mxu0 0.0
        %2142 = vmatprep.subr.mxu0 0.0
        %2143 = vmatpush1.msra.mxu0 0.0
        %2144 = vmatprep.subr.mxu0 0.0
        %2145 = vmatpush1.msra.mxu0 0.0
        %2146 = vmatprep.subr.mxu0 0.0
        %2147 = vmatpush1.msra.mxu0 0.0
        %2148 = vmatprep.subr.mxu0 0.0
        %2149 = vmatpush1.msra.mxu0 0.0
        %2150 = vmatprep.subr.mxu0 0.0
        %2151 = vmatpush1.msra.mxu0 0.0
        %2152 = vmatprep.subr.mxu0 0.0
        %2153 = vmatpush1.msra.mxu0 0.0
        %2154 = vmatprep.subr.mxu0 0.0
        %2155 = vmatpush1.msra.mxu0 0.0
        %2156 = vmatprep.subr.mxu0 0.0
        %2157 = vmatpush1.msra.mxu0 0.0
        %2158 = vmatprep.subr.mxu0 0.0
        %2159 = vmatpush1.msra.mxu0 0.0
        %2160 = vmatprep.subr.mxu0 0.0
        %2161 = vmatpush1.msra.mxu0 0.0
        %2162 = vmatprep.subr.mxu0 0.0
        %2163 = vmatpush1.msra.mxu0 0.0
        %2164 = vmatprep.subr.mxu0 0.0
        %2165 = vmatpush1.msra.mxu0 0.0
        %2166 = vmatprep.subr.mxu0 0.0
        %2167 = vmatpush1.msra.mxu0 0.0
        %2168 = vmatprep.subr.mxu0 0.0
        %2169 = vmatpush1.msra.mxu0 0.0
        %2170 = vmatprep.subr.mxu0 0.0
        %2171 = vmatpush1.msra.mxu0 0.0
        %2172 = vmatprep.subr.mxu0 0.0
        %2173 = vmatpush1.msra.mxu0 0.0
        %2174 = vmatprep.subr.mxu0 0.0
        %2175 = vmatpush1.msra.mxu0 0.0
        %2176 = vmatprep.subr.mxu0 0.0
        %2177 = vmatpush1.msra.mxu0 0.0
        %2178 = vmatprep.subr.mxu0 0.0
        %2179 = vmatpush1.msra.mxu0 0.0
        %2180 = vmatprep.subr.mxu0 0.0
        %2181 = vmatpush1.msra.mxu0 0.0
        %2182 = vmatprep.mubr.f32.mxu0 0.0
        %2183 = vmatmul.mubr.f32.gmra.mrb[0].mxu0 %v2070
        %v2184 = vpop.f32.mrb[0].mxu0
        %v2185 = vadd.f32 0.0, %v2184
        %v2186 = vpop.f32.mrb[0].mxu0
        %2187 = vmatprep.mubr.f32.mxu0 0.0
        %2188 = vmatmul.mubr.f32.gmra.mrb[0].mxu0 %v2073
        %v2189 = vpop.f32.mrb[0].mxu0
        %v2190 = vadd.f32 0.0, %v2189
        %v2191 = vpop.f32.mrb[0].mxu0
        %2192 = vmatprep.mubr.f32.mxu0 0.0
        %2193 = vmatmul.mubr.f32.gmra.mrb[0].mxu0 %v2076
        %v2194 = vpop.f32.mrb[0].mxu0
        %v2195 = vadd.f32 0.0, %v2194
        %v2196 = vpop.f32.mrb[0].mxu0
        %2197 = vmatprep.mubr.f32.mxu0 0.0
        %2198 = vmatmul.mubr.f32.gmra.mrb[0].mxu0 %v2079
        %v2199 = vpop.f32.mrb[0].mxu0
        %v2200 = vadd.f32 0.0, %v2199
        %v2201 = vpop.f32.mrb[0].mxu0
        %2202 = vmatprep.mubr.f32.mxu0 0.0
        %2203 = vmatmul.mubr.f32.gmra.mrb[0].mxu0 %v2082
        %v2204 = vpop.f32.mrb[0].mxu0
        %v2205 = vadd.f32 0.0, %v2204
        %v2206 = vpop.f32.mrb[0].mxu0
        %2207 = vmatprep.mubr.f32.mxu0 0.0
        %2208 = vmatmul.mubr.f32.gmra.mrb[0].mxu0 %v2085
        %v2209 = vpop.f32.mrb[0].mxu0
        %v2210 = vadd.f32 0.0, %v2209
        %v2211 = vpop.f32.mrb[0].mxu0
        %2212 = vmatprep.mubr.f32.mxu0 0.0
        %2213 = vmatmul.mubr.f32.gmra.mrb[0].mxu0 %v2088
        %v2214 = vpop.f32.mrb[0].mxu0
        %v2215 = vadd.f32 0.0, %v2214
        %v2216 = vpop.f32.mrb[0].mxu0
        %2217 = vmatprep.mubr.f32.mxu0 0.0
        %2218 = vmatmul.mubr.f32.gmra.mrb[0].mxu0 %v2091
        %v2219 = vpop.f32.mrb[0].mxu0
        %v2220 = vadd.f32 0.0, %v2219
        %v2221 = vpop.f32.mrb[0].mxu0
        %2222 = vmatprep.mubr.f32.mxu0 0.0
        %2223 = vmatmul.mubr.f32.gmra.mrb[0].mxu0 %v2094
        %v2224 = vpop.f32.mrb[0].mxu0
        %v2225 = vadd.f32 0.0, %v2224
        %v2226 = vpop.f32.mrb[0].mxu0
        %2227 = vmatprep.mubr.f32.mxu0 0.0
        %2228 = vmatmul.mubr.f32.gmra.mrb[0].mxu0 %v2097
        %v2229 = vpop.f32.mrb[0].mxu0
        %v2230 = vadd.f32 0.0, %v2229
        %v2231 = vpop.f32.mrb[0].mxu0
        %2232 = vmatprep.mubr.f32.mxu0 0.0
        %2233 = vmatmul.mubr.f32.gmra.mrb[0].mxu0 %v2100
        %v2234 = vpop.f32.mrb[0].mxu0
        %v2235 = vadd.f32 0.0, %v2234
        %v2236 = vpop.f32.mrb[0].mxu0
        %2237 = vmatprep.mubr.f32.mxu0 0.0
        %2238 = vmatmul.mubr.f32.gmra.mrb[0].mxu0 %v2103
        %v2239 = vpop.f32.mrb[0].mxu0
        %v2240 = vadd.f32 0.0, %v2239
        %v2241 = vpop.f32.mrb[0].mxu0
        %2242 = vmatprep.mubr.f32.mxu0 0.0
        %2243 = vmatmul.mubr.f32.gmra.mrb[0].mxu0 %v2106
        %v2244 = vpop.f32.mrb[0].mxu0
        %v2245 = vadd.f32 0.0, %v2244
        %v2246 = vpop.f32.mrb[0].mxu0
        %2247 = vmatprep.mubr.f32.mxu0 0.0
        %2248 = vmatmul.mubr.f32.gmra.mrb[0].mxu0 %v2109
        %v2249 = vpop.f32.mrb[0].mxu0
        %v2250 = vadd.f32 0.0, %v2249
        %v2251 = vpop.f32.mrb[0].mxu0
        %2252 = vmatprep.mubr.f32.mxu0 0.0
        %2253 = vmatmul.mubr.f32.gmra.mrb[0].mxu0 %v2112
        %v2254 = vpop.f32.mrb[0].mxu0
        %v2255 = vadd.f32 0.0, %v2254
        %v2256 = vpop.f32.mrb[0].mxu0
        %2257 = vdwg.mxu0
        %v2258 = vmul.f32 %v2185, %v1805
        %v2259 = vmul.f32 %v2190, %v1806
        %v2260 = vmul.f32 %v2195, %v1807
        %v2261 = vmul.f32 %v2200, %v1808
        %v2262 = vmul.f32 %v2205, %v1809
        %v2263 = vmul.f32 %v2210, %v1810
        %v2264 = vmul.f32 %v2215, %v1811
        %v2265 = vmul.f32 %v2220, %v1812
        %v2266 = vmul.f32 %v2225, %v1813
        %v2267 = vmul.f32 %v2230, %v1814
        %v2268 = vmul.f32 %v2235, %v1815
        %v2269 = vmul.f32 %v2240, %v1816
        %v2270 = vmul.f32 %v2245, %v1817
        %v2271 = vmul.f32 %v2250, %v1818
        %v2272 = vmul.f32 %v2255, %v1819
        %v2274 = vsel %vm1878, %v2258, 0
        %v2277 = vsel %vm1878, %v2259, 0
        %v2280 = vsel %vm1878, %v2260, 0
        %v2283 = vsel %vm1878, %v2261, 0
        %v2286 = vsel %vm1878, %v2262, 0
        %v2289 = vsel %vm1878, %v2263, 0
        %v2292 = vsel %vm1878, %v2264, 0
        %v2295 = vsel %vm1878, %v2265, 0
        %v2298 = vsel %vm1878, %v2266, 0
        %v2301 = vsel %vm1878, %v2267, 0
        %v2304 = vsel %vm1878, %v2268, 0
        %v2307 = vsel %vm1878, %v2269, 0
        %v2310 = vsel %vm1878, %v2270, 0
        %v2313 = vsel %vm1878, %v2271, 0
        %v2316 = vsel %vm1878, %v2272, 0
        %v2319 = vsel %vm1878, %v1987, 0
        %v2322 = vsel %vm1878, %v1990, 0
        %v2325 = vsel %vm1878, %v1995, 0
        %v2328 = vsel %vm1878, %v1998, 0
        %2330 = vmatprep.subr.mxu0 0.0
        %2331 = vmatpush1.xpose.msra.mxu0 %v2319
        %2332 = vmatprep.subr.mxu0 0.0
        %2333 = vmatpush1.xpose.msra.mxu0 %v2322
        %2334 = vmatprep.subr.mxu0 0.0
        %2335 = vmatpush1.xpose.msra.mxu0 %v2325
        %2336 = vmatprep.subr.mxu0 0.0
        %2337 = vmatpush1.xpose.msra.mxu0 %v2328
        %2338 = vmatprep.subr.mxu0 0.0
        %2339 = vmatpush1.xpose.msra.mxu0 0.0
        %2340 = vmatprep.subr.mxu0 0.0
        %2341 = vmatpush1.xpose.msra.mxu0 0.0
        %2342 = vmatprep.subr.mxu0 0.0
        %2343 = vmatpush1.xpose.msra.mxu0 0.0
        %2344 = vmatprep.subr.mxu0 0.0
        %2345 = vmatpush1.xpose.msra.mxu0 0.0
        %2346 = vmatprep.subr.mxu0 0.0
        %2347 = vmatpush1.xpose.msra.mxu0 0.0
        %2348 = vmatprep.subr.mxu0 0.0
        %2349 = vmatpush1.xpose.msra.mxu0 0.0
        %2350 = vmatprep.subr.mxu0 0.0
        %2351 = vmatpush1.xpose.msra.mxu0 0.0
        %2352 = vmatprep.subr.mxu0 0.0
        %2353 = vmatpush1.xpose.msra.mxu0 0.0
        %2354 = vmatprep.subr.mxu0 0.0
        %2355 = vmatpush1.xpose.msra.mxu0 0.0
        %2356 = vmatprep.subr.mxu0 0.0
        %2357 = vmatpush1.xpose.msra.mxu0 0.0
        %2358 = vmatprep.subr.mxu0 0.0
        %2359 = vmatpush1.xpose.msra.mxu0 0.0
        %2360 = vmatprep.subr.mxu0 0.0
        %2361 = vmatpush1.xpose.msra.mxu0 0.0
        %2362 = vmatprep.subr.mxu0 0.0
        %2363 = vmatpush1.xpose.msra.mxu0 0.0
        %2364 = vmatprep.subr.mxu0 0.0
        %2365 = vmatpush1.xpose.msra.mxu0 0.0
        %2366 = vmatprep.subr.mxu0 0.0
        %2367 = vmatpush1.xpose.msra.mxu0 0.0
        %2368 = vmatprep.subr.mxu0 0.0
        %2369 = vmatpush1.xpose.msra.mxu0 0.0
        %2370 = vmatprep.subr.mxu0 0.0
        %2371 = vmatpush1.xpose.msra.mxu0 0.0
        %2372 = vmatprep.subr.mxu0 0.0
        %2373 = vmatpush1.xpose.msra.mxu0 0.0
        %2374 = vmatprep.subr.mxu0 0.0
        %2375 = vmatpush1.xpose.msra.mxu0 0.0
        %2376 = vmatprep.subr.mxu0 0.0
        %2377 = vmatpush1.xpose.msra.mxu0 0.0
        %2378 = vmatprep.subr.mxu0 0.0
        %2379 = vmatpush1.xpose.msra.mxu0 0.0
        %2380 = vmatprep.subr.mxu0 0.0
        %2381 = vmatpush1.xpose.msra.mxu0 0.0
        %2382 = vmatprep.subr.mxu0 0.0
        %2383 = vmatpush1.xpose.msra.mxu0 0.0
        %2384 = vmatprep.subr.mxu0 0.0
        %2385 = vmatpush1.xpose.msra.mxu0 0.0
        %2386 = vmatprep.subr.mxu0 0.0
        %2387 = vmatpush1.xpose.msra.mxu0 0.0
        %2388 = vmatprep.subr.mxu0 0.0
        %2389 = vmatpush1.xpose.msra.mxu0 0.0
        %2390 = vmatprep.subr.mxu0 0.0
        %2391 = vmatpush1.xpose.msra.mxu0 0.0
        %2392 = vmatprep.subr.mxu0 0.0
        %2393 = vmatpush1.xpose.msra.mxu0 0.0
        %2394 = vmatprep.mubr.f32.mxu0 0.0
        %2395 = vmatmul.mubr.f32.gmra.mrb[0].mxu0 %v2274
        %v2396 = vpop.f32.mrb[0].mxu0
        %v2397 = vadd.f32 %v1769, %v2396
        %v2398 = vpop.f32.mrb[0].mxu0
        %2399 = vmatprep.mubr.f32.mxu0 0.0
        %2400 = vmatmul.mubr.f32.gmra.mrb[0].mxu0 %v2277
        %v2401 = vpop.f32.mrb[0].mxu0
        %v2402 = vadd.f32 %v1770, %v2401
        %v2403 = vpop.f32.mrb[0].mxu0
        %2404 = vmatprep.mubr.f32.mxu0 0.0
        %2405 = vmatmul.mubr.f32.gmra.mrb[0].mxu0 %v2280
        %v2406 = vpop.f32.mrb[0].mxu0
        %v2407 = vadd.f32 %v1771, %v2406
        %v2408 = vpop.f32.mrb[0].mxu0
        %2409 = vmatprep.mubr.f32.mxu0 0.0
        %2410 = vmatmul.mubr.f32.gmra.mrb[0].mxu0 %v2283
        %v2411 = vpop.f32.mrb[0].mxu0
        %v2412 = vadd.f32 %v1772, %v2411
        %v2413 = vpop.f32.mrb[0].mxu0
        %2414 = vmatprep.mubr.f32.mxu0 0.0
        %2415 = vmatmul.mubr.f32.gmra.mrb[0].mxu0 %v2286
        %v2416 = vpop.f32.mrb[0].mxu0
        %v2417 = vadd.f32 %v1773, %v2416
        %v2418 = vpop.f32.mrb[0].mxu0
        %2419 = vmatprep.mubr.f32.mxu0 0.0
        %2420 = vmatmul.mubr.f32.gmra.mrb[0].mxu0 %v2289
        %v2421 = vpop.f32.mrb[0].mxu0
        %v2422 = vadd.f32 %v1774, %v2421
        %v2423 = vpop.f32.mrb[0].mxu0
        %2424 = vmatprep.mubr.f32.mxu0 0.0
        %2425 = vmatmul.mubr.f32.gmra.mrb[0].mxu0 %v2292
        %v2426 = vpop.f32.mrb[0].mxu0
        %v2427 = vadd.f32 %v1775, %v2426
        %v2428 = vpop.f32.mrb[0].mxu0
        %2429 = vmatprep.mubr.f32.mxu0 0.0
        %2430 = vmatmul.mubr.f32.gmra.mrb[0].mxu0 %v2295
        %v2431 = vpop.f32.mrb[0].mxu0
        %v2432 = vadd.f32 %v1776, %v2431
        %v2433 = vpop.f32.mrb[0].mxu0
        %2434 = vmatprep.mubr.f32.mxu0 0.0
        %2435 = vmatmul.mubr.f32.gmra.mrb[0].mxu0 %v2298
        %v2436 = vpop.f32.mrb[0].mxu0
        %v2437 = vadd.f32 %v1777, %v2436
        %v2438 = vpop.f32.mrb[0].mxu0
        %2439 = vmatprep.mubr.f32.mxu0 0.0
        %2440 = vmatmul.mubr.f32.gmra.mrb[0].mxu0 %v2301
        %v2441 = vpop.f32.mrb[0].mxu0
        %v2442 = vadd.f32 %v1778, %v2441
        %v2443 = vpop.f32.mrb[0].mxu0
        %2444 = vmatprep.mubr.f32.mxu0 0.0
        %2445 = vmatmul.mubr.f32.gmra.mrb[0].mxu0 %v2304
        %v2446 = vpop.f32.mrb[0].mxu0
        %v2447 = vadd.f32 %v1779, %v2446
        %v2448 = vpop.f32.mrb[0].mxu0
        %2449 = vmatprep.mubr.f32.mxu0 0.0
        %2450 = vmatmul.mubr.f32.gmra.mrb[0].mxu0 %v2307
        %v2451 = vpop.f32.mrb[0].mxu0
        %v2452 = vadd.f32 %v1780, %v2451
        %v2453 = vpop.f32.mrb[0].mxu0
        %2454 = vmatprep.mubr.f32.mxu0 0.0
        %2455 = vmatmul.mubr.f32.gmra.mrb[0].mxu0 %v2310
        %v2456 = vpop.f32.mrb[0].mxu0
        %v2457 = vadd.f32 %v1781, %v2456
        %v2458 = vpop.f32.mrb[0].mxu0
        %2459 = vmatprep.mubr.f32.mxu0 0.0
        %2460 = vmatmul.mubr.f32.gmra.mrb[0].mxu0 %v2313
        %v2461 = vpop.f32.mrb[0].mxu0
        %v2462 = vadd.f32 %v1782, %v2461
        %v2463 = vpop.f32.mrb[0].mxu0
        %2464 = vmatprep.mubr.f32.mxu0 0.0
        %2465 = vmatmul.mubr.f32.gmra.mrb[0].mxu0 %v2316
        %v2466 = vpop.f32.mrb[0].mxu0
        %v2467 = vadd.f32 %v1783, %v2466
        %v2468 = vpop.f32.mrb[0].mxu0
        %2469 = vdwg.mxu0
        %v2470 = vsel %vm2068, %v2397, -inf
        %2471 = vmax.xlane.f32.xlu0 %v2470
        %v2472 = vpop.xlane.xlu0 %2471
        %v2473 = vsel %vm2068, %v2402, -inf
        %2474 = vmax.xlane.f32.xlu0 %v2473
        %v2475 = vpop.xlane.xlu0 %2474
        %v2476 = vsel %vm2068, %v2407, -inf
        %2477 = vmax.xlane.f32.xlu0 %v2476
        %v2478 = vpop.xlane.xlu0 %2477
        %v2479 = vsel %vm2068, %v2412, -inf
        %2480 = vmax.xlane.f32.xlu0 %v2479
        %v2481 = vpop.xlane.xlu0 %2480
        %v2482 = vsel %vm2068, %v2417, -inf
        %2483 = vmax.xlane.f32.xlu0 %v2482
        %v2484 = vpop.xlane.xlu0 %2483
        %v2485 = vsel %vm2068, %v2422, -inf
        %2486 = vmax.xlane.f32.xlu0 %v2485
        %v2487 = vpop.xlane.xlu0 %2486
        %v2488 = vsel %vm2068, %v2427, -inf
        %2489 = vmax.xlane.f32.xlu0 %v2488
        %v2490 = vpop.xlane.xlu0 %2489
        %v2491 = vsel %vm2068, %v2432, -inf
        %2492 = vmax.xlane.f32.xlu0 %v2491
        %v2493 = vpop.xlane.xlu0 %2492
        %v2494 = vsel %vm2068, %v2437, -inf
        %2495 = vmax.xlane.f32.xlu0 %v2494
        %v2496 = vpop.xlane.xlu0 %2495
        %v2497 = vsel %vm2068, %v2442, -inf
        %2498 = vmax.xlane.f32.xlu0 %v2497
        %v2499 = vpop.xlane.xlu0 %2498
        %v2500 = vsel %vm2068, %v2447, -inf
        %2501 = vmax.xlane.f32.xlu0 %v2500
        %v2502 = vpop.xlane.xlu0 %2501
        %v2503 = vsel %vm2068, %v2452, -inf
        %2504 = vmax.xlane.f32.xlu0 %v2503
        %v2505 = vpop.xlane.xlu0 %2504
        %v2506 = vsel %vm2068, %v2457, -inf
        %2507 = vmax.xlane.f32.xlu0 %v2506
        %v2508 = vpop.xlane.xlu0 %2507
        %v2509 = vsel %vm2068, %v2462, -inf
        %2510 = vmax.xlane.f32.xlu0 %v2509
        %v2511 = vpop.xlane.xlu0 %2510
        %v2512 = vsel %vm2068, %v2467, -inf
        %2513 = vmax.xlane.f32.xlu0 %v2512
        %v2514 = vpop.xlane.xlu0 %2513
        %v2515 = vsub.f32 %v2397, %v2472
        %v2516 = vsub.f32 %v2402, %v2475
        %v2517 = vsub.f32 %v2407, %v2478
        %v2518 = vsub.f32 %v2412, %v2481
        %v2519 = vsub.f32 %v2417, %v2484
        %v2520 = vsub.f32 %v2422, %v2487
        %v2521 = vsub.f32 %v2427, %v2490
        %v2522 = vsub.f32 %v2432, %v2493
        %v2523 = vsub.f32 %v2437, %v2496
        %v2524 = vsub.f32 %v2442, %v2499
        %v2525 = vsub.f32 %v2447, %v2502
        %v2526 = vsub.f32 %v2452, %v2505
        %v2527 = vsub.f32 %v2457, %v2508
        %v2528 = vsub.f32 %v2462, %v2511
        %v2529 = vsub.f32 %v2467, %v2514
        %v2530 = vmul.f32 %v2515, 1.442695
        %v2531 = vpow.pop %v2530
        %v2532 = vmul.f32 %v2516, 1.442695
        %v2533 = vpow.pop %v2532
        %v2534 = vmul.f32 %v2517, 1.442695
        %v2535 = vpow.pop %v2534
        %v2536 = vmul.f32 %v2518, 1.442695
        %v2537 = vpow.pop %v2536
        %v2538 = vmul.f32 %v2519, 1.442695
        %v2539 = vpow.pop %v2538
        %v2540 = vmul.f32 %v2520, 1.442695
        %v2541 = vpow.pop %v2540
        %v2542 = vmul.f32 %v2521, 1.442695
        %v2543 = vpow.pop %v2542
        %v2544 = vmul.f32 %v2522, 1.442695
        %v2545 = vpow.pop %v2544
        %v2546 = vmul.f32 %v2523, 1.442695
        %v2547 = vpow.pop %v2546
        %v2548 = vmul.f32 %v2524, 1.442695
        %v2549 = vpow.pop %v2548
        %v2550 = vmul.f32 %v2525, 1.442695
        %v2551 = vpow.pop %v2550
        %v2552 = vmul.f32 %v2526, 1.442695
        %v2553 = vpow.pop %v2552
        %v2554 = vmul.f32 %v2527, 1.442695
        %v2555 = vpow.pop %v2554
        %v2556 = vmul.f32 %v2528, 1.442695
        %v2557 = vpow.pop %v2556
        %v2558 = vmul.f32 %v2529, 1.442695
        %v2559 = vpow.pop %v2558
        %v2560 = vsel %vm2068, %v2531, 0.0
        %2561 = vadd.xlane.f32.xlu0 %v2560
        %v2562 = vpop.xlane.xlu0 %2561
        %v2563 = vsel %vm2068, %v2533, 0.0
        %2564 = vadd.xlane.f32.xlu0 %v2563
        %v2565 = vpop.xlane.xlu0 %2564
        %v2566 = vsel %vm2068, %v2535, 0.0
        %2567 = vadd.xlane.f32.xlu0 %v2566
        %v2568 = vpop.xlane.xlu0 %2567
        %v2569 = vsel %vm2068, %v2537, 0.0
        %2570 = vadd.xlane.f32.xlu0 %v2569
        %v2571 = vpop.xlane.xlu0 %2570
        %v2572 = vsel %vm2068, %v2539, 0.0
        %2573 = vadd.xlane.f32.xlu0 %v2572
        %v2574 = vpop.xlane.xlu0 %2573
        %v2575 = vsel %vm2068, %v2541, 0.0
        %2576 = vadd.xlane.f32.xlu0 %v2575
        %v2577 = vpop.xlane.xlu0 %2576
        %v2578 = vsel %vm2068, %v2543, 0.0
        %2579 = vadd.xlane.f32.xlu0 %v2578
        %v2580 = vpop.xlane.xlu0 %2579
        %v2581 = vsel %vm2068, %v2545, 0.0
        %2582 = vadd.xlane.f32.xlu0 %v2581
        %v2583 = vpop.xlane.xlu0 %2582
        %v2584 = vsel %vm2068, %v2547, 0.0
        %2585 = vadd.xlane.f32.xlu0 %v2584
        %v2586 = vpop.xlane.xlu0 %2585
        %v2587 = vsel %vm2068, %v2549, 0.0
        %2588 = vadd.xlane.f32.xlu0 %v2587
        %v2589 = vpop.xlane.xlu0 %2588
        %v2590 = vsel %vm2068, %v2551, 0.0
        %2591 = vadd.xlane.f32.xlu0 %v2590
        %v2592 = vpop.xlane.xlu0 %2591
        %v2593 = vsel %vm2068, %v2553, 0.0
        %2594 = vadd.xlane.f32.xlu0 %v2593
        %v2595 = vpop.xlane.xlu0 %2594
        %v2596 = vsel %vm2068, %v2555, 0.0
        %2597 = vadd.xlane.f32.xlu0 %v2596
        %v2598 = vpop.xlane.xlu0 %2597
        %v2599 = vsel %vm2068, %v2557, 0.0
        %2600 = vadd.xlane.f32.xlu0 %v2599
        %v2601 = vpop.xlane.xlu0 %2600
        %v2602 = vsel %vm2068, %v2559, 0.0
        %2603 = vadd.xlane.f32.xlu0 %v2602
        %v2604 = vpop.xlane.xlu0 %2603
        %v2605 = vrcp.pop %v2562
        %v2606 = vmul.f32 %v2531, %v2605
        %v2607 = vrcp.pop %v2565
        %v2608 = vmul.f32 %v2533, %v2607
        %v2609 = vrcp.pop %v2568
        %v2610 = vmul.f32 %v2535, %v2609
        %v2611 = vrcp.pop %v2571
        %v2612 = vmul.f32 %v2537, %v2611
        %v2613 = vrcp.pop %v2574
        %v2614 = vmul.f32 %v2539, %v2613
        %v2615 = vrcp.pop %v2577
        %v2616 = vmul.f32 %v2541, %v2615
        %v2617 = vrcp.pop %v2580
        %v2618 = vmul.f32 %v2543, %v2617
        %v2619 = vrcp.pop %v2583
        %v2620 = vmul.f32 %v2545, %v2619
        %v2621 = vrcp.pop %v2586
        %v2622 = vmul.f32 %v2547, %v2621
        %v2623 = vrcp.pop %v2589
        %v2624 = vmul.f32 %v2549, %v2623
        %v2625 = vrcp.pop %v2592
        %v2626 = vmul.f32 %v2551, %v2625
        %v2627 = vrcp.pop %v2595
        %v2628 = vmul.f32 %v2553, %v2627
        %v2629 = vrcp.pop %v2598
        %v2630 = vmul.f32 %v2555, %v2629
        %v2631 = vrcp.pop %v2601
        %v2632 = vmul.f32 %v2557, %v2631
        %v2633 = vrcp.pop %v2604
        %v2634 = vmul.f32 %v2559, %v2633
        %v2636 = vsel %vm2068, %v2606, 0
        %v2639 = vsel %vm2068, %v2608, 0
        %v2642 = vsel %vm2068, %v2610, 0
        %v2645 = vsel %vm2068, %v2612, 0
        %v2648 = vsel %vm2068, %v2614, 0
        %v2651 = vsel %vm2068, %v2616, 0
        %v2654 = vsel %vm2068, %v2618, 0
        %v2657 = vsel %vm2068, %v2620, 0
        %v2660 = vsel %vm2068, %v2622, 0
        %v2663 = vsel %vm2068, %v2624, 0
        %v2666 = vsel %vm2068, %v2626, 0
        %v2669 = vsel %vm2068, %v2628, 0
        %v2672 = vsel %vm2068, %v2630, 0
        %v2675 = vsel %vm2068, %v2632, 0
        %v2678 = vsel %vm2068, %v2634, 0
        %v2681 = vsel %vm2114, %v2065, 0
        %2683 = vmatprep.subr.mxu0 0.0
        %2684 = vmatpush1.msra.mxu0 %v2054
        %2685 = vmatprep.subr.mxu0 0.0
        %2686 = vmatpush1.msra.mxu0 %v2057
        %2687 = vmatprep.subr.mxu0 0.0
        %2688 = vmatpush1.msra.mxu0 %v2062
        %2689 = vmatprep.subr.mxu0 0.0
        %2690 = vmatpush1.msra.mxu0 %v2681
        %2691 = vmatprep.subr.mxu0 0.0
        %2692 = vmatpush1.msra.mxu0 0.0
        %2693 = vmatprep.subr.mxu0 0.0
        %2694 = vmatpush1.msra.mxu0 0.0
        %2695 = vmatprep.subr.mxu0 0.0
        %2696 = vmatpush1.msra.mxu0 0.0
        %2697 = vmatprep.subr.mxu0 0.0
        %2698 = vmatpush1.msra.mxu0 0.0
        %2699 = vmatprep.subr.mxu0 0.0
        %2700 = vmatpush1.msra.mxu0 0.0
        %2701 = vmatprep.subr.mxu0 0.0
        %2702 = vmatpush1.msra.mxu0 0.0
        %2703 = vmatprep.subr.mxu0 0.0
        %2704 = vmatpush1.msra.mxu0 0.0
        %2705 = vmatprep.subr.mxu0 0.0
        %2706 = vmatpush1.msra.mxu0 0.0
        %2707 = vmatprep.subr.mxu0 0.0
        %2708 = vmatpush1.msra.mxu0 0.0
        %2709 = vmatprep.subr.mxu0 0.0
        %2710 = vmatpush1.msra.mxu0 0.0
        %2711 = vmatprep.subr.mxu0 0.0
        %2712 = vmatpush1.msra.mxu0 0.0
        %2713 = vmatprep.subr.mxu0 0.0
        %2714 = vmatpush1.msra.mxu0 0.0
        %2715 = vmatprep.subr.mxu0 0.0
        %2716 = vmatpush1.msra.mxu0 0.0
        %2717 = vmatprep.subr.mxu0 0.0
        %2718 = vmatpush1.msra.mxu0 0.0
        %2719 = vmatprep.subr.mxu0 0.0
        %2720 = vmatpush1.msra.mxu0 0.0
        %2721 = vmatprep.subr.mxu0 0.0
        %2722 = vmatpush1.msra.mxu0 0.0
        %2723 = vmatprep.subr.mxu0 0.0
        %2724 = vmatpush1.msra.mxu0 0.0
        %2725 = vmatprep.subr.mxu0 0.0
        %2726 = vmatpush1.msra.mxu0 0.0
        %2727 = vmatprep.subr.mxu0 0.0
        %2728 = vmatpush1.msra.mxu0 0.0
        %2729 = vmatprep.subr.mxu0 0.0
        %2730 = vmatpush1.msra.mxu0 0.0
        %2731 = vmatprep.subr.mxu0 0.0
        %2732 = vmatpush1.msra.mxu0 0.0
        %2733 = vmatprep.subr.mxu0 0.0
        %2734 = vmatpush1.msra.mxu0 0.0
        %2735 = vmatprep.subr.mxu0 0.0
        %2736 = vmatpush1.msra.mxu0 0.0
        %2737 = vmatprep.subr.mxu0 0.0
        %2738 = vmatpush1.msra.mxu0 0.0
        %2739 = vmatprep.subr.mxu0 0.0
        %2740 = vmatpush1.msra.mxu0 0.0
        %2741 = vmatprep.subr.mxu0 0.0
        %2742 = vmatpush1.msra.mxu0 0.0
        %2743 = vmatprep.subr.mxu0 0.0
        %2744 = vmatpush1.msra.mxu0 0.0
        %2745 = vmatprep.subr.mxu0 0.0
        %2746 = vmatpush1.msra.mxu0 0.0
        %2747 = vmatprep.mubr.f32.mxu0 0.0
        %2748 = vmatmul.mubr.f32.gmra.mrb[0].mxu0 %v2636
        %v2749 = vpop.f32.mrb[0].mxu0
        %v2750 = vadd.f32 0.0, %v2749
        %v2751 = vpop.f32.mrb[0].mxu0
        %2752 = vmatprep.mubr.f32.mxu0 0.0
        %2753 = vmatmul.mubr.f32.gmra.mrb[0].mxu0 %v2639
        %v2754 = vpop.f32.mrb[0].mxu0
        %v2755 = vadd.f32 0.0, %v2754
        %v2756 = vpop.f32.mrb[0].mxu0
        %2757 = vmatprep.mubr.f32.mxu0 0.0
        %2758 = vmatmul.mubr.f32.gmra.mrb[0].mxu0 %v2642
        %v2759 = vpop.f32.mrb[0].mxu0
        %v2760 = vadd.f32 0.0, %v2759
        %v2761 = vpop.f32.mrb[0].mxu0
        %2762 = vmatprep.mubr.f32.mxu0 0.0
        %2763 = vmatmul.mubr.f32.gmra.mrb[0].mxu0 %v2645
        %v2764 = vpop.f32.mrb[0].mxu0
        %v2765 = vadd.f32 0.0, %v2764
        %v2766 = vpop.f32.mrb[0].mxu0
        %2767 = vmatprep.mubr.f32.mxu0 0.0
        %2768 = vmatmul.mubr.f32.gmra.mrb[0].mxu0 %v2648
        %v2769 = vpop.f32.mrb[0].mxu0
        %v2770 = vadd.f32 0.0, %v2769
        %v2771 = vpop.f32.mrb[0].mxu0
        %2772 = vmatprep.mubr.f32.mxu0 0.0
        %2773 = vmatmul.mubr.f32.gmra.mrb[0].mxu0 %v2651
        %v2774 = vpop.f32.mrb[0].mxu0
        %v2775 = vadd.f32 0.0, %v2774
        %v2776 = vpop.f32.mrb[0].mxu0
        %2777 = vmatprep.mubr.f32.mxu0 0.0
        %2778 = vmatmul.mubr.f32.gmra.mrb[0].mxu0 %v2654
        %v2779 = vpop.f32.mrb[0].mxu0
        %v2780 = vadd.f32 0.0, %v2779
        %v2781 = vpop.f32.mrb[0].mxu0
        %2782 = vmatprep.mubr.f32.mxu0 0.0
        %2783 = vmatmul.mubr.f32.gmra.mrb[0].mxu0 %v2657
        %v2784 = vpop.f32.mrb[0].mxu0
        %v2785 = vadd.f32 0.0, %v2784
        %v2786 = vpop.f32.mrb[0].mxu0
        %2787 = vmatprep.mubr.f32.mxu0 0.0
        %2788 = vmatmul.mubr.f32.gmra.mrb[0].mxu0 %v2660
        %v2789 = vpop.f32.mrb[0].mxu0
        %v2790 = vadd.f32 0.0, %v2789
        %v2791 = vpop.f32.mrb[0].mxu0
        %2792 = vmatprep.mubr.f32.mxu0 0.0
        %2793 = vmatmul.mubr.f32.gmra.mrb[0].mxu0 %v2663
        %v2794 = vpop.f32.mrb[0].mxu0
        %v2795 = vadd.f32 0.0, %v2794
        %v2796 = vpop.f32.mrb[0].mxu0
        %2797 = vmatprep.mubr.f32.mxu0 0.0
        %2798 = vmatmul.mubr.f32.gmra.mrb[0].mxu0 %v2666
        %v2799 = vpop.f32.mrb[0].mxu0
        %v2800 = vadd.f32 0.0, %v2799
        %v2801 = vpop.f32.mrb[0].mxu0
        %2802 = vmatprep.mubr.f32.mxu0 0.0
        %2803 = vmatmul.mubr.f32.gmra.mrb[0].mxu0 %v2669
        %v2804 = vpop.f32.mrb[0].mxu0
        %v2805 = vadd.f32 0.0, %v2804
        %v2806 = vpop.f32.mrb[0].mxu0
        %2807 = vmatprep.mubr.f32.mxu0 0.0
        %2808 = vmatmul.mubr.f32.gmra.mrb[0].mxu0 %v2672
        %v2809 = vpop.f32.mrb[0].mxu0
        %v2810 = vadd.f32 0.0, %v2809
        %v2811 = vpop.f32.mrb[0].mxu0
        %2812 = vmatprep.mubr.f32.mxu0 0.0
        %2813 = vmatmul.mubr.f32.gmra.mrb[0].mxu0 %v2675
        %v2814 = vpop.f32.mrb[0].mxu0
        %v2815 = vadd.f32 0.0, %v2814
        %v2816 = vpop.f32.mrb[0].mxu0
        %2817 = vmatprep.mubr.f32.mxu0 0.0
        %2818 = vmatmul.mubr.f32.gmra.mrb[0].mxu0 %v2678
        %v2819 = vpop.f32.mrb[0].mxu0
        %v2820 = vadd.f32 0.0, %v2819
        %v2821 = vpop.f32.mrb[0].mxu0
        %2822 = vdwg.mxu0
        %v2823 = vmul.f32 %v2750, %v1805
        %v2824 = vmul.f32 %v2755, %v1806
        %v2825 = vmul.f32 %v2760, %v1807
        %v2826 = vmul.f32 %v2765, %v1808
        %v2827 = vmul.f32 %v2770, %v1809
        %v2828 = vmul.f32 %v2775, %v1810
        %v2829 = vmul.f32 %v2780, %v1811
        %v2830 = vmul.f32 %v2785, %v1812
        %v2831 = vmul.f32 %v2790, %v1813
        %v2832 = vmul.f32 %v2795, %v1814
        %v2833 = vmul.f32 %v2800, %v1815
        %v2834 = vmul.f32 %v2805, %v1816
        %v2835 = vmul.f32 %v2810, %v1817
        %v2836 = vmul.f32 %v2815, %v1818
        %v2837 = vmul.f32 %v2820, %v1819
        %vm2838 = vcmask 982016
        %v2840 = vsel %vm2838, %v1834, 0
        %v2843 = vsel %vm2838, %v1835, 0
        %v2846 = vsel %vm2838, %v1836, 0
        %v2849 = vsel %vm2838, %v1837, 0
        %2851 = vmatprep.subr.mxu0 0.0
        %2852 = vmatpush1.msra.mxu0 %v2823
        %2853 = vmatprep.subr.mxu0 0.0
        %2854 = vmatpush1.msra.mxu0 %v2824
        %2855 = vmatprep.subr.mxu0 0.0
        %2856 = vmatpush1.msra.mxu0 %v2825
        %2857 = vmatprep.subr.mxu0 0.0
        %2858 = vmatpush1.msra.mxu0 %v2826
        %2859 = vmatprep.subr.mxu0 0.0
        %2860 = vmatpush1.msra.mxu0 %v2827
        %2861 = vmatprep.subr.mxu0 0.0
        %2862 = vmatpush1.msra.mxu0 %v2828
        %2863 = vmatprep.subr.mxu0 0.0
        %2864 = vmatpush1.msra.mxu0 %v2829
        %2865 = vmatprep.subr.mxu0 0.0
        %2866 = vmatpush1.msra.mxu0 %v2830
        %2867 = vmatprep.subr.mxu0 0.0
        %2868 = vmatpush1.msra.mxu0 %v2831
        %2869 = vmatprep.subr.mxu0 0.0
        %2870 = vmatpush1.msra.mxu0 %v2832
        %2871 = vmatprep.subr.mxu0 0.0
        %2872 = vmatpush1.msra.mxu0 %v2833
        %2873 = vmatprep.subr.mxu0 0.0
        %2874 = vmatpush1.msra.mxu0 %v2834
        %2875 = vmatprep.subr.mxu0 0.0
        %2876 = vmatpush1.msra.mxu0 %v2835
        %2877 = vmatprep.subr.mxu0 0.0
        %2878 = vmatpush1.msra.mxu0 %v2836
        %2879 = vmatprep.subr.mxu0 0.0
        %2880 = vmatpush1.msra.mxu0 %v2837
        %2881 = vmatprep.subr.mxu0 0.0
        %2882 = vmatpush1.msra.mxu0 0.0
        %2883 = vmatprep.subr.mxu0 0.0
        %2884 = vmatpush1.msra.mxu0 0.0
        %2885 = vmatprep.subr.mxu0 0.0
        %2886 = vmatpush1.msra.mxu0 0.0
        %2887 = vmatprep.subr.mxu0 0.0
        %2888 = vmatpush1.msra.mxu0 0.0
        %2889 = vmatprep.subr.mxu0 0.0
        %2890 = vmatpush1.msra.mxu0 0.0
        %2891 = vmatprep.subr.mxu0 0.0
        %2892 = vmatpush1.msra.mxu0 0.0
        %2893 = vmatprep.subr.mxu0 0.0
        %2894 = vmatpush1.msra.mxu0 0.0
        %2895 = vmatprep.subr.mxu0 0.0
        %2896 = vmatpush1.msra.mxu0 0.0
        %2897 = vmatprep.subr.mxu0 0.0
        %2898 = vmatpush1.msra.mxu0 0.0
        %2899 = vmatprep.subr.mxu0 0.0
        %2900 = vmatpush1.msra.mxu0 0.0
        %2901 = vmatprep.subr.mxu0 0.0
        %2902 = vmatpush1.msra.mxu0 0.0
        %2903 = vmatprep.subr.mxu0 0.0
        %2904 = vmatpush1.msra.mxu0 0.0
        %2905 = vmatprep.subr.mxu0 0.0
        %2906 = vmatpush1.msra.mxu0 0.0
        %2907 = vmatprep.subr.mxu0 0.0
        %2908 = vmatpush1.msra.mxu0 0.0
        %2909 = vmatprep.subr.mxu0 0.0
        %2910 = vmatpush1.msra.mxu0 0.0
        %2911 = vmatprep.subr.mxu0 0.0
        %2912 = vmatpush1.msra.mxu0 0.0
        %2913 = vmatprep.subr.mxu0 0.0
        %2914 = vmatpush1.msra.mxu0 0.0
        %2915 = vmatprep.mubr.f32.mxu0 0.0
        %2916 = vmatmul.mubr.f32.gmra.mrb[0].mxu0 %v2840
        %v2917 = vpop.f32.mrb[0].mxu0
        %v2918 = vadd.f32 0.0, %v2917
        %v2919 = vpop.f32.mrb[0].mxu0
        %2920 = vmatprep.mubr.f32.mxu0 0.0
        %2921 = vmatmul.mubr.f32.gmra.mrb[0].mxu0 %v2843
        %v2922 = vpop.f32.mrb[0].mxu0
        %v2923 = vadd.f32 0.0, %v2922
        %v2924 = vpop.f32.mrb[0].mxu0
        %2925 = vmatprep.mubr.f32.mxu0 0.0
        %2926 = vmatmul.mubr.f32.gmra.mrb[0].mxu0 %v2846
        %v2927 = vpop.f32.mrb[0].mxu0
        %v2928 = vadd.f32 0.0, %v2927
        %v2929 = vpop.f32.mrb[0].mxu0
        %2930 = vmatprep.mubr.f32.mxu0 0.0
        %2931 = vmatmul.mubr.f32.gmra.mrb[0].mxu0 %v2849
        %v2932 = vpop.f32.mrb[0].mxu0
        %v2933 = vadd.f32 0.0, %v2932
        %v2934 = vpop.f32.mrb[0].mxu0
        %2935 = vdwg.mxu0
        %v2936 = vpack.c.bf16 %v2923, %v2918
        %v2937 = vpack.c.bf16 %v2933, %v2928
        %v2939 = vlaneseq
        %v2940 = vshrl.u32 %v2939, 7
        %v2941 = vsub.s32 0, %v2940
        %v2942 = vrot.slane %v1857, %v2941
        %v2948 = vunpack.c.l.b16 %v1853
        %v2949 = vunpack.c.l.b16 %v1854
        %v2950 = vunpack.c.l.b16 %v1855
        %v2951 = vunpack.c.l.b16 %v1856
        %v2952 = vpack.c.b16 %v2949, %v2948
        %v2953 = vpack.c.b16 %v2951, %v2950
        %v2957 = vsel %vm1878, %v2936, 0
        %v2960 = vsel %vm1878, %v2937, 0
        %2962 = vmatprep.subr.bf16.mxu0 0
        %2963 = vmatpush1.bf16.msra.mxu0 %v2952
        %2964 = vmatprep.subr.bf16.mxu0 0
        %2965 = vmatpush1.bf16.msra.mxu0 %v2953
        %2966 = vmatprep.subr.bf16.mxu0 0
        %2967 = vmatpush1.bf16.msra.mxu0 0
        %2968 = vmatprep.subr.bf16.mxu0 0
        %2969 = vmatpush1.bf16.msra.mxu0 0
        %2970 = vmatprep.subr.bf16.mxu0 0
        %2971 = vmatpush1.bf16.msra.mxu0 0
        %2972 = vmatprep.subr.bf16.mxu0 0
        %2973 = vmatpush1.bf16.msra.mxu0 0
        %2974 = vmatprep.subr.bf16.mxu0 0
        %2975 = vmatpush1.bf16.msra.mxu0 0
        %2976 = vmatprep.subr.bf16.mxu0 0
        %2977 = vmatpush1.bf16.msra.mxu0 0
        %2978 = vmatprep.subr.bf16.mxu0 0
        %2979 = vmatpush1.bf16.msra.mxu0 0
        %2980 = vmatprep.subr.bf16.mxu0 0
        %2981 = vmatpush1.bf16.msra.mxu0 0
        %2982 = vmatprep.subr.bf16.mxu0 0
        %2983 = vmatpush1.bf16.msra.mxu0 0
        %2984 = vmatprep.subr.bf16.mxu0 0
        %2985 = vmatpush1.bf16.msra.mxu0 0
        %2986 = vmatprep.subr.bf16.mxu0 0
        %2987 = vmatpush1.bf16.msra.mxu0 0
        %2988 = vmatprep.subr.bf16.mxu0 0
        %2989 = vmatpush1.bf16.msra.mxu0 0
        %2990 = vmatprep.subr.bf16.mxu0 0
        %2991 = vmatpush1.bf16.msra.mxu0 0
        %2992 = vmatprep.subr.bf16.mxu0 0
        %2993 = vmatpush1.bf16.msra.mxu0 0
        %2994 = vmatprep.mubr.bf16.mxu0 0
        %2995 = vmatmul.mubr.bf16.gmra.mrb[0].mxu0 %v2957
        %v2996 = vpop.f32.mrb[0].mxu0
        %v2997 = vadd.f32 %v2942, %v2996
        %v2998 = vpop.f32.mrb[0].mxu0
        %v2999 = vpop.f32.mrb[0].mxu0
        %v3000 = vadd.f32 %v2942, %v2999
        %v3001 = vpop.f32.mrb[0].mxu0
        %3002 = vmatprep.mubr.bf16.mxu0 0
        %3003 = vmatmul.mubr.bf16.gmra.mrb[0].mxu0 %v2960
        %v3004 = vpop.f32.mrb[0].mxu0
        %v3005 = vadd.f32 %v2942, %v3004
        %v3006 = vpop.f32.mrb[0].mxu0
        %v3007 = vpop.f32.mrb[0].mxu0
        %v3008 = vadd.f32 %v2942, %v3007
        %v3009 = vpop.f32.mrb[0].mxu0
        %3010 = vdwg.mxu0
        %v3011 = vadd.f32 %v2997, %v1136
        %v3012 = vadd.f32 %v3000, %v1137
        %v3013 = vadd.f32 %v3005, %v1138
        %v3014 = vadd.f32 %v3008, %v1139
        %v3015 = vld [vmem:[%s19] sm:$0x1]
        %v3016 = vld [vmem:[%s21] sm:$0x1]
        %v3017 = vsel %vm1878, %v3011, 0.0
        %3018 = vadd.xlane.f32.xlu0 %v3017
        %v3019 = vpop.xlane.xlu0 %3018
        %v3020 = vsel %vm1878, %v3012, 0.0
        %3021 = vadd.xlane.f32.xlu0 %v3020
        %v3022 = vpop.xlane.xlu0 %3021
        %v3023 = vsel %vm1878, %v3013, 0.0
        %3024 = vadd.xlane.f32.xlu0 %v3023
        %v3025 = vpop.xlane.xlu0 %3024
        %vm3026 = vcmask 259072
        %v3027 = vsel %vm3026, %v3014, 0.0
        %3028 = vadd.xlane.f32.xlu0 %v3027
        %v3029 = vpop.xlane.xlu0 %3028
        %v3030 = vrcp.pop 32.0
        %v3031 = vmul.f32 %v3019, %v3030
        %v3032 = vmul.f32 %v3022, %v3030
        %v3033 = vmul.f32 %v3025, %v3030
        %v3034 = vmul.f32 %v3029, %v3030
        %v3035 = vsub.f32 %v3011, %v3031
        %v3036 = vsub.f32 %v3012, %v3032
        %v3037 = vsub.f32 %v3013, %v3033
        %v3038 = vsub.f32 %v3014, %v3034
        %v3039 = vmul.f32 %v3035, %v3035
        %v3040 = vmul.f32 %v3036, %v3036
        %v3041 = vmul.f32 %v3037, %v3037
        %v3042 = vmul.f32 %v3038, %v3038
        %v3043 = vsel %vm1878, %v3039, 0.0
        %3044 = vadd.xlane.f32.xlu0 %v3043
        %v3045 = vpop.xlane.xlu0 %3044
        %v3046 = vsel %vm1878, %v3040, 0.0
        %3047 = vadd.xlane.f32.xlu0 %v3046
        %v3048 = vpop.xlane.xlu0 %3047
        %v3049 = vsel %vm1878, %v3041, 0.0
        %3050 = vadd.xlane.f32.xlu0 %v3049
        %v3051 = vpop.xlane.xlu0 %3050
        %v3052 = vsel %vm3026, %v3042, 0.0
        %3053 = vadd.xlane.f32.xlu0 %v3052
        %v3054 = vpop.xlane.xlu0 %3053
        %v3055 = vmul.f32 %v3045, %v3030
        %v3056 = vmul.f32 %v3048, %v3030
        %v3057 = vmul.f32 %v3051, %v3030
        %v3058 = vmul.f32 %v3054, %v3030
        %v3059 = vadd.f32 %v3055, 1e-05
        %v3060 = vadd.f32 %v3056, 1e-05
        %v3061 = vadd.f32 %v3057, 1e-05
        %v3062 = vadd.f32 %v3058, 1e-05
        %v3063 = vrsqrt.pop %v3059
        %v3064 = vrsqrt.pop %v3060
        %v3065 = vrsqrt.pop %v3061
        %v3066 = vrsqrt.pop %v3062
        %v3067 = vmul.f32 %v3035, %v3063
        %v3068 = vmul.f32 %v3036, %v3064
        %v3069 = vmul.f32 %v3037, %v3065
        %v3070 = vmul.f32 %v3038, %v3066
        %v3072 = vlaneseq
        %v3073 = vshrl.u32 %v3072, 7
        %v3074 = vsub.s32 0, %v3073
        %v3075 = vrot.slane %v3015, %v3074
        %v3077 = vmul.f32 %v3067, %v3075
        %v3078 = vmul.f32 %v3068, %v3075
        %v3079 = vmul.f32 %v3069, %v3075
        %v3080 = vmul.f32 %v3070, %v3075
        %v3082 = vlaneseq
        %v3083 = vshrl.u32 %v3082, 7
        %v3084 = vsub.s32 0, %v3083
        %v3085 = vrot.slane %v3016, %v3084
        %v3087 = vadd.f32 %v3077, %v3085
        %v3088 = vadd.f32 %v3078, %v3085
        %v3089 = vadd.f32 %v3079, %v3085
        %v3090 = vadd.f32 %v3080, %v3085
        %vm3091 = vcmp.eq.s32.totalorder %v1753, %v1141
        %vm3092 = vcmp.eq.s32.totalorder %v1753, %v1142
        %v3093 = vsel %vm3091, 1.0, 0.0
        %v3094 = vsel %vm3092, 1.0, 0.0
        %v3095 = vrcp.pop 3.0
        %v3096 = vmul.f32 %v3093, %v3095
        %v3097 = vmul.f32 %v3094, %v3095
        %v3099 = vsel %vm2068, %v3096, 0
        %v3102 = vsel %vm2068, %v3097, 0
        %v3105 = vsel %vm2114, %v3090, 0
        %3107 = vmatprep.subr.mxu0 0.0
        %3108 = vmatpush1.msra.mxu0 %v3087
        %3109 = vmatprep.subr.mxu0 0.0
        %3110 = vmatpush1.msra.mxu0 %v3088
        %3111 = vmatprep.subr.mxu0 0.0
        %3112 = vmatpush1.msra.mxu0 %v3089
        %3113 = vmatprep.subr.mxu0 0.0
        %3114 = vmatpush1.msra.mxu0 %v3105
        %3115 = vmatprep.subr.mxu0 0.0
        %3116 = vmatpush1.msra.mxu0 0.0
        %3117 = vmatprep.subr.mxu0 0.0
        %3118 = vmatpush1.msra.mxu0 0.0
        %3119 = vmatprep.subr.mxu0 0.0
        %3120 = vmatpush1.msra.mxu0 0.0
        %3121 = vmatprep.subr.mxu0 0.0
        %3122 = vmatpush1.msra.mxu0 0.0
        %3123 = vmatprep.subr.mxu0 0.0
        %3124 = vmatpush1.msra.mxu0 0.0
        %3125 = vmatprep.subr.mxu0 0.0
        %3126 = vmatpush1.msra.mxu0 0.0
        %3127 = vmatprep.subr.mxu0 0.0
        %3128 = vmatpush1.msra.mxu0 0.0
        %3129 = vmatprep.subr.mxu0 0.0
        %3130 = vmatpush1.msra.mxu0 0.0
        %3131 = vmatprep.subr.mxu0 0.0
        %3132 = vmatpush1.msra.mxu0 0.0
        %3133 = vmatprep.subr.mxu0 0.0
        %3134 = vmatpush1.msra.mxu0 0.0
        %3135 = vmatprep.subr.mxu0 0.0
        %3136 = vmatpush1.msra.mxu0 0.0
        %3137 = vmatprep.subr.mxu0 0.0
        %3138 = vmatpush1.msra.mxu0 0.0
        %3139 = vmatprep.subr.mxu0 0.0
        %3140 = vmatpush1.msra.mxu0 0.0
        %3141 = vmatprep.subr.mxu0 0.0
        %3142 = vmatpush1.msra.mxu0 0.0
        %3143 = vmatprep.subr.mxu0 0.0
        %3144 = vmatpush1.msra.mxu0 0.0
        %3145 = vmatprep.subr.mxu0 0.0
        %3146 = vmatpush1.msra.mxu0 0.0
        %3147 = vmatprep.subr.mxu0 0.0
        %3148 = vmatpush1.msra.mxu0 0.0
        %3149 = vmatprep.subr.mxu0 0.0
        %3150 = vmatpush1.msra.mxu0 0.0
        %3151 = vmatprep.subr.mxu0 0.0
        %3152 = vmatpush1.msra.mxu0 0.0
        %3153 = vmatprep.subr.mxu0 0.0
        %3154 = vmatpush1.msra.mxu0 0.0
        %3155 = vmatprep.subr.mxu0 0.0
        %3156 = vmatpush1.msra.mxu0 0.0
        %3157 = vmatprep.subr.mxu0 0.0
        %3158 = vmatpush1.msra.mxu0 0.0
        %3159 = vmatprep.subr.mxu0 0.0
        %3160 = vmatpush1.msra.mxu0 0.0
        %3161 = vmatprep.subr.mxu0 0.0
        %3162 = vmatpush1.msra.mxu0 0.0
        %3163 = vmatprep.subr.mxu0 0.0
        %3164 = vmatpush1.msra.mxu0 0.0
        %3165 = vmatprep.subr.mxu0 0.0
        %3166 = vmatpush1.msra.mxu0 0.0
        %3167 = vmatprep.subr.mxu0 0.0
        %3168 = vmatpush1.msra.mxu0 0.0
        %3169 = vmatprep.subr.mxu0 0.0
        %3170 = vmatpush1.msra.mxu0 0.0
        %3171 = vmatprep.mubr.f32.mxu0 0.0
        %3172 = vmatmul.mubr.f32.gmra.mrb[0].mxu0 %v3099
        %v3173 = vpop.f32.mrb[0].mxu0
        %v3174 = vadd.f32 0.0, %v3173
        %v3175 = vpop.f32.mrb[0].mxu0
        %3176 = vmatprep.mubr.f32.mxu0 0.0
        %3177 = vmatmul.mubr.f32.gmra.mrb[0].mxu0 %v3102
        %v3178 = vpop.f32.mrb[0].mxu0
        %v3179 = vadd.f32 0.0, %v3178
        %v3180 = vpop.f32.mrb[0].mxu0
        %3181 = vdwg.mxu0
        %3182 = vst.msk [vmem:[#allocation2] sm:$0xff] %vm1878, %v3174
        %vm3183 = vcmask 254976
        %3184 = vst.msk [vmem:[#allocation2 + $0x8] sm:$0x3] %vm3183, %v3179
        %vm3185 = vcmp.ge.s32.totalorder %v1141, 10
        %vm3186 = vcmp.ge.s32.totalorder %v1142, 10
        %vm3187 = vcmp.ge.s32.totalorder %v1143, 10
        %vm3188 = vcmp.ge.s32.totalorder %v1144, 10
        %vm3189 = vcmp.ge.s32.totalorder %v1145, 10
        %vm3190 = vcmp.ge.s32.totalorder %v1146, 10
        %vm3191 = vcmp.ge.s32.totalorder %v1147, 10
        %vm3192 = vcmp.ge.s32.totalorder %v1148, 10
        %vm3193 = vcmp.ge.s32.totalorder %v1149, 10
        %vm3194 = vcmp.ge.s32.totalorder %v1150, 10
        %v3195 = vsel %vm3185, 1, 0
        %v3196 = vsel %vm3186, 1, 0
        %v3197 = vsel %vm3187, 1, 0
        %v3198 = vsel %vm3188, 1, 0
        %v3199 = vsel %vm3189, 1, 0
        %v3200 = vsel %vm3190, 1, 0
        %v3201 = vsel %vm3191, 1, 0
        %v3202 = vsel %vm3192, 1, 0
        %v3203 = vsel %vm3193, 1, 0
        %v3204 = vsel %vm3194, 1, 0
        %vm3205 = vcmp.ge.s32.totalorder %v1141, 20
        %vm3206 = vcmp.ge.s32.totalorder %v1142, 20
        %vm3207 = vcmp.ge.s32.totalorder %v1143, 20
        %vm3208 = vcmp.ge.s32.totalorder %v1144, 20
        %vm3209 = vcmp.ge.s32.totalorder %v1145, 20
        %vm3210 = vcmp.ge.s32.totalorder %v1146, 20
        %vm3211 = vcmp.ge.s32.totalorder %v1147, 20
        %vm3212 = vcmp.ge.s32.totalorder %v1148, 20
        %vm3213 = vcmp.ge.s32.totalorder %v1149, 20
        %vm3214 = vcmp.ge.s32.totalorder %v1150, 20
        %v3215 = vsel %vm3205, 1, 0
        %v3216 = vsel %vm3206, 1, 0
        %v3217 = vsel %vm3207, 1, 0
        %v3218 = vsel %vm3208, 1, 0
        %v3219 = vsel %vm3209, 1, 0
        %v3220 = vsel %vm3210, 1, 0
        %v3221 = vsel %vm3211, 1, 0
        %v3222 = vsel %vm3212, 1, 0
        %v3223 = vsel %vm3213, 1, 0
        %v3224 = vsel %vm3214, 1, 0
        %v3225 = vadd.s32 %v3195, %v3215
        %v3226 = vadd.s32 %v3196, %v3216
        %v3227 = vadd.s32 %v3197, %v3217
        %v3228 = vadd.s32 %v3198, %v3218
        %v3229 = vadd.s32 %v3199, %v3219
        %v3230 = vadd.s32 %v3200, %v3220
        %v3231 = vadd.s32 %v3201, %v3221
        %v3232 = vadd.s32 %v3202, %v3222
        %v3233 = vadd.s32 %v3203, %v3223
        %v3234 = vadd.s32 %v3204, %v3224
        %v3235 = vadd.s32 %v3225, %v1173
        %v3236 = vadd.s32 %v3226, %v1174
        %v3237 = vadd.s32 %v3227, %v1175
        %v3238 = vadd.s32 %v3228, %v1176
        %v3239 = vadd.s32 %v3229, %v1177
        %v3240 = vadd.s32 %v3230, %v1178
        %v3241 = vadd.s32 %v3231, %v1179
        %v3242 = vadd.s32 %v3232, %v1180
        %v3243 = vadd.s32 %v3233, %v1181
        %v3244 = vadd.s32 %v3234, %v1182
        %vm3245 = vcmp.ge.s32.totalorder %v1141, 40
        %vm3246 = vcmp.ge.s32.totalorder %v1142, 40
        %vm3247 = vcmp.ge.s32.totalorder %v1143, 40
        %vm3248 = vcmp.ge.s32.totalorder %v1144, 40
        %vm3249 = vcmp.ge.s32.totalorder %v1145, 40
        %vm3250 = vcmp.ge.s32.totalorder %v1146, 40
        %vm3251 = vcmp.ge.s32.totalorder %v1147, 40
        %vm3252 = vcmp.ge.s32.totalorder %v1148, 40
        %vm3253 = vcmp.ge.s32.totalorder %v1149, 40
        %vm3254 = vcmp.ge.s32.totalorder %v1150, 40
        %v3255 = vsel %vm3245, 1, 0
        %v3256 = vsel %vm3246, 1, 0
        %v3257 = vsel %vm3247, 1, 0
        %v3258 = vsel %vm3248, 1, 0
        %v3259 = vsel %vm3249, 1, 0
        %v3260 = vsel %vm3250, 1, 0
        %v3261 = vsel %vm3251, 1, 0
        %v3262 = vsel %vm3252, 1, 0
        %v3263 = vsel %vm3253, 1, 0
        %v3264 = vsel %vm3254, 1, 0
        %v3265 = vadd.s32 %v3235, %v3255
        %v3266 = vadd.s32 %v3236, %v3256
        %v3267 = vadd.s32 %v3237, %v3257
        %v3268 = vadd.s32 %v3238, %v3258
        %v3269 = vadd.s32 %v3239, %v3259
        %v3270 = vadd.s32 %v3240, %v3260
        %v3271 = vadd.s32 %v3241, %v3261
        %v3272 = vadd.s32 %v3242, %v3262
        %v3273 = vadd.s32 %v3243, %v3263
        %v3274 = vadd.s32 %v3244, %v3264
        %vm3275 = vcmp.ge.s32.totalorder %v1141, 50
        %vm3276 = vcmp.ge.s32.totalorder %v1142, 50
        %vm3277 = vcmp.ge.s32.totalorder %v1143, 50
        %vm3278 = vcmp.ge.s32.totalorder %v1144, 50
        %vm3279 = vcmp.ge.s32.totalorder %v1145, 50
        %vm3280 = vcmp.ge.s32.totalorder %v1146, 50
        %vm3281 = vcmp.ge.s32.totalorder %v1147, 50
        %vm3282 = vcmp.ge.s32.totalorder %v1148, 50
        %vm3283 = vcmp.ge.s32.totalorder %v1149, 50
        %vm3284 = vcmp.ge.s32.totalorder %v1150, 50
        %v3285 = vsel %vm3275, 1, 0
        %v3286 = vsel %vm3276, 1, 0
        %v3287 = vsel %vm3277, 1, 0
        %v3288 = vsel %vm3278, 1, 0
        %v3289 = vsel %vm3279, 1, 0
        %v3290 = vsel %vm3280, 1, 0
        %v3291 = vsel %vm3281, 1, 0
        %v3292 = vsel %vm3282, 1, 0
        %v3293 = vsel %vm3283, 1, 0
        %v3294 = vsel %vm3284, 1, 0
        %v3295 = vadd.s32 %v3265, %v3285
        %v3296 = vadd.s32 %v3266, %v3286
        %v3297 = vadd.s32 %v3267, %v3287
        %v3298 = vadd.s32 %v3268, %v3288
        %v3299 = vadd.s32 %v3269, %v3289
        %v3300 = vadd.s32 %v3270, %v3290
        %v3301 = vadd.s32 %v3271, %v3291
        %v3302 = vadd.s32 %v3272, %v3292
        %v3303 = vadd.s32 %v3273, %v3293
        %v3304 = vadd.s32 %v3274, %v3294
        %v3305 = vadd.s32 %v3295, %v1203
        %v3306 = vadd.s32 %v3296, %v1204
        %v3307 = vadd.s32 %v3297, %v1205
        %v3308 = vadd.s32 %v3298, %v1206
        %v3309 = vadd.s32 %v3299, %v1207
        %v3310 = vadd.s32 %v3300, %v1208
        %v3311 = vadd.s32 %v3301, %v1209
        %v3312 = vadd.s32 %v3302, %v1210
        %v3313 = vadd.s32 %v3303, %v1211
        %v3314 = vadd.s32 %v3304, %v1212
        %vm3315 = vcmp.ge.s32.totalorder %v1141, 70
        %vm3316 = vcmp.ge.s32.totalorder %v1142, 70
        %vm3317 = vcmp.ge.s32.totalorder %v1143, 70
        %vm3318 = vcmp.ge.s32.totalorder %v1144, 70
        %vm3319 = vcmp.ge.s32.totalorder %v1145, 70
        %vm3320 = vcmp.ge.s32.totalorder %v1146, 70
        %vm3321 = vcmp.ge.s32.totalorder %v1147, 70
        %vm3322 = vcmp.ge.s32.totalorder %v1148, 70
        %vm3323 = vcmp.ge.s32.totalorder %v1149, 70
        %vm3324 = vcmp.ge.s32.totalorder %v1150, 70
        %v3325 = vsel %vm3315, 1, 0
        %v3326 = vsel %vm3316, 1, 0
        %v3327 = vsel %vm3317, 1, 0
        %v3328 = vsel %vm3318, 1, 0
        %v3329 = vsel %vm3319, 1, 0
        %v3330 = vsel %vm3320, 1, 0
        %v3331 = vsel %vm3321, 1, 0
        %v3332 = vsel %vm3322, 1, 0
        %v3333 = vsel %vm3323, 1, 0
        %v3334 = vsel %vm3324, 1, 0
        %v3335 = vadd.s32 %v3305, %v3325
        %v3336 = vadd.s32 %v3306, %v3326
        %v3337 = vadd.s32 %v3307, %v3327
        %v3338 = vadd.s32 %v3308, %v3328
        %v3339 = vadd.s32 %v3309, %v3329
        %v3340 = vadd.s32 %v3310, %v3330
        %v3341 = vadd.s32 %v3311, %v3331
        %v3342 = vadd.s32 %v3312, %v3332
        %v3343 = vadd.s32 %v3313, %v3333
        %v3344 = vadd.s32 %v3314, %v3334
        %v3345 = vmul.u32 %v3335, 10
        %v3346 = vmul.u32 %v3336, 10
        %v3347 = vmul.u32 %v3337, 10
        %v3348 = vmul.u32 %v3338, 10
        %v3349 = vmul.u32 %v3339, 10
        %v3350 = vmul.u32 %v3340, 10
        %v3351 = vmul.u32 %v3341, 10
        %v3352 = vmul.u32 %v3342, 10
        %v3353 = vmul.u32 %v3343, 10
        %v3354 = vmul.u32 %v3344, 10
        %v3355 = vsub.s32 %v1141, %v3345
        %v3356 = vsub.s32 %v1142, %v3346
        %v3357 = vsub.s32 %v1143, %v3347
        %v3358 = vsub.s32 %v1144, %v3348
        %v3359 = vsub.s32 %v1145, %v3349
        %v3360 = vsub.s32 %v1146, %v3350
        %v3361 = vsub.s32 %v1147, %v3351
        %v3362 = vsub.s32 %v1148, %v3352
        %v3363 = vsub.s32 %v1149, %v3353
        %v3364 = vsub.s32 %v1150, %v3354
        %vm3365 = vcmp.eq.s32.totalorder %v3355, %v1157
        %vm3366 = vcmp.eq.s32.totalorder %v3356, %v1157
        %vm3367 = vcmp.eq.s32.totalorder %v3357, %v1157
        %vm3368 = vcmp.eq.s32.totalorder %v3358, %v1157
        %vm3369 = vcmp.eq.s32.totalorder %v3359, %v1157
        %vm3370 = vcmp.eq.s32.totalorder %v3360, %v1157
        %vm3371 = vcmp.eq.s32.totalorder %v3361, %v1157
        %vm3372 = vcmp.eq.s32.totalorder %v3362, %v1157
        %vm3373 = vcmp.eq.s32.totalorder %v3363, %v1157
        %vm3374 = vcmp.eq.s32.totalorder %v3364, %v1157
        %v3375 = vsel %vm3365, 1.0, 0.0
        %v3376 = vsel %vm3366, 1.0, 0.0
        %v3377 = vsel %vm3367, 1.0, 0.0
        %v3378 = vsel %vm3368, 1.0, 0.0
        %v3379 = vsel %vm3369, 1.0, 0.0
        %v3380 = vsel %vm3370, 1.0, 0.0
        %v3381 = vsel %vm3371, 1.0, 0.0
        %v3382 = vsel %vm3372, 1.0, 0.0
        %v3383 = vsel %vm3373, 1.0, 0.0
        %v3384 = vsel %vm3374, 1.0, 0.0
        %vm3385 = vcmp.ge.s32.totalorder %v3355, 5
        %vm3386 = vcmp.ge.s32.totalorder %v3356, 5
        %vm3387 = vcmp.ge.s32.totalorder %v3357, 5
        %vm3388 = vcmp.ge.s32.totalorder %v3358, 5
        %vm3389 = vcmp.ge.s32.totalorder %v3359, 5
        %vm3390 = vcmp.ge.s32.totalorder %v3360, 5
        %vm3391 = vcmp.ge.s32.totalorder %v3361, 5
        %vm3392 = vcmp.ge.s32.totalorder %v3362, 5
        %vm3393 = vcmp.ge.s32.totalorder %v3363, 5
        %vm3394 = vcmp.ge.s32.totalorder %v3364, 5
        %v3395 = vsel %vm3385, 1, 0
        %v3396 = vsel %vm3386, 1, 0
        %v3397 = vsel %vm3387, 1, 0
        %v3398 = vsel %vm3388, 1, 0
        %v3399 = vsel %vm3389, 1, 0
        %v3400 = vsel %vm3390, 1, 0
        %v3401 = vsel %vm3391, 1, 0
        %v3402 = vsel %vm3392, 1, 0
        %v3403 = vsel %vm3393, 1, 0
        %v3404 = vsel %vm3394, 1, 0
        %vm3405 = vcmp.ge.s32.totalorder %v1157, 5
        %v3406 = vsel %vm3405, 1, 0
        %vm3407 = vcmp.eq.s32.totalorder %v3395, %v3406
        %vm3408 = vcmp.eq.s32.totalorder %v3396, %v3406
        %vm3409 = vcmp.eq.s32.totalorder %v3397, %v3406
        %vm3410 = vcmp.eq.s32.totalorder %v3398, %v3406
        %vm3411 = vcmp.eq.s32.totalorder %v3399, %v3406
        %vm3412 = vcmp.eq.s32.totalorder %v3400, %v3406
        %vm3413 = vcmp.eq.s32.totalorder %v3401, %v3406
        %vm3414 = vcmp.eq.s32.totalorder %v3402, %v3406
        %vm3415 = vcmp.eq.s32.totalorder %v3403, %v3406
        %vm3416 = vcmp.eq.s32.totalorder %v3404, %v3406
        %v3417 = vsel %vm3407, 0.0, -1e+30
        %v3418 = vsel %vm3408, 0.0, -1e+30
        %v3419 = vsel %vm3409, 0.0, -1e+30
        %v3420 = vsel %vm3410, 0.0, -1e+30
        %v3421 = vsel %vm3411, 0.0, -1e+30
        %v3422 = vsel %vm3412, 0.0, -1e+30
        %v3423 = vsel %vm3413, 0.0, -1e+30
        %v3424 = vsel %vm3414, 0.0, -1e+30
        %v3425 = vsel %vm3415, 0.0, -1e+30
        %v3426 = vsel %vm3416, 0.0, -1e+30
        %vm3427 = vcmp.ge.s32.totalorder %v1157, 4
        %v3428 = vsel %vm3427, 1, 0
        %v3429 = vadd.s32 %v3428, %v1785
        %v3430 = vadd.s32 %v3429, %v1737
        %v3431 = vadd.s32 %v3430, %v1787
        %vm3432 = vcmp.ge.s32.totalorder %v1157, 20
        %v3433 = vsel %vm3432, 1, 0
        %v3434 = vadd.s32 %v3431, %v3433
        %v3435 = vadd.s32 %v3434, %v1749
        %vm3436 = vcmp.ge.s32.totalorder %v1157, 28
        %v3437 = vsel %vm3436, 1, 0
        %v3438 = vadd.s32 %v3435, %v3437
        %vm3439 = vcmp.eq.s32.totalorder %v3335, %v3438
        %vm3440 = vcmp.eq.s32.totalorder %v3336, %v3438
        %vm3441 = vcmp.eq.s32.totalorder %v3337, %v3438
        %vm3442 = vcmp.eq.s32.totalorder %v3338, %v3438
        %vm3443 = vcmp.eq.s32.totalorder %v3339, %v3438
        %vm3444 = vcmp.eq.s32.totalorder %v3340, %v3438
        %vm3445 = vcmp.eq.s32.totalorder %v3341, %v3438
        %vm3446 = vcmp.eq.s32.totalorder %v3342, %v3438
        %vm3447 = vcmp.eq.s32.totalorder %v3343, %v3438
        %vm3448 = vcmp.eq.s32.totalorder %v3344, %v3438
        %v3449 = vsel %vm3439, 1.0, 0.0
        %v3450 = vsel %vm3440, 1.0, 0.0
        %v3451 = vsel %vm3441, 1.0, 0.0
        %v3452 = vsel %vm3442, 1.0, 0.0
        %v3453 = vsel %vm3443, 1.0, 0.0
        %v3454 = vsel %vm3444, 1.0, 0.0
        %v3455 = vsel %vm3445, 1.0, 0.0
        %v3456 = vsel %vm3446, 1.0, 0.0
        %v3457 = vsel %vm3447, 1.0, 0.0
        %v3458 = vsel %vm3448, 1.0, 0.0
        %vm3459 = vcmp.ge.s32.totalorder %v1157, 10
        %v3460 = vsel %vm3459, 1, 0
        %v3461 = vadd.s32 %v3460, %v3433
        %v3462 = vadd.s32 %v3461, %v1821
        %vm3463 = vcmp.ge.s32.totalorder %v1157, 40
        %v3464 = vsel %vm3463, 1, 0
        %v3465 = vadd.s32 %v3462, %v3464
        %vm3466 = vcmp.ge.s32.totalorder %v1157, 50
        %v3467 = vsel %vm3466, 1, 0
        %v3468 = vadd.s32 %v3465, %v3467
        %v3469 = vadd.s32 %v3468, %v1823
        %vm3470 = vcmp.ge.s32.totalorder %v1157, 70
        %v3471 = vsel %vm3470, 1, 0
        %v3472 = vadd.s32 %v3469, %v3471
        %v3473 = vmul.u32 %v3472, 10
        %v3474 = vsub.s32 %v1157, %v3473
        %vm3475 = vcmp.eq.s32.totalorder %v3474, %v1141
        %vm3476 = vcmp.eq.s32.totalorder %v3474, %v1142
        %v3477 = vsel %vm3475, 1.0, 0.0
        %v3478 = vsel %vm3476, 1.0, 0.0
        %vm3479 = vcmask 80896
        %3480 = vst.msk [vmem:[#allocation3] sm:$0xff] %vm3479, %v3375
        %3481 = vst.msk [vmem:[#allocation3 + $0x8] sm:$0xff] %vm3479, %v3376
        %3482 = vst.msk [vmem:[#allocation3 + $0x10] sm:$0xff] %vm3479, %v3377
        %3483 = vst.msk [vmem:[#allocation3 + $0x18] sm:$0xff] %vm3479, %v3378
        %3484 = vst.msk [vmem:[#allocation3 + $0x20] sm:$0xff] %vm3479, %v3379
        %3485 = vst.msk [vmem:[#allocation3 + $0x28] sm:$0xff] %vm3479, %v3380
        %3486 = vst.msk [vmem:[#allocation3 + $0x30] sm:$0xff] %vm3479, %v3381
        %3487 = vst.msk [vmem:[#allocation3 + $0x38] sm:$0xff] %vm3479, %v3382
        %3488 = vst.msk [vmem:[#allocation3 + $0x40] sm:$0xff] %vm3479, %v3383
        %3489 = vst.msk [vmem:[#allocation3 + $0x48] sm:$0xff] %vm3479, %v3384
        %3490 = vst.msk [vmem:[#allocation4] sm:$0xff] %vm3479, %v3417
        %3491 = vst.msk [vmem:[#allocation4 + $0x8] sm:$0xff] %vm3479, %v3418
        %3492 = vst.msk [vmem:[#allocation4 + $0x10] sm:$0xff] %vm3479, %v3419
        %3493 = vst.msk [vmem:[#allocation4 + $0x18] sm:$0xff] %vm3479, %v3420
        %3494 = vst.msk [vmem:[#allocation4 + $0x20] sm:$0xff] %vm3479, %v3421
        %3495 = vst.msk [vmem:[#allocation4 + $0x28] sm:$0xff] %vm3479, %v3422
        %3496 = vst.msk [vmem:[#allocation4 + $0x30] sm:$0xff] %vm3479, %v3423
        %3497 = vst.msk [vmem:[#allocation4 + $0x38] sm:$0xff] %vm3479, %v3424
        %3498 = vst.msk [vmem:[#allocation4 + $0x40] sm:$0xff] %vm3479, %v3425
        %3499 = vst.msk [vmem:[#allocation4 + $0x48] sm:$0xff] %vm3479, %v3426
        %3500 = vst.msk [vmem:[#allocation5] sm:$0xff] %vm1878, %v3449
        %3501 = vst.msk [vmem:[#allocation5 + $0x8] sm:$0xff] %vm1878, %v3450
        %3502 = vst.msk [vmem:[#allocation5 + $0x10] sm:$0xff] %vm1878, %v3451
        %3503 = vst.msk [vmem:[#allocation5 + $0x18] sm:$0xff] %vm1878, %v3452
        %3504 = vst.msk [vmem:[#allocation5 + $0x20] sm:$0xff] %vm1878, %v3453
        %3505 = vst.msk [vmem:[#allocation5 + $0x28] sm:$0xff] %vm1878, %v3454
        %3506 = vst.msk [vmem:[#allocation5 + $0x30] sm:$0xff] %vm1878, %v3455
        %3507 = vst.msk [vmem:[#allocation5 + $0x38] sm:$0xff] %vm1878, %v3456
        %3508 = vst.msk [vmem:[#allocation5 + $0x40] sm:$0xff] %vm1878, %v3457
        %3509 = vst.msk [vmem:[#allocation5 + $0x48] sm:$0xff] %vm1878, %v3458
        %vm3510 = vcmask 654336
        %3511 = vst.msk [vmem:[#allocation6] sm:$0xff] %vm3510, %v3477
        %vm3512 = vcmask 648192
        %3513 = vst.msk [vmem:[#allocation6 + $0x8] sm:$0x3] %vm3512, %v3478
      $region140: #{temporal_transformer_forward.1} parent=135 // pred_fallthru
        _
      %v3514 = vld [vmem:[#allocation2] sm:$0xff]
      %v3515 = vld [vmem:[#allocation2 + $0x8] sm:$0x3]
      %v3516 = vld [vmem:[%s1074] sm:$0xf]
      %v3517 = vld [vmem:[%s1074 + $0x4] sm:$0xf]
      %v3518 = vld [vmem:[%s1074 + $0x8] sm:$0xf]
      %v3519 = vld [vmem:[%s1074 + $0xc] sm:$0xf]
      %v3520 = vld [vmem:[%s1079] sm:$0xf]
      %v3521 = vld [vmem:[%s1079 + $0x4] sm:$0xf]
      %v3522 = vld [vmem:[%s1079 + $0x8] sm:$0xf]
      %v3523 = vld [vmem:[%s1079 + $0xc] sm:$0xf]
      %v3524 = vld [vmem:[%s1084] sm:$0xf]
      %v3525 = vld [vmem:[%s1084 + $0x4] sm:$0xf]
      %v3526 = vld [vmem:[%s1084 + $0x8] sm:$0xf]
      %v3527 = vld [vmem:[%s1084 + $0xc] sm:$0xf]
      %v3528 = vld [vmem:[%s1087] sm:$0x1]
      %v3529 = vld [vmem:[%s1090] sm:$0x1]
      %v3530 = vld [vmem:[%s1093] sm:$0x1]
      %v3531 = vld [vmem:[%s1098] sm:$0xf]
      %v3532 = vld [vmem:[%s1098 + $0x4] sm:$0xf]
      %v3533 = vld [vmem:[%s1098 + $0x8] sm:$0xf]
      %v3534 = vld [vmem:[%s1098 + $0xc] sm:$0xf]
      %v3535 = vld [vmem:[%s1101] sm:$0x1]
      %v3536 = vld [vmem:[#allocation3] sm:$0xff]
      %v3537 = vld [vmem:[#allocation3 + $0x8] sm:$0xff]
      %v3538 = vld [vmem:[#allocation3 + $0x10] sm:$0xff]
      %v3539 = vld [vmem:[#allocation3 + $0x18] sm:$0xff]
      %v3540 = vld [vmem:[#allocation3 + $0x20] sm:$0xff]
      %v3541 = vld [vmem:[#allocation3 + $0x28] sm:$0xff]
      %v3542 = vld [vmem:[#allocation3 + $0x30] sm:$0xff]
      %v3543 = vld [vmem:[#allocation3 + $0x38] sm:$0xff]
      %v3544 = vld [vmem:[#allocation3 + $0x40] sm:$0xff]
      %v3545 = vld [vmem:[#allocation3 + $0x48] sm:$0xff]
      %v3546 = vld [vmem:[#allocation4] sm:$0xff]
      %v3547 = vld [vmem:[#allocation4 + $0x8] sm:$0xff]
      %v3548 = vld [vmem:[#allocation4 + $0x10] sm:$0xff]
      %v3549 = vld [vmem:[#allocation4 + $0x18] sm:$0xff]
      %v3550 = vld [vmem:[#allocation4 + $0x20] sm:$0xff]
      %v3551 = vld [vmem:[#allocation4 + $0x28] sm:$0xff]
      %v3552 = vld [vmem:[#allocation4 + $0x30] sm:$0xff]
      %v3553 = vld [vmem:[#allocation4 + $0x38] sm:$0xff]
      %v3554 = vld [vmem:[#allocation4 + $0x40] sm:$0xff]
      %v3555 = vld [vmem:[#allocation4 + $0x48] sm:$0xff]
      %v3556 = vld [vmem:[#allocation5] sm:$0xff]
      %v3557 = vld [vmem:[#allocation5 + $0x8] sm:$0xff]
      %v3558 = vld [vmem:[#allocation5 + $0x10] sm:$0xff]
      %v3559 = vld [vmem:[#allocation5 + $0x18] sm:$0xff]
      %v3560 = vld [vmem:[#allocation5 + $0x20] sm:$0xff]
      %v3561 = vld [vmem:[#allocation5 + $0x28] sm:$0xff]
      %v3562 = vld [vmem:[#allocation5 + $0x30] sm:$0xff]
      %v3563 = vld [vmem:[#allocation5 + $0x38] sm:$0xff]
      %v3564 = vld [vmem:[#allocation5 + $0x40] sm:$0xff]
      %v3565 = vld [vmem:[#allocation5 + $0x48] sm:$0xff]
      %v3566 = vld [vmem:[#allocation6] sm:$0xff]
      %v3567 = vld [vmem:[#allocation6 + $0x8] sm:$0x3]
      %v3568 = vpack.c.bf16 %v3515, %v3514
      %v3570 = vlaneseq
      %v3571 = vshrl.u32 %v3570, 7
      %v3572 = vsub.s32 0, %v3571
      %v3573 = vrot.slane %v3528, %v3572
      %v3579 = vunpack.c.l.b16 %v3516
      %v3580 = vunpack.c.l.b16 %v3517
      %v3581 = vunpack.c.l.b16 %v3518
      %v3582 = vunpack.c.l.b16 %v3519
      %v3583 = vpack.c.b16 %v3580, %v3579
      %v3584 = vpack.c.b16 %v3582, %v3581
      %vm3587 = vcmask 261120
      %v3589 = vsel %vm3587, %v3568, 0
      %3591 = vmatprep.subr.bf16.mxu0 0
      %3592 = vmatpush1.bf16.msra.mxu0 %v3583
      %3593 = vmatprep.subr.bf16.mxu0 0
      %3594 = vmatpush1.bf16.msra.mxu0 %v3584
      %3595 = vmatprep.subr.bf16.mxu0 0
      %3596 = vmatpush1.bf16.msra.mxu0 0
      %3597 = vmatprep.subr.bf16.mxu0 0
      %3598 = vmatpush1.bf16.msra.mxu0 0
      %3599 = vmatprep.subr.bf16.mxu0 0
      %3600 = vmatpush1.bf16.msra.mxu0 0
      %3601 = vmatprep.subr.bf16.mxu0 0
      %3602 = vmatpush1.bf16.msra.mxu0 0
      %3603 = vmatprep.subr.bf16.mxu0 0
      %3604 = vmatpush1.bf16.msra.mxu0 0
      %3605 = vmatprep.subr.bf16.mxu0 0
      %3606 = vmatpush1.bf16.msra.mxu0 0
      %3607 = vmatprep.subr.bf16.mxu0 0
      %3608 = vmatpush1.bf16.msra.mxu0 0
      %3609 = vmatprep.subr.bf16.mxu0 0
      %3610 = vmatpush1.bf16.msra.mxu0 0
      %3611 = vmatprep.subr.bf16.mxu0 0
      %3612 = vmatpush1.bf16.msra.mxu0 0
      %3613 = vmatprep.subr.bf16.mxu0 0
      %3614 = vmatpush1.bf16.msra.mxu0 0
      %3615 = vmatprep.subr.bf16.mxu0 0
      %3616 = vmatpush1.bf16.msra.mxu0 0
      %3617 = vmatprep.subr.bf16.mxu0 0
      %3618 = vmatpush1.bf16.msra.mxu0 0
      %3619 = vmatprep.subr.bf16.mxu0 0
      %3620 = vmatpush1.bf16.msra.mxu0 0
      %3621 = vmatprep.subr.bf16.mxu0 0
      %3622 = vmatpush1.bf16.msra.mxu0 0
      %3623 = vmatprep.mubr.bf16.mxu0 0
      %3624 = vmatmul.mubr.bf16.gmra.mrb[0].mxu0 %v3589
      %v3625 = vpop.f32.mrb[0].mxu0
      %v3626 = vadd.f32 %v3573, %v3625
      %v3627 = vpop.f32.mrb[0].mxu0
      %v3628 = vpop.f32.mrb[0].mxu0
      %v3629 = vadd.f32 %v3573, %v3628
      %v3630 = vpop.f32.mrb[0].mxu0
      %3631 = vdwg.mxu0
      %v3633 = vlaneseq
      %v3634 = vshrl.u32 %v3633, 7
      %v3635 = vsub.s32 0, %v3634
      %v3636 = vrot.slane %v3529, %v3635
      %v3642 = vunpack.c.l.b16 %v3520
      %v3643 = vunpack.c.l.b16 %v3521
      %v3644 = vunpack.c.l.b16 %v3522
      %v3645 = vunpack.c.l.b16 %v3523
      %v3646 = vpack.c.b16 %v3643, %v3642
      %v3647 = vpack.c.b16 %v3645, %v3644
      %3650 = vmatprep.subr.bf16.mxu0 0
      %3651 = vmatpush1.bf16.msra.mxu0 %v3646
      %3652 = vmatprep.subr.bf16.mxu0 0
      %3653 = vmatpush1.bf16.msra.mxu0 %v3647
      %3654 = vmatprep.subr.bf16.mxu0 0
      %3655 = vmatpush1.bf16.msra.mxu0 0
      %3656 = vmatprep.subr.bf16.mxu0 0
      %3657 = vmatpush1.bf16.msra.mxu0 0
      %3658 = vmatprep.subr.bf16.mxu0 0
      %3659 = vmatpush1.bf16.msra.mxu0 0
      %3660 = vmatprep.subr.bf16.mxu0 0
      %3661 = vmatpush1.bf16.msra.mxu0 0
      %3662 = vmatprep.subr.bf16.mxu0 0
      %3663 = vmatpush1.bf16.msra.mxu0 0
      %3664 = vmatprep.subr.bf16.mxu0 0
      %3665 = vmatpush1.bf16.msra.mxu0 0
      %3666 = vmatprep.subr.bf16.mxu0 0
      %3667 = vmatpush1.bf16.msra.mxu0 0
      %3668 = vmatprep.subr.bf16.mxu0 0
      %3669 = vmatpush1.bf16.msra.mxu0 0
      %3670 = vmatprep.subr.bf16.mxu0 0
      %3671 = vmatpush1.bf16.msra.mxu0 0
      %3672 = vmatprep.subr.bf16.mxu0 0
      %3673 = vmatpush1.bf16.msra.mxu0 0
      %3674 = vmatprep.subr.bf16.mxu0 0
      %3675 = vmatpush1.bf16.msra.mxu0 0
      %3676 = vmatprep.subr.bf16.mxu0 0
      %3677 = vmatpush1.bf16.msra.mxu0 0
      %3678 = vmatprep.subr.bf16.mxu0 0
      %3679 = vmatpush1.bf16.msra.mxu0 0
      %3680 = vmatprep.subr.bf16.mxu0 0
      %3681 = vmatpush1.bf16.msra.mxu0 0
      %3682 = vmatprep.mubr.bf16.mxu0 0
      %3683 = vmatmul.mubr.bf16.gmra.mrb[0].mxu0 %v3589
      %v3684 = vpop.f32.mrb[0].mxu0
      %v3685 = vadd.f32 %v3636, %v3684
      %v3686 = vpop.f32.mrb[0].mxu0
      %v3687 = vpop.f32.mrb[0].mxu0
      %v3688 = vadd.f32 %v3636, %v3687
      %v3689 = vpop.f32.mrb[0].mxu0
      %3690 = vdwg.mxu0
      %v3692 = vlaneseq
      %v3693 = vshrl.u32 %v3692, 7
      %v3694 = vsub.s32 0, %v3693
      %v3695 = vrot.slane %v3530, %v3694
      %v3701 = vunpack.c.l.b16 %v3524
      %v3702 = vunpack.c.l.b16 %v3525
      %v3703 = vunpack.c.l.b16 %v3526
      %v3704 = vunpack.c.l.b16 %v3527
      %v3705 = vpack.c.b16 %v3702, %v3701
      %v3706 = vpack.c.b16 %v3704, %v3703
      %3709 = vmatprep.subr.bf16.mxu0 0
      %3710 = vmatpush1.bf16.msra.mxu0 %v3705
      %3711 = vmatprep.subr.bf16.mxu0 0
      %3712 = vmatpush1.bf16.msra.mxu0 %v3706
      %3713 = vmatprep.subr.bf16.mxu0 0
      %3714 = vmatpush1.bf16.msra.mxu0 0
      %3715 = vmatprep.subr.bf16.mxu0 0
      %3716 = vmatpush1.bf16.msra.mxu0 0
      %3717 = vmatprep.subr.bf16.mxu0 0
      %3718 = vmatpush1.bf16.msra.mxu0 0
      %3719 = vmatprep.subr.bf16.mxu0 0
      %3720 = vmatpush1.bf16.msra.mxu0 0
      %3721 = vmatprep.subr.bf16.mxu0 0
      %3722 = vmatpush1.bf16.msra.mxu0 0
      %3723 = vmatprep.subr.bf16.mxu0 0
      %3724 = vmatpush1.bf16.msra.mxu0 0
      %3725 = vmatprep.subr.bf16.mxu0 0
      %3726 = vmatpush1.bf16.msra.mxu0 0
      %3727 = vmatprep.subr.bf16.mxu0 0
      %3728 = vmatpush1.bf16.msra.mxu0 0
      %3729 = vmatprep.subr.bf16.mxu0 0
      %3730 = vmatpush1.bf16.msra.mxu0 0
      %3731 = vmatprep.subr.bf16.mxu0 0
      %3732 = vmatpush1.bf16.msra.mxu0 0
      %3733 = vmatprep.subr.bf16.mxu0 0
      %3734 = vmatpush1.bf16.msra.mxu0 0
      %3735 = vmatprep.subr.bf16.mxu0 0
      %3736 = vmatpush1.bf16.msra.mxu0 0
      %3737 = vmatprep.subr.bf16.mxu0 0
      %3738 = vmatpush1.bf16.msra.mxu0 0
      %3739 = vmatprep.subr.bf16.mxu0 0
      %3740 = vmatpush1.bf16.msra.mxu0 0
      %3741 = vmatprep.mubr.bf16.mxu0 0
      %3742 = vmatmul.mubr.bf16.gmra.mrb[0].mxu0 %v3589
      %v3743 = vpop.f32.mrb[0].mxu0
      %v3744 = vadd.f32 %v3695, %v3743
      %v3745 = vpop.f32.mrb[0].mxu0
      %v3746 = vpop.f32.mrb[0].mxu0
      %v3747 = vadd.f32 %v3695, %v3746
      %v3748 = vpop.f32.mrb[0].mxu0
      %3749 = vdwg.mxu0
      %vm3750 = vcmask 80896
      %v3752 = vsel %vm3750, %v3536, 0
      %v3755 = vsel %vm3750, %v3537, 0
      %v3758 = vsel %vm3750, %v3538, 0
      %v3761 = vsel %vm3750, %v3539, 0
      %v3764 = vsel %vm3750, %v3540, 0
      %v3767 = vsel %vm3750, %v3541, 0
      %v3770 = vsel %vm3750, %v3542, 0
      %v3773 = vsel %vm3750, %v3543, 0
      %v3776 = vsel %vm3750, %v3544, 0
      %v3779 = vsel %vm3750, %v3545, 0
      %vm3781 = vcmask 1041408
      %v3783 = vsel %vm3781, %v3629, 0
      %3785 = vmatprep.subr.mxu0 0.0
      %3786 = vmatpush1.msra.mxu0 %v3626
      %3787 = vmatprep.subr.mxu0 0.0
      %3788 = vmatpush1.msra.mxu0 %v3783
      %3789 = vmatprep.subr.mxu0 0.0
      %3790 = vmatpush1.msra.mxu0 0.0
      %3791 = vmatprep.subr.mxu0 0.0
      %3792 = vmatpush1.msra.mxu0 0.0
      %3793 = vmatprep.subr.mxu0 0.0
      %3794 = vmatpush1.msra.mxu0 0.0
      %3795 = vmatprep.subr.mxu0 0.0
      %3796 = vmatpush1.msra.mxu0 0.0
      %3797 = vmatprep.subr.mxu0 0.0
      %3798 = vmatpush1.msra.mxu0 0.0
      %3799 = vmatprep.subr.mxu0 0.0
      %3800 = vmatpush1.msra.mxu0 0.0
      %3801 = vmatprep.subr.mxu0 0.0
      %3802 = vmatpush1.msra.mxu0 0.0
      %3803 = vmatprep.subr.mxu0 0.0
      %3804 = vmatpush1.msra.mxu0 0.0
      %3805 = vmatprep.subr.mxu0 0.0
      %3806 = vmatpush1.msra.mxu0 0.0
      %3807 = vmatprep.subr.mxu0 0.0
      %3808 = vmatpush1.msra.mxu0 0.0
      %3809 = vmatprep.subr.mxu0 0.0
      %3810 = vmatpush1.msra.mxu0 0.0
      %3811 = vmatprep.subr.mxu0 0.0
      %3812 = vmatpush1.msra.mxu0 0.0
      %3813 = vmatprep.subr.mxu0 0.0
      %3814 = vmatpush1.msra.mxu0 0.0
      %3815 = vmatprep.subr.mxu0 0.0
      %3816 = vmatpush1.msra.mxu0 0.0
      %3817 = vmatprep.subr.mxu0 0.0
      %3818 = vmatpush1.msra.mxu0 0.0
      %3819 = vmatprep.subr.mxu0 0.0
      %3820 = vmatpush1.msra.mxu0 0.0
      %3821 = vmatprep.subr.mxu0 0.0
      %3822 = vmatpush1.msra.mxu0 0.0
      %3823 = vmatprep.subr.mxu0 0.0
      %3824 = vmatpush1.msra.mxu0 0.0
      %3825 = vmatprep.subr.mxu0 0.0
      %3826 = vmatpush1.msra.mxu0 0.0
      %3827 = vmatprep.subr.mxu0 0.0
      %3828 = vmatpush1.msra.mxu0 0.0
      %3829 = vmatprep.subr.mxu0 0.0
      %3830 = vmatpush1.msra.mxu0 0.0
      %3831 = vmatprep.subr.mxu0 0.0
      %3832 = vmatpush1.msra.mxu0 0.0
      %3833 = vmatprep.subr.mxu0 0.0
      %3834 = vmatpush1.msra.mxu0 0.0
      %3835 = vmatprep.subr.mxu0 0.0
      %3836 = vmatpush1.msra.mxu0 0.0
      %3837 = vmatprep.subr.mxu0 0.0
      %3838 = vmatpush1.msra.mxu0 0.0
      %3839 = vmatprep.subr.mxu0 0.0
      %3840 = vmatpush1.msra.mxu0 0.0
      %3841 = vmatprep.subr.mxu0 0.0
      %3842 = vmatpush1.msra.mxu0 0.0
      %3843 = vmatprep.subr.mxu0 0.0
      %3844 = vmatpush1.msra.mxu0 0.0
      %3845 = vmatprep.subr.mxu0 0.0
      %3846 = vmatpush1.msra.mxu0 0.0
      %3847 = vmatprep.subr.mxu0 0.0
      %3848 = vmatpush1.msra.mxu0 0.0
      %3849 = vmatprep.mubr.f32.mxu0 0.0
      %3850 = vmatmul.mubr.f32.gmra.mrb[0].mxu0 %v3752
      %v3851 = vpop.f32.mrb[0].mxu0
      %v3852 = vadd.f32 0.0, %v3851
      %v3853 = vpop.f32.mrb[0].mxu0
      %3854 = vmatprep.mubr.f32.mxu0 0.0
      %3855 = vmatmul.mubr.f32.gmra.mrb[0].mxu0 %v3755
      %v3856 = vpop.f32.mrb[0].mxu0
      %v3857 = vadd.f32 0.0, %v3856
      %v3858 = vpop.f32.mrb[0].mxu0
      %3859 = vmatprep.mubr.f32.mxu0 0.0
      %3860 = vmatmul.mubr.f32.gmra.mrb[0].mxu0 %v3758
      %v3861 = vpop.f32.mrb[0].mxu0
      %v3862 = vadd.f32 0.0, %v3861
      %v3863 = vpop.f32.mrb[0].mxu0
      %3864 = vmatprep.mubr.f32.mxu0 0.0
      %3865 = vmatmul.mubr.f32.gmra.mrb[0].mxu0 %v3761
      %v3866 = vpop.f32.mrb[0].mxu0
      %v3867 = vadd.f32 0.0, %v3866
      %v3868 = vpop.f32.mrb[0].mxu0
      %3869 = vmatprep.mubr.f32.mxu0 0.0
      %3870 = vmatmul.mubr.f32.gmra.mrb[0].mxu0 %v3764
      %v3871 = vpop.f32.mrb[0].mxu0
      %v3872 = vadd.f32 0.0, %v3871
      %v3873 = vpop.f32.mrb[0].mxu0
      %3874 = vmatprep.mubr.f32.mxu0 0.0
      %3875 = vmatmul.mubr.f32.gmra.mrb[0].mxu0 %v3767
      %v3876 = vpop.f32.mrb[0].mxu0
      %v3877 = vadd.f32 0.0, %v3876
      %v3878 = vpop.f32.mrb[0].mxu0
      %3879 = vmatprep.mubr.f32.mxu0 0.0
      %3880 = vmatmul.mubr.f32.gmra.mrb[0].mxu0 %v3770
      %v3881 = vpop.f32.mrb[0].mxu0
      %v3882 = vadd.f32 0.0, %v3881
      %v3883 = vpop.f32.mrb[0].mxu0
      %3884 = vmatprep.mubr.f32.mxu0 0.0
      %3885 = vmatmul.mubr.f32.gmra.mrb[0].mxu0 %v3773
      %v3886 = vpop.f32.mrb[0].mxu0
      %v3887 = vadd.f32 0.0, %v3886
      %v3888 = vpop.f32.mrb[0].mxu0
      %3889 = vmatprep.mubr.f32.mxu0 0.0
      %3890 = vmatmul.mubr.f32.gmra.mrb[0].mxu0 %v3776
      %v3891 = vpop.f32.mrb[0].mxu0
      %v3892 = vadd.f32 0.0, %v3891
      %v3893 = vpop.f32.mrb[0].mxu0
      %3894 = vmatprep.mubr.f32.mxu0 0.0
      %3895 = vmatmul.mubr.f32.gmra.mrb[0].mxu0 %v3779
      %v3896 = vpop.f32.mrb[0].mxu0
      %v3897 = vadd.f32 0.0, %v3896
      %v3898 = vpop.f32.mrb[0].mxu0
      %3899 = vdwg.mxu0
      %v3900 = vmul.f32 %v3852, %v3556
      %v3901 = vmul.f32 %v3857, %v3557
      %v3902 = vmul.f32 %v3862, %v3558
      %v3903 = vmul.f32 %v3867, %v3559
      %v3904 = vmul.f32 %v3872, %v3560
      %v3905 = vmul.f32 %v3877, %v3561
      %v3906 = vmul.f32 %v3882, %v3562
      %v3907 = vmul.f32 %v3887, %v3563
      %v3908 = vmul.f32 %v3892, %v3564
      %v3909 = vmul.f32 %v3897, %v3565
      %v3911 = vsel %vm3587, %v3900, 0
      %v3914 = vsel %vm3587, %v3901, 0
      %v3917 = vsel %vm3587, %v3902, 0
      %v3920 = vsel %vm3587, %v3903, 0
      %v3923 = vsel %vm3587, %v3904, 0
      %v3926 = vsel %vm3587, %v3905, 0
      %v3929 = vsel %vm3587, %v3906, 0
      %v3932 = vsel %vm3587, %v3907, 0
      %v3935 = vsel %vm3587, %v3908, 0
      %v3938 = vsel %vm3587, %v3909, 0
      %v3941 = vsel %vm3587, %v3685, 0
      %v3944 = vsel %vm3587, %v3688, 0
      %3946 = vmatprep.subr.mxu0 0.0
      %3947 = vmatpush1.xpose.msra.mxu0 %v3941
      %3948 = vmatprep.subr.mxu0 0.0
      %3949 = vmatpush1.xpose.msra.mxu0 %v3944
      %3950 = vmatprep.subr.mxu0 0.0
      %3951 = vmatpush1.xpose.msra.mxu0 0.0
      %3952 = vmatprep.subr.mxu0 0.0
      %3953 = vmatpush1.xpose.msra.mxu0 0.0
      %3954 = vmatprep.subr.mxu0 0.0
      %3955 = vmatpush1.xpose.msra.mxu0 0.0
      %3956 = vmatprep.subr.mxu0 0.0
      %3957 = vmatpush1.xpose.msra.mxu0 0.0
      %3958 = vmatprep.subr.mxu0 0.0
      %3959 = vmatpush1.xpose.msra.mxu0 0.0
      %3960 = vmatprep.subr.mxu0 0.0
      %3961 = vmatpush1.xpose.msra.mxu0 0.0
      %3962 = vmatprep.subr.mxu0 0.0
      %3963 = vmatpush1.xpose.msra.mxu0 0.0
      %3964 = vmatprep.subr.mxu0 0.0
      %3965 = vmatpush1.xpose.msra.mxu0 0.0
      %3966 = vmatprep.subr.mxu0 0.0
      %3967 = vmatpush1.xpose.msra.mxu0 0.0
      %3968 = vmatprep.subr.mxu0 0.0
      %3969 = vmatpush1.xpose.msra.mxu0 0.0
      %3970 = vmatprep.subr.mxu0 0.0
      %3971 = vmatpush1.xpose.msra.mxu0 0.0
      %3972 = vmatprep.subr.mxu0 0.0
      %3973 = vmatpush1.xpose.msra.mxu0 0.0
      %3974 = vmatprep.subr.mxu0 0.0
      %3975 = vmatpush1.xpose.msra.mxu0 0.0
      %3976 = vmatprep.subr.mxu0 0.0
      %3977 = vmatpush1.xpose.msra.mxu0 0.0
      %3978 = vmatprep.subr.mxu0 0.0
      %3979 = vmatpush1.xpose.msra.mxu0 0.0
      %3980 = vmatprep.subr.mxu0 0.0
      %3981 = vmatpush1.xpose.msra.mxu0 0.0
      %3982 = vmatprep.subr.mxu0 0.0
      %3983 = vmatpush1.xpose.msra.mxu0 0.0
      %3984 = vmatprep.subr.mxu0 0.0
      %3985 = vmatpush1.xpose.msra.mxu0 0.0
      %3986 = vmatprep.subr.mxu0 0.0
      %3987 = vmatpush1.xpose.msra.mxu0 0.0
      %3988 = vmatprep.subr.mxu0 0.0
      %3989 = vmatpush1.xpose.msra.mxu0 0.0
      %3990 = vmatprep.subr.mxu0 0.0
      %3991 = vmatpush1.xpose.msra.mxu0 0.0
      %3992 = vmatprep.subr.mxu0 0.0
      %3993 = vmatpush1.xpose.msra.mxu0 0.0
      %3994 = vmatprep.subr.mxu0 0.0
      %3995 = vmatpush1.xpose.msra.mxu0 0.0
      %3996 = vmatprep.subr.mxu0 0.0
      %3997 = vmatpush1.xpose.msra.mxu0 0.0
      %3998 = vmatprep.subr.mxu0 0.0
      %3999 = vmatpush1.xpose.msra.mxu0 0.0
      %4000 = vmatprep.subr.mxu0 0.0
      %4001 = vmatpush1.xpose.msra.mxu0 0.0
      %4002 = vmatprep.subr.mxu0 0.0
      %4003 = vmatpush1.xpose.msra.mxu0 0.0
      %4004 = vmatprep.subr.mxu0 0.0
      %4005 = vmatpush1.xpose.msra.mxu0 0.0
      %4006 = vmatprep.subr.mxu0 0.0
      %4007 = vmatpush1.xpose.msra.mxu0 0.0
      %4008 = vmatprep.subr.mxu0 0.0
      %4009 = vmatpush1.xpose.msra.mxu0 0.0
      %4010 = vmatprep.mubr.f32.mxu0 0.0
      %4011 = vmatmul.mubr.f32.gmra.mrb[0].mxu0 %v3911
      %v4012 = vpop.f32.mrb[0].mxu0
      %v4013 = vadd.f32 %v3546, %v4012
      %v4014 = vpop.f32.mrb[0].mxu0
      %4015 = vmatprep.mubr.f32.mxu0 0.0
      %4016 = vmatmul.mubr.f32.gmra.mrb[0].mxu0 %v3914
      %v4017 = vpop.f32.mrb[0].mxu0
      %v4018 = vadd.f32 %v3547, %v4017
      %v4019 = vpop.f32.mrb[0].mxu0
      %4020 = vmatprep.mubr.f32.mxu0 0.0
      %4021 = vmatmul.mubr.f32.gmra.mrb[0].mxu0 %v3917
      %v4022 = vpop.f32.mrb[0].mxu0
      %v4023 = vadd.f32 %v3548, %v4022
      %v4024 = vpop.f32.mrb[0].mxu0
      %4025 = vmatprep.mubr.f32.mxu0 0.0
      %4026 = vmatmul.mubr.f32.gmra.mrb[0].mxu0 %v3920
      %v4027 = vpop.f32.mrb[0].mxu0
      %v4028 = vadd.f32 %v3549, %v4027
      %v4029 = vpop.f32.mrb[0].mxu0
      %4030 = vmatprep.mubr.f32.mxu0 0.0
      %4031 = vmatmul.mubr.f32.gmra.mrb[0].mxu0 %v3923
      %v4032 = vpop.f32.mrb[0].mxu0
      %v4033 = vadd.f32 %v3550, %v4032
      %v4034 = vpop.f32.mrb[0].mxu0
      %4035 = vmatprep.mubr.f32.mxu0 0.0
      %4036 = vmatmul.mubr.f32.gmra.mrb[0].mxu0 %v3926
      %v4037 = vpop.f32.mrb[0].mxu0
      %v4038 = vadd.f32 %v3551, %v4037
      %v4039 = vpop.f32.mrb[0].mxu0
      %4040 = vmatprep.mubr.f32.mxu0 0.0
      %4041 = vmatmul.mubr.f32.gmra.mrb[0].mxu0 %v3929
      %v4042 = vpop.f32.mrb[0].mxu0
      %v4043 = vadd.f32 %v3552, %v4042
      %v4044 = vpop.f32.mrb[0].mxu0
      %4045 = vmatprep.mubr.f32.mxu0 0.0
      %4046 = vmatmul.mubr.f32.gmra.mrb[0].mxu0 %v3932
      %v4047 = vpop.f32.mrb[0].mxu0
      %v4048 = vadd.f32 %v3553, %v4047
      %v4049 = vpop.f32.mrb[0].mxu0
      %4050 = vmatprep.mubr.f32.mxu0 0.0
      %4051 = vmatmul.mubr.f32.gmra.mrb[0].mxu0 %v3935
      %v4052 = vpop.f32.mrb[0].mxu0
      %v4053 = vadd.f32 %v3554, %v4052
      %v4054 = vpop.f32.mrb[0].mxu0
      %4055 = vmatprep.mubr.f32.mxu0 0.0
      %4056 = vmatmul.mubr.f32.gmra.mrb[0].mxu0 %v3938
      %v4057 = vpop.f32.mrb[0].mxu0
      %v4058 = vadd.f32 %v3555, %v4057
      %v4059 = vpop.f32.mrb[0].mxu0
      %4060 = vdwg.mxu0
      %v4061 = vsel %vm3750, %v4013, -inf
      %4062 = vmax.xlane.f32.xlu0 %v4061
      %v4063 = vpop.xlane.xlu0 %4062
      %v4064 = vsel %vm3750, %v4018, -inf
      %4065 = vmax.xlane.f32.xlu0 %v4064
      %v4066 = vpop.xlane.xlu0 %4065
      %v4067 = vsel %vm3750, %v4023, -inf
      %4068 = vmax.xlane.f32.xlu0 %v4067
      %v4069 = vpop.xlane.xlu0 %4068
      %v4070 = vsel %vm3750, %v4028, -inf
      %4071 = vmax.xlane.f32.xlu0 %v4070
      %v4072 = vpop.xlane.xlu0 %4071
      %v4073 = vsel %vm3750, %v4033, -inf
      %4074 = vmax.xlane.f32.xlu0 %v4073
      %v4075 = vpop.xlane.xlu0 %4074
      %v4076 = vsel %vm3750, %v4038, -inf
      %4077 = vmax.xlane.f32.xlu0 %v4076
      %v4078 = vpop.xlane.xlu0 %4077
      %v4079 = vsel %vm3750, %v4043, -inf
      %4080 = vmax.xlane.f32.xlu0 %v4079
      %v4081 = vpop.xlane.xlu0 %4080
      %v4082 = vsel %vm3750, %v4048, -inf
      %4083 = vmax.xlane.f32.xlu0 %v4082
      %v4084 = vpop.xlane.xlu0 %4083
      %v4085 = vsel %vm3750, %v4053, -inf
      %4086 = vmax.xlane.f32.xlu0 %v4085
      %v4087 = vpop.xlane.xlu0 %4086
      %v4088 = vsel %vm3750, %v4058, -inf
      %4089 = vmax.xlane.f32.xlu0 %v4088
      %v4090 = vpop.xlane.xlu0 %4089
      %v4091 = vsub.f32 %v4013, %v4063
      %v4092 = vsub.f32 %v4018, %v4066
      %v4093 = vsub.f32 %v4023, %v4069
      %v4094 = vsub.f32 %v4028, %v4072
      %v4095 = vsub.f32 %v4033, %v4075
      %v4096 = vsub.f32 %v4038, %v4078
      %v4097 = vsub.f32 %v4043, %v4081
      %v4098 = vsub.f32 %v4048, %v4084
      %v4099 = vsub.f32 %v4053, %v4087
      %v4100 = vsub.f32 %v4058, %v4090
      %v4101 = vmul.f32 %v4091, 1.442695
      %v4102 = vpow.pop %v4101
      %v4103 = vmul.f32 %v4092, 1.442695
      %v4104 = vpow.pop %v4103
      %v4105 = vmul.f32 %v4093, 1.442695
      %v4106 = vpow.pop %v4105
      %v4107 = vmul.f32 %v4094, 1.442695
      %v4108 = vpow.pop %v4107
      %v4109 = vmul.f32 %v4095, 1.442695
      %v4110 = vpow.pop %v4109
      %v4111 = vmul.f32 %v4096, 1.442695
      %v4112 = vpow.pop %v4111
      %v4113 = vmul.f32 %v4097, 1.442695
      %v4114 = vpow.pop %v4113
      %v4115 = vmul.f32 %v4098, 1.442695
      %v4116 = vpow.pop %v4115
      %v4117 = vmul.f32 %v4099, 1.442695
      %v4118 = vpow.pop %v4117
      %v4119 = vmul.f32 %v4100, 1.442695
      %v4120 = vpow.pop %v4119
      %v4121 = vsel %vm3750, %v4102, 0.0
      %4122 = vadd.xlane.f32.xlu0 %v4121
      %v4123 = vpop.xlane.xlu0 %4122
      %v4124 = vsel %vm3750, %v4104, 0.0
      %4125 = vadd.xlane.f32.xlu0 %v4124
      %v4126 = vpop.xlane.xlu0 %4125
      %v4127 = vsel %vm3750, %v4106, 0.0
      %4128 = vadd.xlane.f32.xlu0 %v4127
      %v4129 = vpop.xlane.xlu0 %4128
      %v4130 = vsel %vm3750, %v4108, 0.0
      %4131 = vadd.xlane.f32.xlu0 %v4130
      %v4132 = vpop.xlane.xlu0 %4131
      %v4133 = vsel %vm3750, %v4110, 0.0
      %4134 = vadd.xlane.f32.xlu0 %v4133
      %v4135 = vpop.xlane.xlu0 %4134
      %v4136 = vsel %vm3750, %v4112, 0.0
      %4137 = vadd.xlane.f32.xlu0 %v4136
      %v4138 = vpop.xlane.xlu0 %4137
      %v4139 = vsel %vm3750, %v4114, 0.0
      %4140 = vadd.xlane.f32.xlu0 %v4139
      %v4141 = vpop.xlane.xlu0 %4140
      %v4142 = vsel %vm3750, %v4116, 0.0
      %4143 = vadd.xlane.f32.xlu0 %v4142
      %v4144 = vpop.xlane.xlu0 %4143
      %v4145 = vsel %vm3750, %v4118, 0.0
      %4146 = vadd.xlane.f32.xlu0 %v4145
      %v4147 = vpop.xlane.xlu0 %4146
      %v4148 = vsel %vm3750, %v4120, 0.0
      %4149 = vadd.xlane.f32.xlu0 %v4148
      %v4150 = vpop.xlane.xlu0 %4149
      %v4151 = vrcp.pop %v4123
      %v4152 = vmul.f32 %v4102, %v4151
      %v4153 = vrcp.pop %v4126
      %v4154 = vmul.f32 %v4104, %v4153
      %v4155 = vrcp.pop %v4129
      %v4156 = vmul.f32 %v4106, %v4155
      %v4157 = vrcp.pop %v4132
      %v4158 = vmul.f32 %v4108, %v4157
      %v4159 = vrcp.pop %v4135
      %v4160 = vmul.f32 %v4110, %v4159
      %v4161 = vrcp.pop %v4138
      %v4162 = vmul.f32 %v4112, %v4161
      %v4163 = vrcp.pop %v4141
      %v4164 = vmul.f32 %v4114, %v4163
      %v4165 = vrcp.pop %v4144
      %v4166 = vmul.f32 %v4116, %v4165
      %v4167 = vrcp.pop %v4147
      %v4168 = vmul.f32 %v4118, %v4167
      %v4169 = vrcp.pop %v4150
      %v4170 = vmul.f32 %v4120, %v4169
      %v4172 = vsel %vm3750, %v4152, 0
      %v4175 = vsel %vm3750, %v4154, 0
      %v4178 = vsel %vm3750, %v4156, 0
      %v4181 = vsel %vm3750, %v4158, 0
      %v4184 = vsel %vm3750, %v4160, 0
      %v4187 = vsel %vm3750, %v4162, 0
      %v4190 = vsel %vm3750, %v4164, 0
      %v4193 = vsel %vm3750, %v4166, 0
      %v4196 = vsel %vm3750, %v4168, 0
      %v4199 = vsel %vm3750, %v4170, 0
      %v4202 = vsel %vm3781, %v3747, 0
      %4204 = vmatprep.subr.mxu0 0.0
      %4205 = vmatpush1.msra.mxu0 %v3744
      %4206 = vmatprep.subr.mxu0 0.0
      %4207 = vmatpush1.msra.mxu0 %v4202
      %4208 = vmatprep.subr.mxu0 0.0
      %4209 = vmatpush1.msra.mxu0 0.0
      %4210 = vmatprep.subr.mxu0 0.0
      %4211 = vmatpush1.msra.mxu0 0.0
      %4212 = vmatprep.subr.mxu0 0.0
      %4213 = vmatpush1.msra.mxu0 0.0
      %4214 = vmatprep.subr.mxu0 0.0
      %4215 = vmatpush1.msra.mxu0 0.0
      %4216 = vmatprep.subr.mxu0 0.0
      %4217 = vmatpush1.msra.mxu0 0.0
      %4218 = vmatprep.subr.mxu0 0.0
      %4219 = vmatpush1.msra.mxu0 0.0
      %4220 = vmatprep.subr.mxu0 0.0
      %4221 = vmatpush1.msra.mxu0 0.0
      %4222 = vmatprep.subr.mxu0 0.0
      %4223 = vmatpush1.msra.mxu0 0.0
      %4224 = vmatprep.subr.mxu0 0.0
      %4225 = vmatpush1.msra.mxu0 0.0
      %4226 = vmatprep.subr.mxu0 0.0
      %4227 = vmatpush1.msra.mxu0 0.0
      %4228 = vmatprep.subr.mxu0 0.0
      %4229 = vmatpush1.msra.mxu0 0.0
      %4230 = vmatprep.subr.mxu0 0.0
      %4231 = vmatpush1.msra.mxu0 0.0
      %4232 = vmatprep.subr.mxu0 0.0
      %4233 = vmatpush1.msra.mxu0 0.0
      %4234 = vmatprep.subr.mxu0 0.0
      %4235 = vmatpush1.msra.mxu0 0.0
      %4236 = vmatprep.subr.mxu0 0.0
      %4237 = vmatpush1.msra.mxu0 0.0
      %4238 = vmatprep.subr.mxu0 0.0
      %4239 = vmatpush1.msra.mxu0 0.0
      %4240 = vmatprep.subr.mxu0 0.0
      %4241 = vmatpush1.msra.mxu0 0.0
      %4242 = vmatprep.subr.mxu0 0.0
      %4243 = vmatpush1.msra.mxu0 0.0
      %4244 = vmatprep.subr.mxu0 0.0
      %4245 = vmatpush1.msra.mxu0 0.0
      %4246 = vmatprep.subr.mxu0 0.0
      %4247 = vmatpush1.msra.mxu0 0.0
      %4248 = vmatprep.subr.mxu0 0.0
      %4249 = vmatpush1.msra.mxu0 0.0
      %4250 = vmatprep.subr.mxu0 0.0
      %4251 = vmatpush1.msra.mxu0 0.0
      %4252 = vmatprep.subr.mxu0 0.0
      %4253 = vmatpush1.msra.mxu0 0.0
      %4254 = vmatprep.subr.mxu0 0.0
      %4255 = vmatpush1.msra.mxu0 0.0
      %4256 = vmatprep.subr.mxu0 0.0
      %4257 = vmatpush1.msra.mxu0 0.0
      %4258 = vmatprep.subr.mxu0 0.0
      %4259 = vmatpush1.msra.mxu0 0.0
      %4260 = vmatprep.subr.mxu0 0.0
      %4261 = vmatpush1.msra.mxu0 0.0
      %4262 = vmatprep.subr.mxu0 0.0
      %4263 = vmatpush1.msra.mxu0 0.0
      %4264 = vmatprep.subr.mxu0 0.0
      %4265 = vmatpush1.msra.mxu0 0.0
      %4266 = vmatprep.subr.mxu0 0.0
      %4267 = vmatpush1.msra.mxu0 0.0
      %4268 = vmatprep.mubr.f32.mxu0 0.0
      %4269 = vmatmul.mubr.f32.gmra.mrb[0].mxu0 %v4172
      %v4270 = vpop.f32.mrb[0].mxu0
      %v4271 = vadd.f32 0.0, %v4270
      %v4272 = vpop.f32.mrb[0].mxu0
      %4273 = vmatprep.mubr.f32.mxu0 0.0
      %4274 = vmatmul.mubr.f32.gmra.mrb[0].mxu0 %v4175
      %v4275 = vpop.f32.mrb[0].mxu0
      %v4276 = vadd.f32 0.0, %v4275
      %v4277 = vpop.f32.mrb[0].mxu0
      %4278 = vmatprep.mubr.f32.mxu0 0.0
      %4279 = vmatmul.mubr.f32.gmra.mrb[0].mxu0 %v4178
      %v4280 = vpop.f32.mrb[0].mxu0
      %v4281 = vadd.f32 0.0, %v4280
      %v4282 = vpop.f32.mrb[0].mxu0
      %4283 = vmatprep.mubr.f32.mxu0 0.0
      %4284 = vmatmul.mubr.f32.gmra.mrb[0].mxu0 %v4181
      %v4285 = vpop.f32.mrb[0].mxu0
      %v4286 = vadd.f32 0.0, %v4285
      %v4287 = vpop.f32.mrb[0].mxu0
      %4288 = vmatprep.mubr.f32.mxu0 0.0
      %4289 = vmatmul.mubr.f32.gmra.mrb[0].mxu0 %v4184
      %v4290 = vpop.f32.mrb[0].mxu0
      %v4291 = vadd.f32 0.0, %v4290
      %v4292 = vpop.f32.mrb[0].mxu0
      %4293 = vmatprep.mubr.f32.mxu0 0.0
      %4294 = vmatmul.mubr.f32.gmra.mrb[0].mxu0 %v4187
      %v4295 = vpop.f32.mrb[0].mxu0
      %v4296 = vadd.f32 0.0, %v4295
      %v4297 = vpop.f32.mrb[0].mxu0
      %4298 = vmatprep.mubr.f32.mxu0 0.0
      %4299 = vmatmul.mubr.f32.gmra.mrb[0].mxu0 %v4190
      %v4300 = vpop.f32.mrb[0].mxu0
      %v4301 = vadd.f32 0.0, %v4300
      %v4302 = vpop.f32.mrb[0].mxu0
      %4303 = vmatprep.mubr.f32.mxu0 0.0
      %4304 = vmatmul.mubr.f32.gmra.mrb[0].mxu0 %v4193
      %v4305 = vpop.f32.mrb[0].mxu0
      %v4306 = vadd.f32 0.0, %v4305
      %v4307 = vpop.f32.mrb[0].mxu0
      %4308 = vmatprep.mubr.f32.mxu0 0.0
      %4309 = vmatmul.mubr.f32.gmra.mrb[0].mxu0 %v4196
      %v4310 = vpop.f32.mrb[0].mxu0
      %v4311 = vadd.f32 0.0, %v4310
      %v4312 = vpop.f32.mrb[0].mxu0
      %4313 = vmatprep.mubr.f32.mxu0 0.0
      %4314 = vmatmul.mubr.f32.gmra.mrb[0].mxu0 %v4199
      %v4315 = vpop.f32.mrb[0].mxu0
      %v4316 = vadd.f32 0.0, %v4315
      %v4317 = vpop.f32.mrb[0].mxu0
      %4318 = vdwg.mxu0
      %v4319 = vmul.f32 %v4271, %v3556
      %v4320 = vmul.f32 %v4276, %v3557
      %v4321 = vmul.f32 %v4281, %v3558
      %v4322 = vmul.f32 %v4286, %v3559
      %v4323 = vmul.f32 %v4291, %v3560
      %v4324 = vmul.f32 %v4296, %v3561
      %v4325 = vmul.f32 %v4301, %v3562
      %v4326 = vmul.f32 %v4306, %v3563
      %v4327 = vmul.f32 %v4311, %v3564
      %v4328 = vmul.f32 %v4316, %v3565
      %vm4329 = vcmask 654336
      %v4331 = vsel %vm4329, %v3566, 0
      %v4334 = vsel %vm4329, %v3567, 0
      %4336 = vmatprep.subr.mxu0 0.0
      %4337 = vmatpush1.msra.mxu0 %v4319
      %4338 = vmatprep.subr.mxu0 0.0
      %4339 = vmatpush1.msra.mxu0 %v4320
      %4340 = vmatprep.subr.mxu0 0.0
      %4341 = vmatpush1.msra.mxu0 %v4321
      %4342 = vmatprep.subr.mxu0 0.0
      %4343 = vmatpush1.msra.mxu0 %v4322
      %4344 = vmatprep.subr.mxu0 0.0
      %4345 = vmatpush1.msra.mxu0 %v4323
      %4346 = vmatprep.subr.mxu0 0.0
      %4347 = vmatpush1.msra.mxu0 %v4324
      %4348 = vmatprep.subr.mxu0 0.0
      %4349 = vmatpush1.msra.mxu0 %v4325
      %4350 = vmatprep.subr.mxu0 0.0
      %4351 = vmatpush1.msra.mxu0 %v4326
      %4352 = vmatprep.subr.mxu0 0.0
      %4353 = vmatpush1.msra.mxu0 %v4327
      %4354 = vmatprep.subr.mxu0 0.0
      %4355 = vmatpush1.msra.mxu0 %v4328
      %4356 = vmatprep.subr.mxu0 0.0
      %4357 = vmatpush1.msra.mxu0 0.0
      %4358 = vmatprep.subr.mxu0 0.0
      %4359 = vmatpush1.msra.mxu0 0.0
      %4360 = vmatprep.subr.mxu0 0.0
      %4361 = vmatpush1.msra.mxu0 0.0
      %4362 = vmatprep.subr.mxu0 0.0
      %4363 = vmatpush1.msra.mxu0 0.0
      %4364 = vmatprep.subr.mxu0 0.0
      %4365 = vmatpush1.msra.mxu0 0.0
      %4366 = vmatprep.subr.mxu0 0.0
      %4367 = vmatpush1.msra.mxu0 0.0
      %4368 = vmatprep.subr.mxu0 0.0
      %4369 = vmatpush1.msra.mxu0 0.0
      %4370 = vmatprep.subr.mxu0 0.0
      %4371 = vmatpush1.msra.mxu0 0.0
      %4372 = vmatprep.subr.mxu0 0.0
      %4373 = vmatpush1.msra.mxu0 0.0
      %4374 = vmatprep.subr.mxu0 0.0
      %4375 = vmatpush1.msra.mxu0 0.0
      %4376 = vmatprep.subr.mxu0 0.0
      %4377 = vmatpush1.msra.mxu0 0.0
      %4378 = vmatprep.subr.mxu0 0.0
      %4379 = vmatpush1.msra.mxu0 0.0
      %4380 = vmatprep.subr.mxu0 0.0
      %4381 = vmatpush1.msra.mxu0 0.0
      %4382 = vmatprep.subr.mxu0 0.0
      %4383 = vmatpush1.msra.mxu0 0.0
      %4384 = vmatprep.subr.mxu0 0.0
      %4385 = vmatpush1.msra.mxu0 0.0
      %4386 = vmatprep.subr.mxu0 0.0
      %4387 = vmatpush1.msra.mxu0 0.0
      %4388 = vmatprep.subr.mxu0 0.0
      %4389 = vmatpush1.msra.mxu0 0.0
      %4390 = vmatprep.subr.mxu0 0.0
      %4391 = vmatpush1.msra.mxu0 0.0
      %4392 = vmatprep.subr.mxu0 0.0
      %4393 = vmatpush1.msra.mxu0 0.0
      %4394 = vmatprep.subr.mxu0 0.0
      %4395 = vmatpush1.msra.mxu0 0.0
      %4396 = vmatprep.subr.mxu0 0.0
      %4397 = vmatpush1.msra.mxu0 0.0
      %4398 = vmatprep.subr.mxu0 0.0
      %4399 = vmatpush1.msra.mxu0 0.0
      %4400 = vmatprep.mubr.f32.mxu0 0.0
      %4401 = vmatmul.mubr.f32.gmra.mrb[0].mxu0 %v4331
      %v4402 = vpop.f32.mrb[0].mxu0
      %v4403 = vadd.f32 0.0, %v4402
      %v4404 = vpop.f32.mrb[0].mxu0
      %4405 = vmatprep.mubr.f32.mxu0 0.0
      %4406 = vmatmul.mubr.f32.gmra.mrb[0].mxu0 %v4334
      %v4407 = vpop.f32.mrb[0].mxu0
      %v4408 = vadd.f32 0.0, %v4407
      %v4409 = vpop.f32.mrb[0].mxu0
      %4410 = vdwg.mxu0
      %v4411 = vpack.c.bf16 %v4408, %v4403
      %v4413 = vlaneseq
      %v4414 = vshrl.u32 %v4413, 7
      %v4415 = vsub.s32 0, %v4414
      %v4416 = vrot.slane %v3535, %v4415
      %v4422 = vunpack.c.l.b16 %v3531
      %v4423 = vunpack.c.l.b16 %v3532
      %v4424 = vunpack.c.l.b16 %v3533
      %v4425 = vunpack.c.l.b16 %v3534
      %v4426 = vpack.c.b16 %v4423, %v4422
      %v4427 = vpack.c.b16 %v4425, %v4424
      %v4431 = vsel %vm3587, %v4411, 0
      %4433 = vmatprep.subr.bf16.mxu0 0
      %4434 = vmatpush1.bf16.msra.mxu0 %v4426
      %4435 = vmatprep.subr.bf16.mxu0 0
      %4436 = vmatpush1.bf16.msra.mxu0 %v4427
      %4437 = vmatprep.subr.bf16.mxu0 0
      %4438 = vmatpush1.bf16.msra.mxu0 0
      %4439 = vmatprep.subr.bf16.mxu0 0
      %4440 = vmatpush1.bf16.msra.mxu0 0
      %4441 = vmatprep.subr.bf16.mxu0 0
      %4442 = vmatpush1.bf16.msra.mxu0 0
      %4443 = vmatprep.subr.bf16.mxu0 0
      %4444 = vmatpush1.bf16.msra.mxu0 0
      %4445 = vmatprep.subr.bf16.mxu0 0
      %4446 = vmatpush1.bf16.msra.mxu0 0
      %4447 = vmatprep.subr.bf16.mxu0 0
      %4448 = vmatpush1.bf16.msra.mxu0 0
      %4449 = vmatprep.subr.bf16.mxu0 0
      %4450 = vmatpush1.bf16.msra.mxu0 0
      %4451 = vmatprep.subr.bf16.mxu0 0
      %4452 = vmatpush1.bf16.msra.mxu0 0
      %4453 = vmatprep.subr.bf16.mxu0 0
      %4454 = vmatpush1.bf16.msra.mxu0 0
      %4455 = vmatprep.subr.bf16.mxu0 0
      %4456 = vmatpush1.bf16.msra.mxu0 0
      %4457 = vmatprep.subr.bf16.mxu0 0
      %4458 = vmatpush1.bf16.msra.mxu0 0
      %4459 = vmatprep.subr.bf16.mxu0 0
      %4460 = vmatpush1.bf16.msra.mxu0 0
      %4461 = vmatprep.subr.bf16.mxu0 0
      %4462 = vmatpush1.bf16.msra.mxu0 0
      %4463 = vmatprep.subr.bf16.mxu0 0
      %4464 = vmatpush1.bf16.msra.mxu0 0
      %4465 = vmatprep.mubr.bf16.mxu0 0
      %4466 = vmatmul.mubr.bf16.gmra.mrb[0].mxu0 %v4431
      %v4467 = vpop.f32.mrb[0].mxu0
      %v4468 = vadd.f32 %v4416, %v4467
      %v4469 = vpop.f32.mrb[0].mxu0
      %v4470 = vpop.f32.mrb[0].mxu0
      %v4471 = vadd.f32 %v4416, %v4470
      %v4472 = vpop.f32.mrb[0].mxu0
      %4473 = vdwg.mxu0
      %v4474 = vadd.f32 %v3514, %v4468
      %v4475 = vadd.f32 %v3515, %v4471
      %v4476 = vld [vmem:[%s1104] sm:$0x1]
      %v4477 = vld [vmem:[%s1107] sm:$0x1]
      %v4478 = vsel %vm3587, %v4474, 0.0
      %4479 = vadd.xlane.f32.xlu0 %v4478
      %v4480 = vpop.xlane.xlu0 %4479
      %vm4481 = vcmask 254976
      %v4482 = vsel %vm4481, %v4475, 0.0
      %4483 = vadd.xlane.f32.xlu0 %v4482
      %v4484 = vpop.xlane.xlu0 %4483
      %v4485 = vrcp.pop 32.0
      %v4486 = vmul.f32 %v4480, %v4485
      %v4487 = vmul.f32 %v4484, %v4485
      %v4488 = vsub.f32 %v4474, %v4486
      %v4489 = vsub.f32 %v4475, %v4487
      %v4490 = vmul.f32 %v4488, %v4488
      %v4491 = vmul.f32 %v4489, %v4489
      %v4492 = vsel %vm3587, %v4490, 0.0
      %4493 = vadd.xlane.f32.xlu0 %v4492
      %v4494 = vpop.xlane.xlu0 %4493
      %v4495 = vsel %vm4481, %v4491, 0.0
      %4496 = vadd.xlane.f32.xlu0 %v4495
      %v4497 = vpop.xlane.xlu0 %4496
      %v4498 = vmul.f32 %v4494, %v4485
      %v4499 = vmul.f32 %v4497, %v4485
      %v4500 = vadd.f32 %v4498, 1e-05
      %v4501 = vadd.f32 %v4499, 1e-05
      %v4502 = vrsqrt.pop %v4500
      %v4503 = vrsqrt.pop %v4501
      %v4504 = vmul.f32 %v4488, %v4502
      %v4505 = vmul.f32 %v4489, %v4503
      %v4507 = vlaneseq
      %v4508 = vshrl.u32 %v4507, 7
      %v4509 = vsub.s32 0, %v4508
      %v4510 = vrot.slane %v4476, %v4509
      %v4512 = vmul.f32 %v4504, %v4510
      %v4513 = vmul.f32 %v4505, %v4510
      %v4515 = vlaneseq
      %v4516 = vshrl.u32 %v4515, 7
      %v4517 = vsub.s32 0, %v4516
      %v4518 = vrot.slane %v4477, %v4517
      %v4520 = vadd.f32 %v4512, %v4518
      %v4521 = vadd.f32 %v4513, %v4518
      %v4522 = vpack.c.bf16 %v4521, %v4520
      %v4523 = vld [vmem:[%s1112] sm:$0xff]
      %v4524 = vld [vmem:[%s1112 + $0x8] sm:$0xff]
      %v4525 = vld [vmem:[%s1112 + $0x10] sm:$0xff]
      %v4526 = vld [vmem:[%s1112 + $0x18] sm:$0xff]
      %v4527 = vld [vmem:[%s1112 + $0x20] sm:$0xff]
      %v4528 = vld [vmem:[%s1112 + $0x28] sm:$0xff]
      %v4529 = vld [vmem:[%s1112 + $0x30] sm:$0xff]
      %v4530 = vld [vmem:[%s1112 + $0x38] sm:$0xff]
      %v4531 = vld [vmem:[%s1112 + $0x40] sm:$0xff]
      %v4532 = vld [vmem:[%s1112 + $0x48] sm:$0xff]
      %v4533 = vld [vmem:[%s1112 + $0x50] sm:$0xff]
      %v4534 = vld [vmem:[%s1112 + $0x58] sm:$0xff]
      %v4535 = vld [vmem:[%s1112 + $0x60] sm:$0xff]
      %v4536 = vld [vmem:[%s1112 + $0x68] sm:$0xff]
      %v4537 = vld [vmem:[%s1112 + $0x70] sm:$0xff]
      %v4538 = vld [vmem:[%s1112 + $0x78] sm:$0xff]
      %v4539 = vld [vmem:[%s1112 + $0x80] sm:$0xff]
      %v4540 = vld [vmem:[%s1112 + $0x88] sm:$0xff]
      %v4541 = vld [vmem:[%s1112 + $0x90] sm:$0xff]
      %v4542 = vld [vmem:[%s1112 + $0x98] sm:$0xff]
      %v4543 = vld [vmem:[%s1112 + $0xa0] sm:$0xff]
      %v4544 = vld [vmem:[%s1112 + $0xa8] sm:$0xff]
      %v4545 = vld [vmem:[%s1112 + $0xb0] sm:$0xff]
      %v4546 = vld [vmem:[%s1112 + $0xb8] sm:$0xff]
      %v4547 = vld [vmem:[%s1112 + $0xc0] sm:$0xff]
      %v4548 = vld [vmem:[%s1112 + $0xc8] sm:$0xff]
      %v4549 = vld [vmem:[%s1112 + $0xd0] sm:$0xff]
      %v4550 = vld [vmem:[%s1112 + $0xd8] sm:$0xff]
      %v4551 = vld [vmem:[%s1112 + $0xe0] sm:$0xff]
      %v4552 = vld [vmem:[%s1112 + $0xe8] sm:$0xff]
      %v4553 = vld [vmem:[%s1112 + $0xf0] sm:$0xff]
      %v4554 = vld [vmem:[%s1112 + $0xf8] sm:$0xff]
      %v4555 = vld [vmem:[%s1116] sm:$0xff]
      %v4556 = vld [vmem:[%s1116 + $0x8] sm:$0xff]
      %v4559 = vlaneseq
      %v4560 = vshrl.u32 %v4559, 7
      %v4561 = vsub.s32 0, %v4560
      %v4562 = vrot.slane %v4555, %v4561
      %v4563 = vlaneseq
      %v4564 = vshrl.u32 %v4563, 7
      %v4565 = vsub.s32 1, %v4564
      %v4566 = vrot.slane %v4555, %v4565
      %v4567 = vlaneseq
      %v4568 = vshrl.u32 %v4567, 7
      %v4569 = vsub.s32 2, %v4568
      %v4570 = vrot.slane %v4555, %v4569
      %v4571 = vlaneseq
      %v4572 = vshrl.u32 %v4571, 7
      %v4573 = vsub.s32 3, %v4572
      %v4574 = vrot.slane %v4555, %v4573
      %v4575 = vlaneseq
      %v4576 = vshrl.u32 %v4575, 7
      %v4577 = vsub.s32 4, %v4576
      %v4578 = vrot.slane %v4555, %v4577
      %v4579 = vlaneseq
      %v4580 = vshrl.u32 %v4579, 7
      %v4581 = vsub.s32 5, %v4580
      %v4582 = vrot.slane %v4555, %v4581
      %v4583 = vlaneseq
      %v4584 = vshrl.u32 %v4583, 7
      %v4585 = vsub.s32 6, %v4584
      %v4586 = vrot.slane %v4555, %v4585
      %v4587 = vlaneseq
      %v4588 = vshrl.u32 %v4587, 7
      %v4589 = vsub.s32 7, %v4588
      %v4590 = vrot.slane %v4555, %v4589
      %v4591 = vlaneseq
      %v4592 = vshrl.u32 %v4591, 7
      %v4593 = vsub.s32 0, %v4592
      %v4594 = vrot.slane %v4556, %v4593
      %v4595 = vlaneseq
      %v4596 = vshrl.u32 %v4595, 7
      %v4597 = vsub.s32 1, %v4596
      %v4598 = vrot.slane %v4556, %v4597
      %v4599 = vlaneseq
      %v4600 = vshrl.u32 %v4599, 7
      %v4601 = vsub.s32 2, %v4600
      %v4602 = vrot.slane %v4556, %v4601
      %v4603 = vlaneseq
      %v4604 = vshrl.u32 %v4603, 7
      %v4605 = vsub.s32 3, %v4604
      %v4606 = vrot.slane %v4556, %v4605
      %v4607 = vlaneseq
      %v4608 = vshrl.u32 %v4607, 7
      %v4609 = vsub.s32 4, %v4608
      %v4610 = vrot.slane %v4556, %v4609
      %v4611 = vlaneseq
      %v4612 = vshrl.u32 %v4611, 7
      %v4613 = vsub.s32 5, %v4612
      %v4614 = vrot.slane %v4556, %v4613
      %v4615 = vlaneseq
      %v4616 = vshrl.u32 %v4615, 7
      %v4617 = vsub.s32 6, %v4616
      %v4618 = vrot.slane %v4556, %v4617
      %v4619 = vlaneseq
      %v4620 = vshrl.u32 %v4619, 7
      %v4621 = vsub.s32 7, %v4620
      %v4622 = vrot.slane %v4556, %v4621
      %v4671 = vunpack.c.l.b16 %v4523
      %v4672 = vunpack.c.h.b16 %v4523
      %v4673 = vunpack.c.l.b16 %v4524
      %v4674 = vunpack.c.h.b16 %v4524
      %v4675 = vunpack.c.l.b16 %v4525
      %v4676 = vunpack.c.h.b16 %v4525
      %v4677 = vunpack.c.l.b16 %v4526
      %v4678 = vunpack.c.h.b16 %v4526
      %v4679 = vunpack.c.l.b16 %v4527
      %v4680 = vunpack.c.h.b16 %v4527
      %v4681 = vunpack.c.l.b16 %v4528
      %v4682 = vunpack.c.h.b16 %v4528
      %v4683 = vunpack.c.l.b16 %v4529
      %v4684 = vunpack.c.h.b16 %v4529
      %v4685 = vunpack.c.l.b16 %v4530
      %v4686 = vunpack.c.h.b16 %v4530
      %v4687 = vunpack.c.l.b16 %v4531
      %v4688 = vunpack.c.h.b16 %v4531
      %v4689 = vunpack.c.l.b16 %v4532
      %v4690 = vunpack.c.h.b16 %v4532
      %v4691 = vunpack.c.l.b16 %v4533
      %v4692 = vunpack.c.h.b16 %v4533
      %v4693 = vunpack.c.l.b16 %v4534
      %v4694 = vunpack.c.h.b16 %v4534
      %v4695 = vunpack.c.l.b16 %v4535
      %v4696 = vunpack.c.h.b16 %v4535
      %v4697 = vunpack.c.l.b16 %v4536
      %v4698 = vunpack.c.h.b16 %v4536
      %v4699 = vunpack.c.l.b16 %v4537
      %v4700 = vunpack.c.h.b16 %v4537
      %v4701 = vunpack.c.l.b16 %v4538
      %v4702 = vunpack.c.h.b16 %v4538
      %v4703 = vunpack.c.l.b16 %v4539
      %v4704 = vunpack.c.h.b16 %v4539
      %v4705 = vunpack.c.l.b16 %v4540
      %v4706 = vunpack.c.h.b16 %v4540
      %v4707 = vunpack.c.l.b16 %v4541
      %v4708 = vunpack.c.h.b16 %v4541
      %v4709 = vunpack.c.l.b16 %v4542
      %v4710 = vunpack.c.h.b16 %v4542
      %v4711 = vunpack.c.l.b16 %v4543
      %v4712 = vunpack.c.h.b16 %v4543
      %v4713 = vunpack.c.l.b16 %v4544
      %v4714 = vunpack.c.h.b16 %v4544
      %v4715 = vunpack.c.l.b16 %v4545
      %v4716 = vunpack.c.h.b16 %v4545
      %v4717 = vunpack.c.l.b16 %v4546
      %v4718 = vunpack.c.h.b16 %v4546
      %v4719 = vunpack.c.l.b16 %v4547
      %v4720 = vunpack.c.h.b16 %v4547
      %v4721 = vunpack.c.l.b16 %v4548
      %v4722 = vunpack.c.h.b16 %v4548
      %v4723 = vunpack.c.l.b16 %v4549
      %v4724 = vunpack.c.h.b16 %v4549
      %v4725 = vunpack.c.l.b16 %v4550
      %v4726 = vunpack.c.h.b16 %v4550
      %v4727 = vunpack.c.l.b16 %v4551
      %v4728 = vunpack.c.h.b16 %v4551
      %v4729 = vunpack.c.l.b16 %v4552
      %v4730 = vunpack.c.h.b16 %v4552
      %v4731 = vunpack.c.l.b16 %v4553
      %v4732 = vunpack.c.h.b16 %v4553
      %v4733 = vunpack.c.l.b16 %v4554
      %v4734 = vunpack.c.h.b16 %v4554
      %v4735 = vpack.c.b16 %v4687, %v4671
      %v4736 = vpack.c.b16 %v4688, %v4672
      %v4737 = vpack.c.b16 %v4689, %v4673
      %v4738 = vpack.c.b16 %v4690, %v4674
      %v4739 = vpack.c.b16 %v4691, %v4675
      %v4740 = vpack.c.b16 %v4692, %v4676
      %v4741 = vpack.c.b16 %v4693, %v4677
      %v4742 = vpack.c.b16 %v4694, %v4678
      %v4743 = vpack.c.b16 %v4695, %v4679
      %v4744 = vpack.c.b16 %v4696, %v4680
      %v4745 = vpack.c.b16 %v4697, %v4681
      %v4746 = vpack.c.b16 %v4698, %v4682
      %v4747 = vpack.c.b16 %v4699, %v4683
      %v4748 = vpack.c.b16 %v4700, %v4684
      %v4749 = vpack.c.b16 %v4701, %v4685
      %v4750 = vpack.c.b16 %v4702, %v4686
      %v4751 = vpack.c.b16 %v4719, %v4703
      %v4752 = vpack.c.b16 %v4720, %v4704
      %v4753 = vpack.c.b16 %v4721, %v4705
      %v4754 = vpack.c.b16 %v4722, %v4706
      %v4755 = vpack.c.b16 %v4723, %v4707
      %v4756 = vpack.c.b16 %v4724, %v4708
      %v4757 = vpack.c.b16 %v4725, %v4709
      %v4758 = vpack.c.b16 %v4726, %v4710
      %v4759 = vpack.c.b16 %v4727, %v4711
      %v4760 = vpack.c.b16 %v4728, %v4712
      %v4761 = vpack.c.b16 %v4729, %v4713
      %v4762 = vpack.c.b16 %v4730, %v4714
      %v4763 = vpack.c.b16 %v4731, %v4715
      %v4764 = vpack.c.b16 %v4732, %v4716
      %v4765 = vpack.c.b16 %v4733, %v4717
      %v4766 = vpack.c.b16 %v4734, %v4718
      %v4800 = vsel %vm3587, %v4522, 0
      %4802 = vmatprep.subr.bf16.mxu0 %v4736
      %4803 = vmatpush1.bf16.msra.mxu0 %v4735
      %4804 = vmatprep.subr.bf16.mxu0 %v4752
      %4805 = vmatpush1.bf16.msra.mxu0 %v4751
      %4806 = vmatprep.subr.bf16.mxu0 0
      %4807 = vmatpush1.bf16.msra.mxu0 0
      %4808 = vmatprep.subr.bf16.mxu0 0
      %4809 = vmatpush1.bf16.msra.mxu0 0
      %4810 = vmatprep.subr.bf16.mxu0 0
      %4811 = vmatpush1.bf16.msra.mxu0 0
      %4812 = vmatprep.subr.bf16.mxu0 0
      %4813 = vmatpush1.bf16.msra.mxu0 0
      %4814 = vmatprep.subr.bf16.mxu0 0
      %4815 = vmatpush1.bf16.msra.mxu0 0
      %4816 = vmatprep.subr.bf16.mxu0 0
      %4817 = vmatpush1.bf16.msra.mxu0 0
      %4818 = vmatprep.subr.bf16.mxu0 0
      %4819 = vmatpush1.bf16.msra.mxu0 0
      %4820 = vmatprep.subr.bf16.mxu0 0
      %4821 = vmatpush1.bf16.msra.mxu0 0
      %4822 = vmatprep.subr.bf16.mxu0 0
      %4823 = vmatpush1.bf16.msra.mxu0 0
      %4824 = vmatprep.subr.bf16.mxu0 0
      %4825 = vmatpush1.bf16.msra.mxu0 0
      %4826 = vmatprep.subr.bf16.mxu0 0
      %4827 = vmatpush1.bf16.msra.mxu0 0
      %4828 = vmatprep.subr.bf16.mxu0 0
      %4829 = vmatpush1.bf16.msra.mxu0 0
      %4830 = vmatprep.subr.bf16.mxu0 0
      %4831 = vmatpush1.bf16.msra.mxu0 0
      %4832 = vmatprep.subr.bf16.mxu0 0
      %4833 = vmatpush1.bf16.msra.mxu0 0
      %4834 = vmatprep.mubr.bf16.mxu0 0
      %4835 = vmatmul.mubr.bf16.gmra.mrb[0].mxu0 %v4800
      %v4836 = vpop.f32.mrb[0].mxu0
      %v4837 = vadd.f32 %v4562, %v4836
      %v4838 = vpop.f32.mrb[0].mxu0
      %v4839 = vadd.f32 %v4566, %v4838
      %v4840 = vpop.f32.mrb[0].mxu0
      %v4841 = vadd.f32 %v4562, %v4840
      %v4842 = vpop.f32.mrb[0].mxu0
      %v4843 = vadd.f32 %v4566, %v4842
      %4844 = vdwg.mxu0
      %4845 = vmatprep.subr.bf16.mxu0 %v4738
      %4846 = vmatpush1.bf16.msra.mxu0 %v4737
      %4847 = vmatprep.subr.bf16.mxu0 %v4754
      %4848 = vmatpush1.bf16.msra.mxu0 %v4753
      %4849 = vmatprep.subr.bf16.mxu0 0
      %4850 = vmatpush1.bf16.msra.mxu0 0
      %4851 = vmatprep.subr.bf16.mxu0 0
      %4852 = vmatpush1.bf16.msra.mxu0 0
      %4853 = vmatprep.subr.bf16.mxu0 0
      %4854 = vmatpush1.bf16.msra.mxu0 0
      %4855 = vmatprep.subr.bf16.mxu0 0
      %4856 = vmatpush1.bf16.msra.mxu0 0
      %4857 = vmatprep.subr.bf16.mxu0 0
      %4858 = vmatpush1.bf16.msra.mxu0 0
      %4859 = vmatprep.subr.bf16.mxu0 0
      %4860 = vmatpush1.bf16.msra.mxu0 0
      %4861 = vmatprep.subr.bf16.mxu0 0
      %4862 = vmatpush1.bf16.msra.mxu0 0
      %4863 = vmatprep.subr.bf16.mxu0 0
      %4864 = vmatpush1.bf16.msra.mxu0 0
      %4865 = vmatprep.subr.bf16.mxu0 0
      %4866 = vmatpush1.bf16.msra.mxu0 0
      %4867 = vmatprep.subr.bf16.mxu0 0
      %4868 = vmatpush1.bf16.msra.mxu0 0
      %4869 = vmatprep.subr.bf16.mxu0 0
      %4870 = vmatpush1.bf16.msra.mxu0 0
      %4871 = vmatprep.subr.bf16.mxu0 0
      %4872 = vmatpush1.bf16.msra.mxu0 0
      %4873 = vmatprep.subr.bf16.mxu0 0
      %4874 = vmatpush1.bf16.msra.mxu0 0
      %4875 = vmatprep.subr.bf16.mxu0 0
      %4876 = vmatpush1.bf16.msra.mxu0 0
      %4877 = vmatprep.mubr.bf16.mxu0 0
      %4878 = vmatmul.mubr.bf16.gmra.mrb[0].mxu0 %v4800
      %v4879 = vpop.f32.mrb[0].mxu0
      %v4880 = vadd.f32 %v4570, %v4879
      %v4881 = vpop.f32.mrb[0].mxu0
      %v4882 = vadd.f32 %v4574, %v4881
      %v4883 = vpop.f32.mrb[0].mxu0
      %v4884 = vadd.f32 %v4570, %v4883
      %v4885 = vpop.f32.mrb[0].mxu0
      %v4886 = vadd.f32 %v4574, %v4885
      %4887 = vdwg.mxu0
      %4888 = vmatprep.subr.bf16.mxu0 %v4740
      %4889 = vmatpush1.bf16.msra.mxu0 %v4739
      %4890 = vmatprep.subr.bf16.mxu0 %v4756
      %4891 = vmatpush1.bf16.msra.mxu0 %v4755
      %4892 = vmatprep.subr.bf16.mxu0 0
      %4893 = vmatpush1.bf16.msra.mxu0 0
      %4894 = vmatprep.subr.bf16.mxu0 0
      %4895 = vmatpush1.bf16.msra.mxu0 0
      %4896 = vmatprep.subr.bf16.mxu0 0
      %4897 = vmatpush1.bf16.msra.mxu0 0
      %4898 = vmatprep.subr.bf16.mxu0 0
      %4899 = vmatpush1.bf16.msra.mxu0 0
      %4900 = vmatprep.subr.bf16.mxu0 0
      %4901 = vmatpush1.bf16.msra.mxu0 0
      %4902 = vmatprep.subr.bf16.mxu0 0
      %4903 = vmatpush1.bf16.msra.mxu0 0
      %4904 = vmatprep.subr.bf16.mxu0 0
      %4905 = vmatpush1.bf16.msra.mxu0 0
      %4906 = vmatprep.subr.bf16.mxu0 0
      %4907 = vmatpush1.bf16.msra.mxu0 0
      %4908 = vmatprep.subr.bf16.mxu0 0
      %4909 = vmatpush1.bf16.msra.mxu0 0
      %4910 = vmatprep.subr.bf16.mxu0 0
      %4911 = vmatpush1.bf16.msra.mxu0 0
      %4912 = vmatprep.subr.bf16.mxu0 0
      %4913 = vmatpush1.bf16.msra.mxu0 0
      %4914 = vmatprep.subr.bf16.mxu0 0
      %4915 = vmatpush1.bf16.msra.mxu0 0
      %4916 = vmatprep.subr.bf16.mxu0 0
      %4917 = vmatpush1.bf16.msra.mxu0 0
      %4918 = vmatprep.subr.bf16.mxu0 0
      %4919 = vmatpush1.bf16.msra.mxu0 0
      %4920 = vmatprep.mubr.bf16.mxu0 0
      %4921 = vmatmul.mubr.bf16.gmra.mrb[0].mxu0 %v4800
      %v4922 = vpop.f32.mrb[0].mxu0
      %v4923 = vadd.f32 %v4578, %v4922
      %v4924 = vpop.f32.mrb[0].mxu0
      %v4925 = vadd.f32 %v4582, %v4924
      %v4926 = vpop.f32.mrb[0].mxu0
      %v4927 = vadd.f32 %v4578, %v4926
      %v4928 = vpop.f32.mrb[0].mxu0
      %v4929 = vadd.f32 %v4582, %v4928
      %4930 = vdwg.mxu0
      %4931 = vmatprep.subr.bf16.mxu0 %v4742
      %4932 = vmatpush1.bf16.msra.mxu0 %v4741
      %4933 = vmatprep.subr.bf16.mxu0 %v4758
      %4934 = vmatpush1.bf16.msra.mxu0 %v4757
      %4935 = vmatprep.subr.bf16.mxu0 0
      %4936 = vmatpush1.bf16.msra.mxu0 0
      %4937 = vmatprep.subr.bf16.mxu0 0
      %4938 = vmatpush1.bf16.msra.mxu0 0
      %4939 = vmatprep.subr.bf16.mxu0 0
      %4940 = vmatpush1.bf16.msra.mxu0 0
      %4941 = vmatprep.subr.bf16.mxu0 0
      %4942 = vmatpush1.bf16.msra.mxu0 0
      %4943 = vmatprep.subr.bf16.mxu0 0
      %4944 = vmatpush1.bf16.msra.mxu0 0
      %4945 = vmatprep.subr.bf16.mxu0 0
      %4946 = vmatpush1.bf16.msra.mxu0 0
      %4947 = vmatprep.subr.bf16.mxu0 0
      %4948 = vmatpush1.bf16.msra.mxu0 0
      %4949 = vmatprep.subr.bf16.mxu0 0
      %4950 = vmatpush1.bf16.msra.mxu0 0
      %4951 = vmatprep.subr.bf16.mxu0 0
      %4952 = vmatpush1.bf16.msra.mxu0 0
      %4953 = vmatprep.subr.bf16.mxu0 0
      %4954 = vmatpush1.bf16.msra.mxu0 0
      %4955 = vmatprep.subr.bf16.mxu0 0
      %4956 = vmatpush1.bf16.msra.mxu0 0
      %4957 = vmatprep.subr.bf16.mxu0 0
      %4958 = vmatpush1.bf16.msra.mxu0 0
      %4959 = vmatprep.subr.bf16.mxu0 0
      %4960 = vmatpush1.bf16.msra.mxu0 0
      %4961 = vmatprep.subr.bf16.mxu0 0
      %4962 = vmatpush1.bf16.msra.mxu0 0
      %4963 = vmatprep.mubr.bf16.mxu0 0
      %4964 = vmatmul.mubr.bf16.gmra.mrb[0].mxu0 %v4800
      %v4965 = vpop.f32.mrb[0].mxu0
      %v4966 = vadd.f32 %v4586, %v4965
      %v4967 = vpop.f32.mrb[0].mxu0
      %v4968 = vadd.f32 %v4590, %v4967
      %v4969 = vpop.f32.mrb[0].mxu0
      %v4970 = vadd.f32 %v4586, %v4969
      %v4971 = vpop.f32.mrb[0].mxu0
      %v4972 = vadd.f32 %v4590, %v4971
      %4973 = vdwg.mxu0
      %4974 = vmatprep.subr.bf16.mxu0 %v4744
      %4975 = vmatpush1.bf16.msra.mxu0 %v4743
      %4976 = vmatprep.subr.bf16.mxu0 %v4760
      %4977 = vmatpush1.bf16.msra.mxu0 %v4759
      %4978 = vmatprep.subr.bf16.mxu0 0
      %4979 = vmatpush1.bf16.msra.mxu0 0
      %4980 = vmatprep.subr.bf16.mxu0 0
      %4981 = vmatpush1.bf16.msra.mxu0 0
      %4982 = vmatprep.subr.bf16.mxu0 0
      %4983 = vmatpush1.bf16.msra.mxu0 0
      %4984 = vmatprep.subr.bf16.mxu0 0
      %4985 = vmatpush1.bf16.msra.mxu0 0
      %4986 = vmatprep.subr.bf16.mxu0 0
      %4987 = vmatpush1.bf16.msra.mxu0 0
      %4988 = vmatprep.subr.bf16.mxu0 0
      %4989 = vmatpush1.bf16.msra.mxu0 0
      %4990 = vmatprep.subr.bf16.mxu0 0
      %4991 = vmatpush1.bf16.msra.mxu0 0
      %4992 = vmatprep.subr.bf16.mxu0 0
      %4993 = vmatpush1.bf16.msra.mxu0 0
      %4994 = vmatprep.subr.bf16.mxu0 0
      %4995 = vmatpush1.bf16.msra.mxu0 0
      %4996 = vmatprep.subr.bf16.mxu0 0
      %4997 = vmatpush1.bf16.msra.mxu0 0
      %4998 = vmatprep.subr.bf16.mxu0 0
      %4999 = vmatpush1.bf16.msra.mxu0 0
      %5000 = vmatprep.subr.bf16.mxu0 0
      %5001 = vmatpush1.bf16.msra.mxu0 0
      %5002 = vmatprep.subr.bf16.mxu0 0
      %5003 = vmatpush1.bf16.msra.mxu0 0
      %5004 = vmatprep.subr.bf16.mxu0 0
      %5005 = vmatpush1.bf16.msra.mxu0 0
      %5006 = vmatprep.mubr.bf16.mxu0 0
      %5007 = vmatmul.mubr.bf16.gmra.mrb[0].mxu0 %v4800
      %v5008 = vpop.f32.mrb[0].mxu0
      %v5009 = vadd.f32 %v4594, %v5008
      %v5010 = vpop.f32.mrb[0].mxu0
      %v5011 = vadd.f32 %v4598, %v5010
      %v5012 = vpop.f32.mrb[0].mxu0
      %v5013 = vadd.f32 %v4594, %v5012
      %v5014 = vpop.f32.mrb[0].mxu0
      %v5015 = vadd.f32 %v4598, %v5014
      %5016 = vdwg.mxu0
      %5017 = vmatprep.subr.bf16.mxu0 %v4746
      %5018 = vmatpush1.bf16.msra.mxu0 %v4745
      %5019 = vmatprep.subr.bf16.mxu0 %v4762
      %5020 = vmatpush1.bf16.msra.mxu0 %v4761
      %5021 = vmatprep.subr.bf16.mxu0 0
      %5022 = vmatpush1.bf16.msra.mxu0 0
      %5023 = vmatprep.subr.bf16.mxu0 0
      %5024 = vmatpush1.bf16.msra.mxu0 0
      %5025 = vmatprep.subr.bf16.mxu0 0
      %5026 = vmatpush1.bf16.msra.mxu0 0
      %5027 = vmatprep.subr.bf16.mxu0 0
      %5028 = vmatpush1.bf16.msra.mxu0 0
      %5029 = vmatprep.subr.bf16.mxu0 0
      %5030 = vmatpush1.bf16.msra.mxu0 0
      %5031 = vmatprep.subr.bf16.mxu0 0
      %5032 = vmatpush1.bf16.msra.mxu0 0
      %5033 = vmatprep.subr.bf16.mxu0 0
      %5034 = vmatpush1.bf16.msra.mxu0 0
      %5035 = vmatprep.subr.bf16.mxu0 0
      %5036 = vmatpush1.bf16.msra.mxu0 0
      %5037 = vmatprep.subr.bf16.mxu0 0
      %5038 = vmatpush1.bf16.msra.mxu0 0
      %5039 = vmatprep.subr.bf16.mxu0 0
      %5040 = vmatpush1.bf16.msra.mxu0 0
      %5041 = vmatprep.subr.bf16.mxu0 0
      %5042 = vmatpush1.bf16.msra.mxu0 0
      %5043 = vmatprep.subr.bf16.mxu0 0
      %5044 = vmatpush1.bf16.msra.mxu0 0
      %5045 = vmatprep.subr.bf16.mxu0 0
      %5046 = vmatpush1.bf16.msra.mxu0 0
      %5047 = vmatprep.subr.bf16.mxu0 0
      %5048 = vmatpush1.bf16.msra.mxu0 0
      %5049 = vmatprep.mubr.bf16.mxu0 0
      %5050 = vmatmul.mubr.bf16.gmra.mrb[0].mxu0 %v4800
      %v5051 = vpop.f32.mrb[0].mxu0
      %v5052 = vadd.f32 %v4602, %v5051
      %v5053 = vpop.f32.mrb[0].mxu0
      %v5054 = vadd.f32 %v4606, %v5053
      %v5055 = vpop.f32.mrb[0].mxu0
      %v5056 = vadd.f32 %v4602, %v5055
      %v5057 = vpop.f32.mrb[0].mxu0
      %v5058 = vadd.f32 %v4606, %v5057
      %5059 = vdwg.mxu0
      %5060 = vmatprep.subr.bf16.mxu0 %v4748
      %5061 = vmatpush1.bf16.msra.mxu0 %v4747
      %5062 = vmatprep.subr.bf16.mxu0 %v4764
      %5063 = vmatpush1.bf16.msra.mxu0 %v4763
      %5064 = vmatprep.subr.bf16.mxu0 0
      %5065 = vmatpush1.bf16.msra.mxu0 0
      %5066 = vmatprep.subr.bf16.mxu0 0
      %5067 = vmatpush1.bf16.msra.mxu0 0
      %5068 = vmatprep.subr.bf16.mxu0 0
      %5069 = vmatpush1.bf16.msra.mxu0 0
      %5070 = vmatprep.subr.bf16.mxu0 0
      %5071 = vmatpush1.bf16.msra.mxu0 0
      %5072 = vmatprep.subr.bf16.mxu0 0
      %5073 = vmatpush1.bf16.msra.mxu0 0
      %5074 = vmatprep.subr.bf16.mxu0 0
      %5075 = vmatpush1.bf16.msra.mxu0 0
      %5076 = vmatprep.subr.bf16.mxu0 0
      %5077 = vmatpush1.bf16.msra.mxu0 0
      %5078 = vmatprep.subr.bf16.mxu0 0
      %5079 = vmatpush1.bf16.msra.mxu0 0
      %5080 = vmatprep.subr.bf16.mxu0 0
      %5081 = vmatpush1.bf16.msra.mxu0 0
      %5082 = vmatprep.subr.bf16.mxu0 0
      %5083 = vmatpush1.bf16.msra.mxu0 0
      %5084 = vmatprep.subr.bf16.mxu0 0
      %5085 = vmatpush1.bf16.msra.mxu0 0
      %5086 = vmatprep.subr.bf16.mxu0 0
      %5087 = vmatpush1.bf16.msra.mxu0 0
      %5088 = vmatprep.subr.bf16.mxu0 0
      %5089 = vmatpush1.bf16.msra.mxu0 0
      %5090 = vmatprep.subr.bf16.mxu0 0
      %5091 = vmatpush1.bf16.msra.mxu0 0
      %5092 = vmatprep.mubr.bf16.mxu0 0
      %5093 = vmatmul.mubr.bf16.gmra.mrb[0].mxu0 %v4800
      %v5094 = vpop.f32.mrb[0].mxu0
      %v5095 = vadd.f32 %v4610, %v5094
      %v5096 = vpop.f32.mrb[0].mxu0
      %v5097 = vadd.f32 %v4614, %v5096
      %v5098 = vpop.f32.mrb[0].mxu0
      %v5099 = vadd.f32 %v4610, %v5098
      %v5100 = vpop.f32.mrb[0].mxu0
      %v5101 = vadd.f32 %v4614, %v5100
      %5102 = vdwg.mxu0
      %5103 = vmatprep.subr.bf16.mxu0 %v4750
      %5104 = vmatpush1.bf16.msra.mxu0 %v4749
      %5105 = vmatprep.subr.bf16.mxu0 %v4766
      %5106 = vmatpush1.bf16.msra.mxu0 %v4765
      %5107 = vmatprep.subr.bf16.mxu0 0
      %5108 = vmatpush1.bf16.msra.mxu0 0
      %5109 = vmatprep.subr.bf16.mxu0 0
      %5110 = vmatpush1.bf16.msra.mxu0 0
      %5111 = vmatprep.subr.bf16.mxu0 0
      %5112 = vmatpush1.bf16.msra.mxu0 0
      %5113 = vmatprep.subr.bf16.mxu0 0
      %5114 = vmatpush1.bf16.msra.mxu0 0
      %5115 = vmatprep.subr.bf16.mxu0 0
      %5116 = vmatpush1.bf16.msra.mxu0 0
      %5117 = vmatprep.subr.bf16.mxu0 0
      %5118 = vmatpush1.bf16.msra.mxu0 0
      %5119 = vmatprep.subr.bf16.mxu0 0
      %5120 = vmatpush1.bf16.msra.mxu0 0
      %5121 = vmatprep.subr.bf16.mxu0 0
      %5122 = vmatpush1.bf16.msra.mxu0 0
      %5123 = vmatprep.subr.bf16.mxu0 0
      %5124 = vmatpush1.bf16.msra.mxu0 0
      %5125 = vmatprep.subr.bf16.mxu0 0
      %5126 = vmatpush1.bf16.msra.mxu0 0
      %5127 = vmatprep.subr.bf16.mxu0 0
      %5128 = vmatpush1.bf16.msra.mxu0 0
      %5129 = vmatprep.subr.bf16.mxu0 0
      %5130 = vmatpush1.bf16.msra.mxu0 0
      %5131 = vmatprep.subr.bf16.mxu0 0
      %5132 = vmatpush1.bf16.msra.mxu0 0
      %5133 = vmatprep.subr.bf16.mxu0 0
      %5134 = vmatpush1.bf16.msra.mxu0 0
      %5135 = vmatprep.mubr.bf16.mxu0 0
      %5136 = vmatmul.mubr.bf16.gmra.mrb[0].mxu0 %v4800
      %v5137 = vpop.f32.mrb[0].mxu0
      %v5138 = vadd.f32 %v4618, %v5137
      %v5139 = vpop.f32.mrb[0].mxu0
      %v5140 = vadd.f32 %v4622, %v5139
      %v5141 = vpop.f32.mrb[0].mxu0
      %v5142 = vadd.f32 %v4618, %v5141
      %v5143 = vpop.f32.mrb[0].mxu0
      %v5144 = vadd.f32 %v4622, %v5143
      %5145 = vdwg.mxu0
      %v5146 = vmax.f32 %v4837, 0.0
      %v5147 = vmax.f32 %v4839, 0.0
      %v5148 = vmax.f32 %v4880, 0.0
      %v5149 = vmax.f32 %v4882, 0.0
      %v5150 = vmax.f32 %v4923, 0.0
      %v5151 = vmax.f32 %v4925, 0.0
      %v5152 = vmax.f32 %v4966, 0.0
      %v5153 = vmax.f32 %v4968, 0.0
      %v5154 = vmax.f32 %v5009, 0.0
      %v5155 = vmax.f32 %v5011, 0.0
      %v5156 = vmax.f32 %v5052, 0.0
      %v5157 = vmax.f32 %v5054, 0.0
      %v5158 = vmax.f32 %v5095, 0.0
      %v5159 = vmax.f32 %v5097, 0.0
      %v5160 = vmax.f32 %v5138, 0.0
      %v5161 = vmax.f32 %v5140, 0.0
      %v5162 = vmax.f32 %v4841, 0.0
      %v5163 = vmax.f32 %v4843, 0.0
      %v5164 = vmax.f32 %v4884, 0.0
      %v5165 = vmax.f32 %v4886, 0.0
      %v5166 = vmax.f32 %v4927, 0.0
      %v5167 = vmax.f32 %v4929, 0.0
      %v5168 = vmax.f32 %v4970, 0.0
      %v5169 = vmax.f32 %v4972, 0.0
      %v5170 = vmax.f32 %v5013, 0.0
      %v5171 = vmax.f32 %v5015, 0.0
      %v5172 = vmax.f32 %v5056, 0.0
      %v5173 = vmax.f32 %v5058, 0.0
      %v5174 = vmax.f32 %v5099, 0.0
      %v5175 = vmax.f32 %v5101, 0.0
      %v5176 = vmax.f32 %v5142, 0.0
      %v5177 = vmax.f32 %v5144, 0.0
      %v5178 = vpack.c.bf16 %v5162, %v5146
      %v5179 = vpack.c.bf16 %v5163, %v5147
      %v5180 = vpack.c.bf16 %v5164, %v5148
      %v5181 = vpack.c.bf16 %v5165, %v5149
      %v5182 = vpack.c.bf16 %v5166, %v5150
      %v5183 = vpack.c.bf16 %v5167, %v5151
      %v5184 = vpack.c.bf16 %v5168, %v5152
      %v5185 = vpack.c.bf16 %v5169, %v5153
      %v5186 = vpack.c.bf16 %v5170, %v5154
      %v5187 = vpack.c.bf16 %v5171, %v5155
      %v5188 = vpack.c.bf16 %v5172, %v5156
      %v5189 = vpack.c.bf16 %v5173, %v5157
      %v5190 = vpack.c.bf16 %v5174, %v5158
      %v5191 = vpack.c.bf16 %v5175, %v5159
      %v5192 = vpack.c.bf16 %v5176, %v5160
      %v5193 = vpack.c.bf16 %v5177, %v5161
      %v5194 = vld [vmem:[%s1121] sm:$0xf]
      %v5195 = vld [vmem:[%s1121 + $0x4] sm:$0xf]
      %v5196 = vld [vmem:[%s1121 + $0x8] sm:$0xf]
      %v5197 = vld [vmem:[%s1121 + $0xc] sm:$0xf]
      %v5198 = vld [vmem:[%s1121 + $0x10] sm:$0xf]
      %v5199 = vld [vmem:[%s1121 + $0x14] sm:$0xf]
      %v5200 = vld [vmem:[%s1121 + $0x18] sm:$0xf]
      %v5201 = vld [vmem:[%s1121 + $0x1c] sm:$0xf]
      %v5202 = vld [vmem:[%s1121 + $0x20] sm:$0xf]
      %v5203 = vld [vmem:[%s1121 + $0x24] sm:$0xf]
      %v5204 = vld [vmem:[%s1121 + $0x28] sm:$0xf]
      %v5205 = vld [vmem:[%s1121 + $0x2c] sm:$0xf]
      %v5206 = vld [vmem:[%s1121 + $0x30] sm:$0xf]
      %v5207 = vld [vmem:[%s1121 + $0x34] sm:$0xf]
      %v5208 = vld [vmem:[%s1121 + $0x38] sm:$0xf]
      %v5209 = vld [vmem:[%s1121 + $0x3c] sm:$0xf]
      %v5210 = vld [vmem:[%s1121 + $0x40] sm:$0xf]
      %v5211 = vld [vmem:[%s1121 + $0x44] sm:$0xf]
      %v5212 = vld [vmem:[%s1121 + $0x48] sm:$0xf]
      %v5213 = vld [vmem:[%s1121 + $0x4c] sm:$0xf]
      %v5214 = vld [vmem:[%s1121 + $0x50] sm:$0xf]
      %v5215 = vld [vmem:[%s1121 + $0x54] sm:$0xf]
      %v5216 = vld [vmem:[%s1121 + $0x58] sm:$0xf]
      %v5217 = vld [vmem:[%s1121 + $0x5c] sm:$0xf]
      %v5218 = vld [vmem:[%s1121 + $0x60] sm:$0xf]
      %v5219 = vld [vmem:[%s1121 + $0x64] sm:$0xf]
      %v5220 = vld [vmem:[%s1121 + $0x68] sm:$0xf]
      %v5221 = vld [vmem:[%s1121 + $0x6c] sm:$0xf]
      %v5222 = vld [vmem:[%s1121 + $0x70] sm:$0xf]
      %v5223 = vld [vmem:[%s1121 + $0x74] sm:$0xf]
      %v5224 = vld [vmem:[%s1121 + $0x78] sm:$0xf]
      %v5225 = vld [vmem:[%s1121 + $0x7c] sm:$0xf]
      %v5226 = vld [vmem:[%s1121 + $0x80] sm:$0xf]
      %v5227 = vld [vmem:[%s1121 + $0x84] sm:$0xf]
      %v5228 = vld [vmem:[%s1121 + $0x88] sm:$0xf]
      %v5229 = vld [vmem:[%s1121 + $0x8c] sm:$0xf]
      %v5230 = vld [vmem:[%s1121 + $0x90] sm:$0xf]
      %v5231 = vld [vmem:[%s1121 + $0x94] sm:$0xf]
      %v5232 = vld [vmem:[%s1121 + $0x98] sm:$0xf]
      %v5233 = vld [vmem:[%s1121 + $0x9c] sm:$0xf]
      %v5234 = vld [vmem:[%s1121 + $0xa0] sm:$0xf]
      %v5235 = vld [vmem:[%s1121 + $0xa4] sm:$0xf]
      %v5236 = vld [vmem:[%s1121 + $0xa8] sm:$0xf]
      %v5237 = vld [vmem:[%s1121 + $0xac] sm:$0xf]
      %v5238 = vld [vmem:[%s1121 + $0xb0] sm:$0xf]
      %v5239 = vld [vmem:[%s1121 + $0xb4] sm:$0xf]
      %v5240 = vld [vmem:[%s1121 + $0xb8] sm:$0xf]
      %v5241 = vld [vmem:[%s1121 + $0xbc] sm:$0xf]
      %v5242 = vld [vmem:[%s1121 + $0xc0] sm:$0xf]
      %v5243 = vld [vmem:[%s1121 + $0xc4] sm:$0xf]
      %v5244 = vld [vmem:[%s1121 + $0xc8] sm:$0xf]
      %v5245 = vld [vmem:[%s1121 + $0xcc] sm:$0xf]
      %v5246 = vld [vmem:[%s1121 + $0xd0] sm:$0xf]
      %v5247 = vld [vmem:[%s1121 + $0xd4] sm:$0xf]
      %v5248 = vld [vmem:[%s1121 + $0xd8] sm:$0xf]
      %v5249 = vld [vmem:[%s1121 + $0xdc] sm:$0xf]
      %v5250 = vld [vmem:[%s1121 + $0xe0] sm:$0xf]
      %v5251 = vld [vmem:[%s1121 + $0xe4] sm:$0xf]
      %v5252 = vld [vmem:[%s1121 + $0xe8] sm:$0xf]
      %v5253 = vld [vmem:[%s1121 + $0xec] sm:$0xf]
      %v5254 = vld [vmem:[%s1121 + $0xf0] sm:$0xf]
      %v5255 = vld [vmem:[%s1121 + $0xf4] sm:$0xf]
      %v5256 = vld [vmem:[%s1121 + $0xf8] sm:$0xf]
      %v5257 = vld [vmem:[%s1121 + $0xfc] sm:$0xf]
      %v5258 = vld [vmem:[%s1121 + $0x100] sm:$0xf]
      %v5259 = vld [vmem:[%s1121 + $0x104] sm:$0xf]
      %v5260 = vld [vmem:[%s1121 + $0x108] sm:$0xf]
      %v5261 = vld [vmem:[%s1121 + $0x10c] sm:$0xf]
      %v5262 = vld [vmem:[%s1121 + $0x110] sm:$0xf]
      %v5263 = vld [vmem:[%s1121 + $0x114] sm:$0xf]
      %v5264 = vld [vmem:[%s1121 + $0x118] sm:$0xf]
      %v5265 = vld [vmem:[%s1121 + $0x11c] sm:$0xf]
      %v5266 = vld [vmem:[%s1121 + $0x120] sm:$0xf]
      %v5267 = vld [vmem:[%s1121 + $0x124] sm:$0xf]
      %v5268 = vld [vmem:[%s1121 + $0x128] sm:$0xf]
      %v5269 = vld [vmem:[%s1121 + $0x12c] sm:$0xf]
      %v5270 = vld [vmem:[%s1121 + $0x130] sm:$0xf]
      %v5271 = vld [vmem:[%s1121 + $0x134] sm:$0xf]
      %v5272 = vld [vmem:[%s1121 + $0x138] sm:$0xf]
      %v5273 = vld [vmem:[%s1121 + $0x13c] sm:$0xf]
      %v5274 = vld [vmem:[%s1121 + $0x140] sm:$0xf]
      %v5275 = vld [vmem:[%s1121 + $0x144] sm:$0xf]
      %v5276 = vld [vmem:[%s1121 + $0x148] sm:$0xf]
      %v5277 = vld [vmem:[%s1121 + $0x14c] sm:$0xf]
      %v5278 = vld [vmem:[%s1121 + $0x150] sm:$0xf]
      %v5279 = vld [vmem:[%s1121 + $0x154] sm:$0xf]
      %v5280 = vld [vmem:[%s1121 + $0x158] sm:$0xf]
      %v5281 = vld [vmem:[%s1121 + $0x15c] sm:$0xf]
      %v5282 = vld [vmem:[%s1121 + $0x160] sm:$0xf]
      %v5283 = vld [vmem:[%s1121 + $0x164] sm:$0xf]
      %v5284 = vld [vmem:[%s1121 + $0x168] sm:$0xf]
      %v5285 = vld [vmem:[%s1121 + $0x16c] sm:$0xf]
      %v5286 = vld [vmem:[%s1121 + $0x170] sm:$0xf]
      %v5287 = vld [vmem:[%s1121 + $0x174] sm:$0xf]
      %v5288 = vld [vmem:[%s1121 + $0x178] sm:$0xf]
      %v5289 = vld [vmem:[%s1121 + $0x17c] sm:$0xf]
      %v5290 = vld [vmem:[%s1121 + $0x180] sm:$0xf]
      %v5291 = vld [vmem:[%s1121 + $0x184] sm:$0xf]
      %v5292 = vld [vmem:[%s1121 + $0x188] sm:$0xf]
      %v5293 = vld [vmem:[%s1121 + $0x18c] sm:$0xf]
      %v5294 = vld [vmem:[%s1121 + $0x190] sm:$0xf]
      %v5295 = vld [vmem:[%s1121 + $0x194] sm:$0xf]
      %v5296 = vld [vmem:[%s1121 + $0x198] sm:$0xf]
      %v5297 = vld [vmem:[%s1121 + $0x19c] sm:$0xf]
      %v5298 = vld [vmem:[%s1121 + $0x1a0] sm:$0xf]
      %v5299 = vld [vmem:[%s1121 + $0x1a4] sm:$0xf]
      %v5300 = vld [vmem:[%s1121 + $0x1a8] sm:$0xf]
      %v5301 = vld [vmem:[%s1121 + $0x1ac] sm:$0xf]
      %v5302 = vld [vmem:[%s1121 + $0x1b0] sm:$0xf]
      %v5303 = vld [vmem:[%s1121 + $0x1b4] sm:$0xf]
      %v5304 = vld [vmem:[%s1121 + $0x1b8] sm:$0xf]
      %v5305 = vld [vmem:[%s1121 + $0x1bc] sm:$0xf]
      %v5306 = vld [vmem:[%s1121 + $0x1c0] sm:$0xf]
      %v5307 = vld [vmem:[%s1121 + $0x1c4] sm:$0xf]
      %v5308 = vld [vmem:[%s1121 + $0x1c8] sm:$0xf]
      %v5309 = vld [vmem:[%s1121 + $0x1cc] sm:$0xf]
      %v5310 = vld [vmem:[%s1121 + $0x1d0] sm:$0xf]
      %v5311 = vld [vmem:[%s1121 + $0x1d4] sm:$0xf]
      %v5312 = vld [vmem:[%s1121 + $0x1d8] sm:$0xf]
      %v5313 = vld [vmem:[%s1121 + $0x1dc] sm:$0xf]
      %v5314 = vld [vmem:[%s1121 + $0x1e0] sm:$0xf]
      %v5315 = vld [vmem:[%s1121 + $0x1e4] sm:$0xf]
      %v5316 = vld [vmem:[%s1121 + $0x1e8] sm:$0xf]
      %v5317 = vld [vmem:[%s1121 + $0x1ec] sm:$0xf]
      %v5318 = vld [vmem:[%s1121 + $0x1f0] sm:$0xf]
      %v5319 = vld [vmem:[%s1121 + $0x1f4] sm:$0xf]
      %v5320 = vld [vmem:[%s1121 + $0x1f8] sm:$0xf]
      %v5321 = vld [vmem:[%s1121 + $0x1fc] sm:$0xf]
      %v5322 = vld [vmem:[%s1121 + $0x200] sm:$0xf]
      %v5323 = vld [vmem:[%s1121 + $0x204] sm:$0xf]
      %v5324 = vld [vmem:[%s1121 + $0x208] sm:$0xf]
      %v5325 = vld [vmem:[%s1121 + $0x20c] sm:$0xf]
      %v5326 = vld [vmem:[%s1121 + $0x210] sm:$0xf]
      %v5327 = vld [vmem:[%s1121 + $0x214] sm:$0xf]
      %v5328 = vld [vmem:[%s1121 + $0x218] sm:$0xf]
      %v5329 = vld [vmem:[%s1121 + $0x21c] sm:$0xf]
      %v5330 = vld [vmem:[%s1121 + $0x220] sm:$0xf]
      %v5331 = vld [vmem:[%s1121 + $0x224] sm:$0xf]
      %v5332 = vld [vmem:[%s1121 + $0x228] sm:$0xf]
      %v5333 = vld [vmem:[%s1121 + $0x22c] sm:$0xf]
      %v5334 = vld [vmem:[%s1121 + $0x230] sm:$0xf]
      %v5335 = vld [vmem:[%s1121 + $0x234] sm:$0xf]
      %v5336 = vld [vmem:[%s1121 + $0x238] sm:$0xf]
      %v5337 = vld [vmem:[%s1121 + $0x23c] sm:$0xf]
      %v5338 = vld [vmem:[%s1121 + $0x240] sm:$0xf]
      %v5339 = vld [vmem:[%s1121 + $0x244] sm:$0xf]
      %v5340 = vld [vmem:[%s1121 + $0x248] sm:$0xf]
      %v5341 = vld [vmem:[%s1121 + $0x24c] sm:$0xf]
      %v5342 = vld [vmem:[%s1121 + $0x250] sm:$0xf]
      %v5343 = vld [vmem:[%s1121 + $0x254] sm:$0xf]
      %v5344 = vld [vmem:[%s1121 + $0x258] sm:$0xf]
      %v5345 = vld [vmem:[%s1121 + $0x25c] sm:$0xf]
      %v5346 = vld [vmem:[%s1121 + $0x260] sm:$0xf]
      %v5347 = vld [vmem:[%s1121 + $0x264] sm:$0xf]
      %v5348 = vld [vmem:[%s1121 + $0x268] sm:$0xf]
      %v5349 = vld [vmem:[%s1121 + $0x26c] sm:$0xf]
      %v5350 = vld [vmem:[%s1121 + $0x270] sm:$0xf]
      %v5351 = vld [vmem:[%s1121 + $0x274] sm:$0xf]
      %v5352 = vld [vmem:[%s1121 + $0x278] sm:$0xf]
      %v5353 = vld [vmem:[%s1121 + $0x27c] sm:$0xf]
      %v5354 = vld [vmem:[%s1121 + $0x280] sm:$0xf]
      %v5355 = vld [vmem:[%s1121 + $0x284] sm:$0xf]
      %v5356 = vld [vmem:[%s1121 + $0x288] sm:$0xf]
      %v5357 = vld [vmem:[%s1121 + $0x28c] sm:$0xf]
      %v5358 = vld [vmem:[%s1121 + $0x290] sm:$0xf]
      %v5359 = vld [vmem:[%s1121 + $0x294] sm:$0xf]
      %v5360 = vld [vmem:[%s1121 + $0x298] sm:$0xf]
      %v5361 = vld [vmem:[%s1121 + $0x29c] sm:$0xf]
      %v5362 = vld [vmem:[%s1121 + $0x2a0] sm:$0xf]
      %v5363 = vld [vmem:[%s1121 + $0x2a4] sm:$0xf]
      %v5364 = vld [vmem:[%s1121 + $0x2a8] sm:$0xf]
      %v5365 = vld [vmem:[%s1121 + $0x2ac] sm:$0xf]
      %v5366 = vld [vmem:[%s1121 + $0x2b0] sm:$0xf]
      %v5367 = vld [vmem:[%s1121 + $0x2b4] sm:$0xf]
      %v5368 = vld [vmem:[%s1121 + $0x2b8] sm:$0xf]
      %v5369 = vld [vmem:[%s1121 + $0x2bc] sm:$0xf]
      %v5370 = vld [vmem:[%s1121 + $0x2c0] sm:$0xf]
      %v5371 = vld [vmem:[%s1121 + $0x2c4] sm:$0xf]
      %v5372 = vld [vmem:[%s1121 + $0x2c8] sm:$0xf]
      %v5373 = vld [vmem:[%s1121 + $0x2cc] sm:$0xf]
      %v5374 = vld [vmem:[%s1121 + $0x2d0] sm:$0xf]
      %v5375 = vld [vmem:[%s1121 + $0x2d4] sm:$0xf]
      %v5376 = vld [vmem:[%s1121 + $0x2d8] sm:$0xf]
      %v5377 = vld [vmem:[%s1121 + $0x2dc] sm:$0xf]
      %v5378 = vld [vmem:[%s1121 + $0x2e0] sm:$0xf]
      %v5379 = vld [vmem:[%s1121 + $0x2e4] sm:$0xf]
      %v5380 = vld [vmem:[%s1121 + $0x2e8] sm:$0xf]
      %v5381 = vld [vmem:[%s1121 + $0x2ec] sm:$0xf]
      %v5382 = vld [vmem:[%s1121 + $0x2f0] sm:$0xf]
      %v5383 = vld [vmem:[%s1121 + $0x2f4] sm:$0xf]
      %v5384 = vld [vmem:[%s1121 + $0x2f8] sm:$0xf]
      %v5385 = vld [vmem:[%s1121 + $0x2fc] sm:$0xf]
      %v5386 = vld [vmem:[%s1121 + $0x300] sm:$0xf]
      %v5387 = vld [vmem:[%s1121 + $0x304] sm:$0xf]
      %v5388 = vld [vmem:[%s1121 + $0x308] sm:$0xf]
      %v5389 = vld [vmem:[%s1121 + $0x30c] sm:$0xf]
      %v5390 = vld [vmem:[%s1121 + $0x310] sm:$0xf]
      %v5391 = vld [vmem:[%s1121 + $0x314] sm:$0xf]
      %v5392 = vld [vmem:[%s1121 + $0x318] sm:$0xf]
      %v5393 = vld [vmem:[%s1121 + $0x31c] sm:$0xf]
      %v5394 = vld [vmem:[%s1121 + $0x320] sm:$0xf]
      %v5395 = vld [vmem:[%s1121 + $0x324] sm:$0xf]
      %v5396 = vld [vmem:[%s1121 + $0x328] sm:$0xf]
      %v5397 = vld [vmem:[%s1121 + $0x32c] sm:$0xf]
      %v5398 = vld [vmem:[%s1121 + $0x330] sm:$0xf]
      %v5399 = vld [vmem:[%s1121 + $0x334] sm:$0xf]
      %v5400 = vld [vmem:[%s1121 + $0x338] sm:$0xf]
      %v5401 = vld [vmem:[%s1121 + $0x33c] sm:$0xf]
      %v5402 = vld [vmem:[%s1121 + $0x340] sm:$0xf]
      %v5403 = vld [vmem:[%s1121 + $0x344] sm:$0xf]
      %v5404 = vld [vmem:[%s1121 + $0x348] sm:$0xf]
      %v5405 = vld [vmem:[%s1121 + $0x34c] sm:$0xf]
      %v5406 = vld [vmem:[%s1121 + $0x350] sm:$0xf]
      %v5407 = vld [vmem:[%s1121 + $0x354] sm:$0xf]
      %v5408 = vld [vmem:[%s1121 + $0x358] sm:$0xf]
      %v5409 = vld [vmem:[%s1121 + $0x35c] sm:$0xf]
      %v5410 = vld [vmem:[%s1121 + $0x360] sm:$0xf]
      %v5411 = vld [vmem:[%s1121 + $0x364] sm:$0xf]
      %v5412 = vld [vmem:[%s1121 + $0x368] sm:$0xf]
      %v5413 = vld [vmem:[%s1121 + $0x36c] sm:$0xf]
      %v5414 = vld [vmem:[%s1121 + $0x370] sm:$0xf]
      %v5415 = vld [vmem:[%s1121 + $0x374] sm:$0xf]
      %v5416 = vld [vmem:[%s1121 + $0x378] sm:$0xf]
      %v5417 = vld [vmem:[%s1121 + $0x37c] sm:$0xf]
      %v5418 = vld [vmem:[%s1121 + $0x380] sm:$0xf]
      %v5419 = vld [vmem:[%s1121 + $0x384] sm:$0xf]
      %v5420 = vld [vmem:[%s1121 + $0x388] sm:$0xf]
      %v5421 = vld [vmem:[%s1121 + $0x38c] sm:$0xf]
      %v5422 = vld [vmem:[%s1121 + $0x390] sm:$0xf]
      %v5423 = vld [vmem:[%s1121 + $0x394] sm:$0xf]
      %v5424 = vld [vmem:[%s1121 + $0x398] sm:$0xf]
      %v5425 = vld [vmem:[%s1121 + $0x39c] sm:$0xf]
      %v5426 = vld [vmem:[%s1121 + $0x3a0] sm:$0xf]
      %v5427 = vld [vmem:[%s1121 + $0x3a4] sm:$0xf]
      %v5428 = vld [vmem:[%s1121 + $0x3a8] sm:$0xf]
      %v5429 = vld [vmem:[%s1121 + $0x3ac] sm:$0xf]
      %v5430 = vld [vmem:[%s1121 + $0x3b0] sm:$0xf]
      %v5431 = vld [vmem:[%s1121 + $0x3b4] sm:$0xf]
      %v5432 = vld [vmem:[%s1121 + $0x3b8] sm:$0xf]
      %v5433 = vld [vmem:[%s1121 + $0x3bc] sm:$0xf]
      %v5434 = vld [vmem:[%s1121 + $0x3c0] sm:$0xf]
      %v5435 = vld [vmem:[%s1121 + $0x3c4] sm:$0xf]
      %v5436 = vld [vmem:[%s1121 + $0x3c8] sm:$0xf]
      %v5437 = vld [vmem:[%s1121 + $0x3cc] sm:$0xf]
      %v5438 = vld [vmem:[%s1121 + $0x3d0] sm:$0xf]
      %v5439 = vld [vmem:[%s1121 + $0x3d4] sm:$0xf]
      %v5440 = vld [vmem:[%s1121 + $0x3d8] sm:$0xf]
      %v5441 = vld [vmem:[%s1121 + $0x3dc] sm:$0xf]
      %v5442 = vld [vmem:[%s1121 + $0x3e0] sm:$0xf]
      %v5443 = vld [vmem:[%s1121 + $0x3e4] sm:$0xf]
      %v5444 = vld [vmem:[%s1121 + $0x3e8] sm:$0xf]
      %v5445 = vld [vmem:[%s1121 + $0x3ec] sm:$0xf]
      %v5446 = vld [vmem:[%s1121 + $0x3f0] sm:$0xf]
      %v5447 = vld [vmem:[%s1121 + $0x3f4] sm:$0xf]
      %v5448 = vld [vmem:[%s1121 + $0x3f8] sm:$0xf]
      %v5449 = vld [vmem:[%s1121 + $0x3fc] sm:$0xf]
      %v5450 = vld [vmem:[%s1124] sm:$0x1]
      %v5452 = vlaneseq
      %v5453 = vshrl.u32 %v5452, 7
      %v5454 = vsub.s32 0, %v5453
      %v5455 = vrot.slane %v5450, %v5454
      %v5713 = vunpack.c.l.b16 %v5194
      %v5714 = vunpack.c.l.b16 %v5195
      %v5715 = vunpack.c.l.b16 %v5196
      %v5716 = vunpack.c.l.b16 %v5197
      %v5717 = vunpack.c.l.b16 %v5198
      %v5718 = vunpack.c.l.b16 %v5199
      %v5719 = vunpack.c.l.b16 %v5200
      %v5720 = vunpack.c.l.b16 %v5201
      %v5721 = vunpack.c.l.b16 %v5202
      %v5722 = vunpack.c.l.b16 %v5203
      %v5723 = vunpack.c.l.b16 %v5204
      %v5724 = vunpack.c.l.b16 %v5205
      %v5725 = vunpack.c.l.b16 %v5206
      %v5726 = vunpack.c.l.b16 %v5207
      %v5727 = vunpack.c.l.b16 %v5208
      %v5728 = vunpack.c.l.b16 %v5209
      %v5729 = vunpack.c.l.b16 %v5210
      %v5730 = vunpack.c.l.b16 %v5211
      %v5731 = vunpack.c.l.b16 %v5212
      %v5732 = vunpack.c.l.b16 %v5213
      %v5733 = vunpack.c.l.b16 %v5214
      %v5734 = vunpack.c.l.b16 %v5215
      %v5735 = vunpack.c.l.b16 %v5216
      %v5736 = vunpack.c.l.b16 %v5217
      %v5737 = vunpack.c.l.b16 %v5218
      %v5738 = vunpack.c.l.b16 %v5219
      %v5739 = vunpack.c.l.b16 %v5220
      %v5740 = vunpack.c.l.b16 %v5221
      %v5741 = vunpack.c.l.b16 %v5222
      %v5742 = vunpack.c.l.b16 %v5223
      %v5743 = vunpack.c.l.b16 %v5224
      %v5744 = vunpack.c.l.b16 %v5225
      %v5745 = vunpack.c.l.b16 %v5226
      %v5746 = vunpack.c.l.b16 %v5227
      %v5747 = vunpack.c.l.b16 %v5228
      %v5748 = vunpack.c.l.b16 %v5229
      %v5749 = vunpack.c.l.b16 %v5230
      %v5750 = vunpack.c.l.b16 %v5231
      %v5751 = vunpack.c.l.b16 %v5232
      %v5752 = vunpack.c.l.b16 %v5233
      %v5753 = vunpack.c.l.b16 %v5234
      %v5754 = vunpack.c.l.b16 %v5235
      %v5755 = vunpack.c.l.b16 %v5236
      %v5756 = vunpack.c.l.b16 %v5237
      %v5757 = vunpack.c.l.b16 %v5238
      %v5758 = vunpack.c.l.b16 %v5239
      %v5759 = vunpack.c.l.b16 %v5240
      %v5760 = vunpack.c.l.b16 %v5241
      %v5761 = vunpack.c.l.b16 %v5242
      %v5762 = vunpack.c.l.b16 %v5243
      %v5763 = vunpack.c.l.b16 %v5244
      %v5764 = vunpack.c.l.b16 %v5245
      %v5765 = vunpack.c.l.b16 %v5246
      %v5766 = vunpack.c.l.b16 %v5247
      %v5767 = vunpack.c.l.b16 %v5248
      %v5768 = vunpack.c.l.b16 %v5249
      %v5769 = vunpack.c.l.b16 %v5250
      %v5770 = vunpack.c.l.b16 %v5251
      %v5771 = vunpack.c.l.b16 %v5252
      %v5772 = vunpack.c.l.b16 %v5253
      %v5773 = vunpack.c.l.b16 %v5254
      %v5774 = vunpack.c.l.b16 %v5255
      %v5775 = vunpack.c.l.b16 %v5256
      %v5776 = vunpack.c.l.b16 %v5257
      %v5777 = vunpack.c.l.b16 %v5258
      %v5778 = vunpack.c.l.b16 %v5259
      %v5779 = vunpack.c.l.b16 %v5260
      %v5780 = vunpack.c.l.b16 %v5261
      %v5781 = vunpack.c.l.b16 %v5262
      %v5782 = vunpack.c.l.b16 %v5263
      %v5783 = vunpack.c.l.b16 %v5264
      %v5784 = vunpack.c.l.b16 %v5265
      %v5785 = vunpack.c.l.b16 %v5266
      %v5786 = vunpack.c.l.b16 %v5267
      %v5787 = vunpack.c.l.b16 %v5268
      %v5788 = vunpack.c.l.b16 %v5269
      %v5789 = vunpack.c.l.b16 %v5270
      %v5790 = vunpack.c.l.b16 %v5271
      %v5791 = vunpack.c.l.b16 %v5272
      %v5792 = vunpack.c.l.b16 %v5273
      %v5793 = vunpack.c.l.b16 %v5274
      %v5794 = vunpack.c.l.b16 %v5275
      %v5795 = vunpack.c.l.b16 %v5276
      %v5796 = vunpack.c.l.b16 %v5277
      %v5797 = vunpack.c.l.b16 %v5278
      %v5798 = vunpack.c.l.b16 %v5279
      %v5799 = vunpack.c.l.b16 %v5280
      %v5800 = vunpack.c.l.b16 %v5281
      %v5801 = vunpack.c.l.b16 %v5282
      %v5802 = vunpack.c.l.b16 %v5283
      %v5803 = vunpack.c.l.b16 %v5284
      %v5804 = vunpack.c.l.b16 %v5285
      %v5805 = vunpack.c.l.b16 %v5286
      %v5806 = vunpack.c.l.b16 %v5287
      %v5807 = vunpack.c.l.b16 %v5288
      %v5808 = vunpack.c.l.b16 %v5289
      %v5809 = vunpack.c.l.b16 %v5290
      %v5810 = vunpack.c.l.b16 %v5291
      %v5811 = vunpack.c.l.b16 %v5292
      %v5812 = vunpack.c.l.b16 %v5293
      %v5813 = vunpack.c.l.b16 %v5294
      %v5814 = vunpack.c.l.b16 %v5295
      %v5815 = vunpack.c.l.b16 %v5296
      %v5816 = vunpack.c.l.b16 %v5297
      %v5817 = vunpack.c.l.b16 %v5298
      %v5818 = vunpack.c.l.b16 %v5299
      %v5819 = vunpack.c.l.b16 %v5300
      %v5820 = vunpack.c.l.b16 %v5301
      %v5821 = vunpack.c.l.b16 %v5302
      %v5822 = vunpack.c.l.b16 %v5303
      %v5823 = vunpack.c.l.b16 %v5304
      %v5824 = vunpack.c.l.b16 %v5305
      %v5825 = vunpack.c.l.b16 %v5306
      %v5826 = vunpack.c.l.b16 %v5307
      %v5827 = vunpack.c.l.b16 %v5308
      %v5828 = vunpack.c.l.b16 %v5309
      %v5829 = vunpack.c.l.b16 %v5310
      %v5830 = vunpack.c.l.b16 %v5311
      %v5831 = vunpack.c.l.b16 %v5312
      %v5832 = vunpack.c.l.b16 %v5313
      %v5833 = vunpack.c.l.b16 %v5314
      %v5834 = vunpack.c.l.b16 %v5315
      %v5835 = vunpack.c.l.b16 %v5316
      %v5836 = vunpack.c.l.b16 %v5317
      %v5837 = vunpack.c.l.b16 %v5318
      %v5838 = vunpack.c.l.b16 %v5319
      %v5839 = vunpack.c.l.b16 %v5320
      %v5840 = vunpack.c.l.b16 %v5321
      %v5841 = vunpack.c.l.b16 %v5322
      %v5842 = vunpack.c.l.b16 %v5323
      %v5843 = vunpack.c.l.b16 %v5324
      %v5844 = vunpack.c.l.b16 %v5325
      %v5845 = vunpack.c.l.b16 %v5326
      %v5846 = vunpack.c.l.b16 %v5327
      %v5847 = vunpack.c.l.b16 %v5328
      %v5848 = vunpack.c.l.b16 %v5329
      %v5849 = vunpack.c.l.b16 %v5330
      %v5850 = vunpack.c.l.b16 %v5331
      %v5851 = vunpack.c.l.b16 %v5332
      %v5852 = vunpack.c.l.b16 %v5333
      %v5853 = vunpack.c.l.b16 %v5334
      %v5854 = vunpack.c.l.b16 %v5335
      %v5855 = vunpack.c.l.b16 %v5336
      %v5856 = vunpack.c.l.b16 %v5337
      %v5857 = vunpack.c.l.b16 %v5338
      %v5858 = vunpack.c.l.b16 %v5339
      %v5859 = vunpack.c.l.b16 %v5340
      %v5860 = vunpack.c.l.b16 %v5341
      %v5861 = vunpack.c.l.b16 %v5342
      %v5862 = vunpack.c.l.b16 %v5343
      %v5863 = vunpack.c.l.b16 %v5344
      %v5864 = vunpack.c.l.b16 %v5345
      %v5865 = vunpack.c.l.b16 %v5346
      %v5866 = vunpack.c.l.b16 %v5347
      %v5867 = vunpack.c.l.b16 %v5348
      %v5868 = vunpack.c.l.b16 %v5349
      %v5869 = vunpack.c.l.b16 %v5350
      %v5870 = vunpack.c.l.b16 %v5351
      %v5871 = vunpack.c.l.b16 %v5352
      %v5872 = vunpack.c.l.b16 %v5353
      %v5873 = vunpack.c.l.b16 %v5354
      %v5874 = vunpack.c.l.b16 %v5355
      %v5875 = vunpack.c.l.b16 %v5356
      %v5876 = vunpack.c.l.b16 %v5357
      %v5877 = vunpack.c.l.b16 %v5358
      %v5878 = vunpack.c.l.b16 %v5359
      %v5879 = vunpack.c.l.b16 %v5360
      %v5880 = vunpack.c.l.b16 %v5361
      %v5881 = vunpack.c.l.b16 %v5362
      %v5882 = vunpack.c.l.b16 %v5363
      %v5883 = vunpack.c.l.b16 %v5364
      %v5884 = vunpack.c.l.b16 %v5365
      %v5885 = vunpack.c.l.b16 %v5366
      %v5886 = vunpack.c.l.b16 %v5367
      %v5887 = vunpack.c.l.b16 %v5368
      %v5888 = vunpack.c.l.b16 %v5369
      %v5889 = vunpack.c.l.b16 %v5370
      %v5890 = vunpack.c.l.b16 %v5371
      %v5891 = vunpack.c.l.b16 %v5372
      %v5892 = vunpack.c.l.b16 %v5373
      %v5893 = vunpack.c.l.b16 %v5374
      %v5894 = vunpack.c.l.b16 %v5375
      %v5895 = vunpack.c.l.b16 %v5376
      %v5896 = vunpack.c.l.b16 %v5377
      %v5897 = vunpack.c.l.b16 %v5378
      %v5898 = vunpack.c.l.b16 %v5379
      %v5899 = vunpack.c.l.b16 %v5380
      %v5900 = vunpack.c.l.b16 %v5381
      %v5901 = vunpack.c.l.b16 %v5382
      %v5902 = vunpack.c.l.b16 %v5383
      %v5903 = vunpack.c.l.b16 %v5384
      %v5904 = vunpack.c.l.b16 %v5385
      %v5905 = vunpack.c.l.b16 %v5386
      %v5906 = vunpack.c.l.b16 %v5387
      %v5907 = vunpack.c.l.b16 %v5388
      %v5908 = vunpack.c.l.b16 %v5389
      %v5909 = vunpack.c.l.b16 %v5390
      %v5910 = vunpack.c.l.b16 %v5391
      %v5911 = vunpack.c.l.b16 %v5392
      %v5912 = vunpack.c.l.b16 %v5393
      %v5913 = vunpack.c.l.b16 %v5394
      %v5914 = vunpack.c.l.b16 %v5395
      %v5915 = vunpack.c.l.b16 %v5396
      %v5916 = vunpack.c.l.b16 %v5397
      %v5917 = vunpack.c.l.b16 %v5398
      %v5918 = vunpack.c.l.b16 %v5399
      %v5919 = vunpack.c.l.b16 %v5400
      %v5920 = vunpack.c.l.b16 %v5401
      %v5921 = vunpack.c.l.b16 %v5402
      %v5922 = vunpack.c.l.b16 %v5403
      %v5923 = vunpack.c.l.b16 %v5404
      %v5924 = vunpack.c.l.b16 %v5405
      %v5925 = vunpack.c.l.b16 %v5406
      %v5926 = vunpack.c.l.b16 %v5407
      %v5927 = vunpack.c.l.b16 %v5408
      %v5928 = vunpack.c.l.b16 %v5409
      %v5929 = vunpack.c.l.b16 %v5410
      %v5930 = vunpack.c.l.b16 %v5411
      %v5931 = vunpack.c.l.b16 %v5412
      %v5932 = vunpack.c.l.b16 %v5413
      %v5933 = vunpack.c.l.b16 %v5414
      %v5934 = vunpack.c.l.b16 %v5415
      %v5935 = vunpack.c.l.b16 %v5416
      %v5936 = vunpack.c.l.b16 %v5417
      %v5937 = vunpack.c.l.b16 %v5418
      %v5938 = vunpack.c.l.b16 %v5419
      %v5939 = vunpack.c.l.b16 %v5420
      %v5940 = vunpack.c.l.b16 %v5421
      %v5941 = vunpack.c.l.b16 %v5422
      %v5942 = vunpack.c.l.b16 %v5423
      %v5943 = vunpack.c.l.b16 %v5424
      %v5944 = vunpack.c.l.b16 %v5425
      %v5945 = vunpack.c.l.b16 %v5426
      %v5946 = vunpack.c.l.b16 %v5427
      %v5947 = vunpack.c.l.b16 %v5428
      %v5948 = vunpack.c.l.b16 %v5429
      %v5949 = vunpack.c.l.b16 %v5430
      %v5950 = vunpack.c.l.b16 %v5431
      %v5951 = vunpack.c.l.b16 %v5432
      %v5952 = vunpack.c.l.b16 %v5433
      %v5953 = vunpack.c.l.b16 %v5434
      %v5954 = vunpack.c.l.b16 %v5435
      %v5955 = vunpack.c.l.b16 %v5436
      %v5956 = vunpack.c.l.b16 %v5437
      %v5957 = vunpack.c.l.b16 %v5438
      %v5958 = vunpack.c.l.b16 %v5439
      %v5959 = vunpack.c.l.b16 %v5440
      %v5960 = vunpack.c.l.b16 %v5441
      %v5961 = vunpack.c.l.b16 %v5442
      %v5962 = vunpack.c.l.b16 %v5443
      %v5963 = vunpack.c.l.b16 %v5444
      %v5964 = vunpack.c.l.b16 %v5445
      %v5965 = vunpack.c.l.b16 %v5446
      %v5966 = vunpack.c.l.b16 %v5447
      %v5967 = vunpack.c.l.b16 %v5448
      %v5968 = vunpack.c.l.b16 %v5449
      %v5969 = vpack.c.b16 %v5714, %v5713
      %v5970 = vpack.c.b16 %v5716, %v5715
      %v5971 = vpack.c.b16 %v5718, %v5717
      %v5972 = vpack.c.b16 %v5720, %v5719
      %v5973 = vpack.c.b16 %v5722, %v5721
      %v5974 = vpack.c.b16 %v5724, %v5723
      %v5975 = vpack.c.b16 %v5726, %v5725
      %v5976 = vpack.c.b16 %v5728, %v5727
      %v5977 = vpack.c.b16 %v5730, %v5729
      %v5978 = vpack.c.b16 %v5732, %v5731
      %v5979 = vpack.c.b16 %v5734, %v5733
      %v5980 = vpack.c.b16 %v5736, %v5735
      %v5981 = vpack.c.b16 %v5738, %v5737
      %v5982 = vpack.c.b16 %v5740, %v5739
      %v5983 = vpack.c.b16 %v5742, %v5741
      %v5984 = vpack.c.b16 %v5744, %v5743
      %v5985 = vpack.c.b16 %v5746, %v5745
      %v5986 = vpack.c.b16 %v5748, %v5747
      %v5987 = vpack.c.b16 %v5750, %v5749
      %v5988 = vpack.c.b16 %v5752, %v5751
      %v5989 = vpack.c.b16 %v5754, %v5753
      %v5990 = vpack.c.b16 %v5756, %v5755
      %v5991 = vpack.c.b16 %v5758, %v5757
      %v5992 = vpack.c.b16 %v5760, %v5759
      %v5993 = vpack.c.b16 %v5762, %v5761
      %v5994 = vpack.c.b16 %v5764, %v5763
      %v5995 = vpack.c.b16 %v5766, %v5765
      %v5996 = vpack.c.b16 %v5768, %v5767
      %v5997 = vpack.c.b16 %v5770, %v5769
      %v5998 = vpack.c.b16 %v5772, %v5771
      %v5999 = vpack.c.b16 %v5774, %v5773
      %v6000 = vpack.c.b16 %v5776, %v5775
      %v6001 = vpack.c.b16 %v5778, %v5777
      %v6002 = vpack.c.b16 %v5780, %v5779
      %v6003 = vpack.c.b16 %v5782, %v5781
      %v6004 = vpack.c.b16 %v5784, %v5783
      %v6005 = vpack.c.b16 %v5786, %v5785
      %v6006 = vpack.c.b16 %v5788, %v5787
      %v6007 = vpack.c.b16 %v5790, %v5789
      %v6008 = vpack.c.b16 %v5792, %v5791
      %v6009 = vpack.c.b16 %v5794, %v5793
      %v6010 = vpack.c.b16 %v5796, %v5795
      %v6011 = vpack.c.b16 %v5798, %v5797
      %v6012 = vpack.c.b16 %v5800, %v5799
      %v6013 = vpack.c.b16 %v5802, %v5801
      %v6014 = vpack.c.b16 %v5804, %v5803
      %v6015 = vpack.c.b16 %v5806, %v5805
      %v6016 = vpack.c.b16 %v5808, %v5807
      %v6017 = vpack.c.b16 %v5810, %v5809
      %v6018 = vpack.c.b16 %v5812, %v5811
      %v6019 = vpack.c.b16 %v5814, %v5813
      %v6020 = vpack.c.b16 %v5816, %v5815
      %v6021 = vpack.c.b16 %v5818, %v5817
      %v6022 = vpack.c.b16 %v5820, %v5819
      %v6023 = vpack.c.b16 %v5822, %v5821
      %v6024 = vpack.c.b16 %v5824, %v5823
      %v6025 = vpack.c.b16 %v5826, %v5825
      %v6026 = vpack.c.b16 %v5828, %v5827
      %v6027 = vpack.c.b16 %v5830, %v5829
      %v6028 = vpack.c.b16 %v5832, %v5831
      %v6029 = vpack.c.b16 %v5834, %v5833
      %v6030 = vpack.c.b16 %v5836, %v5835
      %v6031 = vpack.c.b16 %v5838, %v5837
      %v6032 = vpack.c.b16 %v5840, %v5839
      %v6033 = vpack.c.b16 %v5842, %v5841
      %v6034 = vpack.c.b16 %v5844, %v5843
      %v6035 = vpack.c.b16 %v5846, %v5845
      %v6036 = vpack.c.b16 %v5848, %v5847
      %v6037 = vpack.c.b16 %v5850, %v5849
      %v6038 = vpack.c.b16 %v5852, %v5851
      %v6039 = vpack.c.b16 %v5854, %v5853
      %v6040 = vpack.c.b16 %v5856, %v5855
      %v6041 = vpack.c.b16 %v5858, %v5857
      %v6042 = vpack.c.b16 %v5860, %v5859
      %v6043 = vpack.c.b16 %v5862, %v5861
      %v6044 = vpack.c.b16 %v5864, %v5863
      %v6045 = vpack.c.b16 %v5866, %v5865
      %v6046 = vpack.c.b16 %v5868, %v5867
      %v6047 = vpack.c.b16 %v5870, %v5869
      %v6048 = vpack.c.b16 %v5872, %v5871
      %v6049 = vpack.c.b16 %v5874, %v5873
      %v6050 = vpack.c.b16 %v5876, %v5875
      %v6051 = vpack.c.b16 %v5878, %v5877
      %v6052 = vpack.c.b16 %v5880, %v5879
      %v6053 = vpack.c.b16 %v5882, %v5881
      %v6054 = vpack.c.b16 %v5884, %v5883
      %v6055 = vpack.c.b16 %v5886, %v5885
      %v6056 = vpack.c.b16 %v5888, %v5887
      %v6057 = vpack.c.b16 %v5890, %v5889
      %v6058 = vpack.c.b16 %v5892, %v5891
      %v6059 = vpack.c.b16 %v5894, %v5893
      %v6060 = vpack.c.b16 %v5896, %v5895
      %v6061 = vpack.c.b16 %v5898, %v5897
      %v6062 = vpack.c.b16 %v5900, %v5899
      %v6063 = vpack.c.b16 %v5902, %v5901
      %v6064 = vpack.c.b16 %v5904, %v5903
      %v6065 = vpack.c.b16 %v5906, %v5905
      %v6066 = vpack.c.b16 %v5908, %v5907
      %v6067 = vpack.c.b16 %v5910, %v5909
      %v6068 = vpack.c.b16 %v5912, %v5911
      %v6069 = vpack.c.b16 %v5914, %v5913
      %v6070 = vpack.c.b16 %v5916, %v5915
      %v6071 = vpack.c.b16 %v5918, %v5917
      %v6072 = vpack.c.b16 %v5920, %v5919
      %v6073 = vpack.c.b16 %v5922, %v5921
      %v6074 = vpack.c.b16 %v5924, %v5923
      %v6075 = vpack.c.b16 %v5926, %v5925
      %v6076 = vpack.c.b16 %v5928, %v5927
      %v6077 = vpack.c.b16 %v5930, %v5929
      %v6078 = vpack.c.b16 %v5932, %v5931
      %v6079 = vpack.c.b16 %v5934, %v5933
      %v6080 = vpack.c.b16 %v5936, %v5935
      %v6081 = vpack.c.b16 %v5938, %v5937
      %v6082 = vpack.c.b16 %v5940, %v5939
      %v6083 = vpack.c.b16 %v5942, %v5941
      %v6084 = vpack.c.b16 %v5944, %v5943
      %v6085 = vpack.c.b16 %v5946, %v5945
      %v6086 = vpack.c.b16 %v5948, %v5947
      %v6087 = vpack.c.b16 %v5950, %v5949
      %v6088 = vpack.c.b16 %v5952, %v5951
      %v6089 = vpack.c.b16 %v5954, %v5953
      %v6090 = vpack.c.b16 %v5956, %v5955
      %v6091 = vpack.c.b16 %v5958, %v5957
      %v6092 = vpack.c.b16 %v5960, %v5959
      %v6093 = vpack.c.b16 %v5962, %v5961
      %v6094 = vpack.c.b16 %v5964, %v5963
      %v6095 = vpack.c.b16 %v5966, %v5965
      %v6096 = vpack.c.b16 %v5968, %v5967
      %6225 = vmatprep.subr.bf16.mxu0 0
      %6226 = vmatpush1.bf16.msra.mxu0 %v5969
      %6227 = vmatprep.subr.bf16.mxu0 0
      %6228 = vmatpush1.bf16.msra.mxu0 %v5970
      %6229 = vmatprep.subr.bf16.mxu0 0
      %6230 = vmatpush1.bf16.msra.mxu0 %v5971
      %6231 = vmatprep.subr.bf16.mxu0 0
      %6232 = vmatpush1.bf16.msra.mxu0 %v5972
      %6233 = vmatprep.subr.bf16.mxu0 0
      %6234 = vmatpush1.bf16.msra.mxu0 %v5973
      %6235 = vmatprep.subr.bf16.mxu0 0
      %6236 = vmatpush1.bf16.msra.mxu0 %v5974
      %6237 = vmatprep.subr.bf16.mxu0 0
      %6238 = vmatpush1.bf16.msra.mxu0 %v5975
      %6239 = vmatprep.subr.bf16.mxu0 0
      %6240 = vmatpush1.bf16.msra.mxu0 %v5976
      %6241 = vmatprep.subr.bf16.mxu0 0
      %6242 = vmatpush1.bf16.msra.mxu0 %v5977
      %6243 = vmatprep.subr.bf16.mxu0 0
      %6244 = vmatpush1.bf16.msra.mxu0 %v5978
      %6245 = vmatprep.subr.bf16.mxu0 0
      %6246 = vmatpush1.bf16.msra.mxu0 %v5979
      %6247 = vmatprep.subr.bf16.mxu0 0
      %6248 = vmatpush1.bf16.msra.mxu0 %v5980
      %6249 = vmatprep.subr.bf16.mxu0 0
      %6250 = vmatpush1.bf16.msra.mxu0 %v5981
      %6251 = vmatprep.subr.bf16.mxu0 0
      %6252 = vmatpush1.bf16.msra.mxu0 %v5982
      %6253 = vmatprep.subr.bf16.mxu0 0
      %6254 = vmatpush1.bf16.msra.mxu0 %v5983
      %6255 = vmatprep.subr.bf16.mxu0 0
      %6256 = vmatpush1.bf16.msra.mxu0 %v5984
      %6257 = vmatprep.mubr.bf16.mxu0 %v5179
      %6258 = vmatmul.mubr.bf16.gmra.mrb[0].mxu0 %v5178
      %v6259 = vpop.f32.mrb[0].mxu0
      %v6260 = vadd.f32 %v5455, %v6259
      %v6261 = vpop.f32.mrb[0].mxu0
      %v6262 = vpop.f32.mrb[0].mxu0
      %v6263 = vadd.f32 %v5455, %v6262
      %v6264 = vpop.f32.mrb[0].mxu0
      %6265 = vdwg.mxu0
      %6266 = vmatprep.subr.bf16.mxu0 0
      %6267 = vmatpush1.bf16.msra.mxu0 %v5985
      %6268 = vmatprep.subr.bf16.mxu0 0
      %6269 = vmatpush1.bf16.msra.mxu0 %v5986
      %6270 = vmatprep.subr.bf16.mxu0 0
      %6271 = vmatpush1.bf16.msra.mxu0 %v5987
      %6272 = vmatprep.subr.bf16.mxu0 0
      %6273 = vmatpush1.bf16.msra.mxu0 %v5988
      %6274 = vmatprep.subr.bf16.mxu0 0
      %6275 = vmatpush1.bf16.msra.mxu0 %v5989
      %6276 = vmatprep.subr.bf16.mxu0 0
      %6277 = vmatpush1.bf16.msra.mxu0 %v5990
      %6278 = vmatprep.subr.bf16.mxu0 0
      %6279 = vmatpush1.bf16.msra.mxu0 %v5991
      %6280 = vmatprep.subr.bf16.mxu0 0
      %6281 = vmatpush1.bf16.msra.mxu0 %v5992
      %6282 = vmatprep.subr.bf16.mxu0 0
      %6283 = vmatpush1.bf16.msra.mxu0 %v5993
      %6284 = vmatprep.subr.bf16.mxu0 0
      %6285 = vmatpush1.bf16.msra.mxu0 %v5994
      %6286 = vmatprep.subr.bf16.mxu0 0
      %6287 = vmatpush1.bf16.msra.mxu0 %v5995
      %6288 = vmatprep.subr.bf16.mxu0 0
      %6289 = vmatpush1.bf16.msra.mxu0 %v5996
      %6290 = vmatprep.subr.bf16.mxu0 0
      %6291 = vmatpush1.bf16.msra.mxu0 %v5997
      %6292 = vmatprep.subr.bf16.mxu0 0
      %6293 = vmatpush1.bf16.msra.mxu0 %v5998
      %6294 = vmatprep.subr.bf16.mxu0 0
      %6295 = vmatpush1.bf16.msra.mxu0 %v5999
      %6296 = vmatprep.subr.bf16.mxu0 0
      %6297 = vmatpush1.bf16.msra.mxu0 %v6000
      %6298 = vmatprep.mubr.bf16.mxu0 %v5181
      %6299 = vmatmul.mubr.bf16.gmra.mrb[0].mxu0 %v5180
      %v6300 = vpop.f32.mrb[0].mxu0
      %v6301 = vadd.f32 %v6260, %v6300
      %v6302 = vpop.f32.mrb[0].mxu0
      %v6303 = vpop.f32.mrb[0].mxu0
      %v6304 = vadd.f32 %v6263, %v6303
      %v6305 = vpop.f32.mrb[0].mxu0
      %6306 = vdwg.mxu0
      %6307 = vmatprep.subr.bf16.mxu0 0
      %6308 = vmatpush1.bf16.msra.mxu0 %v6001
      %6309 = vmatprep.subr.bf16.mxu0 0
      %6310 = vmatpush1.bf16.msra.mxu0 %v6002
      %6311 = vmatprep.subr.bf16.mxu0 0
      %6312 = vmatpush1.bf16.msra.mxu0 %v6003
      %6313 = vmatprep.subr.bf16.mxu0 0
      %6314 = vmatpush1.bf16.msra.mxu0 %v6004
      %6315 = vmatprep.subr.bf16.mxu0 0
      %6316 = vmatpush1.bf16.msra.mxu0 %v6005
      %6317 = vmatprep.subr.bf16.mxu0 0
      %6318 = vmatpush1.bf16.msra.mxu0 %v6006
      %6319 = vmatprep.subr.bf16.mxu0 0
      %6320 = vmatpush1.bf16.msra.mxu0 %v6007
      %6321 = vmatprep.subr.bf16.mxu0 0
      %6322 = vmatpush1.bf16.msra.mxu0 %v6008
      %6323 = vmatprep.subr.bf16.mxu0 0
      %6324 = vmatpush1.bf16.msra.mxu0 %v6009
      %6325 = vmatprep.subr.bf16.mxu0 0
      %6326 = vmatpush1.bf16.msra.mxu0 %v6010
      %6327 = vmatprep.subr.bf16.mxu0 0
      %6328 = vmatpush1.bf16.msra.mxu0 %v6011
      %6329 = vmatprep.subr.bf16.mxu0 0
      %6330 = vmatpush1.bf16.msra.mxu0 %v6012
      %6331 = vmatprep.subr.bf16.mxu0 0
      %6332 = vmatpush1.bf16.msra.mxu0 %v6013
      %6333 = vmatprep.subr.bf16.mxu0 0
      %6334 = vmatpush1.bf16.msra.mxu0 %v6014
      %6335 = vmatprep.subr.bf16.mxu0 0
      %6336 = vmatpush1.bf16.msra.mxu0 %v6015
      %6337 = vmatprep.subr.bf16.mxu0 0
      %6338 = vmatpush1.bf16.msra.mxu0 %v6016
      %6339 = vmatprep.mubr.bf16.mxu0 %v5183
      %6340 = vmatmul.mubr.bf16.gmra.mrb[0].mxu0 %v5182
      %v6341 = vpop.f32.mrb[0].mxu0
      %v6342 = vadd.f32 %v6301, %v6341
      %v6343 = vpop.f32.mrb[0].mxu0
      %v6344 = vpop.f32.mrb[0].mxu0
      %v6345 = vadd.f32 %v6304, %v6344
      %v6346 = vpop.f32.mrb[0].mxu0
      %6347 = vdwg.mxu0
      %6348 = vmatprep.subr.bf16.mxu0 0
      %6349 = vmatpush1.bf16.msra.mxu0 %v6017
      %6350 = vmatprep.subr.bf16.mxu0 0
      %6351 = vmatpush1.bf16.msra.mxu0 %v6018
      %6352 = vmatprep.subr.bf16.mxu0 0
      %6353 = vmatpush1.bf16.msra.mxu0 %v6019
      %6354 = vmatprep.subr.bf16.mxu0 0
      %6355 = vmatpush1.bf16.msra.mxu0 %v6020
      %6356 = vmatprep.subr.bf16.mxu0 0
      %6357 = vmatpush1.bf16.msra.mxu0 %v6021
      %6358 = vmatprep.subr.bf16.mxu0 0
      %6359 = vmatpush1.bf16.msra.mxu0 %v6022
      %6360 = vmatprep.subr.bf16.mxu0 0
      %6361 = vmatpush1.bf16.msra.mxu0 %v6023
      %6362 = vmatprep.subr.bf16.mxu0 0
      %6363 = vmatpush1.bf16.msra.mxu0 %v6024
      %6364 = vmatprep.subr.bf16.mxu0 0
      %6365 = vmatpush1.bf16.msra.mxu0 %v6025
      %6366 = vmatprep.subr.bf16.mxu0 0
      %6367 = vmatpush1.bf16.msra.mxu0 %v6026
      %6368 = vmatprep.subr.bf16.mxu0 0
      %6369 = vmatpush1.bf16.msra.mxu0 %v6027
      %6370 = vmatprep.subr.bf16.mxu0 0
      %6371 = vmatpush1.bf16.msra.mxu0 %v6028
      %6372 = vmatprep.subr.bf16.mxu0 0
      %6373 = vmatpush1.bf16.msra.mxu0 %v6029
      %6374 = vmatprep.subr.bf16.mxu0 0
      %6375 = vmatpush1.bf16.msra.mxu0 %v6030
      %6376 = vmatprep.subr.bf16.mxu0 0
      %6377 = vmatpush1.bf16.msra.mxu0 %v6031
      %6378 = vmatprep.subr.bf16.mxu0 0
      %6379 = vmatpush1.bf16.msra.mxu0 %v6032
      %6380 = vmatprep.mubr.bf16.mxu0 %v5185
      %6381 = vmatmul.mubr.bf16.gmra.mrb[0].mxu0 %v5184
      %v6382 = vpop.f32.mrb[0].mxu0
      %v6383 = vadd.f32 %v6342, %v6382
      %v6384 = vpop.f32.mrb[0].mxu0
      %v6385 = vpop.f32.mrb[0].mxu0
      %v6386 = vadd.f32 %v6345, %v6385
      %v6387 = vpop.f32.mrb[0].mxu0
      %6388 = vdwg.mxu0
      %6389 = vmatprep.subr.bf16.mxu0 0
      %6390 = vmatpush1.bf16.msra.mxu0 %v6033
      %6391 = vmatprep.subr.bf16.mxu0 0
      %6392 = vmatpush1.bf16.msra.mxu0 %v6034
      %6393 = vmatprep.subr.bf16.mxu0 0
      %6394 = vmatpush1.bf16.msra.mxu0 %v6035
      %6395 = vmatprep.subr.bf16.mxu0 0
      %6396 = vmatpush1.bf16.msra.mxu0 %v6036
      %6397 = vmatprep.subr.bf16.mxu0 0
      %6398 = vmatpush1.bf16.msra.mxu0 %v6037
      %6399 = vmatprep.subr.bf16.mxu0 0
      %6400 = vmatpush1.bf16.msra.mxu0 %v6038
      %6401 = vmatprep.subr.bf16.mxu0 0
      %6402 = vmatpush1.bf16.msra.mxu0 %v6039
      %6403 = vmatprep.subr.bf16.mxu0 0
      %6404 = vmatpush1.bf16.msra.mxu0 %v6040
      %6405 = vmatprep.subr.bf16.mxu0 0
      %6406 = vmatpush1.bf16.msra.mxu0 %v6041
      %6407 = vmatprep.subr.bf16.mxu0 0
      %6408 = vmatpush1.bf16.msra.mxu0 %v6042
      %6409 = vmatprep.subr.bf16.mxu0 0
      %6410 = vmatpush1.bf16.msra.mxu0 %v6043
      %6411 = vmatprep.subr.bf16.mxu0 0
      %6412 = vmatpush1.bf16.msra.mxu0 %v6044
      %6413 = vmatprep.subr.bf16.mxu0 0
      %6414 = vmatpush1.bf16.msra.mxu0 %v6045
      %6415 = vmatprep.subr.bf16.mxu0 0
      %6416 = vmatpush1.bf16.msra.mxu0 %v6046
      %6417 = vmatprep.subr.bf16.mxu0 0
      %6418 = vmatpush1.bf16.msra.mxu0 %v6047
      %6419 = vmatprep.subr.bf16.mxu0 0
      %6420 = vmatpush1.bf16.msra.mxu0 %v6048
      %6421 = vmatprep.mubr.bf16.mxu0 %v5187
      %6422 = vmatmul.mubr.bf16.gmra.mrb[0].mxu0 %v5186
      %v6423 = vpop.f32.mrb[0].mxu0
      %v6424 = vadd.f32 %v6383, %v6423
      %v6425 = vpop.f32.mrb[0].mxu0
      %v6426 = vpop.f32.mrb[0].mxu0
      %v6427 = vadd.f32 %v6386, %v6426
      %v6428 = vpop.f32.mrb[0].mxu0
      %6429 = vdwg.mxu0
      %6430 = vmatprep.subr.bf16.mxu0 0
      %6431 = vmatpush1.bf16.msra.mxu0 %v6049
      %6432 = vmatprep.subr.bf16.mxu0 0
      %6433 = vmatpush1.bf16.msra.mxu0 %v6050
      %6434 = vmatprep.subr.bf16.mxu0 0
      %6435 = vmatpush1.bf16.msra.mxu0 %v6051
      %6436 = vmatprep.subr.bf16.mxu0 0
      %6437 = vmatpush1.bf16.msra.mxu0 %v6052
      %6438 = vmatprep.subr.bf16.mxu0 0
      %6439 = vmatpush1.bf16.msra.mxu0 %v6053
      %6440 = vmatprep.subr.bf16.mxu0 0
      %6441 = vmatpush1.bf16.msra.mxu0 %v6054
      %6442 = vmatprep.subr.bf16.mxu0 0
      %6443 = vmatpush1.bf16.msra.mxu0 %v6055
      %6444 = vmatprep.subr.bf16.mxu0 0
      %6445 = vmatpush1.bf16.msra.mxu0 %v6056
      %6446 = vmatprep.subr.bf16.mxu0 0
      %6447 = vmatpush1.bf16.msra.mxu0 %v6057
      %6448 = vmatprep.subr.bf16.mxu0 0
      %6449 = vmatpush1.bf16.msra.mxu0 %v6058
      %6450 = vmatprep.subr.bf16.mxu0 0
      %6451 = vmatpush1.bf16.msra.mxu0 %v6059
      %6452 = vmatprep.subr.bf16.mxu0 0
      %6453 = vmatpush1.bf16.msra.mxu0 %v6060
      %6454 = vmatprep.subr.bf16.mxu0 0
      %6455 = vmatpush1.bf16.msra.mxu0 %v6061
      %6456 = vmatprep.subr.bf16.mxu0 0
      %6457 = vmatpush1.bf16.msra.mxu0 %v6062
      %6458 = vmatprep.subr.bf16.mxu0 0
      %6459 = vmatpush1.bf16.msra.mxu0 %v6063
      %6460 = vmatprep.subr.bf16.mxu0 0
      %6461 = vmatpush1.bf16.msra.mxu0 %v6064
      %6462 = vmatprep.mubr.bf16.mxu0 %v5189
      %6463 = vmatmul.mubr.bf16.gmra.mrb[0].mxu0 %v5188
      %v6464 = vpop.f32.mrb[0].mxu0
      %v6465 = vadd.f32 %v6424, %v6464
      %v6466 = vpop.f32.mrb[0].mxu0
      %v6467 = vpop.f32.mrb[0].mxu0
      %v6468 = vadd.f32 %v6427, %v6467
      %v6469 = vpop.f32.mrb[0].mxu0
      %6470 = vdwg.mxu0
      %6471 = vmatprep.subr.bf16.mxu0 0
      %6472 = vmatpush1.bf16.msra.mxu0 %v6065
      %6473 = vmatprep.subr.bf16.mxu0 0
      %6474 = vmatpush1.bf16.msra.mxu0 %v6066
      %6475 = vmatprep.subr.bf16.mxu0 0
      %6476 = vmatpush1.bf16.msra.mxu0 %v6067
      %6477 = vmatprep.subr.bf16.mxu0 0
      %6478 = vmatpush1.bf16.msra.mxu0 %v6068
      %6479 = vmatprep.subr.bf16.mxu0 0
      %6480 = vmatpush1.bf16.msra.mxu0 %v6069
      %6481 = vmatprep.subr.bf16.mxu0 0
      %6482 = vmatpush1.bf16.msra.mxu0 %v6070
      %6483 = vmatprep.subr.bf16.mxu0 0
      %6484 = vmatpush1.bf16.msra.mxu0 %v6071
      %6485 = vmatprep.subr.bf16.mxu0 0
      %6486 = vmatpush1.bf16.msra.mxu0 %v6072
      %6487 = vmatprep.subr.bf16.mxu0 0
      %6488 = vmatpush1.bf16.msra.mxu0 %v6073
      %6489 = vmatprep.subr.bf16.mxu0 0
      %6490 = vmatpush1.bf16.msra.mxu0 %v6074
      %6491 = vmatprep.subr.bf16.mxu0 0
      %6492 = vmatpush1.bf16.msra.mxu0 %v6075
      %6493 = vmatprep.subr.bf16.mxu0 0
      %6494 = vmatpush1.bf16.msra.mxu0 %v6076
      %6495 = vmatprep.subr.bf16.mxu0 0
      %6496 = vmatpush1.bf16.msra.mxu0 %v6077
      %6497 = vmatprep.subr.bf16.mxu0 0
      %6498 = vmatpush1.bf16.msra.mxu0 %v6078
      %6499 = vmatprep.subr.bf16.mxu0 0
      %6500 = vmatpush1.bf16.msra.mxu0 %v6079
      %6501 = vmatprep.subr.bf16.mxu0 0
      %6502 = vmatpush1.bf16.msra.mxu0 %v6080
      %6503 = vmatprep.mubr.bf16.mxu0 %v5191
      %6504 = vmatmul.mubr.bf16.gmra.mrb[0].mxu0 %v5190
      %v6505 = vpop.f32.mrb[0].mxu0
      %v6506 = vadd.f32 %v6465, %v6505
      %v6507 = vpop.f32.mrb[0].mxu0
      %v6508 = vpop.f32.mrb[0].mxu0
      %v6509 = vadd.f32 %v6468, %v6508
      %v6510 = vpop.f32.mrb[0].mxu0
      %6511 = vdwg.mxu0
      %6512 = vmatprep.subr.bf16.mxu0 0
      %6513 = vmatpush1.bf16.msra.mxu0 %v6081
      %6514 = vmatprep.subr.bf16.mxu0 0
      %6515 = vmatpush1.bf16.msra.mxu0 %v6082
      %6516 = vmatprep.subr.bf16.mxu0 0
      %6517 = vmatpush1.bf16.msra.mxu0 %v6083
      %6518 = vmatprep.subr.bf16.mxu0 0
      %6519 = vmatpush1.bf16.msra.mxu0 %v6084
      %6520 = vmatprep.subr.bf16.mxu0 0
      %6521 = vmatpush1.bf16.msra.mxu0 %v6085
      %6522 = vmatprep.subr.bf16.mxu0 0
      %6523 = vmatpush1.bf16.msra.mxu0 %v6086
      %6524 = vmatprep.subr.bf16.mxu0 0
      %6525 = vmatpush1.bf16.msra.mxu0 %v6087
      %6526 = vmatprep.subr.bf16.mxu0 0
      %6527 = vmatpush1.bf16.msra.mxu0 %v6088
      %6528 = vmatprep.subr.bf16.mxu0 0
      %6529 = vmatpush1.bf16.msra.mxu0 %v6089
      %6530 = vmatprep.subr.bf16.mxu0 0
      %6531 = vmatpush1.bf16.msra.mxu0 %v6090
      %6532 = vmatprep.subr.bf16.mxu0 0
      %6533 = vmatpush1.bf16.msra.mxu0 %v6091
      %6534 = vmatprep.subr.bf16.mxu0 0
      %6535 = vmatpush1.bf16.msra.mxu0 %v6092
      %6536 = vmatprep.subr.bf16.mxu0 0
      %6537 = vmatpush1.bf16.msra.mxu0 %v6093
      %6538 = vmatprep.subr.bf16.mxu0 0
      %6539 = vmatpush1.bf16.msra.mxu0 %v6094
      %6540 = vmatprep.subr.bf16.mxu0 0
      %6541 = vmatpush1.bf16.msra.mxu0 %v6095
      %6542 = vmatprep.subr.bf16.mxu0 0
      %6543 = vmatpush1.bf16.msra.mxu0 %v6096
      %6544 = vmatprep.mubr.bf16.mxu0 %v5193
      %6545 = vmatmul.mubr.bf16.gmra.mrb[0].mxu0 %v5192
      %v6546 = vpop.f32.mrb[0].mxu0
      %v6547 = vadd.f32 %v6506, %v6546
      %v6548 = vpop.f32.mrb[0].mxu0
      %v6549 = vpop.f32.mrb[0].mxu0
      %v6550 = vadd.f32 %v6509, %v6549
      %v6551 = vpop.f32.mrb[0].mxu0
      %6552 = vdwg.mxu0
      %v6553 = vadd.f32 %v4520, %v6547
      %v6554 = vadd.f32 %v4521, %v6550
      %v6555 = vld [vmem:[%s1127] sm:$0x1]
      %v6556 = vld [vmem:[%s1130] sm:$0x1]
      %v6557 = vsel %vm3587, %v6553, 0.0
      %6558 = vadd.xlane.f32.xlu0 %v6557
      %v6559 = vpop.xlane.xlu0 %6558
      %v6560 = vsel %vm4481, %v6554, 0.0
      %6561 = vadd.xlane.f32.xlu0 %v6560
      %v6562 = vpop.xlane.xlu0 %6561
      %v6563 = vmul.f32 %v6559, %v4485
      %v6564 = vmul.f32 %v6562, %v4485
      %v6565 = vsub.f32 %v6553, %v6563
      %v6566 = vsub.f32 %v6554, %v6564
      %v6567 = vmul.f32 %v6565, %v6565
      %v6568 = vmul.f32 %v6566, %v6566
      %v6569 = vsel %vm3587, %v6567, 0.0
      %6570 = vadd.xlane.f32.xlu0 %v6569
      %v6571 = vpop.xlane.xlu0 %6570
      %v6572 = vsel %vm4481, %v6568, 0.0
      %6573 = vadd.xlane.f32.xlu0 %v6572
      %v6574 = vpop.xlane.xlu0 %6573
      %v6575 = vmul.f32 %v6571, %v4485
      %v6576 = vmul.f32 %v6574, %v4485
      %v6577 = vadd.f32 %v6575, 1e-05
      %v6578 = vadd.f32 %v6576, 1e-05
      %v6579 = vrsqrt.pop %v6577
      %v6580 = vrsqrt.pop %v6578
      %v6581 = vmul.f32 %v6565, %v6579
      %v6582 = vmul.f32 %v6566, %v6580
      %v6584 = vlaneseq
      %v6585 = vshrl.u32 %v6584, 7
      %v6586 = vsub.s32 0, %v6585
      %v6587 = vrot.slane %v6555, %v6586
      %v6589 = vmul.f32 %v6581, %v6587
      %v6590 = vmul.f32 %v6582, %v6587
      %v6592 = vlaneseq
      %v6593 = vshrl.u32 %v6592, 7
      %v6594 = vsub.s32 0, %v6593
      %v6595 = vrot.slane %v6556, %v6594
      %v6597 = vadd.f32 %v6589, %v6595
      %v6598 = vadd.f32 %v6590, %v6595
      %6599 = vst.msk [vmem:[#allocation2] sm:$0xff] %vm3587, %v6597
      %6600 = vst.msk [vmem:[#allocation2 + $0x8] sm:$0x3] %vm4481, %v6598
      %p6601 = scmp.eq.s32.totalorder %s70, 3
      // Predicated region
      $region141: #{temporal_transformer_forward.1} parent=135 // pred_check
        %p6602 = pneg %p6601
      $region142: #{temporal_transformer_forward.1} parent=135 // pred_check_branch
        %6604 = sbr.rel (%p6602) target = $region144
      $region143: #{temporal_transformer_forward.1} parent=135 // pred_region
        %v6605 = vld [vmem:[%s55] sm:$0xff]
        %v6606 = vld [vmem:[%s55 + $0x8] sm:$0xff]
        %v6607 = vld [vmem:[%s55 + $0x10] sm:$0xff]
        %v6608 = vld [vmem:[%s55 + $0x18] sm:$0xff]
        %v6609 = vld [vmem:[%s57] sm:$0x1]
        %v6611 = vlaneseq
        %v6612 = vshrl.u32 %v6611, 7
        %v6613 = vsub.s32 0, %v6612
        %v6614 = vrot.slane %v6609, %v6613
        %v6617 = vsel %vm3587, %v6597, 0
        %v6620 = vsel %vm3587, %v6598, 0
        %6622 = vmatprep.subr.mxu0 0.0
        %6623 = vmatpush1.msra.mxu0 %v6605
        %6624 = vmatprep.subr.mxu0 0.0
        %6625 = vmatpush1.msra.mxu0 %v6606
        %6626 = vmatprep.subr.mxu0 0.0
        %6627 = vmatpush1.msra.mxu0 %v6607
        %6628 = vmatprep.subr.mxu0 0.0
        %6629 = vmatpush1.msra.mxu0 %v6608
        %6630 = vmatprep.subr.mxu0 0.0
        %6631 = vmatpush1.msra.mxu0 0.0
        %6632 = vmatprep.subr.mxu0 0.0
        %6633 = vmatpush1.msra.mxu0 0.0
        %6634 = vmatprep.subr.mxu0 0.0
        %6635 = vmatpush1.msra.mxu0 0.0
        %6636 = vmatprep.subr.mxu0 0.0
        %6637 = vmatpush1.msra.mxu0 0.0
        %6638 = vmatprep.subr.mxu0 0.0
        %6639 = vmatpush1.msra.mxu0 0.0
        %6640 = vmatprep.subr.mxu0 0.0
        %6641 = vmatpush1.msra.mxu0 0.0
        %6642 = vmatprep.subr.mxu0 0.0
        %6643 = vmatpush1.msra.mxu0 0.0
        %6644 = vmatprep.subr.mxu0 0.0
        %6645 = vmatpush1.msra.mxu0 0.0
        %6646 = vmatprep.subr.mxu0 0.0
        %6647 = vmatpush1.msra.mxu0 0.0
        %6648 = vmatprep.subr.mxu0 0.0
        %6649 = vmatpush1.msra.mxu0 0.0
        %6650 = vmatprep.subr.mxu0 0.0
        %6651 = vmatpush1.msra.mxu0 0.0
        %6652 = vmatprep.subr.mxu0 0.0
        %6653 = vmatpush1.msra.mxu0 0.0
        %6654 = vmatprep.subr.mxu0 0.0
        %6655 = vmatpush1.msra.mxu0 0.0
        %6656 = vmatprep.subr.mxu0 0.0
        %6657 = vmatpush1.msra.mxu0 0.0
        %6658 = vmatprep.subr.mxu0 0.0
        %6659 = vmatpush1.msra.mxu0 0.0
        %6660 = vmatprep.subr.mxu0 0.0
        %6661 = vmatpush1.msra.mxu0 0.0
        %6662 = vmatprep.subr.mxu0 0.0
        %6663 = vmatpush1.msra.mxu0 0.0
        %6664 = vmatprep.subr.mxu0 0.0
        %6665 = vmatpush1.msra.mxu0 0.0
        %6666 = vmatprep.subr.mxu0 0.0
        %6667 = vmatpush1.msra.mxu0 0.0
        %6668 = vmatprep.subr.mxu0 0.0
        %6669 = vmatpush1.msra.mxu0 0.0
        %6670 = vmatprep.subr.mxu0 0.0
        %6671 = vmatpush1.msra.mxu0 0.0
        %6672 = vmatprep.subr.mxu0 0.0
        %6673 = vmatpush1.msra.mxu0 0.0
        %6674 = vmatprep.subr.mxu0 0.0
        %6675 = vmatpush1.msra.mxu0 0.0
        %6676 = vmatprep.subr.mxu0 0.0
        %6677 = vmatpush1.msra.mxu0 0.0
        %6678 = vmatprep.subr.mxu0 0.0
        %6679 = vmatpush1.msra.mxu0 0.0
        %6680 = vmatprep.subr.mxu0 0.0
        %6681 = vmatpush1.msra.mxu0 0.0
        %6682 = vmatprep.subr.mxu0 0.0
        %6683 = vmatpush1.msra.mxu0 0.0
        %6684 = vmatprep.subr.mxu0 0.0
        %6685 = vmatpush1.msra.mxu0 0.0
        %6686 = vmatprep.mubr.f32.mxu0 0.0
        %6687 = vmatmul.mubr.f32.gmra.mrb[0].mxu0 %v6617
        %v6688 = vpop.f32.mrb[0].mxu0
        %v6689 = vadd.f32 %v6614, %v6688
        %v6690 = vpop.f32.mrb[0].mxu0
        %6691 = vmatprep.mubr.f32.mxu0 0.0
        %6692 = vmatmul.mubr.f32.gmra.mrb[0].mxu0 %v6620
        %v6693 = vpop.f32.mrb[0].mxu0
        %v6694 = vadd.f32 %v6614, %v6693
        %v6695 = vpop.f32.mrb[0].mxu0
        %6696 = vdwg.mxu0
        %6697 = vst [vmem:[%s59] sm:$0xff] %v6689
        %6698 = vst [vmem:[%s59 + $0x8] sm:$0x3] %v6694
      $region144: #{temporal_transformer_forward.1} parent=135 // pred_fallthru
        _
      // Predicated region
      $region145: #{temporal_transformer_forward.1} parent=135 // pred_check
        %p6699 = pneg %p772
      $region146: #{temporal_transformer_forward.1} parent=135 // pred_check_branch
        %6701 = sbr.rel (%p6699) target = $region148
      $region147: #{temporal_transformer_forward.1} parent=135 // pred_region
        _
      $region148: #{temporal_transformer_forward.1} parent=135 // pred_fallthru
        _
      // Predicated region
      $region149: #{temporal_transformer_forward.1} parent=135 // pred_check
        %p6702 = pneg %p772
      $region150: #{temporal_transformer_forward.1} parent=135 // pred_check_branch
        %6704 = sbr.rel (%p6702) target = $region152
      $region151: #{temporal_transformer_forward.1} parent=135 // pred_region
        _
      $region152: #{temporal_transformer_forward.1} parent=135 // pred_fallthru
        _
    $region136: #{temporal_transformer_forward.1} parent=5 // pred_fallthru
      _
    %p6705 = scmp.le.s32.totalorder 2, %s65
    // Predicated region
    $region153: #{temporal_transformer_forward.1} parent=5 // pred_check
      %p6706 = pneg %p6705
    $region154: #{temporal_transformer_forward.1} parent=5 // pred_check_branch
      %6708 = sbr.rel (%p6706) target = $region156
    $region155: #{temporal_transformer_forward.1} parent=5 // pred_region
      %s6709 = ssub.s32 %s65, 2
    $region156: #{temporal_transformer_forward.1} parent=5 // pred_fallthru
      _
  $region6: #{temporal_transformer_forward.1} parent=0 // loop_footer
    %s69 = sadd.s32 1, %s65
  $region7: #{temporal_transformer_forward.1} parent=0 // loop_footer_branch
    %64 = sbr.rel target = $region3
  $region8: #{temporal_transformer_forward.1} parent=0 // loop_exit
    _

</llo_original>
